<compile_context>
chip_gen: v5e
topology: v5e:2x2
jax: 0.10.0
libtpu: 0.0.40
codegen_flags: <defaults>
</compile_context>

<pallas_src>
import functools
import math

import jax
import jax.numpy as jnp
from jax.experimental import pallas as pl
from jax.experimental.pallas import tpu as pltpu


def _ma_kernel(x_ref, wqkv_ref, bqkv_ref, wf_ref, bf_ref, o_ref, *,
               d, inv_sqrt_c):
    # x_ref block: (TN * d, CP)  -- TN attention locations, d = depth (seq len).
    rows, cp = x_ref.shape
    tn = rows // d

    x = x_ref[...].astype(jnp.float32)                                  # (rows, CP)

    # Fused QKV 1x1x1 conv: one wide MXU matmul + bias + ReLU.
    qkv = jnp.dot(x, wqkv_ref[...], preferred_element_type=jnp.float32)  # (rows, 3CP)
    qkv = jnp.maximum(qkv + bqkv_ref[...], 0.0)

    q = qkv[:, 0 * cp:1 * cp].reshape(tn, d, cp)
    k = qkv[:, 1 * cp:2 * cp].reshape(tn, d, cp)
    v = qkv[:, 2 * cp:3 * cp].reshape(tn, d, cp)

    # Batched attention over the depth axis for all TN locations at once.
    s = jnp.einsum('nsc,ntc->nst', q, k,
                   preferred_element_type=jnp.float32) * inv_sqrt_c      # (tn, d, d)
    s = s - jnp.max(s, axis=-1, keepdims=True)
    p = jnp.exp(s)
    p = p * pl.reciprocal(jnp.sum(p, axis=-1, keepdims=True), approx=True)
    ctx = jnp.einsum('nst,ntc->nsc', p, v,
                     preferred_element_type=jnp.float32)                 # (tn, d, cp)

    # Final 1x1x1 conv + ReLU, lane-dense store.
    out = jnp.dot(ctx.reshape(rows, cp), wf_ref[...],
                  preferred_element_type=jnp.float32)
    out = jnp.maximum(out + bf_ref[...], 0.0)
    o_ref[...] = out.astype(o_ref.dtype)


def _default_tn(n, d, cp, target_rows=512, block_budget_bytes=4 * 1024 * 1024):
    """Locations per grid step: big enough rows for the MXU / HBM roofline,
    small enough that in+out double-buffered f32 blocks stay well inside the
    scoped VMEM budget (safe for v7x's 64 MiB physical)."""
    max_rows = max(d, block_budget_bytes // (cp * 4))
    rows = min(max(target_rows, d), max_rows)
    return max(1, rows // d)


def ma_pallas(rep, params, tn=None):
    """rep: (B, C, D, H, W) float32. Returns (B, C, D, H, W)."""
    B, C, D, H, W = rep.shape
    wq, bq, wk, bk, wv, bv, wf, bf = params

    N = B * H * W
    CP = ((C + 127) // 128) * 128         # lane-dense channel dim

    if tn is None:
        tn = _default_tn(N, D, CP)
    tn = max(1, min(int(tn), N))
    if tn < N:
        # Block sublane extent (tn * D) must be a multiple of 8 when tiling.
        g = 8 // math.gcd(D, 8)
        tn = ((tn + g - 1) // g) * g
    NP = ((N + tn - 1) // tn) * tn        # pad #locations to a multiple of tn

    # NCDHW -> (B, H, W, D, C) -> (N, D, C), pad N and C, flatten to 2-D slab.
    x = jnp.transpose(rep, (0, 3, 4, 2, 1)).reshape(N, D, C)
    x = jnp.pad(x, ((0, NP - N), (0, 0), (0, CP - C)))
    x = x.reshape(NP * D, CP)

    def pad_w(w):  # (C, C) -> (CP, CP)
        return jnp.pad(w, ((0, CP - C), (0, CP - C)))

    def pad_b(b):  # (1, C) -> (1, CP)
        return jnp.pad(b, ((0, 0), (0, CP - C)))

    wqkv = jnp.concatenate([pad_w(wq), pad_w(wk), pad_w(wv)], axis=1)   # (CP, 3CP)
    bqkv = jnp.concatenate([pad_b(bq), pad_b(bk), pad_b(bv)], axis=1)   # (1, 3CP)
    wfp, bfp = pad_w(wf), pad_b(bf)

    rows_blk = tn * D
    x_spec = pl.BlockSpec((rows_blk, CP), lambda i: (i, 0))
    wqkv_spec = pl.BlockSpec((CP, 3 * CP), lambda i: (0, 0))
    bqkv_spec = pl.BlockSpec((1, 3 * CP), lambda i: (0, 0))
    wf_spec = pl.BlockSpec((CP, CP), lambda i: (0, 0))
    bf_spec = pl.BlockSpec((1, CP), lambda i: (0, 0))

    kernel = functools.partial(_ma_kernel, d=D, inv_sqrt_c=1.0 / (C ** 0.5))

    out = pl.pallas_call(
        kernel,
        out_shape=jax.ShapeDtypeStruct((NP * D, CP), rep.dtype),
        grid_spec=pltpu.PrefetchScalarGridSpec(
            num_scalar_prefetch=0,
            grid=(NP // tn,),
            in_specs=[x_spec, wqkv_spec, bqkv_spec, wf_spec, bf_spec],
            out_specs=x_spec,
        ),
        compiler_params=pltpu.CompilerParams(
            dimension_semantics=("parallel",),
            vmem_limit_bytes=32 * 1024 * 1024,
        ),
    )(x, wqkv, bqkv, wfp, bfp)

    # (NP*D, CP) -> strip padding -> (B, H, W, D, C) -> (B, C, D, H, W)
    out = out.reshape(NP, D, CP)[:N, :, :C].reshape(B, H, W, D, C)
    return jnp.transpose(out, (0, 4, 3, 1, 2))


def ma_reference(rep, params):
    """Pure-JAX reference mirroring the PyTorch MA.forward exactly."""
    wq, bq, wk, bk, wv, bv, wf, bf = params
    C = rep.shape[1]

    def pw(x, w, b):  # 1x1x1 Conv3d + ReLU; x: (B,C,D,H,W), w: (Cin,Cout), b: (1,Cout)
        y = jnp.einsum('bcdhw,co->bodhw', x, w) + b.reshape(1, -1, 1, 1, 1)
        return jnp.maximum(y, 0.0)

    q = jnp.transpose(pw(rep, wq, bq), (0, 3, 4, 2, 1))   # (B, H, W, D, C)
    k = jnp.transpose(pw(rep, wk, bk), (0, 3, 4, 2, 1))
    v = jnp.transpose(pw(rep, wv, bv), (0, 3, 4, 2, 1))
    attn = jnp.einsum('bhwsc,bhwtc->bhwst', q, k) / (C ** 0.5)
    attn = jax.nn.softmax(attn, axis=-1)
    ctx = jnp.einsum('bhwst,bhwtc->bhwsc', attn, v)        # (B, H, W, D, C)
    ctx_ncdhw = jnp.transpose(ctx, (0, 4, 3, 1, 2))         # (B, C, D, H, W)
    return pw(ctx_ncdhw, wf, bf)


def make_params(key, C):
    keys = jax.random.split(key, 8)
    scale = 1.0 / (C ** 0.5)
    wq = jax.random.normal(keys[0], (C, C), jnp.float32) * scale
    bq = jax.random.normal(keys[1], (1, C), jnp.float32) * 0.1
    wk = jax.random.normal(keys[2], (C, C), jnp.float32) * scale
    bk = jax.random.normal(keys[3], (1, C), jnp.float32) * 0.1
    wv = jax.random.normal(keys[4], (C, C), jnp.float32) * scale
    bv = jax.random.normal(keys[5], (1, C), jnp.float32) * 0.1
    wf = jax.random.normal(keys[6], (C, C), jnp.float32) * scale
    bf = jax.random.normal(keys[7], (1, C), jnp.float32) * 0.1
    return (wq, bq, wk, bk, wv, bv, wf, bf)


if __name__ == "__main__":
    B, C, D, H, W = 2, 4, 6, 8, 5
    key = jax.random.PRNGKey(0)
    k_rep, k_par = jax.random.split(key)
    rep = jax.random.normal(k_rep, (B, C, D, H, W), jnp.float32)
    params = make_params(k_par, C)

    ref = jax.block_until_ready(ma_reference(rep, params))

    # Default tiling (single block for this small problem).
    out = jax.block_until_ready(ma_pallas(rep, params))
    assert out.shape == (B, C, D, H, W)
    # Tolerance accounts for the approximate EUP reciprocal in the softmax;
    # structural errors would be O(0.1 - 1).
    assert jnp.allclose(out, ref, atol=1e-2, rtol=1e-2), \
        float(jnp.max(jnp.abs(out - ref)))

    # Exercise the multi-block grid + padded-N path as well.
    out2 = jax.block_until_ready(ma_pallas(rep, params, tn=16))
    assert jnp.allclose(out2, ref, atol=1e-2, rtol=1e-2), \
        float(jnp.max(jnp.abs(out2 - ref)))

    print("KERNEL_OK")
</pallas_src>

<mosaic_0001>
module attributes {stable_mosaic.version = 11 : i64} {
  func.func @_ma_kernel(%arg0: i32, %arg1: memref<480x128xf32, #tpu.memory_space<vmem>>, %arg2: memref<128x384xf32, #tpu.memory_space<vmem>>, %arg3: memref<1x384xf32, #tpu.memory_space<vmem>>, %arg4: memref<128x128xf32, #tpu.memory_space<vmem>>, %arg5: memref<1x128xf32, #tpu.memory_space<vmem>>, %arg6: memref<480x128xf32, #tpu.memory_space<vmem>>) attributes {dimension_semantics = [#tpu.dimension_semantics<parallel>], iteration_bounds = array<i64: 1>, scalar_prefetch = 0 : i64, scratch_operands = 0 : i64, tpu.core_type = #tpu.core_type<tc>, window_params = [{transform_indices = @transform_0, window_bounds = array<i64: 480, 128>}, {pipeline_mode = #tpu.pipeline_mode<synchronous>, transform_indices = @transform_1, window_bounds = array<i64: 128, 384>}, {pipeline_mode = #tpu.pipeline_mode<synchronous>, transform_indices = @transform_2, window_bounds = array<i64: 1, 384>}, {pipeline_mode = #tpu.pipeline_mode<synchronous>, transform_indices = @transform_3, window_bounds = array<i64: 128, 128>}, {pipeline_mode = #tpu.pipeline_mode<synchronous>, transform_indices = @transform_4, window_bounds = array<i64: 1, 128>}, {transform_indices = @transform_5, window_bounds = array<i64: 480, 128>}]} {
    %c0 = arith.constant 0 : index
    %c0_0 = arith.constant 0 : index
    %0 = vector.load %arg1[%c0, %c0_0] : memref<480x128xf32, #tpu.memory_space<vmem>>, vector<480x128xf32>
    %c0_1 = arith.constant 0 : index
    %c0_2 = arith.constant 0 : index
    %1 = vector.load %arg2[%c0_1, %c0_2] : memref<128x384xf32, #tpu.memory_space<vmem>>, vector<128x384xf32>
    %cst = arith.constant dense<0.000000e+00> : vector<480x384xf32>
    %2 = tpu.matmul %0, %1, %cst {dimension_numbers = #tpu.dot_dimension_numbers<[1], [0], [0], [1], [0, 0, 1, 1], [], []>} : vector<480x128xf32>, vector<128x384xf32>, vector<480x384xf32> -> vector<480x384xf32>
    %c0_3 = arith.constant 0 : index
    %c0_4 = arith.constant 0 : index
    %3 = vector.load %arg3[%c0_3, %c0_4] : memref<1x384xf32, #tpu.memory_space<vmem>>, vector<1x384xf32>
    %4 = vector.broadcast %3 : vector<1x384xf32> to vector<480x384xf32>
    %5 = arith.addf %2, %4 : vector<480x384xf32>
    %cst_5 = arith.constant 0.000000e+00 : f32
    %6 = vector.broadcast %cst_5 : f32 to vector<480x384xf32>
    %7 = arith.maximumf %5, %6 : vector<480x384xf32>
    %8 = vector.extract_strided_slice %7 {offsets = [0, 0], sizes = [480, 128], strides = [1, 1]} : vector<480x384xf32> to vector<480x128xf32>
    %9 = vector.shape_cast %8 : vector<480x128xf32> to vector<80x6x128xf32>
    %10 = vector.extract_strided_slice %7 {offsets = [0, 128], sizes = [480, 128], strides = [1, 1]} : vector<480x384xf32> to vector<480x128xf32>
    %11 = vector.shape_cast %10 : vector<480x128xf32> to vector<80x6x128xf32>
    %12 = vector.extract_strided_slice %7 {offsets = [0, 256], sizes = [480, 128], strides = [1, 1]} : vector<480x384xf32> to vector<480x128xf32>
    %13 = vector.shape_cast %12 : vector<480x128xf32> to vector<80x6x128xf32>
    "tpu.trace_start"() <{level = 10 : i32, message = "nsc,ntc->nst"}> : () -> ()
    %cst_6 = arith.constant dense<0.000000e+00> : vector<80x6x6xf32>
    %14 = tpu.matmul %9, %11, %cst_6 {dimension_numbers = #tpu.dot_dimension_numbers<[2], [2], [1], [1], [0, 0, 0, 1, 1, 1], [0], [0]>} : vector<80x6x128xf32>, vector<80x6x128xf32>, vector<80x6x6xf32> -> vector<80x6x6xf32>
    "tpu.trace_stop"() : () -> ()
    %cst_7 = arith.constant 5.000000e-01 : f32
    %15 = vector.broadcast %cst_7 : f32 to vector<80x6x6xf32>
    %16 = arith.mulf %14, %15 : vector<80x6x6xf32>
    %cst_8 = arith.constant dense<0xFF800000> : vector<80x6xf32>
    %17 = vector.multi_reduction <maximumf>, %16, %cst_8 [2] : vector<80x6x6xf32> to vector<80x6xf32>
    %18 = vector.shape_cast %17 : vector<80x6xf32> to vector<80x6x1xf32>
    %19 = vector.broadcast %18 : vector<80x6x1xf32> to vector<80x6x6xf32>
    %20 = arith.subf %16, %19 : vector<80x6x6xf32>
    %21 = math.exp %20 : vector<80x6x6xf32>
    %cst_9 = arith.constant dense<0.000000e+00> : vector<80x6xf32>
    %22 = vector.multi_reduction <add>, %21, %cst_9 [2] : vector<80x6x6xf32> to vector<80x6xf32>
    %23 = vector.shape_cast %22 : vector<80x6xf32> to vector<80x6x1xf32>
    %24 = tpu.reciprocal %23 {approx = true} : vector<80x6x1xf32> -> vector<80x6x1xf32>
    %25 = vector.broadcast %24 : vector<80x6x1xf32> to vector<80x6x6xf32>
    %26 = arith.mulf %21, %25 : vector<80x6x6xf32>
    "tpu.trace_start"() <{level = 10 : i32, message = "nst,ntc->nsc"}> : () -> ()
    %cst_10 = arith.constant dense<0.000000e+00> : vector<80x6x128xf32>
    %27 = tpu.matmul %26, %13, %cst_10 {dimension_numbers = #tpu.dot_dimension_numbers<[2], [1], [1], [2], [0, 0, 0, 1, 1, 2], [0], [0]>} : vector<80x6x6xf32>, vector<80x6x128xf32>, vector<80x6x128xf32> -> vector<80x6x128xf32>
    "tpu.trace_stop"() : () -> ()
    %28 = vector.shape_cast %27 : vector<80x6x128xf32> to vector<480x128xf32>
    %c0_11 = arith.constant 0 : index
    %c0_12 = arith.constant 0 : index
    %29 = vector.load %arg4[%c0_11, %c0_12] : memref<128x128xf32, #tpu.memory_space<vmem>>, vector<128x128xf32>
    %cst_13 = arith.constant dense<0.000000e+00> : vector<480x128xf32>
    %30 = tpu.matmul %28, %29, %cst_13 {dimension_numbers = #tpu.dot_dimension_numbers<[1], [0], [0], [1], [0, 0, 1, 1], [], []>} : vector<480x128xf32>, vector<128x128xf32>, vector<480x128xf32> -> vector<480x128xf32>
    %c0_14 = arith.constant 0 : index
    %c0_15 = arith.constant 0 : index
    %31 = vector.load %arg5[%c0_14, %c0_15] : memref<1x128xf32, #tpu.memory_space<vmem>>, vector<1x128xf32>
    %32 = vector.broadcast %31 : vector<1x128xf32> to vector<480x128xf32>
    %33 = arith.addf %30, %32 : vector<480x128xf32>
    %cst_16 = arith.constant 0.000000e+00 : f32
    %34 = vector.broadcast %cst_16 : f32 to vector<480x128xf32>
    %35 = arith.maximumf %33, %34 : vector<480x128xf32>
    %c0_17 = arith.constant 0 : index
    %c0_18 = arith.constant 0 : index
    %36 = vector.load %arg6[%c0_17, %c0_18] : memref<480x128xf32, #tpu.memory_space<vmem>>, vector<480x128xf32>
    tpu.vector_store %arg6[%c0_17, %c0_18], %35 {strides = array<i32>} : memref<480x128xf32, #tpu.memory_space<vmem>>, vector<480x128xf32>,
    return
  }
  func.func @transform_0(%arg0: i32) -> (i32, i32) {
    %c0_i32 = arith.constant 0 : i32
    %c0_i32_0 = arith.constant 0 : i32
    return %arg0, %c0_i32 : i32, i32
  }
  func.func @transform_1(%arg0: i32) -> (i32, i32) {
    %c0_i32 = arith.constant 0 : i32
    %c0_i32_0 = arith.constant 0 : i32
    %c0_i32_1 = arith.constant 0 : i32
    return %c0_i32, %c0_i32_0 : i32, i32
  }
  func.func @transform_2(%arg0: i32) -> (i32, i32) {
    %c0_i32 = arith.constant 0 : i32
    %c0_i32_0 = arith.constant 0 : i32
    %c0_i32_1 = arith.constant 0 : i32
    return %c0_i32, %c0_i32_0 : i32, i32
  }
  func.func @transform_3(%arg0: i32) -> (i32, i32) {
    %c0_i32 = arith.constant 0 : i32
    %c0_i32_0 = arith.constant 0 : i32
    %c0_i32_1 = arith.constant 0 : i32
    return %c0_i32, %c0_i32_0 : i32, i32
  }
  func.func @transform_4(%arg0: i32) -> (i32, i32) {
    %c0_i32 = arith.constant 0 : i32
    %c0_i32_0 = arith.constant 0 : i32
    %c0_i32_1 = arith.constant 0 : i32
    return %c0_i32, %c0_i32_0 : i32, i32
  }
  func.func @transform_5(%arg0: i32) -> (i32, i32) {
    %c0_i32 = arith.constant 0 : i32
    %c0_i32_0 = arith.constant 0 : i32
    return %arg0, %c0_i32 : i32, i32
  }
}

</mosaic_0001>

<llo_original>
// kernel: tpu_custom_call.1
$region0: #{tpu_custom_call.1}
  #allocation0 [shape = 'u32[]', space=smem, size = 0x4, offset = 0x4, fixed_abs, tag = 'smem constant byte address 0x4 - core index']
  #allocation1 [shape = 'u32[72,128]{1,0:T(1,128)}', space=vmem, size = 0x9000, scoped, tag = 'internal scratch']
  %s0 = inlined_call_operand.hbm [shape: f32[480,128], index: 0, kind: input, shape index: {}]
  %s1 = inlined_call_operand.hbm [shape: f32[128,384], index: 1, kind: input, shape index: {}]
  %s2 = inlined_call_operand.hbm [shape: f32[1,384], index: 2, kind: input, shape index: {}]
  %s3 = inlined_call_operand.hbm [shape: f32[128,128], index: 3, kind: input, shape index: {}]
  %s4 = inlined_call_operand.vmem [shape: f32[1,128], index: 4, kind: input, shape index: {}]
  %s5 = inlined_call_operand.hbm [shape: f32[480,128], index: 5, kind: output, shape index: {}]
  %s6 = sld [smem:[#allocation0]]
  $region46: #{tpu_custom_call.1} parent=0
    _
  %s8 = ssub.s32 1, %s6
  %s9 = scalar_select 0, %s8, %s6
  $region1: #{tpu_custom_call.1} parent=0
    #allocation2 [shape = 'u8[245760]{0}', space=vmem, size = 0x3c000, scoped, tag = 'input window, operand 0, single buffered']
    #allocation3 [shape = 's32[1]{0}', space=sflag, size = 0x4, scoped, tag = 'scoped memory for tpu_custom_call.1']
    #allocation4 [shape = 's32[1]{0}', space=sflag, size = 0x4, scoped, tag = 'scoped memory for tpu_custom_call.1']
    #allocation5 [shape = 'u8[196608]{0}', space=vmem, size = 0x30000, scoped, tag = 'input window, operand 1, single buffered']
    #allocation6 [shape = 's32[1]{0}', space=sflag, size = 0x4, scoped, tag = 'scoped memory for tpu_custom_call.1']
    #allocation7 [shape = 'u8[1536]{0}', space=vmem, size = 0x800, scoped, tag = 'input window, operand 2, single buffered']
    #allocation8 [shape = 'u8[65536]{0}', space=vmem, size = 0x10000, scoped, tag = 'input window, operand 3, single buffered']
    #allocation9 [shape = 's32[1]{0}', space=sflag, size = 0x4, scoped, tag = 'scoped memory for tpu_custom_call.1']
    #allocation10 [shape = 'u8[245760]{0}', space=vmem, size = 0x3c000, scoped, tag = 'output window, operand 0, single buffered']
    %10 = vsyncpa [#allocation3], 0
    %11 = vsyncpa [#allocation6], 0
    %12 = vsyncpa [#allocation9], 0
    %13 = vsyncpa [#allocation4], 0
    // Predicated region
    $region2: #{tpu_custom_call.1} parent=1 // pred_check
      _
    $region3: #{tpu_custom_call.1} parent=1 // pred_check_branch
      %15 = sbr.rel (0) target = $region5
    $region4: #{tpu_custom_call.1} parent=1 // pred_region
      %17 = vsyncadd [#allocation3], 0
      %s18 = sshll.u32 %s0, 4
      %s19 = int_to_ptr.hbm [resolvable:$true] %s18
      %s20 = sshll.u32 [#allocation2], 4
      %s21 = int_to_ptr.vmem [resolvable:$true] %s20
      %26 = dma.hbm_to_vmem [thread:$0]  %s19, 7680, %s21, [#allocation3], 128, 128, 8
    $region5: #{tpu_custom_call.1} parent=1 // pred_fallthru
      _
    // Predicated region
    $region6: #{tpu_custom_call.1} parent=1 // pred_check
      _
    $region7: #{tpu_custom_call.1} parent=1 // pred_check_branch
      %28 = sbr.rel (0) target = $region9
    $region8: #{tpu_custom_call.1} parent=1 // pred_region
      %30 = vsyncadd [#allocation6], 0
      %s31 = sshll.u32 %s1, 4
      %s32 = int_to_ptr.hbm [resolvable:$true] %s31
      %s33 = sshll.u32 [#allocation5], 4
      %s34 = int_to_ptr.vmem [resolvable:$true] %s33
      %39 = dma.hbm_to_vmem [thread:$0]  %s32, 6144, %s34, [#allocation6], 384, 384, 24
    $region9: #{tpu_custom_call.1} parent=1 // pred_fallthru
      _
    // Predicated region
    $region10: #{tpu_custom_call.1} parent=1 // pred_check
      _
    $region11: #{tpu_custom_call.1} parent=1 // pred_check_branch
      %41 = sbr.rel (0) target = $region13
    $region12: #{tpu_custom_call.1} parent=1 // pred_region
      %43 = vsyncadd [#allocation6], 0
      %s45 = sshll.u32 %s2, 4
      %s46 = int_to_ptr.hbm [resolvable:$true] %s45
      %s47 = sshll.u32 [#allocation7], 4
      %s48 = int_to_ptr.vmem [resolvable:$true] %s47
      %50 = dma.hbm_to_vmem [thread:$0]  %s46, 48, %s48, [#allocation6]
    $region13: #{tpu_custom_call.1} parent=1 // pred_fallthru
      _
    // Predicated region
    $region14: #{tpu_custom_call.1} parent=1 // pred_check
      _
    $region15: #{tpu_custom_call.1} parent=1 // pred_check_branch
      %52 = sbr.rel (0) target = $region17
    $region16: #{tpu_custom_call.1} parent=1 // pred_region
      %54 = vsyncadd [#allocation9], 0
      %s55 = sshll.u32 %s3, 4
      %s56 = int_to_ptr.hbm [resolvable:$true] %s55
      %s57 = sshll.u32 [#allocation8], 4
      %s58 = int_to_ptr.vmem [resolvable:$true] %s57
      %63 = dma.hbm_to_vmem [thread:$0]  %s56, 2048, %s58, [#allocation9], 128, 128, 8
    $region17: #{tpu_custom_call.1} parent=1 // pred_fallthru
      _
    // Predicated region
    $region18: #{tpu_custom_call.1} parent=1 // pred_check
      _
    $region19: #{tpu_custom_call.1} parent=1 // pred_check_branch
      %65 = sbr.rel (0) target = $region21
    $region20: #{tpu_custom_call.1} parent=1 // pred_region
      _
    $region21: #{tpu_custom_call.1} parent=1 // pred_fallthru
      _
    // Predicated region
    $region22: #{tpu_custom_call.1} parent=1 // pred_check
      _
    $region23: #{tpu_custom_call.1} parent=1 // pred_check_branch
      %67 = sbr.rel (0) target = $region25
    $region24: #{tpu_custom_call.1} parent=1 // pred_region
      %69 = dma.done [#allocation3], 7680
    $region25: #{tpu_custom_call.1} parent=1 // pred_fallthru
      _
    // Predicated region
    $region26: #{tpu_custom_call.1} parent=1 // pred_check
      _
    $region27: #{tpu_custom_call.1} parent=1 // pred_check_branch
      %71 = sbr.rel (0) target = $region29
    $region28: #{tpu_custom_call.1} parent=1 // pred_region
      %73 = dma.done [#allocation6], 6144
    $region29: #{tpu_custom_call.1} parent=1 // pred_fallthru
      _
    // Predicated region
    $region30: #{tpu_custom_call.1} parent=1 // pred_check
      _
    $region31: #{tpu_custom_call.1} parent=1 // pred_check_branch
      %75 = sbr.rel (0) target = $region33
    $region32: #{tpu_custom_call.1} parent=1 // pred_region
      %77 = dma.done [#allocation6], 48
    $region33: #{tpu_custom_call.1} parent=1 // pred_fallthru
      _
    // Predicated region
    $region34: #{tpu_custom_call.1} parent=1 // pred_check
      _
    $region35: #{tpu_custom_call.1} parent=1 // pred_check_branch
      %79 = sbr.rel (0) target = $region37
    $region36: #{tpu_custom_call.1} parent=1 // pred_region
      %81 = dma.done [#allocation9], 2048
    $region37: #{tpu_custom_call.1} parent=1 // pred_fallthru
      _
    %v82 = vld [vmem:[#allocation2] sm:$0xff]
    %v83 = vld [vmem:[#allocation2 + $0x8] sm:$0xff]
    %v84 = vld [vmem:[#allocation2 + $0x10] sm:$0xff]
    %v85 = vld [vmem:[#allocation2 + $0x18] sm:$0xff]
    %v86 = vld [vmem:[#allocation2 + $0x20] sm:$0xff]
    %v87 = vld [vmem:[#allocation2 + $0x28] sm:$0xff]
    %v88 = vld [vmem:[#allocation2 + $0x30] sm:$0xff]
    %v89 = vld [vmem:[#allocation2 + $0x38] sm:$0xff]
    %v90 = vld [vmem:[#allocation2 + $0x40] sm:$0xff]
    %v91 = vld [vmem:[#allocation2 + $0x48] sm:$0xff]
    %v92 = vld [vmem:[#allocation2 + $0x50] sm:$0xff]
    %v93 = vld [vmem:[#allocation2 + $0x58] sm:$0xff]
    %v94 = vld [vmem:[#allocation2 + $0x60] sm:$0xff]
    %v95 = vld [vmem:[#allocation2 + $0x68] sm:$0xff]
    %v96 = vld [vmem:[#allocation2 + $0x70] sm:$0xff]
    %v97 = vld [vmem:[#allocation2 + $0x78] sm:$0xff]
    %v98 = vld [vmem:[#allocation2 + $0x80] sm:$0xff]
    %v99 = vld [vmem:[#allocation2 + $0x88] sm:$0xff]
    %v100 = vld [vmem:[#allocation2 + $0x90] sm:$0xff]
    %v101 = vld [vmem:[#allocation2 + $0x98] sm:$0xff]
    %v102 = vld [vmem:[#allocation2 + $0xa0] sm:$0xff]
    %v103 = vld [vmem:[#allocation2 + $0xa8] sm:$0xff]
    %v104 = vld [vmem:[#allocation2 + $0xb0] sm:$0xff]
    %v105 = vld [vmem:[#allocation2 + $0xb8] sm:$0xff]
    %v106 = vld [vmem:[#allocation2 + $0xc0] sm:$0xff]
    %v107 = vld [vmem:[#allocation2 + $0xc8] sm:$0xff]
    %v108 = vld [vmem:[#allocation2 + $0xd0] sm:$0xff]
    %v109 = vld [vmem:[#allocation2 + $0xd8] sm:$0xff]
    %v110 = vld [vmem:[#allocation2 + $0xe0] sm:$0xff]
    %v111 = vld [vmem:[#allocation2 + $0xe8] sm:$0xff]
    %v112 = vld [vmem:[#allocation2 + $0xf0] sm:$0xff]
    %v113 = vld [vmem:[#allocation2 + $0xf8] sm:$0xff]
    %v114 = vld [vmem:[#allocation2 + $0x100] sm:$0xff]
    %v115 = vld [vmem:[#allocation2 + $0x108] sm:$0xff]
    %v116 = vld [vmem:[#allocation2 + $0x110] sm:$0xff]
    %v117 = vld [vmem:[#allocation2 + $0x118] sm:$0xff]
    %v118 = vld [vmem:[#allocation2 + $0x120] sm:$0xff]
    %v119 = vld [vmem:[#allocation2 + $0x128] sm:$0xff]
    %v120 = vld [vmem:[#allocation2 + $0x130] sm:$0xff]
    %v121 = vld [vmem:[#allocation2 + $0x138] sm:$0xff]
    %v122 = vld [vmem:[#allocation2 + $0x140] sm:$0xff]
    %v123 = vld [vmem:[#allocation2 + $0x148] sm:$0xff]
    %v124 = vld [vmem:[#allocation2 + $0x150] sm:$0xff]
    %v125 = vld [vmem:[#allocation2 + $0x158] sm:$0xff]
    %v126 = vld [vmem:[#allocation2 + $0x160] sm:$0xff]
    %v127 = vld [vmem:[#allocation2 + $0x168] sm:$0xff]
    %v128 = vld [vmem:[#allocation2 + $0x170] sm:$0xff]
    %v129 = vld [vmem:[#allocation2 + $0x178] sm:$0xff]
    %v130 = vld [vmem:[#allocation2 + $0x180] sm:$0xff]
    %v131 = vld [vmem:[#allocation2 + $0x188] sm:$0xff]
    %v132 = vld [vmem:[#allocation2 + $0x190] sm:$0xff]
    %v133 = vld [vmem:[#allocation2 + $0x198] sm:$0xff]
    %v134 = vld [vmem:[#allocation2 + $0x1a0] sm:$0xff]
    %v135 = vld [vmem:[#allocation2 + $0x1a8] sm:$0xff]
    %v136 = vld [vmem:[#allocation2 + $0x1b0] sm:$0xff]
    %v137 = vld [vmem:[#allocation2 + $0x1b8] sm:$0xff]
    %v138 = vld [vmem:[#allocation2 + $0x1c0] sm:$0xff]
    %v139 = vld [vmem:[#allocation2 + $0x1c8] sm:$0xff]
    %v140 = vld [vmem:[#allocation2 + $0x1d0] sm:$0xff]
    %v141 = vld [vmem:[#allocation2 + $0x1d8] sm:$0xff]
    %v142 = vld [vmem:[#allocation5] sm:$0xff]
    %v143 = vld [vmem:[#allocation5 + $0x8] sm:$0xff]
    %v144 = vld [vmem:[#allocation5 + $0x10] sm:$0xff]
    %v145 = vld [vmem:[#allocation5 + $0x18] sm:$0xff]
    %v146 = vld [vmem:[#allocation5 + $0x20] sm:$0xff]
    %v147 = vld [vmem:[#allocation5 + $0x28] sm:$0xff]
    %v148 = vld [vmem:[#allocation5 + $0x30] sm:$0xff]
    %v149 = vld [vmem:[#allocation5 + $0x38] sm:$0xff]
    %v150 = vld [vmem:[#allocation5 + $0x40] sm:$0xff]
    %v151 = vld [vmem:[#allocation5 + $0x48] sm:$0xff]
    %v152 = vld [vmem:[#allocation5 + $0x50] sm:$0xff]
    %v153 = vld [vmem:[#allocation5 + $0x58] sm:$0xff]
    %v154 = vld [vmem:[#allocation5 + $0x60] sm:$0xff]
    %v155 = vld [vmem:[#allocation5 + $0x68] sm:$0xff]
    %v156 = vld [vmem:[#allocation5 + $0x70] sm:$0xff]
    %v157 = vld [vmem:[#allocation5 + $0x78] sm:$0xff]
    %v158 = vld [vmem:[#allocation5 + $0x80] sm:$0xff]
    %v159 = vld [vmem:[#allocation5 + $0x88] sm:$0xff]
    %v160 = vld [vmem:[#allocation5 + $0x90] sm:$0xff]
    %v161 = vld [vmem:[#allocation5 + $0x98] sm:$0xff]
    %v162 = vld [vmem:[#allocation5 + $0xa0] sm:$0xff]
    %v163 = vld [vmem:[#allocation5 + $0xa8] sm:$0xff]
    %v164 = vld [vmem:[#allocation5 + $0xb0] sm:$0xff]
    %v165 = vld [vmem:[#allocation5 + $0xb8] sm:$0xff]
    %v166 = vld [vmem:[#allocation5 + $0xc0] sm:$0xff]
    %v167 = vld [vmem:[#allocation5 + $0xc8] sm:$0xff]
    %v168 = vld [vmem:[#allocation5 + $0xd0] sm:$0xff]
    %v169 = vld [vmem:[#allocation5 + $0xd8] sm:$0xff]
    %v170 = vld [vmem:[#allocation5 + $0xe0] sm:$0xff]
    %v171 = vld [vmem:[#allocation5 + $0xe8] sm:$0xff]
    %v172 = vld [vmem:[#allocation5 + $0xf0] sm:$0xff]
    %v173 = vld [vmem:[#allocation5 + $0xf8] sm:$0xff]
    %v174 = vld [vmem:[#allocation5 + $0x100] sm:$0xff]
    %v175 = vld [vmem:[#allocation5 + $0x108] sm:$0xff]
    %v176 = vld [vmem:[#allocation5 + $0x110] sm:$0xff]
    %v177 = vld [vmem:[#allocation5 + $0x118] sm:$0xff]
    %v178 = vld [vmem:[#allocation5 + $0x120] sm:$0xff]
    %v179 = vld [vmem:[#allocation5 + $0x128] sm:$0xff]
    %v180 = vld [vmem:[#allocation5 + $0x130] sm:$0xff]
    %v181 = vld [vmem:[#allocation5 + $0x138] sm:$0xff]
    %v182 = vld [vmem:[#allocation5 + $0x140] sm:$0xff]
    %v183 = vld [vmem:[#allocation5 + $0x148] sm:$0xff]
    %v184 = vld [vmem:[#allocation5 + $0x150] sm:$0xff]
    %v185 = vld [vmem:[#allocation5 + $0x158] sm:$0xff]
    %v186 = vld [vmem:[#allocation5 + $0x160] sm:$0xff]
    %v187 = vld [vmem:[#allocation5 + $0x168] sm:$0xff]
    %v188 = vld [vmem:[#allocation5 + $0x170] sm:$0xff]
    %v189 = vld [vmem:[#allocation5 + $0x178] sm:$0xff]
    %v190 = vld [vmem:[#allocation7] sm:$0x7]
    %v192 = vperm.slane %v190, 0
    %v193 = vperm.slane %v190, 1
    %v194 = vperm.slane %v190, 2
    %198 = vmatpush.msra.mxu0 %v187
    %199 = vmatpush.msra.mxu0 %v184
    %200 = vmatpush.msra.mxu0 %v181
    %201 = vmatpush.msra.mxu0 %v178
    %202 = vmatpush.msra.mxu0 %v175
    %203 = vmatpush.msra.mxu0 %v172
    %204 = vmatpush.msra.mxu0 %v169
    %205 = vmatpush.msra.mxu0 %v166
    %206 = vmatpush.msra.mxu0 %v163
    %207 = vmatpush.msra.mxu0 %v160
    %208 = vmatpush.msra.mxu0 %v157
    %209 = vmatpush.msra.mxu0 %v154
    %210 = vmatpush.msra.mxu0 %v151
    %211 = vmatpush.msra.mxu0 %v148
    %212 = vmatpush.msra.mxu0 %v145
    %213 = vmatpush.msra.mxu0 %v142
    %214 = vmatmul.f32.gmra.mxu0 %v82
    %v215 = vpop.f32.mrf.mxu0
    %v216 = vadd.f32 %v192, %v215
    %217 = vmatmul.f32.gmra.mxu0 %v83
    %v218 = vpop.f32.mrf.mxu0
    %v219 = vadd.f32 %v192, %v218
    %220 = vmatmul.f32.gmra.mxu0 %v84
    %v221 = vpop.f32.mrf.mxu0
    %v222 = vadd.f32 %v192, %v221
    %223 = vmatmul.f32.gmra.mxu0 %v85
    %v224 = vpop.f32.mrf.mxu0
    %v225 = vadd.f32 %v192, %v224
    %226 = vmatmul.f32.gmra.mxu0 %v86
    %v227 = vpop.f32.mrf.mxu0
    %v228 = vadd.f32 %v192, %v227
    %229 = vmatmul.f32.gmra.mxu0 %v87
    %v230 = vpop.f32.mrf.mxu0
    %v231 = vadd.f32 %v192, %v230
    %232 = vmatmul.f32.gmra.mxu0 %v88
    %v233 = vpop.f32.mrf.mxu0
    %v234 = vadd.f32 %v192, %v233
    %235 = vmatmul.f32.gmra.mxu0 %v89
    %v236 = vpop.f32.mrf.mxu0
    %v237 = vadd.f32 %v192, %v236
    %238 = vmatmul.f32.gmra.mxu0 %v90
    %v239 = vpop.f32.mrf.mxu0
    %v240 = vadd.f32 %v192, %v239
    %241 = vmatmul.f32.gmra.mxu0 %v91
    %v242 = vpop.f32.mrf.mxu0
    %v243 = vadd.f32 %v192, %v242
    %244 = vmatmul.f32.gmra.mxu0 %v92
    %v245 = vpop.f32.mrf.mxu0
    %v246 = vadd.f32 %v192, %v245
    %247 = vmatmul.f32.gmra.mxu0 %v93
    %v248 = vpop.f32.mrf.mxu0
    %v249 = vadd.f32 %v192, %v248
    %250 = vmatmul.f32.gmra.mxu0 %v94
    %v251 = vpop.f32.mrf.mxu0
    %v252 = vadd.f32 %v192, %v251
    %253 = vmatmul.f32.gmra.mxu0 %v95
    %v254 = vpop.f32.mrf.mxu0
    %v255 = vadd.f32 %v192, %v254
    %256 = vmatmul.f32.gmra.mxu0 %v96
    %v257 = vpop.f32.mrf.mxu0
    %v258 = vadd.f32 %v192, %v257
    %259 = vmatmul.f32.gmra.mxu0 %v97
    %v260 = vpop.f32.mrf.mxu0
    %v261 = vadd.f32 %v192, %v260
    %262 = vmatmul.f32.gmra.mxu0 %v98
    %v263 = vpop.f32.mrf.mxu0
    %v264 = vadd.f32 %v192, %v263
    %265 = vmatmul.f32.gmra.mxu0 %v99
    %v266 = vpop.f32.mrf.mxu0
    %v267 = vadd.f32 %v192, %v266
    %268 = vmatmul.f32.gmra.mxu0 %v100
    %v269 = vpop.f32.mrf.mxu0
    %v270 = vadd.f32 %v192, %v269
    %271 = vmatmul.f32.gmra.mxu0 %v101
    %v272 = vpop.f32.mrf.mxu0
    %v273 = vadd.f32 %v192, %v272
    %274 = vmatmul.f32.gmra.mxu0 %v102
    %v275 = vpop.f32.mrf.mxu0
    %v276 = vadd.f32 %v192, %v275
    %277 = vmatmul.f32.gmra.mxu0 %v103
    %v278 = vpop.f32.mrf.mxu0
    %v279 = vadd.f32 %v192, %v278
    %280 = vmatmul.f32.gmra.mxu0 %v104
    %v281 = vpop.f32.mrf.mxu0
    %v282 = vadd.f32 %v192, %v281
    %283 = vmatmul.f32.gmra.mxu0 %v105
    %v284 = vpop.f32.mrf.mxu0
    %v285 = vadd.f32 %v192, %v284
    %286 = vmatmul.f32.gmra.mxu0 %v106
    %v287 = vpop.f32.mrf.mxu0
    %v288 = vadd.f32 %v192, %v287
    %289 = vmatmul.f32.gmra.mxu0 %v107
    %v290 = vpop.f32.mrf.mxu0
    %v291 = vadd.f32 %v192, %v290
    %292 = vmatmul.f32.gmra.mxu0 %v108
    %v293 = vpop.f32.mrf.mxu0
    %v294 = vadd.f32 %v192, %v293
    %295 = vmatmul.f32.gmra.mxu0 %v109
    %v296 = vpop.f32.mrf.mxu0
    %v297 = vadd.f32 %v192, %v296
    %298 = vmatmul.f32.gmra.mxu0 %v110
    %v299 = vpop.f32.mrf.mxu0
    %v300 = vadd.f32 %v192, %v299
    %301 = vmatmul.f32.gmra.mxu0 %v111
    %v302 = vpop.f32.mrf.mxu0
    %v303 = vadd.f32 %v192, %v302
    %304 = vmatmul.f32.gmra.mxu0 %v112
    %v305 = vpop.f32.mrf.mxu0
    %v306 = vadd.f32 %v192, %v305
    %307 = vmatmul.f32.gmra.mxu0 %v113
    %v308 = vpop.f32.mrf.mxu0
    %v309 = vadd.f32 %v192, %v308
    %310 = vmatmul.f32.gmra.mxu0 %v114
    %v311 = vpop.f32.mrf.mxu0
    %v312 = vadd.f32 %v192, %v311
    %313 = vmatmul.f32.gmra.mxu0 %v115
    %v314 = vpop.f32.mrf.mxu0
    %v315 = vadd.f32 %v192, %v314
    %316 = vmatmul.f32.gmra.mxu0 %v116
    %v317 = vpop.f32.mrf.mxu0
    %v318 = vadd.f32 %v192, %v317
    %319 = vmatmul.f32.gmra.mxu0 %v117
    %v320 = vpop.f32.mrf.mxu0
    %v321 = vadd.f32 %v192, %v320
    %322 = vmatmul.f32.gmra.mxu0 %v118
    %v323 = vpop.f32.mrf.mxu0
    %v324 = vadd.f32 %v192, %v323
    %325 = vmatmul.f32.gmra.mxu0 %v119
    %v326 = vpop.f32.mrf.mxu0
    %v327 = vadd.f32 %v192, %v326
    %328 = vmatmul.f32.gmra.mxu0 %v120
    %v329 = vpop.f32.mrf.mxu0
    %v330 = vadd.f32 %v192, %v329
    %331 = vmatmul.f32.gmra.mxu0 %v121
    %v332 = vpop.f32.mrf.mxu0
    %v333 = vadd.f32 %v192, %v332
    %334 = vmatmul.f32.gmra.mxu0 %v122
    %v335 = vpop.f32.mrf.mxu0
    %v336 = vadd.f32 %v192, %v335
    %337 = vmatmul.f32.gmra.mxu0 %v123
    %v338 = vpop.f32.mrf.mxu0
    %v339 = vadd.f32 %v192, %v338
    %340 = vmatmul.f32.gmra.mxu0 %v124
    %v341 = vpop.f32.mrf.mxu0
    %v342 = vadd.f32 %v192, %v341
    %343 = vmatmul.f32.gmra.mxu0 %v125
    %v344 = vpop.f32.mrf.mxu0
    %v345 = vadd.f32 %v192, %v344
    %346 = vmatmul.f32.gmra.mxu0 %v126
    %v347 = vpop.f32.mrf.mxu0
    %v348 = vadd.f32 %v192, %v347
    %349 = vmatmul.f32.gmra.mxu0 %v127
    %v350 = vpop.f32.mrf.mxu0
    %v351 = vadd.f32 %v192, %v350
    %352 = vmatmul.f32.gmra.mxu0 %v128
    %v353 = vpop.f32.mrf.mxu0
    %v354 = vadd.f32 %v192, %v353
    %355 = vmatmul.f32.gmra.mxu0 %v129
    %v356 = vpop.f32.mrf.mxu0
    %v357 = vadd.f32 %v192, %v356
    %358 = vmatmul.f32.gmra.mxu0 %v130
    %v359 = vpop.f32.mrf.mxu0
    %v360 = vadd.f32 %v192, %v359
    %361 = vmatmul.f32.gmra.mxu0 %v131
    %v362 = vpop.f32.mrf.mxu0
    %v363 = vadd.f32 %v192, %v362
    %364 = vmatmul.f32.gmra.mxu0 %v132
    %v365 = vpop.f32.mrf.mxu0
    %v366 = vadd.f32 %v192, %v365
    %367 = vmatmul.f32.gmra.mxu0 %v133
    %v368 = vpop.f32.mrf.mxu0
    %v369 = vadd.f32 %v192, %v368
    %370 = vmatmul.f32.gmra.mxu0 %v134
    %v371 = vpop.f32.mrf.mxu0
    %v372 = vadd.f32 %v192, %v371
    %373 = vmatmul.f32.gmra.mxu0 %v135
    %v374 = vpop.f32.mrf.mxu0
    %v375 = vadd.f32 %v192, %v374
    %376 = vmatmul.f32.gmra.mxu0 %v136
    %v377 = vpop.f32.mrf.mxu0
    %v378 = vadd.f32 %v192, %v377
    %379 = vmatmul.f32.gmra.mxu0 %v137
    %v380 = vpop.f32.mrf.mxu0
    %v381 = vadd.f32 %v192, %v380
    %382 = vmatmul.f32.gmra.mxu0 %v138
    %v383 = vpop.f32.mrf.mxu0
    %v384 = vadd.f32 %v192, %v383
    %385 = vmatmul.f32.gmra.mxu0 %v139
    %v386 = vpop.f32.mrf.mxu0
    %v387 = vadd.f32 %v192, %v386
    %388 = vmatmul.f32.gmra.mxu0 %v140
    %v389 = vpop.f32.mrf.mxu0
    %v390 = vadd.f32 %v192, %v389
    %391 = vmatmul.f32.gmra.mxu0 %v141
    %v392 = vpop.f32.mrf.mxu0
    %v393 = vadd.f32 %v192, %v392
    %394 = vdwg.mxu0
    %395 = vmatpush.msra.mxu0 %v188
    %396 = vmatpush.msra.mxu0 %v185
    %397 = vmatpush.msra.mxu0 %v182
    %398 = vmatpush.msra.mxu0 %v179
    %399 = vmatpush.msra.mxu0 %v176
    %400 = vmatpush.msra.mxu0 %v173
    %401 = vmatpush.msra.mxu0 %v170
    %402 = vmatpush.msra.mxu0 %v167
    %403 = vmatpush.msra.mxu0 %v164
    %404 = vmatpush.msra.mxu0 %v161
    %405 = vmatpush.msra.mxu0 %v158
    %406 = vmatpush.msra.mxu0 %v155
    %407 = vmatpush.msra.mxu0 %v152
    %408 = vmatpush.msra.mxu0 %v149
    %409 = vmatpush.msra.mxu0 %v146
    %410 = vmatpush.msra.mxu0 %v143
    %411 = vmatmul.f32.gmra.mxu0 %v82
    %v412 = vpop.f32.mrf.mxu0
    %v413 = vadd.f32 %v193, %v412
    %414 = vmatmul.f32.gmra.mxu0 %v83
    %v415 = vpop.f32.mrf.mxu0
    %v416 = vadd.f32 %v193, %v415
    %417 = vmatmul.f32.gmra.mxu0 %v84
    %v418 = vpop.f32.mrf.mxu0
    %v419 = vadd.f32 %v193, %v418
    %420 = vmatmul.f32.gmra.mxu0 %v85
    %v421 = vpop.f32.mrf.mxu0
    %v422 = vadd.f32 %v193, %v421
    %423 = vmatmul.f32.gmra.mxu0 %v86
    %v424 = vpop.f32.mrf.mxu0
    %v425 = vadd.f32 %v193, %v424
    %426 = vmatmul.f32.gmra.mxu0 %v87
    %v427 = vpop.f32.mrf.mxu0
    %v428 = vadd.f32 %v193, %v427
    %429 = vmatmul.f32.gmra.mxu0 %v88
    %v430 = vpop.f32.mrf.mxu0
    %v431 = vadd.f32 %v193, %v430
    %432 = vmatmul.f32.gmra.mxu0 %v89
    %v433 = vpop.f32.mrf.mxu0
    %v434 = vadd.f32 %v193, %v433
    %435 = vmatmul.f32.gmra.mxu0 %v90
    %v436 = vpop.f32.mrf.mxu0
    %v437 = vadd.f32 %v193, %v436
    %438 = vmatmul.f32.gmra.mxu0 %v91
    %v439 = vpop.f32.mrf.mxu0
    %v440 = vadd.f32 %v193, %v439
    %441 = vmatmul.f32.gmra.mxu0 %v92
    %v442 = vpop.f32.mrf.mxu0
    %v443 = vadd.f32 %v193, %v442
    %444 = vmatmul.f32.gmra.mxu0 %v93
    %v445 = vpop.f32.mrf.mxu0
    %v446 = vadd.f32 %v193, %v445
    %447 = vmatmul.f32.gmra.mxu0 %v94
    %v448 = vpop.f32.mrf.mxu0
    %v449 = vadd.f32 %v193, %v448
    %450 = vmatmul.f32.gmra.mxu0 %v95
    %v451 = vpop.f32.mrf.mxu0
    %v452 = vadd.f32 %v193, %v451
    %453 = vmatmul.f32.gmra.mxu0 %v96
    %v454 = vpop.f32.mrf.mxu0
    %v455 = vadd.f32 %v193, %v454
    %456 = vmatmul.f32.gmra.mxu0 %v97
    %v457 = vpop.f32.mrf.mxu0
    %v458 = vadd.f32 %v193, %v457
    %459 = vmatmul.f32.gmra.mxu0 %v98
    %v460 = vpop.f32.mrf.mxu0
    %v461 = vadd.f32 %v193, %v460
    %462 = vmatmul.f32.gmra.mxu0 %v99
    %v463 = vpop.f32.mrf.mxu0
    %v464 = vadd.f32 %v193, %v463
    %465 = vmatmul.f32.gmra.mxu0 %v100
    %v466 = vpop.f32.mrf.mxu0
    %v467 = vadd.f32 %v193, %v466
    %468 = vmatmul.f32.gmra.mxu0 %v101
    %v469 = vpop.f32.mrf.mxu0
    %v470 = vadd.f32 %v193, %v469
    %471 = vmatmul.f32.gmra.mxu0 %v102
    %v472 = vpop.f32.mrf.mxu0
    %v473 = vadd.f32 %v193, %v472
    %474 = vmatmul.f32.gmra.mxu0 %v103
    %v475 = vpop.f32.mrf.mxu0
    %v476 = vadd.f32 %v193, %v475
    %477 = vmatmul.f32.gmra.mxu0 %v104
    %v478 = vpop.f32.mrf.mxu0
    %v479 = vadd.f32 %v193, %v478
    %480 = vmatmul.f32.gmra.mxu0 %v105
    %v481 = vpop.f32.mrf.mxu0
    %v482 = vadd.f32 %v193, %v481
    %483 = vmatmul.f32.gmra.mxu0 %v106
    %v484 = vpop.f32.mrf.mxu0
    %v485 = vadd.f32 %v193, %v484
    %486 = vmatmul.f32.gmra.mxu0 %v107
    %v487 = vpop.f32.mrf.mxu0
    %v488 = vadd.f32 %v193, %v487
    %489 = vmatmul.f32.gmra.mxu0 %v108
    %v490 = vpop.f32.mrf.mxu0
    %v491 = vadd.f32 %v193, %v490
    %492 = vmatmul.f32.gmra.mxu0 %v109
    %v493 = vpop.f32.mrf.mxu0
    %v494 = vadd.f32 %v193, %v493
    %495 = vmatmul.f32.gmra.mxu0 %v110
    %v496 = vpop.f32.mrf.mxu0
    %v497 = vadd.f32 %v193, %v496
    %498 = vmatmul.f32.gmra.mxu0 %v111
    %v499 = vpop.f32.mrf.mxu0
    %v500 = vadd.f32 %v193, %v499
    %501 = vmatmul.f32.gmra.mxu0 %v112
    %v502 = vpop.f32.mrf.mxu0
    %v503 = vadd.f32 %v193, %v502
    %504 = vmatmul.f32.gmra.mxu0 %v113
    %v505 = vpop.f32.mrf.mxu0
    %v506 = vadd.f32 %v193, %v505
    %507 = vmatmul.f32.gmra.mxu0 %v114
    %v508 = vpop.f32.mrf.mxu0
    %v509 = vadd.f32 %v193, %v508
    %510 = vmatmul.f32.gmra.mxu0 %v115
    %v511 = vpop.f32.mrf.mxu0
    %v512 = vadd.f32 %v193, %v511
    %513 = vmatmul.f32.gmra.mxu0 %v116
    %v514 = vpop.f32.mrf.mxu0
    %v515 = vadd.f32 %v193, %v514
    %516 = vmatmul.f32.gmra.mxu0 %v117
    %v517 = vpop.f32.mrf.mxu0
    %v518 = vadd.f32 %v193, %v517
    %519 = vmatmul.f32.gmra.mxu0 %v118
    %v520 = vpop.f32.mrf.mxu0
    %v521 = vadd.f32 %v193, %v520
    %522 = vmatmul.f32.gmra.mxu0 %v119
    %v523 = vpop.f32.mrf.mxu0
    %v524 = vadd.f32 %v193, %v523
    %525 = vmatmul.f32.gmra.mxu0 %v120
    %v526 = vpop.f32.mrf.mxu0
    %v527 = vadd.f32 %v193, %v526
    %528 = vmatmul.f32.gmra.mxu0 %v121
    %v529 = vpop.f32.mrf.mxu0
    %v530 = vadd.f32 %v193, %v529
    %531 = vmatmul.f32.gmra.mxu0 %v122
    %v532 = vpop.f32.mrf.mxu0
    %v533 = vadd.f32 %v193, %v532
    %534 = vmatmul.f32.gmra.mxu0 %v123
    %v535 = vpop.f32.mrf.mxu0
    %v536 = vadd.f32 %v193, %v535
    %537 = vmatmul.f32.gmra.mxu0 %v124
    %v538 = vpop.f32.mrf.mxu0
    %v539 = vadd.f32 %v193, %v538
    %540 = vmatmul.f32.gmra.mxu0 %v125
    %v541 = vpop.f32.mrf.mxu0
    %v542 = vadd.f32 %v193, %v541
    %543 = vmatmul.f32.gmra.mxu0 %v126
    %v544 = vpop.f32.mrf.mxu0
    %v545 = vadd.f32 %v193, %v544
    %546 = vmatmul.f32.gmra.mxu0 %v127
    %v547 = vpop.f32.mrf.mxu0
    %v548 = vadd.f32 %v193, %v547
    %549 = vmatmul.f32.gmra.mxu0 %v128
    %v550 = vpop.f32.mrf.mxu0
    %v551 = vadd.f32 %v193, %v550
    %552 = vmatmul.f32.gmra.mxu0 %v129
    %v553 = vpop.f32.mrf.mxu0
    %v554 = vadd.f32 %v193, %v553
    %555 = vmatmul.f32.gmra.mxu0 %v130
    %v556 = vpop.f32.mrf.mxu0
    %v557 = vadd.f32 %v193, %v556
    %558 = vmatmul.f32.gmra.mxu0 %v131
    %v559 = vpop.f32.mrf.mxu0
    %v560 = vadd.f32 %v193, %v559
    %561 = vmatmul.f32.gmra.mxu0 %v132
    %v562 = vpop.f32.mrf.mxu0
    %v563 = vadd.f32 %v193, %v562
    %564 = vmatmul.f32.gmra.mxu0 %v133
    %v565 = vpop.f32.mrf.mxu0
    %v566 = vadd.f32 %v193, %v565
    %567 = vmatmul.f32.gmra.mxu0 %v134
    %v568 = vpop.f32.mrf.mxu0
    %v569 = vadd.f32 %v193, %v568
    %570 = vmatmul.f32.gmra.mxu0 %v135
    %v571 = vpop.f32.mrf.mxu0
    %v572 = vadd.f32 %v193, %v571
    %573 = vmatmul.f32.gmra.mxu0 %v136
    %v574 = vpop.f32.mrf.mxu0
    %v575 = vadd.f32 %v193, %v574
    %576 = vmatmul.f32.gmra.mxu0 %v137
    %v577 = vpop.f32.mrf.mxu0
    %v578 = vadd.f32 %v193, %v577
    %579 = vmatmul.f32.gmra.mxu0 %v138
    %v580 = vpop.f32.mrf.mxu0
    %v581 = vadd.f32 %v193, %v580
    %582 = vmatmul.f32.gmra.mxu0 %v139
    %v583 = vpop.f32.mrf.mxu0
    %v584 = vadd.f32 %v193, %v583
    %585 = vmatmul.f32.gmra.mxu0 %v140
    %v586 = vpop.f32.mrf.mxu0
    %v587 = vadd.f32 %v193, %v586
    %588 = vmatmul.f32.gmra.mxu0 %v141
    %v589 = vpop.f32.mrf.mxu0
    %v590 = vadd.f32 %v193, %v589
    %591 = vdwg.mxu0
    %592 = vmatpush.msra.mxu0 %v189
    %593 = vmatpush.msra.mxu0 %v186
    %594 = vmatpush.msra.mxu0 %v183
    %595 = vmatpush.msra.mxu0 %v180
    %596 = vmatpush.msra.mxu0 %v177
    %597 = vmatpush.msra.mxu0 %v174
    %598 = vmatpush.msra.mxu0 %v171
    %599 = vmatpush.msra.mxu0 %v168
    %600 = vmatpush.msra.mxu0 %v165
    %601 = vmatpush.msra.mxu0 %v162
    %602 = vmatpush.msra.mxu0 %v159
    %603 = vmatpush.msra.mxu0 %v156
    %604 = vmatpush.msra.mxu0 %v153
    %605 = vmatpush.msra.mxu0 %v150
    %606 = vmatpush.msra.mxu0 %v147
    %607 = vmatpush.msra.mxu0 %v144
    %608 = vmatmul.f32.gmra.mxu0 %v82
    %v609 = vpop.f32.mrf.mxu0
    %v610 = vadd.f32 %v194, %v609
    %611 = vmatmul.f32.gmra.mxu0 %v83
    %v612 = vpop.f32.mrf.mxu0
    %v613 = vadd.f32 %v194, %v612
    %614 = vmatmul.f32.gmra.mxu0 %v84
    %v615 = vpop.f32.mrf.mxu0
    %v616 = vadd.f32 %v194, %v615
    %617 = vmatmul.f32.gmra.mxu0 %v85
    %v618 = vpop.f32.mrf.mxu0
    %v619 = vadd.f32 %v194, %v618
    %620 = vmatmul.f32.gmra.mxu0 %v86
    %v621 = vpop.f32.mrf.mxu0
    %v622 = vadd.f32 %v194, %v621
    %623 = vmatmul.f32.gmra.mxu0 %v87
    %v624 = vpop.f32.mrf.mxu0
    %v625 = vadd.f32 %v194, %v624
    %626 = vmatmul.f32.gmra.mxu0 %v88
    %v627 = vpop.f32.mrf.mxu0
    %v628 = vadd.f32 %v194, %v627
    %629 = vmatmul.f32.gmra.mxu0 %v89
    %v630 = vpop.f32.mrf.mxu0
    %v631 = vadd.f32 %v194, %v630
    %632 = vmatmul.f32.gmra.mxu0 %v90
    %v633 = vpop.f32.mrf.mxu0
    %v634 = vadd.f32 %v194, %v633
    %635 = vmatmul.f32.gmra.mxu0 %v91
    %v636 = vpop.f32.mrf.mxu0
    %v637 = vadd.f32 %v194, %v636
    %638 = vmatmul.f32.gmra.mxu0 %v92
    %v639 = vpop.f32.mrf.mxu0
    %v640 = vadd.f32 %v194, %v639
    %641 = vmatmul.f32.gmra.mxu0 %v93
    %v642 = vpop.f32.mrf.mxu0
    %v643 = vadd.f32 %v194, %v642
    %644 = vmatmul.f32.gmra.mxu0 %v94
    %v645 = vpop.f32.mrf.mxu0
    %v646 = vadd.f32 %v194, %v645
    %647 = vmatmul.f32.gmra.mxu0 %v95
    %v648 = vpop.f32.mrf.mxu0
    %v649 = vadd.f32 %v194, %v648
    %650 = vmatmul.f32.gmra.mxu0 %v96
    %v651 = vpop.f32.mrf.mxu0
    %v652 = vadd.f32 %v194, %v651
    %653 = vmatmul.f32.gmra.mxu0 %v97
    %v654 = vpop.f32.mrf.mxu0
    %v655 = vadd.f32 %v194, %v654
    %656 = vmatmul.f32.gmra.mxu0 %v98
    %v657 = vpop.f32.mrf.mxu0
    %v658 = vadd.f32 %v194, %v657
    %659 = vmatmul.f32.gmra.mxu0 %v99
    %v660 = vpop.f32.mrf.mxu0
    %v661 = vadd.f32 %v194, %v660
    %662 = vmatmul.f32.gmra.mxu0 %v100
    %v663 = vpop.f32.mrf.mxu0
    %v664 = vadd.f32 %v194, %v663
    %665 = vmatmul.f32.gmra.mxu0 %v101
    %v666 = vpop.f32.mrf.mxu0
    %v667 = vadd.f32 %v194, %v666
    %668 = vmatmul.f32.gmra.mxu0 %v102
    %v669 = vpop.f32.mrf.mxu0
    %v670 = vadd.f32 %v194, %v669
    %671 = vmatmul.f32.gmra.mxu0 %v103
    %v672 = vpop.f32.mrf.mxu0
    %v673 = vadd.f32 %v194, %v672
    %674 = vmatmul.f32.gmra.mxu0 %v104
    %v675 = vpop.f32.mrf.mxu0
    %v676 = vadd.f32 %v194, %v675
    %677 = vmatmul.f32.gmra.mxu0 %v105
    %v678 = vpop.f32.mrf.mxu0
    %v679 = vadd.f32 %v194, %v678
    %680 = vmatmul.f32.gmra.mxu0 %v106
    %v681 = vpop.f32.mrf.mxu0
    %v682 = vadd.f32 %v194, %v681
    %683 = vmatmul.f32.gmra.mxu0 %v107
    %v684 = vpop.f32.mrf.mxu0
    %v685 = vadd.f32 %v194, %v684
    %686 = vmatmul.f32.gmra.mxu0 %v108
    %v687 = vpop.f32.mrf.mxu0
    %v688 = vadd.f32 %v194, %v687
    %689 = vmatmul.f32.gmra.mxu0 %v109
    %v690 = vpop.f32.mrf.mxu0
    %v691 = vadd.f32 %v194, %v690
    %692 = vmatmul.f32.gmra.mxu0 %v110
    %v693 = vpop.f32.mrf.mxu0
    %v694 = vadd.f32 %v194, %v693
    %695 = vmatmul.f32.gmra.mxu0 %v111
    %v696 = vpop.f32.mrf.mxu0
    %v697 = vadd.f32 %v194, %v696
    %698 = vmatmul.f32.gmra.mxu0 %v112
    %v699 = vpop.f32.mrf.mxu0
    %v700 = vadd.f32 %v194, %v699
    %701 = vmatmul.f32.gmra.mxu0 %v113
    %v702 = vpop.f32.mrf.mxu0
    %v703 = vadd.f32 %v194, %v702
    %704 = vmatmul.f32.gmra.mxu0 %v114
    %v705 = vpop.f32.mrf.mxu0
    %v706 = vadd.f32 %v194, %v705
    %707 = vmatmul.f32.gmra.mxu0 %v115
    %v708 = vpop.f32.mrf.mxu0
    %v709 = vadd.f32 %v194, %v708
    %710 = vmatmul.f32.gmra.mxu0 %v116
    %v711 = vpop.f32.mrf.mxu0
    %v712 = vadd.f32 %v194, %v711
    %713 = vmatmul.f32.gmra.mxu0 %v117
    %v714 = vpop.f32.mrf.mxu0
    %v715 = vadd.f32 %v194, %v714
    %716 = vmatmul.f32.gmra.mxu0 %v118
    %v717 = vpop.f32.mrf.mxu0
    %v718 = vadd.f32 %v194, %v717
    %719 = vmatmul.f32.gmra.mxu0 %v119
    %v720 = vpop.f32.mrf.mxu0
    %v721 = vadd.f32 %v194, %v720
    %722 = vmatmul.f32.gmra.mxu0 %v120
    %v723 = vpop.f32.mrf.mxu0
    %v724 = vadd.f32 %v194, %v723
    %725 = vmatmul.f32.gmra.mxu0 %v121
    %v726 = vpop.f32.mrf.mxu0
    %v727 = vadd.f32 %v194, %v726
    %728 = vmatmul.f32.gmra.mxu0 %v122
    %v729 = vpop.f32.mrf.mxu0
    %v730 = vadd.f32 %v194, %v729
    %731 = vmatmul.f32.gmra.mxu0 %v123
    %v732 = vpop.f32.mrf.mxu0
    %v733 = vadd.f32 %v194, %v732
    %734 = vmatmul.f32.gmra.mxu0 %v124
    %v735 = vpop.f32.mrf.mxu0
    %v736 = vadd.f32 %v194, %v735
    %737 = vmatmul.f32.gmra.mxu0 %v125
    %v738 = vpop.f32.mrf.mxu0
    %v739 = vadd.f32 %v194, %v738
    %740 = vmatmul.f32.gmra.mxu0 %v126
    %v741 = vpop.f32.mrf.mxu0
    %v742 = vadd.f32 %v194, %v741
    %743 = vmatmul.f32.gmra.mxu0 %v127
    %v744 = vpop.f32.mrf.mxu0
    %v745 = vadd.f32 %v194, %v744
    %746 = vmatmul.f32.gmra.mxu0 %v128
    %v747 = vpop.f32.mrf.mxu0
    %v748 = vadd.f32 %v194, %v747
    %749 = vmatmul.f32.gmra.mxu0 %v129
    %v750 = vpop.f32.mrf.mxu0
    %v751 = vadd.f32 %v194, %v750
    %752 = vmatmul.f32.gmra.mxu0 %v130
    %v753 = vpop.f32.mrf.mxu0
    %v754 = vadd.f32 %v194, %v753
    %755 = vmatmul.f32.gmra.mxu0 %v131
    %v756 = vpop.f32.mrf.mxu0
    %v757 = vadd.f32 %v194, %v756
    %758 = vmatmul.f32.gmra.mxu0 %v132
    %v759 = vpop.f32.mrf.mxu0
    %v760 = vadd.f32 %v194, %v759
    %761 = vmatmul.f32.gmra.mxu0 %v133
    %v762 = vpop.f32.mrf.mxu0
    %v763 = vadd.f32 %v194, %v762
    %764 = vmatmul.f32.gmra.mxu0 %v134
    %v765 = vpop.f32.mrf.mxu0
    %v766 = vadd.f32 %v194, %v765
    %767 = vmatmul.f32.gmra.mxu0 %v135
    %v768 = vpop.f32.mrf.mxu0
    %v769 = vadd.f32 %v194, %v768
    %770 = vmatmul.f32.gmra.mxu0 %v136
    %v771 = vpop.f32.mrf.mxu0
    %v772 = vadd.f32 %v194, %v771
    %773 = vmatmul.f32.gmra.mxu0 %v137
    %v774 = vpop.f32.mrf.mxu0
    %v775 = vadd.f32 %v194, %v774
    %776 = vmatmul.f32.gmra.mxu0 %v138
    %v777 = vpop.f32.mrf.mxu0
    %v778 = vadd.f32 %v194, %v777
    %779 = vmatmul.f32.gmra.mxu0 %v139
    %v780 = vpop.f32.mrf.mxu0
    %v781 = vadd.f32 %v194, %v780
    %782 = vmatmul.f32.gmra.mxu0 %v140
    %v783 = vpop.f32.mrf.mxu0
    %v784 = vadd.f32 %v194, %v783
    %785 = vmatmul.f32.gmra.mxu0 %v141
    %v786 = vpop.f32.mrf.mxu0
    %v787 = vadd.f32 %v194, %v786
    %788 = vdwg.mxu0
    %v789 = vmax.f32 %v216, 0.0
    %v790 = vmax.f32 %v413, 0.0
    %v791 = vmax.f32 %v610, 0.0
    %v792 = vmax.f32 %v219, 0.0
    %v793 = vmax.f32 %v416, 0.0
    %v794 = vmax.f32 %v613, 0.0
    %v795 = vmax.f32 %v222, 0.0
    %v796 = vmax.f32 %v419, 0.0
    %v797 = vmax.f32 %v616, 0.0
    %v798 = vmax.f32 %v225, 0.0
    %v799 = vmax.f32 %v422, 0.0
    %v800 = vmax.f32 %v619, 0.0
    %v801 = vmax.f32 %v228, 0.0
    %v802 = vmax.f32 %v425, 0.0
    %v803 = vmax.f32 %v622, 0.0
    %v804 = vmax.f32 %v231, 0.0
    %v805 = vmax.f32 %v428, 0.0
    %v806 = vmax.f32 %v625, 0.0
    %v807 = vmax.f32 %v234, 0.0
    %v808 = vmax.f32 %v431, 0.0
    %v809 = vmax.f32 %v628, 0.0
    %v810 = vmax.f32 %v237, 0.0
    %v811 = vmax.f32 %v434, 0.0
    %v812 = vmax.f32 %v631, 0.0
    %v813 = vmax.f32 %v240, 0.0
    %v814 = vmax.f32 %v437, 0.0
    %v815 = vmax.f32 %v634, 0.0
    %v816 = vmax.f32 %v243, 0.0
    %v817 = vmax.f32 %v440, 0.0
    %v818 = vmax.f32 %v637, 0.0
    %v819 = vmax.f32 %v246, 0.0
    %v820 = vmax.f32 %v443, 0.0
    %v821 = vmax.f32 %v640, 0.0
    %v822 = vmax.f32 %v249, 0.0
    %v823 = vmax.f32 %v446, 0.0
    %v824 = vmax.f32 %v643, 0.0
    %v825 = vmax.f32 %v252, 0.0
    %v826 = vmax.f32 %v449, 0.0
    %v827 = vmax.f32 %v646, 0.0
    %v828 = vmax.f32 %v255, 0.0
    %v829 = vmax.f32 %v452, 0.0
    %v830 = vmax.f32 %v649, 0.0
    %v831 = vmax.f32 %v258, 0.0
    %v832 = vmax.f32 %v455, 0.0
    %v833 = vmax.f32 %v652, 0.0
    %v834 = vmax.f32 %v261, 0.0
    %v835 = vmax.f32 %v458, 0.0
    %v836 = vmax.f32 %v655, 0.0
    %v837 = vmax.f32 %v264, 0.0
    %v838 = vmax.f32 %v461, 0.0
    %v839 = vmax.f32 %v658, 0.0
    %v840 = vmax.f32 %v267, 0.0
    %v841 = vmax.f32 %v464, 0.0
    %v842 = vmax.f32 %v661, 0.0
    %v843 = vmax.f32 %v270, 0.0
    %v844 = vmax.f32 %v467, 0.0
    %v845 = vmax.f32 %v664, 0.0
    %v846 = vmax.f32 %v273, 0.0
    %v847 = vmax.f32 %v470, 0.0
    %v848 = vmax.f32 %v667, 0.0
    %v849 = vmax.f32 %v276, 0.0
    %v850 = vmax.f32 %v473, 0.0
    %v851 = vmax.f32 %v670, 0.0
    %v852 = vmax.f32 %v279, 0.0
    %v853 = vmax.f32 %v476, 0.0
    %v854 = vmax.f32 %v673, 0.0
    %v855 = vmax.f32 %v282, 0.0
    %v856 = vmax.f32 %v479, 0.0
    %v857 = vmax.f32 %v676, 0.0
    %v858 = vmax.f32 %v285, 0.0
    %v859 = vmax.f32 %v482, 0.0
    %v860 = vmax.f32 %v679, 0.0
    %v861 = vmax.f32 %v288, 0.0
    %v862 = vmax.f32 %v485, 0.0
    %v863 = vmax.f32 %v682, 0.0
    %v864 = vmax.f32 %v291, 0.0
    %v865 = vmax.f32 %v488, 0.0
    %v866 = vmax.f32 %v685, 0.0
    %v867 = vmax.f32 %v294, 0.0
    %v868 = vmax.f32 %v491, 0.0
    %v869 = vmax.f32 %v688, 0.0
    %v870 = vmax.f32 %v297, 0.0
    %v871 = vmax.f32 %v494, 0.0
    %v872 = vmax.f32 %v691, 0.0
    %v873 = vmax.f32 %v300, 0.0
    %v874 = vmax.f32 %v497, 0.0
    %v875 = vmax.f32 %v694, 0.0
    %v876 = vmax.f32 %v303, 0.0
    %v877 = vmax.f32 %v500, 0.0
    %v878 = vmax.f32 %v697, 0.0
    %v879 = vmax.f32 %v306, 0.0
    %v880 = vmax.f32 %v503, 0.0
    %v881 = vmax.f32 %v700, 0.0
    %v882 = vmax.f32 %v309, 0.0
    %v883 = vmax.f32 %v506, 0.0
    %v884 = vmax.f32 %v703, 0.0
    %v885 = vmax.f32 %v312, 0.0
    %v886 = vmax.f32 %v509, 0.0
    %v887 = vmax.f32 %v706, 0.0
    %v888 = vmax.f32 %v315, 0.0
    %v889 = vmax.f32 %v512, 0.0
    %v890 = vmax.f32 %v709, 0.0
    %v891 = vmax.f32 %v318, 0.0
    %v892 = vmax.f32 %v515, 0.0
    %v893 = vmax.f32 %v712, 0.0
    %v894 = vmax.f32 %v321, 0.0
    %v895 = vmax.f32 %v518, 0.0
    %v896 = vmax.f32 %v715, 0.0
    %v897 = vmax.f32 %v324, 0.0
    %v898 = vmax.f32 %v521, 0.0
    %v899 = vmax.f32 %v718, 0.0
    %v900 = vmax.f32 %v327, 0.0
    %v901 = vmax.f32 %v524, 0.0
    %v902 = vmax.f32 %v721, 0.0
    %v903 = vmax.f32 %v330, 0.0
    %v904 = vmax.f32 %v527, 0.0
    %v905 = vmax.f32 %v724, 0.0
    %v906 = vmax.f32 %v333, 0.0
    %v907 = vmax.f32 %v530, 0.0
    %v908 = vmax.f32 %v727, 0.0
    %v909 = vmax.f32 %v336, 0.0
    %v910 = vmax.f32 %v533, 0.0
    %v911 = vmax.f32 %v730, 0.0
    %v912 = vmax.f32 %v339, 0.0
    %v913 = vmax.f32 %v536, 0.0
    %v914 = vmax.f32 %v733, 0.0
    %v915 = vmax.f32 %v342, 0.0
    %v916 = vmax.f32 %v539, 0.0
    %v917 = vmax.f32 %v736, 0.0
    %v918 = vmax.f32 %v345, 0.0
    %v919 = vmax.f32 %v542, 0.0
    %v920 = vmax.f32 %v739, 0.0
    %v921 = vmax.f32 %v348, 0.0
    %v922 = vmax.f32 %v545, 0.0
    %v923 = vmax.f32 %v742, 0.0
    %v924 = vmax.f32 %v351, 0.0
    %v925 = vmax.f32 %v548, 0.0
    %v926 = vmax.f32 %v745, 0.0
    %v927 = vmax.f32 %v354, 0.0
    %v928 = vmax.f32 %v551, 0.0
    %v929 = vmax.f32 %v748, 0.0
    %v930 = vmax.f32 %v357, 0.0
    %v931 = vmax.f32 %v554, 0.0
    %v932 = vmax.f32 %v751, 0.0
    %v933 = vmax.f32 %v360, 0.0
    %v934 = vmax.f32 %v557, 0.0
    %v935 = vmax.f32 %v754, 0.0
    %v936 = vmax.f32 %v363, 0.0
    %v937 = vmax.f32 %v560, 0.0
    %v938 = vmax.f32 %v757, 0.0
    %v939 = vmax.f32 %v366, 0.0
    %v940 = vmax.f32 %v563, 0.0
    %v941 = vmax.f32 %v760, 0.0
    %v942 = vmax.f32 %v369, 0.0
    %v943 = vmax.f32 %v566, 0.0
    %v944 = vmax.f32 %v763, 0.0
    %v945 = vmax.f32 %v372, 0.0
    %v946 = vmax.f32 %v569, 0.0
    %v947 = vmax.f32 %v766, 0.0
    %v948 = vmax.f32 %v375, 0.0
    %v949 = vmax.f32 %v572, 0.0
    %v950 = vmax.f32 %v769, 0.0
    %v951 = vmax.f32 %v378, 0.0
    %v952 = vmax.f32 %v575, 0.0
    %v953 = vmax.f32 %v772, 0.0
    %v954 = vmax.f32 %v381, 0.0
    %v955 = vmax.f32 %v578, 0.0
    %v956 = vmax.f32 %v775, 0.0
    %v957 = vmax.f32 %v384, 0.0
    %v958 = vmax.f32 %v581, 0.0
    %v959 = vmax.f32 %v778, 0.0
    %v960 = vmax.f32 %v387, 0.0
    %v961 = vmax.f32 %v584, 0.0
    %v962 = vmax.f32 %v781, 0.0
    %v963 = vmax.f32 %v390, 0.0
    %v964 = vmax.f32 %v587, 0.0
    %v965 = vmax.f32 %v784, 0.0
    %v966 = vmax.f32 %v393, 0.0
    %v967 = vmax.f32 %v590, 0.0
    %v968 = vmax.f32 %v787, 0.0
    %v1029 = vrot.slane %v789, 2
    %v1030 = vrot.slane %v789, 4
    %v1031 = vrot.slane %v789, 6
    %v1032 = vrot.slane %v792, 2
    %v1033 = vrot.slane %v792, 4
    %v1034 = vrot.slane %v792, 6
    %v1035 = vrot.slane %v795, 2
    %v1036 = vrot.slane %v795, 4
    %v1037 = vrot.slane %v795, 6
    %v1038 = vrot.slane %v798, 2
    %v1039 = vrot.slane %v798, 4
    %v1040 = vrot.slane %v798, 6
    %v1041 = vrot.slane %v801, 2
    %v1042 = vrot.slane %v801, 4
    %v1043 = vrot.slane %v801, 6
    %v1044 = vrot.slane %v804, 2
    %v1045 = vrot.slane %v804, 4
    %v1046 = vrot.slane %v804, 6
    %v1047 = vrot.slane %v807, 2
    %v1048 = vrot.slane %v807, 4
    %v1049 = vrot.slane %v807, 6
    %v1050 = vrot.slane %v810, 2
    %v1051 = vrot.slane %v810, 4
    %v1052 = vrot.slane %v810, 6
    %v1053 = vrot.slane %v813, 2
    %v1054 = vrot.slane %v813, 4
    %v1055 = vrot.slane %v813, 6
    %v1056 = vrot.slane %v816, 2
    %v1057 = vrot.slane %v816, 4
    %v1058 = vrot.slane %v816, 6
    %v1059 = vrot.slane %v819, 2
    %v1060 = vrot.slane %v819, 4
    %v1061 = vrot.slane %v819, 6
    %v1062 = vrot.slane %v822, 2
    %v1063 = vrot.slane %v822, 4
    %v1064 = vrot.slane %v822, 6
    %v1065 = vrot.slane %v825, 2
    %v1066 = vrot.slane %v825, 4
    %v1067 = vrot.slane %v825, 6
    %v1068 = vrot.slane %v828, 2
    %v1069 = vrot.slane %v828, 4
    %v1070 = vrot.slane %v828, 6
    %v1071 = vrot.slane %v831, 2
    %v1072 = vrot.slane %v831, 4
    %v1073 = vrot.slane %v831, 6
    %v1074 = vrot.slane %v834, 2
    %v1075 = vrot.slane %v834, 4
    %v1076 = vrot.slane %v834, 6
    %v1077 = vrot.slane %v837, 2
    %v1078 = vrot.slane %v837, 4
    %v1079 = vrot.slane %v837, 6
    %v1080 = vrot.slane %v840, 2
    %v1081 = vrot.slane %v840, 4
    %v1082 = vrot.slane %v840, 6
    %v1083 = vrot.slane %v843, 2
    %v1084 = vrot.slane %v843, 4
    %v1085 = vrot.slane %v843, 6
    %v1086 = vrot.slane %v846, 2
    %v1087 = vrot.slane %v846, 4
    %v1088 = vrot.slane %v846, 6
    %v1089 = vrot.slane %v849, 2
    %v1090 = vrot.slane %v849, 4
    %v1091 = vrot.slane %v849, 6
    %v1092 = vrot.slane %v852, 2
    %v1093 = vrot.slane %v852, 4
    %v1094 = vrot.slane %v852, 6
    %v1095 = vrot.slane %v855, 2
    %v1096 = vrot.slane %v855, 4
    %v1097 = vrot.slane %v855, 6
    %v1098 = vrot.slane %v858, 2
    %v1099 = vrot.slane %v858, 4
    %v1100 = vrot.slane %v858, 6
    %v1101 = vrot.slane %v861, 2
    %v1102 = vrot.slane %v861, 4
    %v1103 = vrot.slane %v861, 6
    %v1104 = vrot.slane %v864, 2
    %v1105 = vrot.slane %v864, 4
    %v1106 = vrot.slane %v864, 6
    %v1107 = vrot.slane %v867, 2
    %v1108 = vrot.slane %v867, 4
    %v1109 = vrot.slane %v867, 6
    %v1110 = vrot.slane %v870, 2
    %v1111 = vrot.slane %v870, 4
    %v1112 = vrot.slane %v870, 6
    %v1113 = vrot.slane %v873, 2
    %v1114 = vrot.slane %v873, 4
    %v1115 = vrot.slane %v873, 6
    %v1116 = vrot.slane %v876, 2
    %v1117 = vrot.slane %v876, 4
    %v1118 = vrot.slane %v876, 6
    %v1119 = vrot.slane %v879, 2
    %v1120 = vrot.slane %v879, 4
    %v1121 = vrot.slane %v879, 6
    %v1122 = vrot.slane %v882, 2
    %v1123 = vrot.slane %v882, 4
    %v1124 = vrot.slane %v882, 6
    %v1125 = vrot.slane %v885, 2
    %v1126 = vrot.slane %v885, 4
    %v1127 = vrot.slane %v885, 6
    %v1128 = vrot.slane %v888, 2
    %v1129 = vrot.slane %v888, 4
    %v1130 = vrot.slane %v888, 6
    %v1131 = vrot.slane %v891, 2
    %v1132 = vrot.slane %v891, 4
    %v1133 = vrot.slane %v891, 6
    %v1134 = vrot.slane %v894, 2
    %v1135 = vrot.slane %v894, 4
    %v1136 = vrot.slane %v894, 6
    %v1137 = vrot.slane %v897, 2
    %v1138 = vrot.slane %v897, 4
    %v1139 = vrot.slane %v897, 6
    %v1140 = vrot.slane %v900, 2
    %v1141 = vrot.slane %v900, 4
    %v1142 = vrot.slane %v900, 6
    %v1143 = vrot.slane %v903, 2
    %v1144 = vrot.slane %v903, 4
    %v1145 = vrot.slane %v903, 6
    %v1146 = vrot.slane %v906, 2
    %v1147 = vrot.slane %v906, 4
    %v1148 = vrot.slane %v906, 6
    %v1149 = vrot.slane %v909, 2
    %v1150 = vrot.slane %v909, 4
    %v1151 = vrot.slane %v909, 6
    %v1152 = vrot.slane %v912, 2
    %v1153 = vrot.slane %v912, 4
    %v1154 = vrot.slane %v912, 6
    %v1155 = vrot.slane %v915, 2
    %v1156 = vrot.slane %v915, 4
    %v1157 = vrot.slane %v915, 6
    %v1158 = vrot.slane %v918, 2
    %v1159 = vrot.slane %v918, 4
    %v1160 = vrot.slane %v918, 6
    %v1161 = vrot.slane %v921, 2
    %v1162 = vrot.slane %v921, 4
    %v1163 = vrot.slane %v921, 6
    %v1164 = vrot.slane %v924, 2
    %v1165 = vrot.slane %v924, 4
    %v1166 = vrot.slane %v924, 6
    %v1167 = vrot.slane %v927, 2
    %v1168 = vrot.slane %v927, 4
    %v1169 = vrot.slane %v927, 6
    %v1170 = vrot.slane %v930, 2
    %v1171 = vrot.slane %v930, 4
    %v1172 = vrot.slane %v930, 6
    %v1173 = vrot.slane %v933, 2
    %v1174 = vrot.slane %v933, 4
    %v1175 = vrot.slane %v933, 6
    %v1176 = vrot.slane %v936, 2
    %v1177 = vrot.slane %v936, 4
    %v1178 = vrot.slane %v936, 6
    %v1179 = vrot.slane %v939, 2
    %v1180 = vrot.slane %v939, 4
    %v1181 = vrot.slane %v939, 6
    %v1182 = vrot.slane %v942, 2
    %v1183 = vrot.slane %v942, 4
    %v1184 = vrot.slane %v942, 6
    %v1185 = vrot.slane %v945, 2
    %v1186 = vrot.slane %v945, 4
    %v1187 = vrot.slane %v945, 6
    %v1188 = vrot.slane %v948, 2
    %v1189 = vrot.slane %v948, 4
    %v1190 = vrot.slane %v948, 6
    %v1191 = vrot.slane %v951, 2
    %v1192 = vrot.slane %v951, 4
    %v1193 = vrot.slane %v951, 6
    %v1194 = vrot.slane %v954, 2
    %v1195 = vrot.slane %v954, 4
    %v1196 = vrot.slane %v954, 6
    %v1197 = vrot.slane %v957, 2
    %v1198 = vrot.slane %v957, 4
    %v1199 = vrot.slane %v957, 6
    %v1200 = vrot.slane %v960, 2
    %v1201 = vrot.slane %v960, 4
    %v1202 = vrot.slane %v960, 6
    %v1203 = vrot.slane %v963, 2
    %v1204 = vrot.slane %v963, 4
    %v1205 = vrot.slane %v963, 6
    %v1206 = vrot.slane %v966, 2
    %v1207 = vrot.slane %v966, 4
    %v1208 = vrot.slane %v966, 6
    %v1269 = vrot.slane %v790, 2
    %v1270 = vrot.slane %v790, 4
    %v1271 = vrot.slane %v790, 6
    %v1272 = vrot.slane %v793, 2
    %v1273 = vrot.slane %v793, 4
    %v1274 = vrot.slane %v793, 6
    %v1275 = vrot.slane %v796, 2
    %v1276 = vrot.slane %v796, 4
    %v1277 = vrot.slane %v796, 6
    %v1278 = vrot.slane %v799, 2
    %v1279 = vrot.slane %v799, 4
    %v1280 = vrot.slane %v799, 6
    %v1281 = vrot.slane %v802, 2
    %v1282 = vrot.slane %v802, 4
    %v1283 = vrot.slane %v802, 6
    %v1284 = vrot.slane %v805, 2
    %v1285 = vrot.slane %v805, 4
    %v1286 = vrot.slane %v805, 6
    %v1287 = vrot.slane %v808, 2
    %v1288 = vrot.slane %v808, 4
    %v1289 = vrot.slane %v808, 6
    %v1290 = vrot.slane %v811, 2
    %v1291 = vrot.slane %v811, 4
    %v1292 = vrot.slane %v811, 6
    %v1293 = vrot.slane %v814, 2
    %v1294 = vrot.slane %v814, 4
    %v1295 = vrot.slane %v814, 6
    %v1296 = vrot.slane %v817, 2
    %v1297 = vrot.slane %v817, 4
    %v1298 = vrot.slane %v817, 6
    %v1299 = vrot.slane %v820, 2
    %v1300 = vrot.slane %v820, 4
    %v1301 = vrot.slane %v820, 6
    %v1302 = vrot.slane %v823, 2
    %v1303 = vrot.slane %v823, 4
    %v1304 = vrot.slane %v823, 6
    %v1305 = vrot.slane %v826, 2
    %v1306 = vrot.slane %v826, 4
    %v1307 = vrot.slane %v826, 6
    %v1308 = vrot.slane %v829, 2
    %v1309 = vrot.slane %v829, 4
    %v1310 = vrot.slane %v829, 6
    %v1311 = vrot.slane %v832, 2
    %v1312 = vrot.slane %v832, 4
    %v1313 = vrot.slane %v832, 6
    %v1314 = vrot.slane %v835, 2
    %v1315 = vrot.slane %v835, 4
    %v1316 = vrot.slane %v835, 6
    %v1317 = vrot.slane %v838, 2
    %v1318 = vrot.slane %v838, 4
    %v1319 = vrot.slane %v838, 6
    %v1320 = vrot.slane %v841, 2
    %v1321 = vrot.slane %v841, 4
    %v1322 = vrot.slane %v841, 6
    %v1323 = vrot.slane %v844, 2
    %v1324 = vrot.slane %v844, 4
    %v1325 = vrot.slane %v844, 6
    %v1326 = vrot.slane %v847, 2
    %v1327 = vrot.slane %v847, 4
    %v1328 = vrot.slane %v847, 6
    %v1329 = vrot.slane %v850, 2
    %v1330 = vrot.slane %v850, 4
    %v1331 = vrot.slane %v850, 6
    %v1332 = vrot.slane %v853, 2
    %v1333 = vrot.slane %v853, 4
    %v1334 = vrot.slane %v853, 6
    %v1335 = vrot.slane %v856, 2
    %v1336 = vrot.slane %v856, 4
    %v1337 = vrot.slane %v856, 6
    %v1338 = vrot.slane %v859, 2
    %v1339 = vrot.slane %v859, 4
    %v1340 = vrot.slane %v859, 6
    %v1341 = vrot.slane %v862, 2
    %v1342 = vrot.slane %v862, 4
    %v1343 = vrot.slane %v862, 6
    %v1344 = vrot.slane %v865, 2
    %v1345 = vrot.slane %v865, 4
    %v1346 = vrot.slane %v865, 6
    %v1347 = vrot.slane %v868, 2
    %v1348 = vrot.slane %v868, 4
    %v1349 = vrot.slane %v868, 6
    %v1350 = vrot.slane %v871, 2
    %v1351 = vrot.slane %v871, 4
    %v1352 = vrot.slane %v871, 6
    %v1353 = vrot.slane %v874, 2
    %v1354 = vrot.slane %v874, 4
    %v1355 = vrot.slane %v874, 6
    %v1356 = vrot.slane %v877, 2
    %v1357 = vrot.slane %v877, 4
    %v1358 = vrot.slane %v877, 6
    %v1359 = vrot.slane %v880, 2
    %v1360 = vrot.slane %v880, 4
    %v1361 = vrot.slane %v880, 6
    %v1362 = vrot.slane %v883, 2
    %v1363 = vrot.slane %v883, 4
    %v1364 = vrot.slane %v883, 6
    %v1365 = vrot.slane %v886, 2
    %v1366 = vrot.slane %v886, 4
    %v1367 = vrot.slane %v886, 6
    %v1368 = vrot.slane %v889, 2
    %v1369 = vrot.slane %v889, 4
    %v1370 = vrot.slane %v889, 6
    %v1371 = vrot.slane %v892, 2
    %v1372 = vrot.slane %v892, 4
    %v1373 = vrot.slane %v892, 6
    %v1374 = vrot.slane %v895, 2
    %v1375 = vrot.slane %v895, 4
    %v1376 = vrot.slane %v895, 6
    %v1377 = vrot.slane %v898, 2
    %v1378 = vrot.slane %v898, 4
    %v1379 = vrot.slane %v898, 6
    %v1380 = vrot.slane %v901, 2
    %v1381 = vrot.slane %v901, 4
    %v1382 = vrot.slane %v901, 6
    %v1383 = vrot.slane %v904, 2
    %v1384 = vrot.slane %v904, 4
    %v1385 = vrot.slane %v904, 6
    %v1386 = vrot.slane %v907, 2
    %v1387 = vrot.slane %v907, 4
    %v1388 = vrot.slane %v907, 6
    %v1389 = vrot.slane %v910, 2
    %v1390 = vrot.slane %v910, 4
    %v1391 = vrot.slane %v910, 6
    %v1392 = vrot.slane %v913, 2
    %v1393 = vrot.slane %v913, 4
    %v1394 = vrot.slane %v913, 6
    %v1395 = vrot.slane %v916, 2
    %v1396 = vrot.slane %v916, 4
    %v1397 = vrot.slane %v916, 6
    %v1398 = vrot.slane %v919, 2
    %v1399 = vrot.slane %v919, 4
    %v1400 = vrot.slane %v919, 6
    %v1401 = vrot.slane %v922, 2
    %v1402 = vrot.slane %v922, 4
    %v1403 = vrot.slane %v922, 6
    %v1404 = vrot.slane %v925, 2
    %v1405 = vrot.slane %v925, 4
    %v1406 = vrot.slane %v925, 6
    %v1407 = vrot.slane %v928, 2
    %v1408 = vrot.slane %v928, 4
    %v1409 = vrot.slane %v928, 6
    %v1410 = vrot.slane %v931, 2
    %v1411 = vrot.slane %v931, 4
    %v1412 = vrot.slane %v931, 6
    %v1413 = vrot.slane %v934, 2
    %v1414 = vrot.slane %v934, 4
    %v1415 = vrot.slane %v934, 6
    %v1416 = vrot.slane %v937, 2
    %v1417 = vrot.slane %v937, 4
    %v1418 = vrot.slane %v937, 6
    %v1419 = vrot.slane %v940, 2
    %v1420 = vrot.slane %v940, 4
    %v1421 = vrot.slane %v940, 6
    %v1422 = vrot.slane %v943, 2
    %v1423 = vrot.slane %v943, 4
    %v1424 = vrot.slane %v943, 6
    %v1425 = vrot.slane %v946, 2
    %v1426 = vrot.slane %v946, 4
    %v1427 = vrot.slane %v946, 6
    %v1428 = vrot.slane %v949, 2
    %v1429 = vrot.slane %v949, 4
    %v1430 = vrot.slane %v949, 6
    %v1431 = vrot.slane %v952, 2
    %v1432 = vrot.slane %v952, 4
    %v1433 = vrot.slane %v952, 6
    %v1434 = vrot.slane %v955, 2
    %v1435 = vrot.slane %v955, 4
    %v1436 = vrot.slane %v955, 6
    %v1437 = vrot.slane %v958, 2
    %v1438 = vrot.slane %v958, 4
    %v1439 = vrot.slane %v958, 6
    %v1440 = vrot.slane %v961, 2
    %v1441 = vrot.slane %v961, 4
    %v1442 = vrot.slane %v961, 6
    %v1443 = vrot.slane %v964, 2
    %v1444 = vrot.slane %v964, 4
    %v1445 = vrot.slane %v964, 6
    %v1446 = vrot.slane %v967, 2
    %v1447 = vrot.slane %v967, 4
    %v1448 = vrot.slane %v967, 6
    %v1509 = vrot.slane %v791, 2
    %v1510 = vrot.slane %v791, 4
    %v1511 = vrot.slane %v791, 6
    %v1512 = vrot.slane %v794, 2
    %v1513 = vrot.slane %v794, 4
    %v1514 = vrot.slane %v794, 6
    %v1515 = vrot.slane %v797, 2
    %v1516 = vrot.slane %v797, 4
    %v1517 = vrot.slane %v797, 6
    %v1518 = vrot.slane %v800, 2
    %v1519 = vrot.slane %v800, 4
    %v1520 = vrot.slane %v800, 6
    %v1521 = vrot.slane %v803, 2
    %v1522 = vrot.slane %v803, 4
    %v1523 = vrot.slane %v803, 6
    %v1524 = vrot.slane %v806, 2
    %v1525 = vrot.slane %v806, 4
    %v1526 = vrot.slane %v806, 6
    %v1527 = vrot.slane %v809, 2
    %v1528 = vrot.slane %v809, 4
    %v1529 = vrot.slane %v809, 6
    %v1530 = vrot.slane %v812, 2
    %v1531 = vrot.slane %v812, 4
    %v1532 = vrot.slane %v812, 6
    %v1533 = vrot.slane %v815, 2
    %v1534 = vrot.slane %v815, 4
    %v1535 = vrot.slane %v815, 6
    %v1536 = vrot.slane %v818, 2
    %v1537 = vrot.slane %v818, 4
    %v1538 = vrot.slane %v818, 6
    %v1539 = vrot.slane %v821, 2
    %v1540 = vrot.slane %v821, 4
    %v1541 = vrot.slane %v821, 6
    %v1542 = vrot.slane %v824, 2
    %v1543 = vrot.slane %v824, 4
    %v1544 = vrot.slane %v824, 6
    %v1545 = vrot.slane %v827, 2
    %v1546 = vrot.slane %v827, 4
    %v1547 = vrot.slane %v827, 6
    %v1548 = vrot.slane %v830, 2
    %v1549 = vrot.slane %v830, 4
    %v1550 = vrot.slane %v830, 6
    %v1551 = vrot.slane %v833, 2
    %v1552 = vrot.slane %v833, 4
    %v1553 = vrot.slane %v833, 6
    %v1554 = vrot.slane %v836, 2
    %v1555 = vrot.slane %v836, 4
    %v1556 = vrot.slane %v836, 6
    %v1557 = vrot.slane %v839, 2
    %v1558 = vrot.slane %v839, 4
    %v1559 = vrot.slane %v839, 6
    %v1560 = vrot.slane %v842, 2
    %v1561 = vrot.slane %v842, 4
    %v1562 = vrot.slane %v842, 6
    %v1563 = vrot.slane %v845, 2
    %v1564 = vrot.slane %v845, 4
    %v1565 = vrot.slane %v845, 6
    %v1566 = vrot.slane %v848, 2
    %v1567 = vrot.slane %v848, 4
    %v1568 = vrot.slane %v848, 6
    %v1569 = vrot.slane %v851, 2
    %v1570 = vrot.slane %v851, 4
    %v1571 = vrot.slane %v851, 6
    %v1572 = vrot.slane %v854, 2
    %v1573 = vrot.slane %v854, 4
    %v1574 = vrot.slane %v854, 6
    %v1575 = vrot.slane %v857, 2
    %v1576 = vrot.slane %v857, 4
    %v1577 = vrot.slane %v857, 6
    %v1578 = vrot.slane %v860, 2
    %v1579 = vrot.slane %v860, 4
    %v1580 = vrot.slane %v860, 6
    %v1581 = vrot.slane %v863, 2
    %v1582 = vrot.slane %v863, 4
    %v1583 = vrot.slane %v863, 6
    %v1584 = vrot.slane %v866, 2
    %v1585 = vrot.slane %v866, 4
    %v1586 = vrot.slane %v866, 6
    %v1587 = vrot.slane %v869, 2
    %v1588 = vrot.slane %v869, 4
    %v1589 = vrot.slane %v869, 6
    %v1590 = vrot.slane %v872, 2
    %v1591 = vrot.slane %v872, 4
    %v1592 = vrot.slane %v872, 6
    %v1593 = vrot.slane %v875, 2
    %v1594 = vrot.slane %v875, 4
    %v1595 = vrot.slane %v875, 6
    %v1596 = vrot.slane %v878, 2
    %v1597 = vrot.slane %v878, 4
    %v1598 = vrot.slane %v878, 6
    %v1599 = vrot.slane %v881, 2
    %v1600 = vrot.slane %v881, 4
    %v1601 = vrot.slane %v881, 6
    %v1602 = vrot.slane %v884, 2
    %v1603 = vrot.slane %v884, 4
    %v1604 = vrot.slane %v884, 6
    %v1605 = vrot.slane %v887, 2
    %v1606 = vrot.slane %v887, 4
    %v1607 = vrot.slane %v887, 6
    %v1608 = vrot.slane %v890, 2
    %v1609 = vrot.slane %v890, 4
    %v1610 = vrot.slane %v890, 6
    %v1611 = vrot.slane %v893, 2
    %v1612 = vrot.slane %v893, 4
    %v1613 = vrot.slane %v893, 6
    %v1614 = vrot.slane %v896, 2
    %v1615 = vrot.slane %v896, 4
    %v1616 = vrot.slane %v896, 6
    %v1617 = vrot.slane %v899, 2
    %v1618 = vrot.slane %v899, 4
    %v1619 = vrot.slane %v899, 6
    %v1620 = vrot.slane %v902, 2
    %v1621 = vrot.slane %v902, 4
    %v1622 = vrot.slane %v902, 6
    %v1623 = vrot.slane %v905, 2
    %v1624 = vrot.slane %v905, 4
    %v1625 = vrot.slane %v905, 6
    %v1626 = vrot.slane %v908, 2
    %v1627 = vrot.slane %v908, 4
    %v1628 = vrot.slane %v908, 6
    %v1629 = vrot.slane %v911, 2
    %v1630 = vrot.slane %v911, 4
    %v1631 = vrot.slane %v911, 6
    %v1632 = vrot.slane %v914, 2
    %v1633 = vrot.slane %v914, 4
    %v1634 = vrot.slane %v914, 6
    %v1635 = vrot.slane %v917, 2
    %v1636 = vrot.slane %v917, 4
    %v1637 = vrot.slane %v917, 6
    %v1638 = vrot.slane %v920, 2
    %v1639 = vrot.slane %v920, 4
    %v1640 = vrot.slane %v920, 6
    %v1641 = vrot.slane %v923, 2
    %v1642 = vrot.slane %v923, 4
    %v1643 = vrot.slane %v923, 6
    %v1644 = vrot.slane %v926, 2
    %v1645 = vrot.slane %v926, 4
    %v1646 = vrot.slane %v926, 6
    %v1647 = vrot.slane %v929, 2
    %v1648 = vrot.slane %v929, 4
    %v1649 = vrot.slane %v929, 6
    %v1650 = vrot.slane %v932, 2
    %v1651 = vrot.slane %v932, 4
    %v1652 = vrot.slane %v932, 6
    %v1653 = vrot.slane %v935, 2
    %v1654 = vrot.slane %v935, 4
    %v1655 = vrot.slane %v935, 6
    %v1656 = vrot.slane %v938, 2
    %v1657 = vrot.slane %v938, 4
    %v1658 = vrot.slane %v938, 6
    %v1659 = vrot.slane %v941, 2
    %v1660 = vrot.slane %v941, 4
    %v1661 = vrot.slane %v941, 6
    %v1662 = vrot.slane %v944, 2
    %v1663 = vrot.slane %v944, 4
    %v1664 = vrot.slane %v944, 6
    %v1665 = vrot.slane %v947, 2
    %v1666 = vrot.slane %v947, 4
    %v1667 = vrot.slane %v947, 6
    %v1668 = vrot.slane %v950, 2
    %v1669 = vrot.slane %v950, 4
    %v1670 = vrot.slane %v950, 6
    %v1671 = vrot.slane %v953, 2
    %v1672 = vrot.slane %v953, 4
    %v1673 = vrot.slane %v953, 6
    %v1674 = vrot.slane %v956, 2
    %v1675 = vrot.slane %v956, 4
    %v1676 = vrot.slane %v956, 6
    %v1677 = vrot.slane %v959, 2
    %v1678 = vrot.slane %v959, 4
    %v1679 = vrot.slane %v959, 6
    %v1680 = vrot.slane %v962, 2
    %v1681 = vrot.slane %v962, 4
    %v1682 = vrot.slane %v962, 6
    %v1683 = vrot.slane %v965, 2
    %v1684 = vrot.slane %v965, 4
    %v1685 = vrot.slane %v965, 6
    %v1686 = vrot.slane %v968, 2
    %v1687 = vrot.slane %v968, 4
    %v1688 = vrot.slane %v968, 6
    %1689 = vst [vmem:[#allocation1] ss:$4 sm:$0xff] %v789
    %s1690 = scalar_lea.vmem [#allocation1], 1
    %1691 = vst [vmem:[%s1690] ss:$4 sm:$0xff] %v1029
    %s1692 = scalar_lea.vmem [#allocation1], 2
    %1693 = vst [vmem:[%s1692] ss:$4 sm:$0xff] %v1030
    %v1694 = vld.sshfl [vmem:[#allocation1] sm:$0xff pattern:$0x73625140]
    %1696 = vst [vmem:[#allocation1] ss:$4 sm:$0xff] %v790
    %s1697 = scalar_lea.vmem [#allocation1], 1
    %1698 = vst [vmem:[%s1697] ss:$4 sm:$0xff] %v1269
    %s1699 = scalar_lea.vmem [#allocation1], 2
    %1700 = vst [vmem:[%s1699] ss:$4 sm:$0xff] %v1270
    %v1701 = vld.sshfl [vmem:[#allocation1] sm:$0xff pattern:$0x73625140]
    %1703 = vmatpush.xpose.msra.mxu0 0.0
    %1704 = vmatpush.xpose.msra.mxu0 0.0
    %1705 = vmatpush.xpose.msra.mxu0 0.0
    %1706 = vmatpush.xpose.msra.mxu0 0.0
    %1707 = vmatpush.xpose.msra.mxu0 0.0
    %1708 = vmatpush.xpose.msra.mxu0 0.0
    %1709 = vmatpush.xpose.msra.mxu0 0.0
    %1710 = vmatpush.xpose.msra.mxu0 0.0
    %1711 = vmatpush.xpose.msra.mxu0 0.0
    %1712 = vmatpush.xpose.msra.mxu0 0.0
    %1713 = vmatpush.xpose.msra.mxu0 0.0
    %1714 = vmatpush.xpose.msra.mxu0 0.0
    %1715 = vmatpush.xpose.msra.mxu0 0.0
    %1716 = vmatpush.xpose.msra.mxu0 0.0
    %1717 = vmatpush.xpose.msra.mxu0 0.0
    %1718 = vmatpush.xpose.msra.mxu0 %v1701
    %1719 = vmatmul.f32.gmra.mxu0 %v1694
    %v1720 = vpop.f32.mrf.mxu0
    %v1721 = vadd.f32 0.0, %v1720
    %1722 = vdwg.mxu0
    %1723 = vst [vmem:[#allocation1] ss:$4 sm:$0xff] %v1031
    %s1724 = scalar_lea.vmem [#allocation1], 1
    %1725 = vst [vmem:[%s1724] ss:$4 sm:$0xff] %v792
    %s1726 = scalar_lea.vmem [#allocation1], 2
    %1727 = vst [vmem:[%s1726] ss:$4 sm:$0xff] %v1032
    %v1728 = vld.sshfl [vmem:[#allocation1] sm:$0xff pattern:$0x73625140]
    %1730 = vst [vmem:[#allocation1] ss:$4 sm:$0xff] %v1271
    %s1731 = scalar_lea.vmem [#allocation1], 1
    %1732 = vst [vmem:[%s1731] ss:$4 sm:$0xff] %v793
    %s1733 = scalar_lea.vmem [#allocation1], 2
    %1734 = vst [vmem:[%s1733] ss:$4 sm:$0xff] %v1272
    %v1735 = vld.sshfl [vmem:[#allocation1] sm:$0xff pattern:$0x73625140]
    %1737 = vmatpush.xpose.msra.mxu0 0.0
    %1738 = vmatpush.xpose.msra.mxu0 0.0
    %1739 = vmatpush.xpose.msra.mxu0 0.0
    %1740 = vmatpush.xpose.msra.mxu0 0.0
    %1741 = vmatpush.xpose.msra.mxu0 0.0
    %1742 = vmatpush.xpose.msra.mxu0 0.0
    %1743 = vmatpush.xpose.msra.mxu0 0.0
    %1744 = vmatpush.xpose.msra.mxu0 0.0
    %1745 = vmatpush.xpose.msra.mxu0 0.0
    %1746 = vmatpush.xpose.msra.mxu0 0.0
    %1747 = vmatpush.xpose.msra.mxu0 0.0
    %1748 = vmatpush.xpose.msra.mxu0 0.0
    %1749 = vmatpush.xpose.msra.mxu0 0.0
    %1750 = vmatpush.xpose.msra.mxu0 0.0
    %1751 = vmatpush.xpose.msra.mxu0 0.0
    %1752 = vmatpush.xpose.msra.mxu0 %v1735
    %1753 = vmatmul.f32.gmra.mxu0 %v1728
    %v1754 = vpop.f32.mrf.mxu0
    %v1755 = vadd.f32 0.0, %v1754
    %1756 = vdwg.mxu0
    %1757 = vst [vmem:[#allocation1] ss:$4 sm:$0xff] %v1033
    %s1758 = scalar_lea.vmem [#allocation1], 1
    %1759 = vst [vmem:[%s1758] ss:$4 sm:$0xff] %v1034
    %s1760 = scalar_lea.vmem [#allocation1], 2
    %1761 = vst [vmem:[%s1760] ss:$4 sm:$0xff] %v795
    %v1762 = vld.sshfl [vmem:[#allocation1] sm:$0xff pattern:$0x73625140]
    %1764 = vst [vmem:[#allocation1] ss:$4 sm:$0xff] %v1273
    %s1765 = scalar_lea.vmem [#allocation1], 1
    %1766 = vst [vmem:[%s1765] ss:$4 sm:$0xff] %v1274
    %s1767 = scalar_lea.vmem [#allocation1], 2
    %1768 = vst [vmem:[%s1767] ss:$4 sm:$0xff] %v796
    %v1769 = vld.sshfl [vmem:[#allocation1] sm:$0xff pattern:$0x73625140]
    %1771 = vmatpush.xpose.msra.mxu0 0.0
    %1772 = vmatpush.xpose.msra.mxu0 0.0
    %1773 = vmatpush.xpose.msra.mxu0 0.0
    %1774 = vmatpush.xpose.msra.mxu0 0.0
    %1775 = vmatpush.xpose.msra.mxu0 0.0
    %1776 = vmatpush.xpose.msra.mxu0 0.0
    %1777 = vmatpush.xpose.msra.mxu0 0.0
    %1778 = vmatpush.xpose.msra.mxu0 0.0
    %1779 = vmatpush.xpose.msra.mxu0 0.0
    %1780 = vmatpush.xpose.msra.mxu0 0.0
    %1781 = vmatpush.xpose.msra.mxu0 0.0
    %1782 = vmatpush.xpose.msra.mxu0 0.0
    %1783 = vmatpush.xpose.msra.mxu0 0.0
    %1784 = vmatpush.xpose.msra.mxu0 0.0
    %1785 = vmatpush.xpose.msra.mxu0 0.0
    %1786 = vmatpush.xpose.msra.mxu0 %v1769
    %1787 = vmatmul.f32.gmra.mxu0 %v1762
    %v1788 = vpop.f32.mrf.mxu0
    %v1789 = vadd.f32 0.0, %v1788
    %1790 = vdwg.mxu0
    %1791 = vst [vmem:[#allocation1] ss:$4 sm:$0xff] %v1035
    %s1792 = scalar_lea.vmem [#allocation1], 1
    %1793 = vst [vmem:[%s1792] ss:$4 sm:$0xff] %v1036
    %s1794 = scalar_lea.vmem [#allocation1], 2
    %1795 = vst [vmem:[%s1794] ss:$4 sm:$0xff] %v1037
    %v1796 = vld.sshfl [vmem:[#allocation1] sm:$0xff pattern:$0x73625140]
    %1798 = vst [vmem:[#allocation1] ss:$4 sm:$0xff] %v1275
    %s1799 = scalar_lea.vmem [#allocation1], 1
    %1800 = vst [vmem:[%s1799] ss:$4 sm:$0xff] %v1276
    %s1801 = scalar_lea.vmem [#allocation1], 2
    %1802 = vst [vmem:[%s1801] ss:$4 sm:$0xff] %v1277
    %v1803 = vld.sshfl [vmem:[#allocation1] sm:$0xff pattern:$0x73625140]
    %1805 = vmatpush.xpose.msra.mxu0 0.0
    %1806 = vmatpush.xpose.msra.mxu0 0.0
    %1807 = vmatpush.xpose.msra.mxu0 0.0
    %1808 = vmatpush.xpose.msra.mxu0 0.0
    %1809 = vmatpush.xpose.msra.mxu0 0.0
    %1810 = vmatpush.xpose.msra.mxu0 0.0
    %1811 = vmatpush.xpose.msra.mxu0 0.0
    %1812 = vmatpush.xpose.msra.mxu0 0.0
    %1813 = vmatpush.xpose.msra.mxu0 0.0
    %1814 = vmatpush.xpose.msra.mxu0 0.0
    %1815 = vmatpush.xpose.msra.mxu0 0.0
    %1816 = vmatpush.xpose.msra.mxu0 0.0
    %1817 = vmatpush.xpose.msra.mxu0 0.0
    %1818 = vmatpush.xpose.msra.mxu0 0.0
    %1819 = vmatpush.xpose.msra.mxu0 0.0
    %1820 = vmatpush.xpose.msra.mxu0 %v1803
    %1821 = vmatmul.f32.gmra.mxu0 %v1796
    %v1822 = vpop.f32.mrf.mxu0
    %v1823 = vadd.f32 0.0, %v1822
    %1824 = vdwg.mxu0
    %1825 = vst [vmem:[#allocation1] ss:$4 sm:$0xff] %v798
    %s1826 = scalar_lea.vmem [#allocation1], 1
    %1827 = vst [vmem:[%s1826] ss:$4 sm:$0xff] %v1038
    %s1828 = scalar_lea.vmem [#allocation1], 2
    %1829 = vst [vmem:[%s1828] ss:$4 sm:$0xff] %v1039
    %v1830 = vld.sshfl [vmem:[#allocation1] sm:$0xff pattern:$0x73625140]
    %1832 = vst [vmem:[#allocation1] ss:$4 sm:$0xff] %v799
    %s1833 = scalar_lea.vmem [#allocation1], 1
    %1834 = vst [vmem:[%s1833] ss:$4 sm:$0xff] %v1278
    %s1835 = scalar_lea.vmem [#allocation1], 2
    %1836 = vst [vmem:[%s1835] ss:$4 sm:$0xff] %v1279
    %v1837 = vld.sshfl [vmem:[#allocation1] sm:$0xff pattern:$0x73625140]
    %1839 = vmatpush.xpose.msra.mxu0 0.0
    %1840 = vmatpush.xpose.msra.mxu0 0.0
    %1841 = vmatpush.xpose.msra.mxu0 0.0
    %1842 = vmatpush.xpose.msra.mxu0 0.0
    %1843 = vmatpush.xpose.msra.mxu0 0.0
    %1844 = vmatpush.xpose.msra.mxu0 0.0
    %1845 = vmatpush.xpose.msra.mxu0 0.0
    %1846 = vmatpush.xpose.msra.mxu0 0.0
    %1847 = vmatpush.xpose.msra.mxu0 0.0
    %1848 = vmatpush.xpose.msra.mxu0 0.0
    %1849 = vmatpush.xpose.msra.mxu0 0.0
    %1850 = vmatpush.xpose.msra.mxu0 0.0
    %1851 = vmatpush.xpose.msra.mxu0 0.0
    %1852 = vmatpush.xpose.msra.mxu0 0.0
    %1853 = vmatpush.xpose.msra.mxu0 0.0
    %1854 = vmatpush.xpose.msra.mxu0 %v1837
    %1855 = vmatmul.f32.gmra.mxu0 %v1830
    %v1856 = vpop.f32.mrf.mxu0
    %v1857 = vadd.f32 0.0, %v1856
    %1858 = vdwg.mxu0
    %1859 = vst [vmem:[#allocation1] ss:$4 sm:$0xff] %v1040
    %s1860 = scalar_lea.vmem [#allocation1], 1
    %1861 = vst [vmem:[%s1860] ss:$4 sm:$0xff] %v801
    %s1862 = scalar_lea.vmem [#allocation1], 2
    %1863 = vst [vmem:[%s1862] ss:$4 sm:$0xff] %v1041
    %v1864 = vld.sshfl [vmem:[#allocation1] sm:$0xff pattern:$0x73625140]
    %1866 = vst [vmem:[#allocation1] ss:$4 sm:$0xff] %v1280
    %s1867 = scalar_lea.vmem [#allocation1], 1
    %1868 = vst [vmem:[%s1867] ss:$4 sm:$0xff] %v802
    %s1869 = scalar_lea.vmem [#allocation1], 2
    %1870 = vst [vmem:[%s1869] ss:$4 sm:$0xff] %v1281
    %v1871 = vld.sshfl [vmem:[#allocation1] sm:$0xff pattern:$0x73625140]
    %1873 = vmatpush.xpose.msra.mxu0 0.0
    %1874 = vmatpush.xpose.msra.mxu0 0.0
    %1875 = vmatpush.xpose.msra.mxu0 0.0
    %1876 = vmatpush.xpose.msra.mxu0 0.0
    %1877 = vmatpush.xpose.msra.mxu0 0.0
    %1878 = vmatpush.xpose.msra.mxu0 0.0
    %1879 = vmatpush.xpose.msra.mxu0 0.0
    %1880 = vmatpush.xpose.msra.mxu0 0.0
    %1881 = vmatpush.xpose.msra.mxu0 0.0
    %1882 = vmatpush.xpose.msra.mxu0 0.0
    %1883 = vmatpush.xpose.msra.mxu0 0.0
    %1884 = vmatpush.xpose.msra.mxu0 0.0
    %1885 = vmatpush.xpose.msra.mxu0 0.0
    %1886 = vmatpush.xpose.msra.mxu0 0.0
    %1887 = vmatpush.xpose.msra.mxu0 0.0
    %1888 = vmatpush.xpose.msra.mxu0 %v1871
    %1889 = vmatmul.f32.gmra.mxu0 %v1864
    %v1890 = vpop.f32.mrf.mxu0
    %v1891 = vadd.f32 0.0, %v1890
    %1892 = vdwg.mxu0
    %1893 = vst [vmem:[#allocation1] ss:$4 sm:$0xff] %v1042
    %s1894 = scalar_lea.vmem [#allocation1], 1
    %1895 = vst [vmem:[%s1894] ss:$4 sm:$0xff] %v1043
    %s1896 = scalar_lea.vmem [#allocation1], 2
    %1897 = vst [vmem:[%s1896] ss:$4 sm:$0xff] %v804
    %v1898 = vld.sshfl [vmem:[#allocation1] sm:$0xff pattern:$0x73625140]
    %1900 = vst [vmem:[#allocation1] ss:$4 sm:$0xff] %v1282
    %s1901 = scalar_lea.vmem [#allocation1], 1
    %1902 = vst [vmem:[%s1901] ss:$4 sm:$0xff] %v1283
    %s1903 = scalar_lea.vmem [#allocation1], 2
    %1904 = vst [vmem:[%s1903] ss:$4 sm:$0xff] %v805
    %v1905 = vld.sshfl [vmem:[#allocation1] sm:$0xff pattern:$0x73625140]
    %1907 = vmatpush.xpose.msra.mxu0 0.0
    %1908 = vmatpush.xpose.msra.mxu0 0.0
    %1909 = vmatpush.xpose.msra.mxu0 0.0
    %1910 = vmatpush.xpose.msra.mxu0 0.0
    %1911 = vmatpush.xpose.msra.mxu0 0.0
    %1912 = vmatpush.xpose.msra.mxu0 0.0
    %1913 = vmatpush.xpose.msra.mxu0 0.0
    %1914 = vmatpush.xpose.msra.mxu0 0.0
    %1915 = vmatpush.xpose.msra.mxu0 0.0
    %1916 = vmatpush.xpose.msra.mxu0 0.0
    %1917 = vmatpush.xpose.msra.mxu0 0.0
    %1918 = vmatpush.xpose.msra.mxu0 0.0
    %1919 = vmatpush.xpose.msra.mxu0 0.0
    %1920 = vmatpush.xpose.msra.mxu0 0.0
    %1921 = vmatpush.xpose.msra.mxu0 0.0
    %1922 = vmatpush.xpose.msra.mxu0 %v1905
    %1923 = vmatmul.f32.gmra.mxu0 %v1898
    %v1924 = vpop.f32.mrf.mxu0
    %v1925 = vadd.f32 0.0, %v1924
    %1926 = vdwg.mxu0
    %1927 = vst [vmem:[#allocation1] ss:$4 sm:$0xff] %v1044
    %s1928 = scalar_lea.vmem [#allocation1], 1
    %1929 = vst [vmem:[%s1928] ss:$4 sm:$0xff] %v1045
    %s1930 = scalar_lea.vmem [#allocation1], 2
    %1931 = vst [vmem:[%s1930] ss:$4 sm:$0xff] %v1046
    %v1932 = vld.sshfl [vmem:[#allocation1] sm:$0xff pattern:$0x73625140]
    %1934 = vst [vmem:[#allocation1] ss:$4 sm:$0xff] %v1284
    %s1935 = scalar_lea.vmem [#allocation1], 1
    %1936 = vst [vmem:[%s1935] ss:$4 sm:$0xff] %v1285
    %s1937 = scalar_lea.vmem [#allocation1], 2
    %1938 = vst [vmem:[%s1937] ss:$4 sm:$0xff] %v1286
    %v1939 = vld.sshfl [vmem:[#allocation1] sm:$0xff pattern:$0x73625140]
    %1941 = vmatpush.xpose.msra.mxu0 0.0
    %1942 = vmatpush.xpose.msra.mxu0 0.0
    %1943 = vmatpush.xpose.msra.mxu0 0.0
    %1944 = vmatpush.xpose.msra.mxu0 0.0
    %1945 = vmatpush.xpose.msra.mxu0 0.0
    %1946 = vmatpush.xpose.msra.mxu0 0.0
    %1947 = vmatpush.xpose.msra.mxu0 0.0
    %1948 = vmatpush.xpose.msra.mxu0 0.0
    %1949 = vmatpush.xpose.msra.mxu0 0.0
    %1950 = vmatpush.xpose.msra.mxu0 0.0
    %1951 = vmatpush.xpose.msra.mxu0 0.0
    %1952 = vmatpush.xpose.msra.mxu0 0.0
    %1953 = vmatpush.xpose.msra.mxu0 0.0
    %1954 = vmatpush.xpose.msra.mxu0 0.0
    %1955 = vmatpush.xpose.msra.mxu0 0.0
    %1956 = vmatpush.xpose.msra.mxu0 %v1939
    %1957 = vmatmul.f32.gmra.mxu0 %v1932
    %v1958 = vpop.f32.mrf.mxu0
    %v1959 = vadd.f32 0.0, %v1958
    %1960 = vdwg.mxu0
    %1961 = vst [vmem:[#allocation1] ss:$4 sm:$0xff] %v807
    %s1962 = scalar_lea.vmem [#allocation1], 1
    %1963 = vst [vmem:[%s1962] ss:$4 sm:$0xff] %v1047
    %s1964 = scalar_lea.vmem [#allocation1], 2
    %1965 = vst [vmem:[%s1964] ss:$4 sm:$0xff] %v1048
    %v1966 = vld.sshfl [vmem:[#allocation1] sm:$0xff pattern:$0x73625140]
    %1968 = vst [vmem:[#allocation1] ss:$4 sm:$0xff] %v808
    %s1969 = scalar_lea.vmem [#allocation1], 1
    %1970 = vst [vmem:[%s1969] ss:$4 sm:$0xff] %v1287
    %s1971 = scalar_lea.vmem [#allocation1], 2
    %1972 = vst [vmem:[%s1971] ss:$4 sm:$0xff] %v1288
    %v1973 = vld.sshfl [vmem:[#allocation1] sm:$0xff pattern:$0x73625140]
    %1975 = vmatpush.xpose.msra.mxu0 0.0
    %1976 = vmatpush.xpose.msra.mxu0 0.0
    %1977 = vmatpush.xpose.msra.mxu0 0.0
    %1978 = vmatpush.xpose.msra.mxu0 0.0
    %1979 = vmatpush.xpose.msra.mxu0 0.0
    %1980 = vmatpush.xpose.msra.mxu0 0.0
    %1981 = vmatpush.xpose.msra.mxu0 0.0
    %1982 = vmatpush.xpose.msra.mxu0 0.0
    %1983 = vmatpush.xpose.msra.mxu0 0.0
    %1984 = vmatpush.xpose.msra.mxu0 0.0
    %1985 = vmatpush.xpose.msra.mxu0 0.0
    %1986 = vmatpush.xpose.msra.mxu0 0.0
    %1987 = vmatpush.xpose.msra.mxu0 0.0
    %1988 = vmatpush.xpose.msra.mxu0 0.0
    %1989 = vmatpush.xpose.msra.mxu0 0.0
    %1990 = vmatpush.xpose.msra.mxu0 %v1973
    %1991 = vmatmul.f32.gmra.mxu0 %v1966
    %v1992 = vpop.f32.mrf.mxu0
    %v1993 = vadd.f32 0.0, %v1992
    %1994 = vdwg.mxu0
    %1995 = vst [vmem:[#allocation1] ss:$4 sm:$0xff] %v1049
    %s1996 = scalar_lea.vmem [#allocation1], 1
    %1997 = vst [vmem:[%s1996] ss:$4 sm:$0xff] %v810
    %s1998 = scalar_lea.vmem [#allocation1], 2
    %1999 = vst [vmem:[%s1998] ss:$4 sm:$0xff] %v1050
    %v2000 = vld.sshfl [vmem:[#allocation1] sm:$0xff pattern:$0x73625140]
    %2002 = vst [vmem:[#allocation1] ss:$4 sm:$0xff] %v1289
    %s2003 = scalar_lea.vmem [#allocation1], 1
    %2004 = vst [vmem:[%s2003] ss:$4 sm:$0xff] %v811
    %s2005 = scalar_lea.vmem [#allocation1], 2
    %2006 = vst [vmem:[%s2005] ss:$4 sm:$0xff] %v1290
    %v2007 = vld.sshfl [vmem:[#allocation1] sm:$0xff pattern:$0x73625140]
    %2009 = vmatpush.xpose.msra.mxu0 0.0
    %2010 = vmatpush.xpose.msra.mxu0 0.0
    %2011 = vmatpush.xpose.msra.mxu0 0.0
    %2012 = vmatpush.xpose.msra.mxu0 0.0
    %2013 = vmatpush.xpose.msra.mxu0 0.0
    %2014 = vmatpush.xpose.msra.mxu0 0.0
    %2015 = vmatpush.xpose.msra.mxu0 0.0
    %2016 = vmatpush.xpose.msra.mxu0 0.0
    %2017 = vmatpush.xpose.msra.mxu0 0.0
    %2018 = vmatpush.xpose.msra.mxu0 0.0
    %2019 = vmatpush.xpose.msra.mxu0 0.0
    %2020 = vmatpush.xpose.msra.mxu0 0.0
    %2021 = vmatpush.xpose.msra.mxu0 0.0
    %2022 = vmatpush.xpose.msra.mxu0 0.0
    %2023 = vmatpush.xpose.msra.mxu0 0.0
    %2024 = vmatpush.xpose.msra.mxu0 %v2007
    %2025 = vmatmul.f32.gmra.mxu0 %v2000
    %v2026 = vpop.f32.mrf.mxu0
    %v2027 = vadd.f32 0.0, %v2026
    %2028 = vdwg.mxu0
    %2029 = vst [vmem:[#allocation1] ss:$4 sm:$0xff] %v1051
    %s2030 = scalar_lea.vmem [#allocation1], 1
    %2031 = vst [vmem:[%s2030] ss:$4 sm:$0xff] %v1052
    %s2032 = scalar_lea.vmem [#allocation1], 2
    %2033 = vst [vmem:[%s2032] ss:$4 sm:$0xff] %v813
    %v2034 = vld.sshfl [vmem:[#allocation1] sm:$0xff pattern:$0x73625140]
    %2036 = vst [vmem:[#allocation1] ss:$4 sm:$0xff] %v1291
    %s2037 = scalar_lea.vmem [#allocation1], 1
    %2038 = vst [vmem:[%s2037] ss:$4 sm:$0xff] %v1292
    %s2039 = scalar_lea.vmem [#allocation1], 2
    %2040 = vst [vmem:[%s2039] ss:$4 sm:$0xff] %v814
    %v2041 = vld.sshfl [vmem:[#allocation1] sm:$0xff pattern:$0x73625140]
    %2043 = vmatpush.xpose.msra.mxu0 0.0
    %2044 = vmatpush.xpose.msra.mxu0 0.0
    %2045 = vmatpush.xpose.msra.mxu0 0.0
    %2046 = vmatpush.xpose.msra.mxu0 0.0
    %2047 = vmatpush.xpose.msra.mxu0 0.0
    %2048 = vmatpush.xpose.msra.mxu0 0.0
    %2049 = vmatpush.xpose.msra.mxu0 0.0
    %2050 = vmatpush.xpose.msra.mxu0 0.0
    %2051 = vmatpush.xpose.msra.mxu0 0.0
    %2052 = vmatpush.xpose.msra.mxu0 0.0
    %2053 = vmatpush.xpose.msra.mxu0 0.0
    %2054 = vmatpush.xpose.msra.mxu0 0.0
    %2055 = vmatpush.xpose.msra.mxu0 0.0
    %2056 = vmatpush.xpose.msra.mxu0 0.0
    %2057 = vmatpush.xpose.msra.mxu0 0.0
    %2058 = vmatpush.xpose.msra.mxu0 %v2041
    %2059 = vmatmul.f32.gmra.mxu0 %v2034
    %v2060 = vpop.f32.mrf.mxu0
    %v2061 = vadd.f32 0.0, %v2060
    %2062 = vdwg.mxu0
    %2063 = vst [vmem:[#allocation1] ss:$4 sm:$0xff] %v1053
    %s2064 = scalar_lea.vmem [#allocation1], 1
    %2065 = vst [vmem:[%s2064] ss:$4 sm:$0xff] %v1054
    %s2066 = scalar_lea.vmem [#allocation1], 2
    %2067 = vst [vmem:[%s2066] ss:$4 sm:$0xff] %v1055
    %v2068 = vld.sshfl [vmem:[#allocation1] sm:$0xff pattern:$0x73625140]
    %2070 = vst [vmem:[#allocation1] ss:$4 sm:$0xff] %v1293
    %s2071 = scalar_lea.vmem [#allocation1], 1
    %2072 = vst [vmem:[%s2071] ss:$4 sm:$0xff] %v1294
    %s2073 = scalar_lea.vmem [#allocation1], 2
    %2074 = vst [vmem:[%s2073] ss:$4 sm:$0xff] %v1295
    %v2075 = vld.sshfl [vmem:[#allocation1] sm:$0xff pattern:$0x73625140]
    %2077 = vmatpush.xpose.msra.mxu0 0.0
    %2078 = vmatpush.xpose.msra.mxu0 0.0
    %2079 = vmatpush.xpose.msra.mxu0 0.0
    %2080 = vmatpush.xpose.msra.mxu0 0.0
    %2081 = vmatpush.xpose.msra.mxu0 0.0
    %2082 = vmatpush.xpose.msra.mxu0 0.0
    %2083 = vmatpush.xpose.msra.mxu0 0.0
    %2084 = vmatpush.xpose.msra.mxu0 0.0
    %2085 = vmatpush.xpose.msra.mxu0 0.0
    %2086 = vmatpush.xpose.msra.mxu0 0.0
    %2087 = vmatpush.xpose.msra.mxu0 0.0
    %2088 = vmatpush.xpose.msra.mxu0 0.0
    %2089 = vmatpush.xpose.msra.mxu0 0.0
    %2090 = vmatpush.xpose.msra.mxu0 0.0
    %2091 = vmatpush.xpose.msra.mxu0 0.0
    %2092 = vmatpush.xpose.msra.mxu0 %v2075
    %2093 = vmatmul.f32.gmra.mxu0 %v2068
    %v2094 = vpop.f32.mrf.mxu0
    %v2095 = vadd.f32 0.0, %v2094
    %2096 = vdwg.mxu0
    %2097 = vst [vmem:[#allocation1] ss:$4 sm:$0xff] %v816
    %s2098 = scalar_lea.vmem [#allocation1], 1
    %2099 = vst [vmem:[%s2098] ss:$4 sm:$0xff] %v1056
    %s2100 = scalar_lea.vmem [#allocation1], 2
    %2101 = vst [vmem:[%s2100] ss:$4 sm:$0xff] %v1057
    %v2102 = vld.sshfl [vmem:[#allocation1] sm:$0xff pattern:$0x73625140]
    %2104 = vst [vmem:[#allocation1] ss:$4 sm:$0xff] %v817
    %s2105 = scalar_lea.vmem [#allocation1], 1
    %2106 = vst [vmem:[%s2105] ss:$4 sm:$0xff] %v1296
    %s2107 = scalar_lea.vmem [#allocation1], 2
    %2108 = vst [vmem:[%s2107] ss:$4 sm:$0xff] %v1297
    %v2109 = vld.sshfl [vmem:[#allocation1] sm:$0xff pattern:$0x73625140]
    %2111 = vmatpush.xpose.msra.mxu0 0.0
    %2112 = vmatpush.xpose.msra.mxu0 0.0
    %2113 = vmatpush.xpose.msra.mxu0 0.0
    %2114 = vmatpush.xpose.msra.mxu0 0.0
    %2115 = vmatpush.xpose.msra.mxu0 0.0
    %2116 = vmatpush.xpose.msra.mxu0 0.0
    %2117 = vmatpush.xpose.msra.mxu0 0.0
    %2118 = vmatpush.xpose.msra.mxu0 0.0
    %2119 = vmatpush.xpose.msra.mxu0 0.0
    %2120 = vmatpush.xpose.msra.mxu0 0.0
    %2121 = vmatpush.xpose.msra.mxu0 0.0
    %2122 = vmatpush.xpose.msra.mxu0 0.0
    %2123 = vmatpush.xpose.msra.mxu0 0.0
    %2124 = vmatpush.xpose.msra.mxu0 0.0
    %2125 = vmatpush.xpose.msra.mxu0 0.0
    %2126 = vmatpush.xpose.msra.mxu0 %v2109
    %2127 = vmatmul.f32.gmra.mxu0 %v2102
    %v2128 = vpop.f32.mrf.mxu0
    %v2129 = vadd.f32 0.0, %v2128
    %2130 = vdwg.mxu0
    %2131 = vst [vmem:[#allocation1] ss:$4 sm:$0xff] %v1058
    %s2132 = scalar_lea.vmem [#allocation1], 1
    %2133 = vst [vmem:[%s2132] ss:$4 sm:$0xff] %v819
    %s2134 = scalar_lea.vmem [#allocation1], 2
    %2135 = vst [vmem:[%s2134] ss:$4 sm:$0xff] %v1059
    %v2136 = vld.sshfl [vmem:[#allocation1] sm:$0xff pattern:$0x73625140]
    %2138 = vst [vmem:[#allocation1] ss:$4 sm:$0xff] %v1298
    %s2139 = scalar_lea.vmem [#allocation1], 1
    %2140 = vst [vmem:[%s2139] ss:$4 sm:$0xff] %v820
    %s2141 = scalar_lea.vmem [#allocation1], 2
    %2142 = vst [vmem:[%s2141] ss:$4 sm:$0xff] %v1299
    %v2143 = vld.sshfl [vmem:[#allocation1] sm:$0xff pattern:$0x73625140]
    %2145 = vmatpush.xpose.msra.mxu0 0.0
    %2146 = vmatpush.xpose.msra.mxu0 0.0
    %2147 = vmatpush.xpose.msra.mxu0 0.0
    %2148 = vmatpush.xpose.msra.mxu0 0.0
    %2149 = vmatpush.xpose.msra.mxu0 0.0
    %2150 = vmatpush.xpose.msra.mxu0 0.0
    %2151 = vmatpush.xpose.msra.mxu0 0.0
    %2152 = vmatpush.xpose.msra.mxu0 0.0
    %2153 = vmatpush.xpose.msra.mxu0 0.0
    %2154 = vmatpush.xpose.msra.mxu0 0.0
    %2155 = vmatpush.xpose.msra.mxu0 0.0
    %2156 = vmatpush.xpose.msra.mxu0 0.0
    %2157 = vmatpush.xpose.msra.mxu0 0.0
    %2158 = vmatpush.xpose.msra.mxu0 0.0
    %2159 = vmatpush.xpose.msra.mxu0 0.0
    %2160 = vmatpush.xpose.msra.mxu0 %v2143
    %2161 = vmatmul.f32.gmra.mxu0 %v2136
    %v2162 = vpop.f32.mrf.mxu0
    %v2163 = vadd.f32 0.0, %v2162
    %2164 = vdwg.mxu0
    %2165 = vst [vmem:[#allocation1] ss:$4 sm:$0xff] %v1060
    %s2166 = scalar_lea.vmem [#allocation1], 1
    %2167 = vst [vmem:[%s2166] ss:$4 sm:$0xff] %v1061
    %s2168 = scalar_lea.vmem [#allocation1], 2
    %2169 = vst [vmem:[%s2168] ss:$4 sm:$0xff] %v822
    %v2170 = vld.sshfl [vmem:[#allocation1] sm:$0xff pattern:$0x73625140]
    %2172 = vst [vmem:[#allocation1] ss:$4 sm:$0xff] %v1300
    %s2173 = scalar_lea.vmem [#allocation1], 1
    %2174 = vst [vmem:[%s2173] ss:$4 sm:$0xff] %v1301
    %s2175 = scalar_lea.vmem [#allocation1], 2
    %2176 = vst [vmem:[%s2175] ss:$4 sm:$0xff] %v823
    %v2177 = vld.sshfl [vmem:[#allocation1] sm:$0xff pattern:$0x73625140]
    %2179 = vmatpush.xpose.msra.mxu0 0.0
    %2180 = vmatpush.xpose.msra.mxu0 0.0
    %2181 = vmatpush.xpose.msra.mxu0 0.0
    %2182 = vmatpush.xpose.msra.mxu0 0.0
    %2183 = vmatpush.xpose.msra.mxu0 0.0
    %2184 = vmatpush.xpose.msra.mxu0 0.0
    %2185 = vmatpush.xpose.msra.mxu0 0.0
    %2186 = vmatpush.xpose.msra.mxu0 0.0
    %2187 = vmatpush.xpose.msra.mxu0 0.0
    %2188 = vmatpush.xpose.msra.mxu0 0.0
    %2189 = vmatpush.xpose.msra.mxu0 0.0
    %2190 = vmatpush.xpose.msra.mxu0 0.0
    %2191 = vmatpush.xpose.msra.mxu0 0.0
    %2192 = vmatpush.xpose.msra.mxu0 0.0
    %2193 = vmatpush.xpose.msra.mxu0 0.0
    %2194 = vmatpush.xpose.msra.mxu0 %v2177
    %2195 = vmatmul.f32.gmra.mxu0 %v2170
    %v2196 = vpop.f32.mrf.mxu0
    %v2197 = vadd.f32 0.0, %v2196
    %2198 = vdwg.mxu0
    %2199 = vst [vmem:[#allocation1] ss:$4 sm:$0xff] %v1062
    %s2200 = scalar_lea.vmem [#allocation1], 1
    %2201 = vst [vmem:[%s2200] ss:$4 sm:$0xff] %v1063
    %s2202 = scalar_lea.vmem [#allocation1], 2
    %2203 = vst [vmem:[%s2202] ss:$4 sm:$0xff] %v1064
    %v2204 = vld.sshfl [vmem:[#allocation1] sm:$0xff pattern:$0x73625140]
    %2206 = vst [vmem:[#allocation1] ss:$4 sm:$0xff] %v1302
    %s2207 = scalar_lea.vmem [#allocation1], 1
    %2208 = vst [vmem:[%s2207] ss:$4 sm:$0xff] %v1303
    %s2209 = scalar_lea.vmem [#allocation1], 2
    %2210 = vst [vmem:[%s2209] ss:$4 sm:$0xff] %v1304
    %v2211 = vld.sshfl [vmem:[#allocation1] sm:$0xff pattern:$0x73625140]
    %2213 = vmatpush.xpose.msra.mxu0 0.0
    %2214 = vmatpush.xpose.msra.mxu0 0.0
    %2215 = vmatpush.xpose.msra.mxu0 0.0
    %2216 = vmatpush.xpose.msra.mxu0 0.0
    %2217 = vmatpush.xpose.msra.mxu0 0.0
    %2218 = vmatpush.xpose.msra.mxu0 0.0
    %2219 = vmatpush.xpose.msra.mxu0 0.0
    %2220 = vmatpush.xpose.msra.mxu0 0.0
    %2221 = vmatpush.xpose.msra.mxu0 0.0
    %2222 = vmatpush.xpose.msra.mxu0 0.0
    %2223 = vmatpush.xpose.msra.mxu0 0.0
    %2224 = vmatpush.xpose.msra.mxu0 0.0
    %2225 = vmatpush.xpose.msra.mxu0 0.0
    %2226 = vmatpush.xpose.msra.mxu0 0.0
    %2227 = vmatpush.xpose.msra.mxu0 0.0
    %2228 = vmatpush.xpose.msra.mxu0 %v2211
    %2229 = vmatmul.f32.gmra.mxu0 %v2204
    %v2230 = vpop.f32.mrf.mxu0
    %v2231 = vadd.f32 0.0, %v2230
    %2232 = vdwg.mxu0
    %2233 = vst [vmem:[#allocation1] ss:$4 sm:$0xff] %v825
    %s2234 = scalar_lea.vmem [#allocation1], 1
    %2235 = vst [vmem:[%s2234] ss:$4 sm:$0xff] %v1065
    %s2236 = scalar_lea.vmem [#allocation1], 2
    %2237 = vst [vmem:[%s2236] ss:$4 sm:$0xff] %v1066
    %v2238 = vld.sshfl [vmem:[#allocation1] sm:$0xff pattern:$0x73625140]
    %2240 = vst [vmem:[#allocation1] ss:$4 sm:$0xff] %v826
    %s2241 = scalar_lea.vmem [#allocation1], 1
    %2242 = vst [vmem:[%s2241] ss:$4 sm:$0xff] %v1305
    %s2243 = scalar_lea.vmem [#allocation1], 2
    %2244 = vst [vmem:[%s2243] ss:$4 sm:$0xff] %v1306
    %v2245 = vld.sshfl [vmem:[#allocation1] sm:$0xff pattern:$0x73625140]
    %2247 = vmatpush.xpose.msra.mxu0 0.0
    %2248 = vmatpush.xpose.msra.mxu0 0.0
    %2249 = vmatpush.xpose.msra.mxu0 0.0
    %2250 = vmatpush.xpose.msra.mxu0 0.0
    %2251 = vmatpush.xpose.msra.mxu0 0.0
    %2252 = vmatpush.xpose.msra.mxu0 0.0
    %2253 = vmatpush.xpose.msra.mxu0 0.0
    %2254 = vmatpush.xpose.msra.mxu0 0.0
    %2255 = vmatpush.xpose.msra.mxu0 0.0
    %2256 = vmatpush.xpose.msra.mxu0 0.0
    %2257 = vmatpush.xpose.msra.mxu0 0.0
    %2258 = vmatpush.xpose.msra.mxu0 0.0
    %2259 = vmatpush.xpose.msra.mxu0 0.0
    %2260 = vmatpush.xpose.msra.mxu0 0.0
    %2261 = vmatpush.xpose.msra.mxu0 0.0
    %2262 = vmatpush.xpose.msra.mxu0 %v2245
    %2263 = vmatmul.f32.gmra.mxu0 %v2238
    %v2264 = vpop.f32.mrf.mxu0
    %v2265 = vadd.f32 0.0, %v2264
    %2266 = vdwg.mxu0
    %2267 = vst [vmem:[#allocation1] ss:$4 sm:$0xff] %v1067
    %s2268 = scalar_lea.vmem [#allocation1], 1
    %2269 = vst [vmem:[%s2268] ss:$4 sm:$0xff] %v828
    %s2270 = scalar_lea.vmem [#allocation1], 2
    %2271 = vst [vmem:[%s2270] ss:$4 sm:$0xff] %v1068
    %v2272 = vld.sshfl [vmem:[#allocation1] sm:$0xff pattern:$0x73625140]
    %2274 = vst [vmem:[#allocation1] ss:$4 sm:$0xff] %v1307
    %s2275 = scalar_lea.vmem [#allocation1], 1
    %2276 = vst [vmem:[%s2275] ss:$4 sm:$0xff] %v829
    %s2277 = scalar_lea.vmem [#allocation1], 2
    %2278 = vst [vmem:[%s2277] ss:$4 sm:$0xff] %v1308
    %v2279 = vld.sshfl [vmem:[#allocation1] sm:$0xff pattern:$0x73625140]
    %2281 = vmatpush.xpose.msra.mxu0 0.0
    %2282 = vmatpush.xpose.msra.mxu0 0.0
    %2283 = vmatpush.xpose.msra.mxu0 0.0
    %2284 = vmatpush.xpose.msra.mxu0 0.0
    %2285 = vmatpush.xpose.msra.mxu0 0.0
    %2286 = vmatpush.xpose.msra.mxu0 0.0
    %2287 = vmatpush.xpose.msra.mxu0 0.0
    %2288 = vmatpush.xpose.msra.mxu0 0.0
    %2289 = vmatpush.xpose.msra.mxu0 0.0
    %2290 = vmatpush.xpose.msra.mxu0 0.0
    %2291 = vmatpush.xpose.msra.mxu0 0.0
    %2292 = vmatpush.xpose.msra.mxu0 0.0
    %2293 = vmatpush.xpose.msra.mxu0 0.0
    %2294 = vmatpush.xpose.msra.mxu0 0.0
    %2295 = vmatpush.xpose.msra.mxu0 0.0
    %2296 = vmatpush.xpose.msra.mxu0 %v2279
    %2297 = vmatmul.f32.gmra.mxu0 %v2272
    %v2298 = vpop.f32.mrf.mxu0
    %v2299 = vadd.f32 0.0, %v2298
    %2300 = vdwg.mxu0
    %2301 = vst [vmem:[#allocation1] ss:$4 sm:$0xff] %v1069
    %s2302 = scalar_lea.vmem [#allocation1], 1
    %2303 = vst [vmem:[%s2302] ss:$4 sm:$0xff] %v1070
    %s2304 = scalar_lea.vmem [#allocation1], 2
    %2305 = vst [vmem:[%s2304] ss:$4 sm:$0xff] %v831
    %v2306 = vld.sshfl [vmem:[#allocation1] sm:$0xff pattern:$0x73625140]
    %2308 = vst [vmem:[#allocation1] ss:$4 sm:$0xff] %v1309
    %s2309 = scalar_lea.vmem [#allocation1], 1
    %2310 = vst [vmem:[%s2309] ss:$4 sm:$0xff] %v1310
    %s2311 = scalar_lea.vmem [#allocation1], 2
    %2312 = vst [vmem:[%s2311] ss:$4 sm:$0xff] %v832
    %v2313 = vld.sshfl [vmem:[#allocation1] sm:$0xff pattern:$0x73625140]
    %2315 = vmatpush.xpose.msra.mxu0 0.0
    %2316 = vmatpush.xpose.msra.mxu0 0.0
    %2317 = vmatpush.xpose.msra.mxu0 0.0
    %2318 = vmatpush.xpose.msra.mxu0 0.0
    %2319 = vmatpush.xpose.msra.mxu0 0.0
    %2320 = vmatpush.xpose.msra.mxu0 0.0
    %2321 = vmatpush.xpose.msra.mxu0 0.0
    %2322 = vmatpush.xpose.msra.mxu0 0.0
    %2323 = vmatpush.xpose.msra.mxu0 0.0
    %2324 = vmatpush.xpose.msra.mxu0 0.0
    %2325 = vmatpush.xpose.msra.mxu0 0.0
    %2326 = vmatpush.xpose.msra.mxu0 0.0
    %2327 = vmatpush.xpose.msra.mxu0 0.0
    %2328 = vmatpush.xpose.msra.mxu0 0.0
    %2329 = vmatpush.xpose.msra.mxu0 0.0
    %2330 = vmatpush.xpose.msra.mxu0 %v2313
    %2331 = vmatmul.f32.gmra.mxu0 %v2306
    %v2332 = vpop.f32.mrf.mxu0
    %v2333 = vadd.f32 0.0, %v2332
    %2334 = vdwg.mxu0
    %2335 = vst [vmem:[#allocation1] ss:$4 sm:$0xff] %v1071
    %s2336 = scalar_lea.vmem [#allocation1], 1
    %2337 = vst [vmem:[%s2336] ss:$4 sm:$0xff] %v1072
    %s2338 = scalar_lea.vmem [#allocation1], 2
    %2339 = vst [vmem:[%s2338] ss:$4 sm:$0xff] %v1073
    %v2340 = vld.sshfl [vmem:[#allocation1] sm:$0xff pattern:$0x73625140]
    %2342 = vst [vmem:[#allocation1] ss:$4 sm:$0xff] %v1311
    %s2343 = scalar_lea.vmem [#allocation1], 1
    %2344 = vst [vmem:[%s2343] ss:$4 sm:$0xff] %v1312
    %s2345 = scalar_lea.vmem [#allocation1], 2
    %2346 = vst [vmem:[%s2345] ss:$4 sm:$0xff] %v1313
    %v2347 = vld.sshfl [vmem:[#allocation1] sm:$0xff pattern:$0x73625140]
    %2349 = vmatpush.xpose.msra.mxu0 0.0
    %2350 = vmatpush.xpose.msra.mxu0 0.0
    %2351 = vmatpush.xpose.msra.mxu0 0.0
    %2352 = vmatpush.xpose.msra.mxu0 0.0
    %2353 = vmatpush.xpose.msra.mxu0 0.0
    %2354 = vmatpush.xpose.msra.mxu0 0.0
    %2355 = vmatpush.xpose.msra.mxu0 0.0
    %2356 = vmatpush.xpose.msra.mxu0 0.0
    %2357 = vmatpush.xpose.msra.mxu0 0.0
    %2358 = vmatpush.xpose.msra.mxu0 0.0
    %2359 = vmatpush.xpose.msra.mxu0 0.0
    %2360 = vmatpush.xpose.msra.mxu0 0.0
    %2361 = vmatpush.xpose.msra.mxu0 0.0
    %2362 = vmatpush.xpose.msra.mxu0 0.0
    %2363 = vmatpush.xpose.msra.mxu0 0.0
    %2364 = vmatpush.xpose.msra.mxu0 %v2347
    %2365 = vmatmul.f32.gmra.mxu0 %v2340
    %v2366 = vpop.f32.mrf.mxu0
    %v2367 = vadd.f32 0.0, %v2366
    %2368 = vdwg.mxu0
    %2369 = vst [vmem:[#allocation1] ss:$4 sm:$0xff] %v834
    %s2370 = scalar_lea.vmem [#allocation1], 1
    %2371 = vst [vmem:[%s2370] ss:$4 sm:$0xff] %v1074
    %s2372 = scalar_lea.vmem [#allocation1], 2
    %2373 = vst [vmem:[%s2372] ss:$4 sm:$0xff] %v1075
    %v2374 = vld.sshfl [vmem:[#allocation1] sm:$0xff pattern:$0x73625140]
    %2376 = vst [vmem:[#allocation1] ss:$4 sm:$0xff] %v835
    %s2377 = scalar_lea.vmem [#allocation1], 1
    %2378 = vst [vmem:[%s2377] ss:$4 sm:$0xff] %v1314
    %s2379 = scalar_lea.vmem [#allocation1], 2
    %2380 = vst [vmem:[%s2379] ss:$4 sm:$0xff] %v1315
    %v2381 = vld.sshfl [vmem:[#allocation1] sm:$0xff pattern:$0x73625140]
    %2383 = vmatpush.xpose.msra.mxu0 0.0
    %2384 = vmatpush.xpose.msra.mxu0 0.0
    %2385 = vmatpush.xpose.msra.mxu0 0.0
    %2386 = vmatpush.xpose.msra.mxu0 0.0
    %2387 = vmatpush.xpose.msra.mxu0 0.0
    %2388 = vmatpush.xpose.msra.mxu0 0.0
    %2389 = vmatpush.xpose.msra.mxu0 0.0
    %2390 = vmatpush.xpose.msra.mxu0 0.0
    %2391 = vmatpush.xpose.msra.mxu0 0.0
    %2392 = vmatpush.xpose.msra.mxu0 0.0
    %2393 = vmatpush.xpose.msra.mxu0 0.0
    %2394 = vmatpush.xpose.msra.mxu0 0.0
    %2395 = vmatpush.xpose.msra.mxu0 0.0
    %2396 = vmatpush.xpose.msra.mxu0 0.0
    %2397 = vmatpush.xpose.msra.mxu0 0.0
    %2398 = vmatpush.xpose.msra.mxu0 %v2381
    %2399 = vmatmul.f32.gmra.mxu0 %v2374
    %v2400 = vpop.f32.mrf.mxu0
    %v2401 = vadd.f32 0.0, %v2400
    %2402 = vdwg.mxu0
    %2403 = vst [vmem:[#allocation1] ss:$4 sm:$0xff] %v1076
    %s2404 = scalar_lea.vmem [#allocation1], 1
    %2405 = vst [vmem:[%s2404] ss:$4 sm:$0xff] %v837
    %s2406 = scalar_lea.vmem [#allocation1], 2
    %2407 = vst [vmem:[%s2406] ss:$4 sm:$0xff] %v1077
    %v2408 = vld.sshfl [vmem:[#allocation1] sm:$0xff pattern:$0x73625140]
    %2410 = vst [vmem:[#allocation1] ss:$4 sm:$0xff] %v1316
    %s2411 = scalar_lea.vmem [#allocation1], 1
    %2412 = vst [vmem:[%s2411] ss:$4 sm:$0xff] %v838
    %s2413 = scalar_lea.vmem [#allocation1], 2
    %2414 = vst [vmem:[%s2413] ss:$4 sm:$0xff] %v1317
    %v2415 = vld.sshfl [vmem:[#allocation1] sm:$0xff pattern:$0x73625140]
    %2417 = vmatpush.xpose.msra.mxu0 0.0
    %2418 = vmatpush.xpose.msra.mxu0 0.0
    %2419 = vmatpush.xpose.msra.mxu0 0.0
    %2420 = vmatpush.xpose.msra.mxu0 0.0
    %2421 = vmatpush.xpose.msra.mxu0 0.0
    %2422 = vmatpush.xpose.msra.mxu0 0.0
    %2423 = vmatpush.xpose.msra.mxu0 0.0
    %2424 = vmatpush.xpose.msra.mxu0 0.0
    %2425 = vmatpush.xpose.msra.mxu0 0.0
    %2426 = vmatpush.xpose.msra.mxu0 0.0
    %2427 = vmatpush.xpose.msra.mxu0 0.0
    %2428 = vmatpush.xpose.msra.mxu0 0.0
    %2429 = vmatpush.xpose.msra.mxu0 0.0
    %2430 = vmatpush.xpose.msra.mxu0 0.0
    %2431 = vmatpush.xpose.msra.mxu0 0.0
    %2432 = vmatpush.xpose.msra.mxu0 %v2415
    %2433 = vmatmul.f32.gmra.mxu0 %v2408
    %v2434 = vpop.f32.mrf.mxu0
    %v2435 = vadd.f32 0.0, %v2434
    %2436 = vdwg.mxu0
    %2437 = vst [vmem:[#allocation1] ss:$4 sm:$0xff] %v1078
    %s2438 = scalar_lea.vmem [#allocation1], 1
    %2439 = vst [vmem:[%s2438] ss:$4 sm:$0xff] %v1079
    %s2440 = scalar_lea.vmem [#allocation1], 2
    %2441 = vst [vmem:[%s2440] ss:$4 sm:$0xff] %v840
    %v2442 = vld.sshfl [vmem:[#allocation1] sm:$0xff pattern:$0x73625140]
    %2444 = vst [vmem:[#allocation1] ss:$4 sm:$0xff] %v1318
    %s2445 = scalar_lea.vmem [#allocation1], 1
    %2446 = vst [vmem:[%s2445] ss:$4 sm:$0xff] %v1319
    %s2447 = scalar_lea.vmem [#allocation1], 2
    %2448 = vst [vmem:[%s2447] ss:$4 sm:$0xff] %v841
    %v2449 = vld.sshfl [vmem:[#allocation1] sm:$0xff pattern:$0x73625140]
    %2451 = vmatpush.xpose.msra.mxu0 0.0
    %2452 = vmatpush.xpose.msra.mxu0 0.0
    %2453 = vmatpush.xpose.msra.mxu0 0.0
    %2454 = vmatpush.xpose.msra.mxu0 0.0
    %2455 = vmatpush.xpose.msra.mxu0 0.0
    %2456 = vmatpush.xpose.msra.mxu0 0.0
    %2457 = vmatpush.xpose.msra.mxu0 0.0
    %2458 = vmatpush.xpose.msra.mxu0 0.0
    %2459 = vmatpush.xpose.msra.mxu0 0.0
    %2460 = vmatpush.xpose.msra.mxu0 0.0
    %2461 = vmatpush.xpose.msra.mxu0 0.0
    %2462 = vmatpush.xpose.msra.mxu0 0.0
    %2463 = vmatpush.xpose.msra.mxu0 0.0
    %2464 = vmatpush.xpose.msra.mxu0 0.0
    %2465 = vmatpush.xpose.msra.mxu0 0.0
    %2466 = vmatpush.xpose.msra.mxu0 %v2449
    %2467 = vmatmul.f32.gmra.mxu0 %v2442
    %v2468 = vpop.f32.mrf.mxu0
    %v2469 = vadd.f32 0.0, %v2468
    %2470 = vdwg.mxu0
    %2471 = vst [vmem:[#allocation1] ss:$4 sm:$0xff] %v1080
    %s2472 = scalar_lea.vmem [#allocation1], 1
    %2473 = vst [vmem:[%s2472] ss:$4 sm:$0xff] %v1081
    %s2474 = scalar_lea.vmem [#allocation1], 2
    %2475 = vst [vmem:[%s2474] ss:$4 sm:$0xff] %v1082
    %v2476 = vld.sshfl [vmem:[#allocation1] sm:$0xff pattern:$0x73625140]
    %2478 = vst [vmem:[#allocation1] ss:$4 sm:$0xff] %v1320
    %s2479 = scalar_lea.vmem [#allocation1], 1
    %2480 = vst [vmem:[%s2479] ss:$4 sm:$0xff] %v1321
    %s2481 = scalar_lea.vmem [#allocation1], 2
    %2482 = vst [vmem:[%s2481] ss:$4 sm:$0xff] %v1322
    %v2483 = vld.sshfl [vmem:[#allocation1] sm:$0xff pattern:$0x73625140]
    %2485 = vmatpush.xpose.msra.mxu0 0.0
    %2486 = vmatpush.xpose.msra.mxu0 0.0
    %2487 = vmatpush.xpose.msra.mxu0 0.0
    %2488 = vmatpush.xpose.msra.mxu0 0.0
    %2489 = vmatpush.xpose.msra.mxu0 0.0
    %2490 = vmatpush.xpose.msra.mxu0 0.0
    %2491 = vmatpush.xpose.msra.mxu0 0.0
    %2492 = vmatpush.xpose.msra.mxu0 0.0
    %2493 = vmatpush.xpose.msra.mxu0 0.0
    %2494 = vmatpush.xpose.msra.mxu0 0.0
    %2495 = vmatpush.xpose.msra.mxu0 0.0
    %2496 = vmatpush.xpose.msra.mxu0 0.0
    %2497 = vmatpush.xpose.msra.mxu0 0.0
    %2498 = vmatpush.xpose.msra.mxu0 0.0
    %2499 = vmatpush.xpose.msra.mxu0 0.0
    %2500 = vmatpush.xpose.msra.mxu0 %v2483
    %2501 = vmatmul.f32.gmra.mxu0 %v2476
    %v2502 = vpop.f32.mrf.mxu0
    %v2503 = vadd.f32 0.0, %v2502
    %2504 = vdwg.mxu0
    %2505 = vst [vmem:[#allocation1] ss:$4 sm:$0xff] %v843
    %s2506 = scalar_lea.vmem [#allocation1], 1
    %2507 = vst [vmem:[%s2506] ss:$4 sm:$0xff] %v1083
    %s2508 = scalar_lea.vmem [#allocation1], 2
    %2509 = vst [vmem:[%s2508] ss:$4 sm:$0xff] %v1084
    %v2510 = vld.sshfl [vmem:[#allocation1] sm:$0xff pattern:$0x73625140]
    %2512 = vst [vmem:[#allocation1] ss:$4 sm:$0xff] %v844
    %s2513 = scalar_lea.vmem [#allocation1], 1
    %2514 = vst [vmem:[%s2513] ss:$4 sm:$0xff] %v1323
    %s2515 = scalar_lea.vmem [#allocation1], 2
    %2516 = vst [vmem:[%s2515] ss:$4 sm:$0xff] %v1324
    %v2517 = vld.sshfl [vmem:[#allocation1] sm:$0xff pattern:$0x73625140]
    %2519 = vmatpush.xpose.msra.mxu0 0.0
    %2520 = vmatpush.xpose.msra.mxu0 0.0
    %2521 = vmatpush.xpose.msra.mxu0 0.0
    %2522 = vmatpush.xpose.msra.mxu0 0.0
    %2523 = vmatpush.xpose.msra.mxu0 0.0
    %2524 = vmatpush.xpose.msra.mxu0 0.0
    %2525 = vmatpush.xpose.msra.mxu0 0.0
    %2526 = vmatpush.xpose.msra.mxu0 0.0
    %2527 = vmatpush.xpose.msra.mxu0 0.0
    %2528 = vmatpush.xpose.msra.mxu0 0.0
    %2529 = vmatpush.xpose.msra.mxu0 0.0
    %2530 = vmatpush.xpose.msra.mxu0 0.0
    %2531 = vmatpush.xpose.msra.mxu0 0.0
    %2532 = vmatpush.xpose.msra.mxu0 0.0
    %2533 = vmatpush.xpose.msra.mxu0 0.0
    %2534 = vmatpush.xpose.msra.mxu0 %v2517
    %2535 = vmatmul.f32.gmra.mxu0 %v2510
    %v2536 = vpop.f32.mrf.mxu0
    %v2537 = vadd.f32 0.0, %v2536
    %2538 = vdwg.mxu0
    %2539 = vst [vmem:[#allocation1] ss:$4 sm:$0xff] %v1085
    %s2540 = scalar_lea.vmem [#allocation1], 1
    %2541 = vst [vmem:[%s2540] ss:$4 sm:$0xff] %v846
    %s2542 = scalar_lea.vmem [#allocation1], 2
    %2543 = vst [vmem:[%s2542] ss:$4 sm:$0xff] %v1086
    %v2544 = vld.sshfl [vmem:[#allocation1] sm:$0xff pattern:$0x73625140]
    %2546 = vst [vmem:[#allocation1] ss:$4 sm:$0xff] %v1325
    %s2547 = scalar_lea.vmem [#allocation1], 1
    %2548 = vst [vmem:[%s2547] ss:$4 sm:$0xff] %v847
    %s2549 = scalar_lea.vmem [#allocation1], 2
    %2550 = vst [vmem:[%s2549] ss:$4 sm:$0xff] %v1326
    %v2551 = vld.sshfl [vmem:[#allocation1] sm:$0xff pattern:$0x73625140]
    %2553 = vmatpush.xpose.msra.mxu0 0.0
    %2554 = vmatpush.xpose.msra.mxu0 0.0
    %2555 = vmatpush.xpose.msra.mxu0 0.0
    %2556 = vmatpush.xpose.msra.mxu0 0.0
    %2557 = vmatpush.xpose.msra.mxu0 0.0
    %2558 = vmatpush.xpose.msra.mxu0 0.0
    %2559 = vmatpush.xpose.msra.mxu0 0.0
    %2560 = vmatpush.xpose.msra.mxu0 0.0
    %2561 = vmatpush.xpose.msra.mxu0 0.0
    %2562 = vmatpush.xpose.msra.mxu0 0.0
    %2563 = vmatpush.xpose.msra.mxu0 0.0
    %2564 = vmatpush.xpose.msra.mxu0 0.0
    %2565 = vmatpush.xpose.msra.mxu0 0.0
    %2566 = vmatpush.xpose.msra.mxu0 0.0
    %2567 = vmatpush.xpose.msra.mxu0 0.0
    %2568 = vmatpush.xpose.msra.mxu0 %v2551
    %2569 = vmatmul.f32.gmra.mxu0 %v2544
    %v2570 = vpop.f32.mrf.mxu0
    %v2571 = vadd.f32 0.0, %v2570
    %2572 = vdwg.mxu0
    %2573 = vst [vmem:[#allocation1] ss:$4 sm:$0xff] %v1087
    %s2574 = scalar_lea.vmem [#allocation1], 1
    %2575 = vst [vmem:[%s2574] ss:$4 sm:$0xff] %v1088
    %s2576 = scalar_lea.vmem [#allocation1], 2
    %2577 = vst [vmem:[%s2576] ss:$4 sm:$0xff] %v849
    %v2578 = vld.sshfl [vmem:[#allocation1] sm:$0xff pattern:$0x73625140]
    %2580 = vst [vmem:[#allocation1] ss:$4 sm:$0xff] %v1327
    %s2581 = scalar_lea.vmem [#allocation1], 1
    %2582 = vst [vmem:[%s2581] ss:$4 sm:$0xff] %v1328
    %s2583 = scalar_lea.vmem [#allocation1], 2
    %2584 = vst [vmem:[%s2583] ss:$4 sm:$0xff] %v850
    %v2585 = vld.sshfl [vmem:[#allocation1] sm:$0xff pattern:$0x73625140]
    %2587 = vmatpush.xpose.msra.mxu0 0.0
    %2588 = vmatpush.xpose.msra.mxu0 0.0
    %2589 = vmatpush.xpose.msra.mxu0 0.0
    %2590 = vmatpush.xpose.msra.mxu0 0.0
    %2591 = vmatpush.xpose.msra.mxu0 0.0
    %2592 = vmatpush.xpose.msra.mxu0 0.0
    %2593 = vmatpush.xpose.msra.mxu0 0.0
    %2594 = vmatpush.xpose.msra.mxu0 0.0
    %2595 = vmatpush.xpose.msra.mxu0 0.0
    %2596 = vmatpush.xpose.msra.mxu0 0.0
    %2597 = vmatpush.xpose.msra.mxu0 0.0
    %2598 = vmatpush.xpose.msra.mxu0 0.0
    %2599 = vmatpush.xpose.msra.mxu0 0.0
    %2600 = vmatpush.xpose.msra.mxu0 0.0
    %2601 = vmatpush.xpose.msra.mxu0 0.0
    %2602 = vmatpush.xpose.msra.mxu0 %v2585
    %2603 = vmatmul.f32.gmra.mxu0 %v2578
    %v2604 = vpop.f32.mrf.mxu0
    %v2605 = vadd.f32 0.0, %v2604
    %2606 = vdwg.mxu0
    %2607 = vst [vmem:[#allocation1] ss:$4 sm:$0xff] %v1089
    %s2608 = scalar_lea.vmem [#allocation1], 1
    %2609 = vst [vmem:[%s2608] ss:$4 sm:$0xff] %v1090
    %s2610 = scalar_lea.vmem [#allocation1], 2
    %2611 = vst [vmem:[%s2610] ss:$4 sm:$0xff] %v1091
    %v2612 = vld.sshfl [vmem:[#allocation1] sm:$0xff pattern:$0x73625140]
    %2614 = vst [vmem:[#allocation1] ss:$4 sm:$0xff] %v1329
    %s2615 = scalar_lea.vmem [#allocation1], 1
    %2616 = vst [vmem:[%s2615] ss:$4 sm:$0xff] %v1330
    %s2617 = scalar_lea.vmem [#allocation1], 2
    %2618 = vst [vmem:[%s2617] ss:$4 sm:$0xff] %v1331
    %v2619 = vld.sshfl [vmem:[#allocation1] sm:$0xff pattern:$0x73625140]
    %2621 = vmatpush.xpose.msra.mxu0 0.0
    %2622 = vmatpush.xpose.msra.mxu0 0.0
    %2623 = vmatpush.xpose.msra.mxu0 0.0
    %2624 = vmatpush.xpose.msra.mxu0 0.0
    %2625 = vmatpush.xpose.msra.mxu0 0.0
    %2626 = vmatpush.xpose.msra.mxu0 0.0
    %2627 = vmatpush.xpose.msra.mxu0 0.0
    %2628 = vmatpush.xpose.msra.mxu0 0.0
    %2629 = vmatpush.xpose.msra.mxu0 0.0
    %2630 = vmatpush.xpose.msra.mxu0 0.0
    %2631 = vmatpush.xpose.msra.mxu0 0.0
    %2632 = vmatpush.xpose.msra.mxu0 0.0
    %2633 = vmatpush.xpose.msra.mxu0 0.0
    %2634 = vmatpush.xpose.msra.mxu0 0.0
    %2635 = vmatpush.xpose.msra.mxu0 0.0
    %2636 = vmatpush.xpose.msra.mxu0 %v2619
    %2637 = vmatmul.f32.gmra.mxu0 %v2612
    %v2638 = vpop.f32.mrf.mxu0
    %v2639 = vadd.f32 0.0, %v2638
    %2640 = vdwg.mxu0
    %2641 = vst [vmem:[#allocation1] ss:$4 sm:$0xff] %v852
    %s2642 = scalar_lea.vmem [#allocation1], 1
    %2643 = vst [vmem:[%s2642] ss:$4 sm:$0xff] %v1092
    %s2644 = scalar_lea.vmem [#allocation1], 2
    %2645 = vst [vmem:[%s2644] ss:$4 sm:$0xff] %v1093
    %v2646 = vld.sshfl [vmem:[#allocation1] sm:$0xff pattern:$0x73625140]
    %2648 = vst [vmem:[#allocation1] ss:$4 sm:$0xff] %v853
    %s2649 = scalar_lea.vmem [#allocation1], 1
    %2650 = vst [vmem:[%s2649] ss:$4 sm:$0xff] %v1332
    %s2651 = scalar_lea.vmem [#allocation1], 2
    %2652 = vst [vmem:[%s2651] ss:$4 sm:$0xff] %v1333
    %v2653 = vld.sshfl [vmem:[#allocation1] sm:$0xff pattern:$0x73625140]
    %2655 = vmatpush.xpose.msra.mxu0 0.0
    %2656 = vmatpush.xpose.msra.mxu0 0.0
    %2657 = vmatpush.xpose.msra.mxu0 0.0
    %2658 = vmatpush.xpose.msra.mxu0 0.0
    %2659 = vmatpush.xpose.msra.mxu0 0.0
    %2660 = vmatpush.xpose.msra.mxu0 0.0
    %2661 = vmatpush.xpose.msra.mxu0 0.0
    %2662 = vmatpush.xpose.msra.mxu0 0.0
    %2663 = vmatpush.xpose.msra.mxu0 0.0
    %2664 = vmatpush.xpose.msra.mxu0 0.0
    %2665 = vmatpush.xpose.msra.mxu0 0.0
    %2666 = vmatpush.xpose.msra.mxu0 0.0
    %2667 = vmatpush.xpose.msra.mxu0 0.0
    %2668 = vmatpush.xpose.msra.mxu0 0.0
    %2669 = vmatpush.xpose.msra.mxu0 0.0
    %2670 = vmatpush.xpose.msra.mxu0 %v2653
    %2671 = vmatmul.f32.gmra.mxu0 %v2646
    %v2672 = vpop.f32.mrf.mxu0
    %v2673 = vadd.f32 0.0, %v2672
    %2674 = vdwg.mxu0
    %2675 = vst [vmem:[#allocation1] ss:$4 sm:$0xff] %v1094
    %s2676 = scalar_lea.vmem [#allocation1], 1
    %2677 = vst [vmem:[%s2676] ss:$4 sm:$0xff] %v855
    %s2678 = scalar_lea.vmem [#allocation1], 2
    %2679 = vst [vmem:[%s2678] ss:$4 sm:$0xff] %v1095
    %v2680 = vld.sshfl [vmem:[#allocation1] sm:$0xff pattern:$0x73625140]
    %2682 = vst [vmem:[#allocation1] ss:$4 sm:$0xff] %v1334
    %s2683 = scalar_lea.vmem [#allocation1], 1
    %2684 = vst [vmem:[%s2683] ss:$4 sm:$0xff] %v856
    %s2685 = scalar_lea.vmem [#allocation1], 2
    %2686 = vst [vmem:[%s2685] ss:$4 sm:$0xff] %v1335
    %v2687 = vld.sshfl [vmem:[#allocation1] sm:$0xff pattern:$0x73625140]
    %2689 = vmatpush.xpose.msra.mxu0 0.0
    %2690 = vmatpush.xpose.msra.mxu0 0.0
    %2691 = vmatpush.xpose.msra.mxu0 0.0
    %2692 = vmatpush.xpose.msra.mxu0 0.0
    %2693 = vmatpush.xpose.msra.mxu0 0.0
    %2694 = vmatpush.xpose.msra.mxu0 0.0
    %2695 = vmatpush.xpose.msra.mxu0 0.0
    %2696 = vmatpush.xpose.msra.mxu0 0.0
    %2697 = vmatpush.xpose.msra.mxu0 0.0
    %2698 = vmatpush.xpose.msra.mxu0 0.0
    %2699 = vmatpush.xpose.msra.mxu0 0.0
    %2700 = vmatpush.xpose.msra.mxu0 0.0
    %2701 = vmatpush.xpose.msra.mxu0 0.0
    %2702 = vmatpush.xpose.msra.mxu0 0.0
    %2703 = vmatpush.xpose.msra.mxu0 0.0
    %2704 = vmatpush.xpose.msra.mxu0 %v2687
    %2705 = vmatmul.f32.gmra.mxu0 %v2680
    %v2706 = vpop.f32.mrf.mxu0
    %v2707 = vadd.f32 0.0, %v2706
    %2708 = vdwg.mxu0
    %2709 = vst [vmem:[#allocation1] ss:$4 sm:$0xff] %v1096
    %s2710 = scalar_lea.vmem [#allocation1], 1
    %2711 = vst [vmem:[%s2710] ss:$4 sm:$0xff] %v1097
    %s2712 = scalar_lea.vmem [#allocation1], 2
    %2713 = vst [vmem:[%s2712] ss:$4 sm:$0xff] %v858
    %v2714 = vld.sshfl [vmem:[#allocation1] sm:$0xff pattern:$0x73625140]
    %2716 = vst [vmem:[#allocation1] ss:$4 sm:$0xff] %v1336
    %s2717 = scalar_lea.vmem [#allocation1], 1
    %2718 = vst [vmem:[%s2717] ss:$4 sm:$0xff] %v1337
    %s2719 = scalar_lea.vmem [#allocation1], 2
    %2720 = vst [vmem:[%s2719] ss:$4 sm:$0xff] %v859
    %v2721 = vld.sshfl [vmem:[#allocation1] sm:$0xff pattern:$0x73625140]
    %2723 = vmatpush.xpose.msra.mxu0 0.0
    %2724 = vmatpush.xpose.msra.mxu0 0.0
    %2725 = vmatpush.xpose.msra.mxu0 0.0
    %2726 = vmatpush.xpose.msra.mxu0 0.0
    %2727 = vmatpush.xpose.msra.mxu0 0.0
    %2728 = vmatpush.xpose.msra.mxu0 0.0
    %2729 = vmatpush.xpose.msra.mxu0 0.0
    %2730 = vmatpush.xpose.msra.mxu0 0.0
    %2731 = vmatpush.xpose.msra.mxu0 0.0
    %2732 = vmatpush.xpose.msra.mxu0 0.0
    %2733 = vmatpush.xpose.msra.mxu0 0.0
    %2734 = vmatpush.xpose.msra.mxu0 0.0
    %2735 = vmatpush.xpose.msra.mxu0 0.0
    %2736 = vmatpush.xpose.msra.mxu0 0.0
    %2737 = vmatpush.xpose.msra.mxu0 0.0
    %2738 = vmatpush.xpose.msra.mxu0 %v2721
    %2739 = vmatmul.f32.gmra.mxu0 %v2714
    %v2740 = vpop.f32.mrf.mxu0
    %v2741 = vadd.f32 0.0, %v2740
    %2742 = vdwg.mxu0
    %2743 = vst [vmem:[#allocation1] ss:$4 sm:$0xff] %v1098
    %s2744 = scalar_lea.vmem [#allocation1], 1
    %2745 = vst [vmem:[%s2744] ss:$4 sm:$0xff] %v1099
    %s2746 = scalar_lea.vmem [#allocation1], 2
    %2747 = vst [vmem:[%s2746] ss:$4 sm:$0xff] %v1100
    %v2748 = vld.sshfl [vmem:[#allocation1] sm:$0xff pattern:$0x73625140]
    %2750 = vst [vmem:[#allocation1] ss:$4 sm:$0xff] %v1338
    %s2751 = scalar_lea.vmem [#allocation1], 1
    %2752 = vst [vmem:[%s2751] ss:$4 sm:$0xff] %v1339
    %s2753 = scalar_lea.vmem [#allocation1], 2
    %2754 = vst [vmem:[%s2753] ss:$4 sm:$0xff] %v1340
    %v2755 = vld.sshfl [vmem:[#allocation1] sm:$0xff pattern:$0x73625140]
    %2757 = vmatpush.xpose.msra.mxu0 0.0
    %2758 = vmatpush.xpose.msra.mxu0 0.0
    %2759 = vmatpush.xpose.msra.mxu0 0.0
    %2760 = vmatpush.xpose.msra.mxu0 0.0
    %2761 = vmatpush.xpose.msra.mxu0 0.0
    %2762 = vmatpush.xpose.msra.mxu0 0.0
    %2763 = vmatpush.xpose.msra.mxu0 0.0
    %2764 = vmatpush.xpose.msra.mxu0 0.0
    %2765 = vmatpush.xpose.msra.mxu0 0.0
    %2766 = vmatpush.xpose.msra.mxu0 0.0
    %2767 = vmatpush.xpose.msra.mxu0 0.0
    %2768 = vmatpush.xpose.msra.mxu0 0.0
    %2769 = vmatpush.xpose.msra.mxu0 0.0
    %2770 = vmatpush.xpose.msra.mxu0 0.0
    %2771 = vmatpush.xpose.msra.mxu0 0.0
    %2772 = vmatpush.xpose.msra.mxu0 %v2755
    %2773 = vmatmul.f32.gmra.mxu0 %v2748
    %v2774 = vpop.f32.mrf.mxu0
    %v2775 = vadd.f32 0.0, %v2774
    %2776 = vdwg.mxu0
    %2777 = vst [vmem:[#allocation1] ss:$4 sm:$0xff] %v861
    %s2778 = scalar_lea.vmem [#allocation1], 1
    %2779 = vst [vmem:[%s2778] ss:$4 sm:$0xff] %v1101
    %s2780 = scalar_lea.vmem [#allocation1], 2
    %2781 = vst [vmem:[%s2780] ss:$4 sm:$0xff] %v1102
    %v2782 = vld.sshfl [vmem:[#allocation1] sm:$0xff pattern:$0x73625140]
    %2784 = vst [vmem:[#allocation1] ss:$4 sm:$0xff] %v862
    %s2785 = scalar_lea.vmem [#allocation1], 1
    %2786 = vst [vmem:[%s2785] ss:$4 sm:$0xff] %v1341
    %s2787 = scalar_lea.vmem [#allocation1], 2
    %2788 = vst [vmem:[%s2787] ss:$4 sm:$0xff] %v1342
    %v2789 = vld.sshfl [vmem:[#allocation1] sm:$0xff pattern:$0x73625140]
    %2791 = vmatpush.xpose.msra.mxu0 0.0
    %2792 = vmatpush.xpose.msra.mxu0 0.0
    %2793 = vmatpush.xpose.msra.mxu0 0.0
    %2794 = vmatpush.xpose.msra.mxu0 0.0
    %2795 = vmatpush.xpose.msra.mxu0 0.0
    %2796 = vmatpush.xpose.msra.mxu0 0.0
    %2797 = vmatpush.xpose.msra.mxu0 0.0
    %2798 = vmatpush.xpose.msra.mxu0 0.0
    %2799 = vmatpush.xpose.msra.mxu0 0.0
    %2800 = vmatpush.xpose.msra.mxu0 0.0
    %2801 = vmatpush.xpose.msra.mxu0 0.0
    %2802 = vmatpush.xpose.msra.mxu0 0.0
    %2803 = vmatpush.xpose.msra.mxu0 0.0
    %2804 = vmatpush.xpose.msra.mxu0 0.0
    %2805 = vmatpush.xpose.msra.mxu0 0.0
    %2806 = vmatpush.xpose.msra.mxu0 %v2789
    %2807 = vmatmul.f32.gmra.mxu0 %v2782
    %v2808 = vpop.f32.mrf.mxu0
    %v2809 = vadd.f32 0.0, %v2808
    %2810 = vdwg.mxu0
    %2811 = vst [vmem:[#allocation1] ss:$4 sm:$0xff] %v1103
    %s2812 = scalar_lea.vmem [#allocation1], 1
    %2813 = vst [vmem:[%s2812] ss:$4 sm:$0xff] %v864
    %s2814 = scalar_lea.vmem [#allocation1], 2
    %2815 = vst [vmem:[%s2814] ss:$4 sm:$0xff] %v1104
    %v2816 = vld.sshfl [vmem:[#allocation1] sm:$0xff pattern:$0x73625140]
    %2818 = vst [vmem:[#allocation1] ss:$4 sm:$0xff] %v1343
    %s2819 = scalar_lea.vmem [#allocation1], 1
    %2820 = vst [vmem:[%s2819] ss:$4 sm:$0xff] %v865
    %s2821 = scalar_lea.vmem [#allocation1], 2
    %2822 = vst [vmem:[%s2821] ss:$4 sm:$0xff] %v1344
    %v2823 = vld.sshfl [vmem:[#allocation1] sm:$0xff pattern:$0x73625140]
    %2825 = vmatpush.xpose.msra.mxu0 0.0
    %2826 = vmatpush.xpose.msra.mxu0 0.0
    %2827 = vmatpush.xpose.msra.mxu0 0.0
    %2828 = vmatpush.xpose.msra.mxu0 0.0
    %2829 = vmatpush.xpose.msra.mxu0 0.0
    %2830 = vmatpush.xpose.msra.mxu0 0.0
    %2831 = vmatpush.xpose.msra.mxu0 0.0
    %2832 = vmatpush.xpose.msra.mxu0 0.0
    %2833 = vmatpush.xpose.msra.mxu0 0.0
    %2834 = vmatpush.xpose.msra.mxu0 0.0
    %2835 = vmatpush.xpose.msra.mxu0 0.0
    %2836 = vmatpush.xpose.msra.mxu0 0.0
    %2837 = vmatpush.xpose.msra.mxu0 0.0
    %2838 = vmatpush.xpose.msra.mxu0 0.0
    %2839 = vmatpush.xpose.msra.mxu0 0.0
    %2840 = vmatpush.xpose.msra.mxu0 %v2823
    %2841 = vmatmul.f32.gmra.mxu0 %v2816
    %v2842 = vpop.f32.mrf.mxu0
    %v2843 = vadd.f32 0.0, %v2842
    %2844 = vdwg.mxu0
    %2845 = vst [vmem:[#allocation1] ss:$4 sm:$0xff] %v1105
    %s2846 = scalar_lea.vmem [#allocation1], 1
    %2847 = vst [vmem:[%s2846] ss:$4 sm:$0xff] %v1106
    %s2848 = scalar_lea.vmem [#allocation1], 2
    %2849 = vst [vmem:[%s2848] ss:$4 sm:$0xff] %v867
    %v2850 = vld.sshfl [vmem:[#allocation1] sm:$0xff pattern:$0x73625140]
    %2852 = vst [vmem:[#allocation1] ss:$4 sm:$0xff] %v1345
    %s2853 = scalar_lea.vmem [#allocation1], 1
    %2854 = vst [vmem:[%s2853] ss:$4 sm:$0xff] %v1346
    %s2855 = scalar_lea.vmem [#allocation1], 2
    %2856 = vst [vmem:[%s2855] ss:$4 sm:$0xff] %v868
    %v2857 = vld.sshfl [vmem:[#allocation1] sm:$0xff pattern:$0x73625140]
    %2859 = vmatpush.xpose.msra.mxu0 0.0
    %2860 = vmatpush.xpose.msra.mxu0 0.0
    %2861 = vmatpush.xpose.msra.mxu0 0.0
    %2862 = vmatpush.xpose.msra.mxu0 0.0
    %2863 = vmatpush.xpose.msra.mxu0 0.0
    %2864 = vmatpush.xpose.msra.mxu0 0.0
    %2865 = vmatpush.xpose.msra.mxu0 0.0
    %2866 = vmatpush.xpose.msra.mxu0 0.0
    %2867 = vmatpush.xpose.msra.mxu0 0.0
    %2868 = vmatpush.xpose.msra.mxu0 0.0
    %2869 = vmatpush.xpose.msra.mxu0 0.0
    %2870 = vmatpush.xpose.msra.mxu0 0.0
    %2871 = vmatpush.xpose.msra.mxu0 0.0
    %2872 = vmatpush.xpose.msra.mxu0 0.0
    %2873 = vmatpush.xpose.msra.mxu0 0.0
    %2874 = vmatpush.xpose.msra.mxu0 %v2857
    %2875 = vmatmul.f32.gmra.mxu0 %v2850
    %v2876 = vpop.f32.mrf.mxu0
    %v2877 = vadd.f32 0.0, %v2876
    %2878 = vdwg.mxu0
    %2879 = vst [vmem:[#allocation1] ss:$4 sm:$0xff] %v1107
    %s2880 = scalar_lea.vmem [#allocation1], 1
    %2881 = vst [vmem:[%s2880] ss:$4 sm:$0xff] %v1108
    %s2882 = scalar_lea.vmem [#allocation1], 2
    %2883 = vst [vmem:[%s2882] ss:$4 sm:$0xff] %v1109
    %v2884 = vld.sshfl [vmem:[#allocation1] sm:$0xff pattern:$0x73625140]
    %2886 = vst [vmem:[#allocation1] ss:$4 sm:$0xff] %v1347
    %s2887 = scalar_lea.vmem [#allocation1], 1
    %2888 = vst [vmem:[%s2887] ss:$4 sm:$0xff] %v1348
    %s2889 = scalar_lea.vmem [#allocation1], 2
    %2890 = vst [vmem:[%s2889] ss:$4 sm:$0xff] %v1349
    %v2891 = vld.sshfl [vmem:[#allocation1] sm:$0xff pattern:$0x73625140]
    %2893 = vmatpush.xpose.msra.mxu0 0.0
    %2894 = vmatpush.xpose.msra.mxu0 0.0
    %2895 = vmatpush.xpose.msra.mxu0 0.0
    %2896 = vmatpush.xpose.msra.mxu0 0.0
    %2897 = vmatpush.xpose.msra.mxu0 0.0
    %2898 = vmatpush.xpose.msra.mxu0 0.0
    %2899 = vmatpush.xpose.msra.mxu0 0.0
    %2900 = vmatpush.xpose.msra.mxu0 0.0
    %2901 = vmatpush.xpose.msra.mxu0 0.0
    %2902 = vmatpush.xpose.msra.mxu0 0.0
    %2903 = vmatpush.xpose.msra.mxu0 0.0
    %2904 = vmatpush.xpose.msra.mxu0 0.0
    %2905 = vmatpush.xpose.msra.mxu0 0.0
    %2906 = vmatpush.xpose.msra.mxu0 0.0
    %2907 = vmatpush.xpose.msra.mxu0 0.0
    %2908 = vmatpush.xpose.msra.mxu0 %v2891
    %2909 = vmatmul.f32.gmra.mxu0 %v2884
    %v2910 = vpop.f32.mrf.mxu0
    %v2911 = vadd.f32 0.0, %v2910
    %2912 = vdwg.mxu0
    %2913 = vst [vmem:[#allocation1] ss:$4 sm:$0xff] %v870
    %s2914 = scalar_lea.vmem [#allocation1], 1
    %2915 = vst [vmem:[%s2914] ss:$4 sm:$0xff] %v1110
    %s2916 = scalar_lea.vmem [#allocation1], 2
    %2917 = vst [vmem:[%s2916] ss:$4 sm:$0xff] %v1111
    %v2918 = vld.sshfl [vmem:[#allocation1] sm:$0xff pattern:$0x73625140]
    %2920 = vst [vmem:[#allocation1] ss:$4 sm:$0xff] %v871
    %s2921 = scalar_lea.vmem [#allocation1], 1
    %2922 = vst [vmem:[%s2921] ss:$4 sm:$0xff] %v1350
    %s2923 = scalar_lea.vmem [#allocation1], 2
    %2924 = vst [vmem:[%s2923] ss:$4 sm:$0xff] %v1351
    %v2925 = vld.sshfl [vmem:[#allocation1] sm:$0xff pattern:$0x73625140]
    %2927 = vmatpush.xpose.msra.mxu0 0.0
    %2928 = vmatpush.xpose.msra.mxu0 0.0
    %2929 = vmatpush.xpose.msra.mxu0 0.0
    %2930 = vmatpush.xpose.msra.mxu0 0.0
    %2931 = vmatpush.xpose.msra.mxu0 0.0
    %2932 = vmatpush.xpose.msra.mxu0 0.0
    %2933 = vmatpush.xpose.msra.mxu0 0.0
    %2934 = vmatpush.xpose.msra.mxu0 0.0
    %2935 = vmatpush.xpose.msra.mxu0 0.0
    %2936 = vmatpush.xpose.msra.mxu0 0.0
    %2937 = vmatpush.xpose.msra.mxu0 0.0
    %2938 = vmatpush.xpose.msra.mxu0 0.0
    %2939 = vmatpush.xpose.msra.mxu0 0.0
    %2940 = vmatpush.xpose.msra.mxu0 0.0
    %2941 = vmatpush.xpose.msra.mxu0 0.0
    %2942 = vmatpush.xpose.msra.mxu0 %v2925
    %2943 = vmatmul.f32.gmra.mxu0 %v2918
    %v2944 = vpop.f32.mrf.mxu0
    %v2945 = vadd.f32 0.0, %v2944
    %2946 = vdwg.mxu0
    %2947 = vst [vmem:[#allocation1] ss:$4 sm:$0xff] %v1112
    %s2948 = scalar_lea.vmem [#allocation1], 1
    %2949 = vst [vmem:[%s2948] ss:$4 sm:$0xff] %v873
    %s2950 = scalar_lea.vmem [#allocation1], 2
    %2951 = vst [vmem:[%s2950] ss:$4 sm:$0xff] %v1113
    %v2952 = vld.sshfl [vmem:[#allocation1] sm:$0xff pattern:$0x73625140]
    %2954 = vst [vmem:[#allocation1] ss:$4 sm:$0xff] %v1352
    %s2955 = scalar_lea.vmem [#allocation1], 1
    %2956 = vst [vmem:[%s2955] ss:$4 sm:$0xff] %v874
    %s2957 = scalar_lea.vmem [#allocation1], 2
    %2958 = vst [vmem:[%s2957] ss:$4 sm:$0xff] %v1353
    %v2959 = vld.sshfl [vmem:[#allocation1] sm:$0xff pattern:$0x73625140]
    %2961 = vmatpush.xpose.msra.mxu0 0.0
    %2962 = vmatpush.xpose.msra.mxu0 0.0
    %2963 = vmatpush.xpose.msra.mxu0 0.0
    %2964 = vmatpush.xpose.msra.mxu0 0.0
    %2965 = vmatpush.xpose.msra.mxu0 0.0
    %2966 = vmatpush.xpose.msra.mxu0 0.0
    %2967 = vmatpush.xpose.msra.mxu0 0.0
    %2968 = vmatpush.xpose.msra.mxu0 0.0
    %2969 = vmatpush.xpose.msra.mxu0 0.0
    %2970 = vmatpush.xpose.msra.mxu0 0.0
    %2971 = vmatpush.xpose.msra.mxu0 0.0
    %2972 = vmatpush.xpose.msra.mxu0 0.0
    %2973 = vmatpush.xpose.msra.mxu0 0.0
    %2974 = vmatpush.xpose.msra.mxu0 0.0
    %2975 = vmatpush.xpose.msra.mxu0 0.0
    %2976 = vmatpush.xpose.msra.mxu0 %v2959
    %2977 = vmatmul.f32.gmra.mxu0 %v2952
    %v2978 = vpop.f32.mrf.mxu0
    %v2979 = vadd.f32 0.0, %v2978
    %2980 = vdwg.mxu0
    %2981 = vst [vmem:[#allocation1] ss:$4 sm:$0xff] %v1114
    %s2982 = scalar_lea.vmem [#allocation1], 1
    %2983 = vst [vmem:[%s2982] ss:$4 sm:$0xff] %v1115
    %s2984 = scalar_lea.vmem [#allocation1], 2
    %2985 = vst [vmem:[%s2984] ss:$4 sm:$0xff] %v876
    %v2986 = vld.sshfl [vmem:[#allocation1] sm:$0xff pattern:$0x73625140]
    %2988 = vst [vmem:[#allocation1] ss:$4 sm:$0xff] %v1354
    %s2989 = scalar_lea.vmem [#allocation1], 1
    %2990 = vst [vmem:[%s2989] ss:$4 sm:$0xff] %v1355
    %s2991 = scalar_lea.vmem [#allocation1], 2
    %2992 = vst [vmem:[%s2991] ss:$4 sm:$0xff] %v877
    %v2993 = vld.sshfl [vmem:[#allocation1] sm:$0xff pattern:$0x73625140]
    %2995 = vmatpush.xpose.msra.mxu0 0.0
    %2996 = vmatpush.xpose.msra.mxu0 0.0
    %2997 = vmatpush.xpose.msra.mxu0 0.0
    %2998 = vmatpush.xpose.msra.mxu0 0.0
    %2999 = vmatpush.xpose.msra.mxu0 0.0
    %3000 = vmatpush.xpose.msra.mxu0 0.0
    %3001 = vmatpush.xpose.msra.mxu0 0.0
    %3002 = vmatpush.xpose.msra.mxu0 0.0
    %3003 = vmatpush.xpose.msra.mxu0 0.0
    %3004 = vmatpush.xpose.msra.mxu0 0.0
    %3005 = vmatpush.xpose.msra.mxu0 0.0
    %3006 = vmatpush.xpose.msra.mxu0 0.0
    %3007 = vmatpush.xpose.msra.mxu0 0.0
    %3008 = vmatpush.xpose.msra.mxu0 0.0
    %3009 = vmatpush.xpose.msra.mxu0 0.0
    %3010 = vmatpush.xpose.msra.mxu0 %v2993
    %3011 = vmatmul.f32.gmra.mxu0 %v2986
    %v3012 = vpop.f32.mrf.mxu0
    %v3013 = vadd.f32 0.0, %v3012
    %3014 = vdwg.mxu0
    %3015 = vst [vmem:[#allocation1] ss:$4 sm:$0xff] %v1116
    %s3016 = scalar_lea.vmem [#allocation1], 1
    %3017 = vst [vmem:[%s3016] ss:$4 sm:$0xff] %v1117
    %s3018 = scalar_lea.vmem [#allocation1], 2
    %3019 = vst [vmem:[%s3018] ss:$4 sm:$0xff] %v1118
    %v3020 = vld.sshfl [vmem:[#allocation1] sm:$0xff pattern:$0x73625140]
    %3022 = vst [vmem:[#allocation1] ss:$4 sm:$0xff] %v1356
    %s3023 = scalar_lea.vmem [#allocation1], 1
    %3024 = vst [vmem:[%s3023] ss:$4 sm:$0xff] %v1357
    %s3025 = scalar_lea.vmem [#allocation1], 2
    %3026 = vst [vmem:[%s3025] ss:$4 sm:$0xff] %v1358
    %v3027 = vld.sshfl [vmem:[#allocation1] sm:$0xff pattern:$0x73625140]
    %3029 = vmatpush.xpose.msra.mxu0 0.0
    %3030 = vmatpush.xpose.msra.mxu0 0.0
    %3031 = vmatpush.xpose.msra.mxu0 0.0
    %3032 = vmatpush.xpose.msra.mxu0 0.0
    %3033 = vmatpush.xpose.msra.mxu0 0.0
    %3034 = vmatpush.xpose.msra.mxu0 0.0
    %3035 = vmatpush.xpose.msra.mxu0 0.0
    %3036 = vmatpush.xpose.msra.mxu0 0.0
    %3037 = vmatpush.xpose.msra.mxu0 0.0
    %3038 = vmatpush.xpose.msra.mxu0 0.0
    %3039 = vmatpush.xpose.msra.mxu0 0.0
    %3040 = vmatpush.xpose.msra.mxu0 0.0
    %3041 = vmatpush.xpose.msra.mxu0 0.0
    %3042 = vmatpush.xpose.msra.mxu0 0.0
    %3043 = vmatpush.xpose.msra.mxu0 0.0
    %3044 = vmatpush.xpose.msra.mxu0 %v3027
    %3045 = vmatmul.f32.gmra.mxu0 %v3020
    %v3046 = vpop.f32.mrf.mxu0
    %v3047 = vadd.f32 0.0, %v3046
    %3048 = vdwg.mxu0
    %3049 = vst [vmem:[#allocation1] ss:$4 sm:$0xff] %v879
    %s3050 = scalar_lea.vmem [#allocation1], 1
    %3051 = vst [vmem:[%s3050] ss:$4 sm:$0xff] %v1119
    %s3052 = scalar_lea.vmem [#allocation1], 2
    %3053 = vst [vmem:[%s3052] ss:$4 sm:$0xff] %v1120
    %v3054 = vld.sshfl [vmem:[#allocation1] sm:$0xff pattern:$0x73625140]
    %3056 = vst [vmem:[#allocation1] ss:$4 sm:$0xff] %v880
    %s3057 = scalar_lea.vmem [#allocation1], 1
    %3058 = vst [vmem:[%s3057] ss:$4 sm:$0xff] %v1359
    %s3059 = scalar_lea.vmem [#allocation1], 2
    %3060 = vst [vmem:[%s3059] ss:$4 sm:$0xff] %v1360
    %v3061 = vld.sshfl [vmem:[#allocation1] sm:$0xff pattern:$0x73625140]
    %3063 = vmatpush.xpose.msra.mxu0 0.0
    %3064 = vmatpush.xpose.msra.mxu0 0.0
    %3065 = vmatpush.xpose.msra.mxu0 0.0
    %3066 = vmatpush.xpose.msra.mxu0 0.0
    %3067 = vmatpush.xpose.msra.mxu0 0.0
    %3068 = vmatpush.xpose.msra.mxu0 0.0
    %3069 = vmatpush.xpose.msra.mxu0 0.0
    %3070 = vmatpush.xpose.msra.mxu0 0.0
    %3071 = vmatpush.xpose.msra.mxu0 0.0
    %3072 = vmatpush.xpose.msra.mxu0 0.0
    %3073 = vmatpush.xpose.msra.mxu0 0.0
    %3074 = vmatpush.xpose.msra.mxu0 0.0
    %3075 = vmatpush.xpose.msra.mxu0 0.0
    %3076 = vmatpush.xpose.msra.mxu0 0.0
    %3077 = vmatpush.xpose.msra.mxu0 0.0
    %3078 = vmatpush.xpose.msra.mxu0 %v3061
    %3079 = vmatmul.f32.gmra.mxu0 %v3054
    %v3080 = vpop.f32.mrf.mxu0
    %v3081 = vadd.f32 0.0, %v3080
    %3082 = vdwg.mxu0
    %3083 = vst [vmem:[#allocation1] ss:$4 sm:$0xff] %v1121
    %s3084 = scalar_lea.vmem [#allocation1], 1
    %3085 = vst [vmem:[%s3084] ss:$4 sm:$0xff] %v882
    %s3086 = scalar_lea.vmem [#allocation1], 2
    %3087 = vst [vmem:[%s3086] ss:$4 sm:$0xff] %v1122
    %v3088 = vld.sshfl [vmem:[#allocation1] sm:$0xff pattern:$0x73625140]
    %3090 = vst [vmem:[#allocation1] ss:$4 sm:$0xff] %v1361
    %s3091 = scalar_lea.vmem [#allocation1], 1
    %3092 = vst [vmem:[%s3091] ss:$4 sm:$0xff] %v883
    %s3093 = scalar_lea.vmem [#allocation1], 2
    %3094 = vst [vmem:[%s3093] ss:$4 sm:$0xff] %v1362
    %v3095 = vld.sshfl [vmem:[#allocation1] sm:$0xff pattern:$0x73625140]
    %3097 = vmatpush.xpose.msra.mxu0 0.0
    %3098 = vmatpush.xpose.msra.mxu0 0.0
    %3099 = vmatpush.xpose.msra.mxu0 0.0
    %3100 = vmatpush.xpose.msra.mxu0 0.0
    %3101 = vmatpush.xpose.msra.mxu0 0.0
    %3102 = vmatpush.xpose.msra.mxu0 0.0
    %3103 = vmatpush.xpose.msra.mxu0 0.0
    %3104 = vmatpush.xpose.msra.mxu0 0.0
    %3105 = vmatpush.xpose.msra.mxu0 0.0
    %3106 = vmatpush.xpose.msra.mxu0 0.0
    %3107 = vmatpush.xpose.msra.mxu0 0.0
    %3108 = vmatpush.xpose.msra.mxu0 0.0
    %3109 = vmatpush.xpose.msra.mxu0 0.0
    %3110 = vmatpush.xpose.msra.mxu0 0.0
    %3111 = vmatpush.xpose.msra.mxu0 0.0
    %3112 = vmatpush.xpose.msra.mxu0 %v3095
    %3113 = vmatmul.f32.gmra.mxu0 %v3088
    %v3114 = vpop.f32.mrf.mxu0
    %v3115 = vadd.f32 0.0, %v3114
    %3116 = vdwg.mxu0
    %3117 = vst [vmem:[#allocation1] ss:$4 sm:$0xff] %v1123
    %s3118 = scalar_lea.vmem [#allocation1], 1
    %3119 = vst [vmem:[%s3118] ss:$4 sm:$0xff] %v1124
    %s3120 = scalar_lea.vmem [#allocation1], 2
    %3121 = vst [vmem:[%s3120] ss:$4 sm:$0xff] %v885
    %v3122 = vld.sshfl [vmem:[#allocation1] sm:$0xff pattern:$0x73625140]
    %3124 = vst [vmem:[#allocation1] ss:$4 sm:$0xff] %v1363
    %s3125 = scalar_lea.vmem [#allocation1], 1
    %3126 = vst [vmem:[%s3125] ss:$4 sm:$0xff] %v1364
    %s3127 = scalar_lea.vmem [#allocation1], 2
    %3128 = vst [vmem:[%s3127] ss:$4 sm:$0xff] %v886
    %v3129 = vld.sshfl [vmem:[#allocation1] sm:$0xff pattern:$0x73625140]
    %3131 = vmatpush.xpose.msra.mxu0 0.0
    %3132 = vmatpush.xpose.msra.mxu0 0.0
    %3133 = vmatpush.xpose.msra.mxu0 0.0
    %3134 = vmatpush.xpose.msra.mxu0 0.0
    %3135 = vmatpush.xpose.msra.mxu0 0.0
    %3136 = vmatpush.xpose.msra.mxu0 0.0
    %3137 = vmatpush.xpose.msra.mxu0 0.0
    %3138 = vmatpush.xpose.msra.mxu0 0.0
    %3139 = vmatpush.xpose.msra.mxu0 0.0
    %3140 = vmatpush.xpose.msra.mxu0 0.0
    %3141 = vmatpush.xpose.msra.mxu0 0.0
    %3142 = vmatpush.xpose.msra.mxu0 0.0
    %3143 = vmatpush.xpose.msra.mxu0 0.0
    %3144 = vmatpush.xpose.msra.mxu0 0.0
    %3145 = vmatpush.xpose.msra.mxu0 0.0
    %3146 = vmatpush.xpose.msra.mxu0 %v3129
    %3147 = vmatmul.f32.gmra.mxu0 %v3122
    %v3148 = vpop.f32.mrf.mxu0
    %v3149 = vadd.f32 0.0, %v3148
    %3150 = vdwg.mxu0
    %3151 = vst [vmem:[#allocation1] ss:$4 sm:$0xff] %v1125
    %s3152 = scalar_lea.vmem [#allocation1], 1
    %3153 = vst [vmem:[%s3152] ss:$4 sm:$0xff] %v1126
    %s3154 = scalar_lea.vmem [#allocation1], 2
    %3155 = vst [vmem:[%s3154] ss:$4 sm:$0xff] %v1127
    %v3156 = vld.sshfl [vmem:[#allocation1] sm:$0xff pattern:$0x73625140]
    %3158 = vst [vmem:[#allocation1] ss:$4 sm:$0xff] %v1365
    %s3159 = scalar_lea.vmem [#allocation1], 1
    %3160 = vst [vmem:[%s3159] ss:$4 sm:$0xff] %v1366
    %s3161 = scalar_lea.vmem [#allocation1], 2
    %3162 = vst [vmem:[%s3161] ss:$4 sm:$0xff] %v1367
    %v3163 = vld.sshfl [vmem:[#allocation1] sm:$0xff pattern:$0x73625140]
    %3165 = vmatpush.xpose.msra.mxu0 0.0
    %3166 = vmatpush.xpose.msra.mxu0 0.0
    %3167 = vmatpush.xpose.msra.mxu0 0.0
    %3168 = vmatpush.xpose.msra.mxu0 0.0
    %3169 = vmatpush.xpose.msra.mxu0 0.0
    %3170 = vmatpush.xpose.msra.mxu0 0.0
    %3171 = vmatpush.xpose.msra.mxu0 0.0
    %3172 = vmatpush.xpose.msra.mxu0 0.0
    %3173 = vmatpush.xpose.msra.mxu0 0.0
    %3174 = vmatpush.xpose.msra.mxu0 0.0
    %3175 = vmatpush.xpose.msra.mxu0 0.0
    %3176 = vmatpush.xpose.msra.mxu0 0.0
    %3177 = vmatpush.xpose.msra.mxu0 0.0
    %3178 = vmatpush.xpose.msra.mxu0 0.0
    %3179 = vmatpush.xpose.msra.mxu0 0.0
    %3180 = vmatpush.xpose.msra.mxu0 %v3163
    %3181 = vmatmul.f32.gmra.mxu0 %v3156
    %v3182 = vpop.f32.mrf.mxu0
    %v3183 = vadd.f32 0.0, %v3182
    %3184 = vdwg.mxu0
    %3185 = vst [vmem:[#allocation1] ss:$4 sm:$0xff] %v888
    %s3186 = scalar_lea.vmem [#allocation1], 1
    %3187 = vst [vmem:[%s3186] ss:$4 sm:$0xff] %v1128
    %s3188 = scalar_lea.vmem [#allocation1], 2
    %3189 = vst [vmem:[%s3188] ss:$4 sm:$0xff] %v1129
    %v3190 = vld.sshfl [vmem:[#allocation1] sm:$0xff pattern:$0x73625140]
    %3192 = vst [vmem:[#allocation1] ss:$4 sm:$0xff] %v889
    %s3193 = scalar_lea.vmem [#allocation1], 1
    %3194 = vst [vmem:[%s3193] ss:$4 sm:$0xff] %v1368
    %s3195 = scalar_lea.vmem [#allocation1], 2
    %3196 = vst [vmem:[%s3195] ss:$4 sm:$0xff] %v1369
    %v3197 = vld.sshfl [vmem:[#allocation1] sm:$0xff pattern:$0x73625140]
    %3199 = vmatpush.xpose.msra.mxu0 0.0
    %3200 = vmatpush.xpose.msra.mxu0 0.0
    %3201 = vmatpush.xpose.msra.mxu0 0.0
    %3202 = vmatpush.xpose.msra.mxu0 0.0
    %3203 = vmatpush.xpose.msra.mxu0 0.0
    %3204 = vmatpush.xpose.msra.mxu0 0.0
    %3205 = vmatpush.xpose.msra.mxu0 0.0
    %3206 = vmatpush.xpose.msra.mxu0 0.0
    %3207 = vmatpush.xpose.msra.mxu0 0.0
    %3208 = vmatpush.xpose.msra.mxu0 0.0
    %3209 = vmatpush.xpose.msra.mxu0 0.0
    %3210 = vmatpush.xpose.msra.mxu0 0.0
    %3211 = vmatpush.xpose.msra.mxu0 0.0
    %3212 = vmatpush.xpose.msra.mxu0 0.0
    %3213 = vmatpush.xpose.msra.mxu0 0.0
    %3214 = vmatpush.xpose.msra.mxu0 %v3197
    %3215 = vmatmul.f32.gmra.mxu0 %v3190
    %v3216 = vpop.f32.mrf.mxu0
    %v3217 = vadd.f32 0.0, %v3216
    %3218 = vdwg.mxu0
    %3219 = vst [vmem:[#allocation1] ss:$4 sm:$0xff] %v1130
    %s3220 = scalar_lea.vmem [#allocation1], 1
    %3221 = vst [vmem:[%s3220] ss:$4 sm:$0xff] %v891
    %s3222 = scalar_lea.vmem [#allocation1], 2
    %3223 = vst [vmem:[%s3222] ss:$4 sm:$0xff] %v1131
    %v3224 = vld.sshfl [vmem:[#allocation1] sm:$0xff pattern:$0x73625140]
    %3226 = vst [vmem:[#allocation1] ss:$4 sm:$0xff] %v1370
    %s3227 = scalar_lea.vmem [#allocation1], 1
    %3228 = vst [vmem:[%s3227] ss:$4 sm:$0xff] %v892
    %s3229 = scalar_lea.vmem [#allocation1], 2
    %3230 = vst [vmem:[%s3229] ss:$4 sm:$0xff] %v1371
    %v3231 = vld.sshfl [vmem:[#allocation1] sm:$0xff pattern:$0x73625140]
    %3233 = vmatpush.xpose.msra.mxu0 0.0
    %3234 = vmatpush.xpose.msra.mxu0 0.0
    %3235 = vmatpush.xpose.msra.mxu0 0.0
    %3236 = vmatpush.xpose.msra.mxu0 0.0
    %3237 = vmatpush.xpose.msra.mxu0 0.0
    %3238 = vmatpush.xpose.msra.mxu0 0.0
    %3239 = vmatpush.xpose.msra.mxu0 0.0
    %3240 = vmatpush.xpose.msra.mxu0 0.0
    %3241 = vmatpush.xpose.msra.mxu0 0.0
    %3242 = vmatpush.xpose.msra.mxu0 0.0
    %3243 = vmatpush.xpose.msra.mxu0 0.0
    %3244 = vmatpush.xpose.msra.mxu0 0.0
    %3245 = vmatpush.xpose.msra.mxu0 0.0
    %3246 = vmatpush.xpose.msra.mxu0 0.0
    %3247 = vmatpush.xpose.msra.mxu0 0.0
    %3248 = vmatpush.xpose.msra.mxu0 %v3231
    %3249 = vmatmul.f32.gmra.mxu0 %v3224
    %v3250 = vpop.f32.mrf.mxu0
    %v3251 = vadd.f32 0.0, %v3250
    %3252 = vdwg.mxu0
    %3253 = vst [vmem:[#allocation1] ss:$4 sm:$0xff] %v1132
    %s3254 = scalar_lea.vmem [#allocation1], 1
    %3255 = vst [vmem:[%s3254] ss:$4 sm:$0xff] %v1133
    %s3256 = scalar_lea.vmem [#allocation1], 2
    %3257 = vst [vmem:[%s3256] ss:$4 sm:$0xff] %v894
    %v3258 = vld.sshfl [vmem:[#allocation1] sm:$0xff pattern:$0x73625140]
    %3260 = vst [vmem:[#allocation1] ss:$4 sm:$0xff] %v1372
    %s3261 = scalar_lea.vmem [#allocation1], 1
    %3262 = vst [vmem:[%s3261] ss:$4 sm:$0xff] %v1373
    %s3263 = scalar_lea.vmem [#allocation1], 2
    %3264 = vst [vmem:[%s3263] ss:$4 sm:$0xff] %v895
    %v3265 = vld.sshfl [vmem:[#allocation1] sm:$0xff pattern:$0x73625140]
    %3267 = vmatpush.xpose.msra.mxu0 0.0
    %3268 = vmatpush.xpose.msra.mxu0 0.0
    %3269 = vmatpush.xpose.msra.mxu0 0.0
    %3270 = vmatpush.xpose.msra.mxu0 0.0
    %3271 = vmatpush.xpose.msra.mxu0 0.0
    %3272 = vmatpush.xpose.msra.mxu0 0.0
    %3273 = vmatpush.xpose.msra.mxu0 0.0
    %3274 = vmatpush.xpose.msra.mxu0 0.0
    %3275 = vmatpush.xpose.msra.mxu0 0.0
    %3276 = vmatpush.xpose.msra.mxu0 0.0
    %3277 = vmatpush.xpose.msra.mxu0 0.0
    %3278 = vmatpush.xpose.msra.mxu0 0.0
    %3279 = vmatpush.xpose.msra.mxu0 0.0
    %3280 = vmatpush.xpose.msra.mxu0 0.0
    %3281 = vmatpush.xpose.msra.mxu0 0.0
    %3282 = vmatpush.xpose.msra.mxu0 %v3265
    %3283 = vmatmul.f32.gmra.mxu0 %v3258
    %v3284 = vpop.f32.mrf.mxu0
    %v3285 = vadd.f32 0.0, %v3284
    %3286 = vdwg.mxu0
    %3287 = vst [vmem:[#allocation1] ss:$4 sm:$0xff] %v1134
    %s3288 = scalar_lea.vmem [#allocation1], 1
    %3289 = vst [vmem:[%s3288] ss:$4 sm:$0xff] %v1135
    %s3290 = scalar_lea.vmem [#allocation1], 2
    %3291 = vst [vmem:[%s3290] ss:$4 sm:$0xff] %v1136
    %v3292 = vld.sshfl [vmem:[#allocation1] sm:$0xff pattern:$0x73625140]
    %3294 = vst [vmem:[#allocation1] ss:$4 sm:$0xff] %v1374
    %s3295 = scalar_lea.vmem [#allocation1], 1
    %3296 = vst [vmem:[%s3295] ss:$4 sm:$0xff] %v1375
    %s3297 = scalar_lea.vmem [#allocation1], 2
    %3298 = vst [vmem:[%s3297] ss:$4 sm:$0xff] %v1376
    %v3299 = vld.sshfl [vmem:[#allocation1] sm:$0xff pattern:$0x73625140]
    %3301 = vmatpush.xpose.msra.mxu0 0.0
    %3302 = vmatpush.xpose.msra.mxu0 0.0
    %3303 = vmatpush.xpose.msra.mxu0 0.0
    %3304 = vmatpush.xpose.msra.mxu0 0.0
    %3305 = vmatpush.xpose.msra.mxu0 0.0
    %3306 = vmatpush.xpose.msra.mxu0 0.0
    %3307 = vmatpush.xpose.msra.mxu0 0.0
    %3308 = vmatpush.xpose.msra.mxu0 0.0
    %3309 = vmatpush.xpose.msra.mxu0 0.0
    %3310 = vmatpush.xpose.msra.mxu0 0.0
    %3311 = vmatpush.xpose.msra.mxu0 0.0
    %3312 = vmatpush.xpose.msra.mxu0 0.0
    %3313 = vmatpush.xpose.msra.mxu0 0.0
    %3314 = vmatpush.xpose.msra.mxu0 0.0
    %3315 = vmatpush.xpose.msra.mxu0 0.0
    %3316 = vmatpush.xpose.msra.mxu0 %v3299
    %3317 = vmatmul.f32.gmra.mxu0 %v3292
    %v3318 = vpop.f32.mrf.mxu0
    %v3319 = vadd.f32 0.0, %v3318
    %3320 = vdwg.mxu0
    %3321 = vst [vmem:[#allocation1] ss:$4 sm:$0xff] %v897
    %s3322 = scalar_lea.vmem [#allocation1], 1
    %3323 = vst [vmem:[%s3322] ss:$4 sm:$0xff] %v1137
    %s3324 = scalar_lea.vmem [#allocation1], 2
    %3325 = vst [vmem:[%s3324] ss:$4 sm:$0xff] %v1138
    %v3326 = vld.sshfl [vmem:[#allocation1] sm:$0xff pattern:$0x73625140]
    %3328 = vst [vmem:[#allocation1] ss:$4 sm:$0xff] %v898
    %s3329 = scalar_lea.vmem [#allocation1], 1
    %3330 = vst [vmem:[%s3329] ss:$4 sm:$0xff] %v1377
    %s3331 = scalar_lea.vmem [#allocation1], 2
    %3332 = vst [vmem:[%s3331] ss:$4 sm:$0xff] %v1378
    %v3333 = vld.sshfl [vmem:[#allocation1] sm:$0xff pattern:$0x73625140]
    %3335 = vmatpush.xpose.msra.mxu0 0.0
    %3336 = vmatpush.xpose.msra.mxu0 0.0
    %3337 = vmatpush.xpose.msra.mxu0 0.0
    %3338 = vmatpush.xpose.msra.mxu0 0.0
    %3339 = vmatpush.xpose.msra.mxu0 0.0
    %3340 = vmatpush.xpose.msra.mxu0 0.0
    %3341 = vmatpush.xpose.msra.mxu0 0.0
    %3342 = vmatpush.xpose.msra.mxu0 0.0
    %3343 = vmatpush.xpose.msra.mxu0 0.0
    %3344 = vmatpush.xpose.msra.mxu0 0.0
    %3345 = vmatpush.xpose.msra.mxu0 0.0
    %3346 = vmatpush.xpose.msra.mxu0 0.0
    %3347 = vmatpush.xpose.msra.mxu0 0.0
    %3348 = vmatpush.xpose.msra.mxu0 0.0
    %3349 = vmatpush.xpose.msra.mxu0 0.0
    %3350 = vmatpush.xpose.msra.mxu0 %v3333
    %3351 = vmatmul.f32.gmra.mxu0 %v3326
    %v3352 = vpop.f32.mrf.mxu0
    %v3353 = vadd.f32 0.0, %v3352
    %3354 = vdwg.mxu0
    %3355 = vst [vmem:[#allocation1] ss:$4 sm:$0xff] %v1139
    %s3356 = scalar_lea.vmem [#allocation1], 1
    %3357 = vst [vmem:[%s3356] ss:$4 sm:$0xff] %v900
    %s3358 = scalar_lea.vmem [#allocation1], 2
    %3359 = vst [vmem:[%s3358] ss:$4 sm:$0xff] %v1140
    %v3360 = vld.sshfl [vmem:[#allocation1] sm:$0xff pattern:$0x73625140]
    %3362 = vst [vmem:[#allocation1] ss:$4 sm:$0xff] %v1379
    %s3363 = scalar_lea.vmem [#allocation1], 1
    %3364 = vst [vmem:[%s3363] ss:$4 sm:$0xff] %v901
    %s3365 = scalar_lea.vmem [#allocation1], 2
    %3366 = vst [vmem:[%s3365] ss:$4 sm:$0xff] %v1380
    %v3367 = vld.sshfl [vmem:[#allocation1] sm:$0xff pattern:$0x73625140]
    %3369 = vmatpush.xpose.msra.mxu0 0.0
    %3370 = vmatpush.xpose.msra.mxu0 0.0
    %3371 = vmatpush.xpose.msra.mxu0 0.0
    %3372 = vmatpush.xpose.msra.mxu0 0.0
    %3373 = vmatpush.xpose.msra.mxu0 0.0
    %3374 = vmatpush.xpose.msra.mxu0 0.0
    %3375 = vmatpush.xpose.msra.mxu0 0.0
    %3376 = vmatpush.xpose.msra.mxu0 0.0
    %3377 = vmatpush.xpose.msra.mxu0 0.0
    %3378 = vmatpush.xpose.msra.mxu0 0.0
    %3379 = vmatpush.xpose.msra.mxu0 0.0
    %3380 = vmatpush.xpose.msra.mxu0 0.0
    %3381 = vmatpush.xpose.msra.mxu0 0.0
    %3382 = vmatpush.xpose.msra.mxu0 0.0
    %3383 = vmatpush.xpose.msra.mxu0 0.0
    %3384 = vmatpush.xpose.msra.mxu0 %v3367
    %3385 = vmatmul.f32.gmra.mxu0 %v3360
    %v3386 = vpop.f32.mrf.mxu0
    %v3387 = vadd.f32 0.0, %v3386
    %3388 = vdwg.mxu0
    %3389 = vst [vmem:[#allocation1] ss:$4 sm:$0xff] %v1141
    %s3390 = scalar_lea.vmem [#allocation1], 1
    %3391 = vst [vmem:[%s3390] ss:$4 sm:$0xff] %v1142
    %s3392 = scalar_lea.vmem [#allocation1], 2
    %3393 = vst [vmem:[%s3392] ss:$4 sm:$0xff] %v903
    %v3394 = vld.sshfl [vmem:[#allocation1] sm:$0xff pattern:$0x73625140]
    %3396 = vst [vmem:[#allocation1] ss:$4 sm:$0xff] %v1381
    %s3397 = scalar_lea.vmem [#allocation1], 1
    %3398 = vst [vmem:[%s3397] ss:$4 sm:$0xff] %v1382
    %s3399 = scalar_lea.vmem [#allocation1], 2
    %3400 = vst [vmem:[%s3399] ss:$4 sm:$0xff] %v904
    %v3401 = vld.sshfl [vmem:[#allocation1] sm:$0xff pattern:$0x73625140]
    %3403 = vmatpush.xpose.msra.mxu0 0.0
    %3404 = vmatpush.xpose.msra.mxu0 0.0
    %3405 = vmatpush.xpose.msra.mxu0 0.0
    %3406 = vmatpush.xpose.msra.mxu0 0.0
    %3407 = vmatpush.xpose.msra.mxu0 0.0
    %3408 = vmatpush.xpose.msra.mxu0 0.0
    %3409 = vmatpush.xpose.msra.mxu0 0.0
    %3410 = vmatpush.xpose.msra.mxu0 0.0
    %3411 = vmatpush.xpose.msra.mxu0 0.0
    %3412 = vmatpush.xpose.msra.mxu0 0.0
    %3413 = vmatpush.xpose.msra.mxu0 0.0
    %3414 = vmatpush.xpose.msra.mxu0 0.0
    %3415 = vmatpush.xpose.msra.mxu0 0.0
    %3416 = vmatpush.xpose.msra.mxu0 0.0
    %3417 = vmatpush.xpose.msra.mxu0 0.0
    %3418 = vmatpush.xpose.msra.mxu0 %v3401
    %3419 = vmatmul.f32.gmra.mxu0 %v3394
    %v3420 = vpop.f32.mrf.mxu0
    %v3421 = vadd.f32 0.0, %v3420
    %3422 = vdwg.mxu0
    %3423 = vst [vmem:[#allocation1] ss:$4 sm:$0xff] %v1143
    %s3424 = scalar_lea.vmem [#allocation1], 1
    %3425 = vst [vmem:[%s3424] ss:$4 sm:$0xff] %v1144
    %s3426 = scalar_lea.vmem [#allocation1], 2
    %3427 = vst [vmem:[%s3426] ss:$4 sm:$0xff] %v1145
    %v3428 = vld.sshfl [vmem:[#allocation1] sm:$0xff pattern:$0x73625140]
    %3430 = vst [vmem:[#allocation1] ss:$4 sm:$0xff] %v1383
    %s3431 = scalar_lea.vmem [#allocation1], 1
    %3432 = vst [vmem:[%s3431] ss:$4 sm:$0xff] %v1384
    %s3433 = scalar_lea.vmem [#allocation1], 2
    %3434 = vst [vmem:[%s3433] ss:$4 sm:$0xff] %v1385
    %v3435 = vld.sshfl [vmem:[#allocation1] sm:$0xff pattern:$0x73625140]
    %3437 = vmatpush.xpose.msra.mxu0 0.0
    %3438 = vmatpush.xpose.msra.mxu0 0.0
    %3439 = vmatpush.xpose.msra.mxu0 0.0
    %3440 = vmatpush.xpose.msra.mxu0 0.0
    %3441 = vmatpush.xpose.msra.mxu0 0.0
    %3442 = vmatpush.xpose.msra.mxu0 0.0
    %3443 = vmatpush.xpose.msra.mxu0 0.0
    %3444 = vmatpush.xpose.msra.mxu0 0.0
    %3445 = vmatpush.xpose.msra.mxu0 0.0
    %3446 = vmatpush.xpose.msra.mxu0 0.0
    %3447 = vmatpush.xpose.msra.mxu0 0.0
    %3448 = vmatpush.xpose.msra.mxu0 0.0
    %3449 = vmatpush.xpose.msra.mxu0 0.0
    %3450 = vmatpush.xpose.msra.mxu0 0.0
    %3451 = vmatpush.xpose.msra.mxu0 0.0
    %3452 = vmatpush.xpose.msra.mxu0 %v3435
    %3453 = vmatmul.f32.gmra.mxu0 %v3428
    %v3454 = vpop.f32.mrf.mxu0
    %v3455 = vadd.f32 0.0, %v3454
    %3456 = vdwg.mxu0
    %3457 = vst [vmem:[#allocation1] ss:$4 sm:$0xff] %v906
    %s3458 = scalar_lea.vmem [#allocation1], 1
    %3459 = vst [vmem:[%s3458] ss:$4 sm:$0xff] %v1146
    %s3460 = scalar_lea.vmem [#allocation1], 2
    %3461 = vst [vmem:[%s3460] ss:$4 sm:$0xff] %v1147
    %v3462 = vld.sshfl [vmem:[#allocation1] sm:$0xff pattern:$0x73625140]
    %3464 = vst [vmem:[#allocation1] ss:$4 sm:$0xff] %v907
    %s3465 = scalar_lea.vmem [#allocation1], 1
    %3466 = vst [vmem:[%s3465] ss:$4 sm:$0xff] %v1386
    %s3467 = scalar_lea.vmem [#allocation1], 2
    %3468 = vst [vmem:[%s3467] ss:$4 sm:$0xff] %v1387
    %v3469 = vld.sshfl [vmem:[#allocation1] sm:$0xff pattern:$0x73625140]
    %3471 = vmatpush.xpose.msra.mxu0 0.0
    %3472 = vmatpush.xpose.msra.mxu0 0.0
    %3473 = vmatpush.xpose.msra.mxu0 0.0
    %3474 = vmatpush.xpose.msra.mxu0 0.0
    %3475 = vmatpush.xpose.msra.mxu0 0.0
    %3476 = vmatpush.xpose.msra.mxu0 0.0
    %3477 = vmatpush.xpose.msra.mxu0 0.0
    %3478 = vmatpush.xpose.msra.mxu0 0.0
    %3479 = vmatpush.xpose.msra.mxu0 0.0
    %3480 = vmatpush.xpose.msra.mxu0 0.0
    %3481 = vmatpush.xpose.msra.mxu0 0.0
    %3482 = vmatpush.xpose.msra.mxu0 0.0
    %3483 = vmatpush.xpose.msra.mxu0 0.0
    %3484 = vmatpush.xpose.msra.mxu0 0.0
    %3485 = vmatpush.xpose.msra.mxu0 0.0
    %3486 = vmatpush.xpose.msra.mxu0 %v3469
    %3487 = vmatmul.f32.gmra.mxu0 %v3462
    %v3488 = vpop.f32.mrf.mxu0
    %v3489 = vadd.f32 0.0, %v3488
    %3490 = vdwg.mxu0
    %3491 = vst [vmem:[#allocation1] ss:$4 sm:$0xff] %v1148
    %s3492 = scalar_lea.vmem [#allocation1], 1
    %3493 = vst [vmem:[%s3492] ss:$4 sm:$0xff] %v909
    %s3494 = scalar_lea.vmem [#allocation1], 2
    %3495 = vst [vmem:[%s3494] ss:$4 sm:$0xff] %v1149
    %v3496 = vld.sshfl [vmem:[#allocation1] sm:$0xff pattern:$0x73625140]
    %3498 = vst [vmem:[#allocation1] ss:$4 sm:$0xff] %v1388
    %s3499 = scalar_lea.vmem [#allocation1], 1
    %3500 = vst [vmem:[%s3499] ss:$4 sm:$0xff] %v910
    %s3501 = scalar_lea.vmem [#allocation1], 2
    %3502 = vst [vmem:[%s3501] ss:$4 sm:$0xff] %v1389
    %v3503 = vld.sshfl [vmem:[#allocation1] sm:$0xff pattern:$0x73625140]
    %3505 = vmatpush.xpose.msra.mxu0 0.0
    %3506 = vmatpush.xpose.msra.mxu0 0.0
    %3507 = vmatpush.xpose.msra.mxu0 0.0
    %3508 = vmatpush.xpose.msra.mxu0 0.0
    %3509 = vmatpush.xpose.msra.mxu0 0.0
    %3510 = vmatpush.xpose.msra.mxu0 0.0
    %3511 = vmatpush.xpose.msra.mxu0 0.0
    %3512 = vmatpush.xpose.msra.mxu0 0.0
    %3513 = vmatpush.xpose.msra.mxu0 0.0
    %3514 = vmatpush.xpose.msra.mxu0 0.0
    %3515 = vmatpush.xpose.msra.mxu0 0.0
    %3516 = vmatpush.xpose.msra.mxu0 0.0
    %3517 = vmatpush.xpose.msra.mxu0 0.0
    %3518 = vmatpush.xpose.msra.mxu0 0.0
    %3519 = vmatpush.xpose.msra.mxu0 0.0
    %3520 = vmatpush.xpose.msra.mxu0 %v3503
    %3521 = vmatmul.f32.gmra.mxu0 %v3496
    %v3522 = vpop.f32.mrf.mxu0
    %v3523 = vadd.f32 0.0, %v3522
    %3524 = vdwg.mxu0
    %3525 = vst [vmem:[#allocation1] ss:$4 sm:$0xff] %v1150
    %s3526 = scalar_lea.vmem [#allocation1], 1
    %3527 = vst [vmem:[%s3526] ss:$4 sm:$0xff] %v1151
    %s3528 = scalar_lea.vmem [#allocation1], 2
    %3529 = vst [vmem:[%s3528] ss:$4 sm:$0xff] %v912
    %v3530 = vld.sshfl [vmem:[#allocation1] sm:$0xff pattern:$0x73625140]
    %3532 = vst [vmem:[#allocation1] ss:$4 sm:$0xff] %v1390
    %s3533 = scalar_lea.vmem [#allocation1], 1
    %3534 = vst [vmem:[%s3533] ss:$4 sm:$0xff] %v1391
    %s3535 = scalar_lea.vmem [#allocation1], 2
    %3536 = vst [vmem:[%s3535] ss:$4 sm:$0xff] %v913
    %v3537 = vld.sshfl [vmem:[#allocation1] sm:$0xff pattern:$0x73625140]
    %3539 = vmatpush.xpose.msra.mxu0 0.0
    %3540 = vmatpush.xpose.msra.mxu0 0.0
    %3541 = vmatpush.xpose.msra.mxu0 0.0
    %3542 = vmatpush.xpose.msra.mxu0 0.0
    %3543 = vmatpush.xpose.msra.mxu0 0.0
    %3544 = vmatpush.xpose.msra.mxu0 0.0
    %3545 = vmatpush.xpose.msra.mxu0 0.0
    %3546 = vmatpush.xpose.msra.mxu0 0.0
    %3547 = vmatpush.xpose.msra.mxu0 0.0
    %3548 = vmatpush.xpose.msra.mxu0 0.0
    %3549 = vmatpush.xpose.msra.mxu0 0.0
    %3550 = vmatpush.xpose.msra.mxu0 0.0
    %3551 = vmatpush.xpose.msra.mxu0 0.0
    %3552 = vmatpush.xpose.msra.mxu0 0.0
    %3553 = vmatpush.xpose.msra.mxu0 0.0
    %3554 = vmatpush.xpose.msra.mxu0 %v3537
    %3555 = vmatmul.f32.gmra.mxu0 %v3530
    %v3556 = vpop.f32.mrf.mxu0
    %v3557 = vadd.f32 0.0, %v3556
    %3558 = vdwg.mxu0
    %3559 = vst [vmem:[#allocation1] ss:$4 sm:$0xff] %v1152
    %s3560 = scalar_lea.vmem [#allocation1], 1
    %3561 = vst [vmem:[%s3560] ss:$4 sm:$0xff] %v1153
    %s3562 = scalar_lea.vmem [#allocation1], 2
    %3563 = vst [vmem:[%s3562] ss:$4 sm:$0xff] %v1154
    %v3564 = vld.sshfl [vmem:[#allocation1] sm:$0xff pattern:$0x73625140]
    %3566 = vst [vmem:[#allocation1] ss:$4 sm:$0xff] %v1392
    %s3567 = scalar_lea.vmem [#allocation1], 1
    %3568 = vst [vmem:[%s3567] ss:$4 sm:$0xff] %v1393
    %s3569 = scalar_lea.vmem [#allocation1], 2
    %3570 = vst [vmem:[%s3569] ss:$4 sm:$0xff] %v1394
    %v3571 = vld.sshfl [vmem:[#allocation1] sm:$0xff pattern:$0x73625140]
    %3573 = vmatpush.xpose.msra.mxu0 0.0
    %3574 = vmatpush.xpose.msra.mxu0 0.0
    %3575 = vmatpush.xpose.msra.mxu0 0.0
    %3576 = vmatpush.xpose.msra.mxu0 0.0
    %3577 = vmatpush.xpose.msra.mxu0 0.0
    %3578 = vmatpush.xpose.msra.mxu0 0.0
    %3579 = vmatpush.xpose.msra.mxu0 0.0
    %3580 = vmatpush.xpose.msra.mxu0 0.0
    %3581 = vmatpush.xpose.msra.mxu0 0.0
    %3582 = vmatpush.xpose.msra.mxu0 0.0
    %3583 = vmatpush.xpose.msra.mxu0 0.0
    %3584 = vmatpush.xpose.msra.mxu0 0.0
    %3585 = vmatpush.xpose.msra.mxu0 0.0
    %3586 = vmatpush.xpose.msra.mxu0 0.0
    %3587 = vmatpush.xpose.msra.mxu0 0.0
    %3588 = vmatpush.xpose.msra.mxu0 %v3571
    %3589 = vmatmul.f32.gmra.mxu0 %v3564
    %v3590 = vpop.f32.mrf.mxu0
    %v3591 = vadd.f32 0.0, %v3590
    %3592 = vdwg.mxu0
    %3593 = vst [vmem:[#allocation1] ss:$4 sm:$0xff] %v915
    %s3594 = scalar_lea.vmem [#allocation1], 1
    %3595 = vst [vmem:[%s3594] ss:$4 sm:$0xff] %v1155
    %s3596 = scalar_lea.vmem [#allocation1], 2
    %3597 = vst [vmem:[%s3596] ss:$4 sm:$0xff] %v1156
    %v3598 = vld.sshfl [vmem:[#allocation1] sm:$0xff pattern:$0x73625140]
    %3600 = vst [vmem:[#allocation1] ss:$4 sm:$0xff] %v916
    %s3601 = scalar_lea.vmem [#allocation1], 1
    %3602 = vst [vmem:[%s3601] ss:$4 sm:$0xff] %v1395
    %s3603 = scalar_lea.vmem [#allocation1], 2
    %3604 = vst [vmem:[%s3603] ss:$4 sm:$0xff] %v1396
    %v3605 = vld.sshfl [vmem:[#allocation1] sm:$0xff pattern:$0x73625140]
    %3607 = vmatpush.xpose.msra.mxu0 0.0
    %3608 = vmatpush.xpose.msra.mxu0 0.0
    %3609 = vmatpush.xpose.msra.mxu0 0.0
    %3610 = vmatpush.xpose.msra.mxu0 0.0
    %3611 = vmatpush.xpose.msra.mxu0 0.0
    %3612 = vmatpush.xpose.msra.mxu0 0.0
    %3613 = vmatpush.xpose.msra.mxu0 0.0
    %3614 = vmatpush.xpose.msra.mxu0 0.0
    %3615 = vmatpush.xpose.msra.mxu0 0.0
    %3616 = vmatpush.xpose.msra.mxu0 0.0
    %3617 = vmatpush.xpose.msra.mxu0 0.0
    %3618 = vmatpush.xpose.msra.mxu0 0.0
    %3619 = vmatpush.xpose.msra.mxu0 0.0
    %3620 = vmatpush.xpose.msra.mxu0 0.0
    %3621 = vmatpush.xpose.msra.mxu0 0.0
    %3622 = vmatpush.xpose.msra.mxu0 %v3605
    %3623 = vmatmul.f32.gmra.mxu0 %v3598
    %v3624 = vpop.f32.mrf.mxu0
    %v3625 = vadd.f32 0.0, %v3624
    %3626 = vdwg.mxu0
    %3627 = vst [vmem:[#allocation1] ss:$4 sm:$0xff] %v1157
    %s3628 = scalar_lea.vmem [#allocation1], 1
    %3629 = vst [vmem:[%s3628] ss:$4 sm:$0xff] %v918
    %s3630 = scalar_lea.vmem [#allocation1], 2
    %3631 = vst [vmem:[%s3630] ss:$4 sm:$0xff] %v1158
    %v3632 = vld.sshfl [vmem:[#allocation1] sm:$0xff pattern:$0x73625140]
    %3634 = vst [vmem:[#allocation1] ss:$4 sm:$0xff] %v1397
    %s3635 = scalar_lea.vmem [#allocation1], 1
    %3636 = vst [vmem:[%s3635] ss:$4 sm:$0xff] %v919
    %s3637 = scalar_lea.vmem [#allocation1], 2
    %3638 = vst [vmem:[%s3637] ss:$4 sm:$0xff] %v1398
    %v3639 = vld.sshfl [vmem:[#allocation1] sm:$0xff pattern:$0x73625140]
    %3641 = vmatpush.xpose.msra.mxu0 0.0
    %3642 = vmatpush.xpose.msra.mxu0 0.0
    %3643 = vmatpush.xpose.msra.mxu0 0.0
    %3644 = vmatpush.xpose.msra.mxu0 0.0
    %3645 = vmatpush.xpose.msra.mxu0 0.0
    %3646 = vmatpush.xpose.msra.mxu0 0.0
    %3647 = vmatpush.xpose.msra.mxu0 0.0
    %3648 = vmatpush.xpose.msra.mxu0 0.0
    %3649 = vmatpush.xpose.msra.mxu0 0.0
    %3650 = vmatpush.xpose.msra.mxu0 0.0
    %3651 = vmatpush.xpose.msra.mxu0 0.0
    %3652 = vmatpush.xpose.msra.mxu0 0.0
    %3653 = vmatpush.xpose.msra.mxu0 0.0
    %3654 = vmatpush.xpose.msra.mxu0 0.0
    %3655 = vmatpush.xpose.msra.mxu0 0.0
    %3656 = vmatpush.xpose.msra.mxu0 %v3639
    %3657 = vmatmul.f32.gmra.mxu0 %v3632
    %v3658 = vpop.f32.mrf.mxu0
    %v3659 = vadd.f32 0.0, %v3658
    %3660 = vdwg.mxu0
    %3661 = vst [vmem:[#allocation1] ss:$4 sm:$0xff] %v1159
    %s3662 = scalar_lea.vmem [#allocation1], 1
    %3663 = vst [vmem:[%s3662] ss:$4 sm:$0xff] %v1160
    %s3664 = scalar_lea.vmem [#allocation1], 2
    %3665 = vst [vmem:[%s3664] ss:$4 sm:$0xff] %v921
    %v3666 = vld.sshfl [vmem:[#allocation1] sm:$0xff pattern:$0x73625140]
    %3668 = vst [vmem:[#allocation1] ss:$4 sm:$0xff] %v1399
    %s3669 = scalar_lea.vmem [#allocation1], 1
    %3670 = vst [vmem:[%s3669] ss:$4 sm:$0xff] %v1400
    %s3671 = scalar_lea.vmem [#allocation1], 2
    %3672 = vst [vmem:[%s3671] ss:$4 sm:$0xff] %v922
    %v3673 = vld.sshfl [vmem:[#allocation1] sm:$0xff pattern:$0x73625140]
    %3675 = vmatpush.xpose.msra.mxu0 0.0
    %3676 = vmatpush.xpose.msra.mxu0 0.0
    %3677 = vmatpush.xpose.msra.mxu0 0.0
    %3678 = vmatpush.xpose.msra.mxu0 0.0
    %3679 = vmatpush.xpose.msra.mxu0 0.0
    %3680 = vmatpush.xpose.msra.mxu0 0.0
    %3681 = vmatpush.xpose.msra.mxu0 0.0
    %3682 = vmatpush.xpose.msra.mxu0 0.0
    %3683 = vmatpush.xpose.msra.mxu0 0.0
    %3684 = vmatpush.xpose.msra.mxu0 0.0
    %3685 = vmatpush.xpose.msra.mxu0 0.0
    %3686 = vmatpush.xpose.msra.mxu0 0.0
    %3687 = vmatpush.xpose.msra.mxu0 0.0
    %3688 = vmatpush.xpose.msra.mxu0 0.0
    %3689 = vmatpush.xpose.msra.mxu0 0.0
    %3690 = vmatpush.xpose.msra.mxu0 %v3673
    %3691 = vmatmul.f32.gmra.mxu0 %v3666
    %v3692 = vpop.f32.mrf.mxu0
    %v3693 = vadd.f32 0.0, %v3692
    %3694 = vdwg.mxu0
    %3695 = vst [vmem:[#allocation1] ss:$4 sm:$0xff] %v1161
    %s3696 = scalar_lea.vmem [#allocation1], 1
    %3697 = vst [vmem:[%s3696] ss:$4 sm:$0xff] %v1162
    %s3698 = scalar_lea.vmem [#allocation1], 2
    %3699 = vst [vmem:[%s3698] ss:$4 sm:$0xff] %v1163
    %v3700 = vld.sshfl [vmem:[#allocation1] sm:$0xff pattern:$0x73625140]
    %3702 = vst [vmem:[#allocation1] ss:$4 sm:$0xff] %v1401
    %s3703 = scalar_lea.vmem [#allocation1], 1
    %3704 = vst [vmem:[%s3703] ss:$4 sm:$0xff] %v1402
    %s3705 = scalar_lea.vmem [#allocation1], 2
    %3706 = vst [vmem:[%s3705] ss:$4 sm:$0xff] %v1403
    %v3707 = vld.sshfl [vmem:[#allocation1] sm:$0xff pattern:$0x73625140]
    %3709 = vmatpush.xpose.msra.mxu0 0.0
    %3710 = vmatpush.xpose.msra.mxu0 0.0
    %3711 = vmatpush.xpose.msra.mxu0 0.0
    %3712 = vmatpush.xpose.msra.mxu0 0.0
    %3713 = vmatpush.xpose.msra.mxu0 0.0
    %3714 = vmatpush.xpose.msra.mxu0 0.0
    %3715 = vmatpush.xpose.msra.mxu0 0.0
    %3716 = vmatpush.xpose.msra.mxu0 0.0
    %3717 = vmatpush.xpose.msra.mxu0 0.0
    %3718 = vmatpush.xpose.msra.mxu0 0.0
    %3719 = vmatpush.xpose.msra.mxu0 0.0
    %3720 = vmatpush.xpose.msra.mxu0 0.0
    %3721 = vmatpush.xpose.msra.mxu0 0.0
    %3722 = vmatpush.xpose.msra.mxu0 0.0
    %3723 = vmatpush.xpose.msra.mxu0 0.0
    %3724 = vmatpush.xpose.msra.mxu0 %v3707
    %3725 = vmatmul.f32.gmra.mxu0 %v3700
    %v3726 = vpop.f32.mrf.mxu0
    %v3727 = vadd.f32 0.0, %v3726
    %3728 = vdwg.mxu0
    %3729 = vst [vmem:[#allocation1] ss:$4 sm:$0xff] %v924
    %s3730 = scalar_lea.vmem [#allocation1], 1
    %3731 = vst [vmem:[%s3730] ss:$4 sm:$0xff] %v1164
    %s3732 = scalar_lea.vmem [#allocation1], 2
    %3733 = vst [vmem:[%s3732] ss:$4 sm:$0xff] %v1165
    %v3734 = vld.sshfl [vmem:[#allocation1] sm:$0xff pattern:$0x73625140]
    %3736 = vst [vmem:[#allocation1] ss:$4 sm:$0xff] %v925
    %s3737 = scalar_lea.vmem [#allocation1], 1
    %3738 = vst [vmem:[%s3737] ss:$4 sm:$0xff] %v1404
    %s3739 = scalar_lea.vmem [#allocation1], 2
    %3740 = vst [vmem:[%s3739] ss:$4 sm:$0xff] %v1405
    %v3741 = vld.sshfl [vmem:[#allocation1] sm:$0xff pattern:$0x73625140]
    %3743 = vmatpush.xpose.msra.mxu0 0.0
    %3744 = vmatpush.xpose.msra.mxu0 0.0
    %3745 = vmatpush.xpose.msra.mxu0 0.0
    %3746 = vmatpush.xpose.msra.mxu0 0.0
    %3747 = vmatpush.xpose.msra.mxu0 0.0
    %3748 = vmatpush.xpose.msra.mxu0 0.0
    %3749 = vmatpush.xpose.msra.mxu0 0.0
    %3750 = vmatpush.xpose.msra.mxu0 0.0
    %3751 = vmatpush.xpose.msra.mxu0 0.0
    %3752 = vmatpush.xpose.msra.mxu0 0.0
    %3753 = vmatpush.xpose.msra.mxu0 0.0
    %3754 = vmatpush.xpose.msra.mxu0 0.0
    %3755 = vmatpush.xpose.msra.mxu0 0.0
    %3756 = vmatpush.xpose.msra.mxu0 0.0
    %3757 = vmatpush.xpose.msra.mxu0 0.0
    %3758 = vmatpush.xpose.msra.mxu0 %v3741
    %3759 = vmatmul.f32.gmra.mxu0 %v3734
    %v3760 = vpop.f32.mrf.mxu0
    %v3761 = vadd.f32 0.0, %v3760
    %3762 = vdwg.mxu0
    %3763 = vst [vmem:[#allocation1] ss:$4 sm:$0xff] %v1166
    %s3764 = scalar_lea.vmem [#allocation1], 1
    %3765 = vst [vmem:[%s3764] ss:$4 sm:$0xff] %v927
    %s3766 = scalar_lea.vmem [#allocation1], 2
    %3767 = vst [vmem:[%s3766] ss:$4 sm:$0xff] %v1167
    %v3768 = vld.sshfl [vmem:[#allocation1] sm:$0xff pattern:$0x73625140]
    %3770 = vst [vmem:[#allocation1] ss:$4 sm:$0xff] %v1406
    %s3771 = scalar_lea.vmem [#allocation1], 1
    %3772 = vst [vmem:[%s3771] ss:$4 sm:$0xff] %v928
    %s3773 = scalar_lea.vmem [#allocation1], 2
    %3774 = vst [vmem:[%s3773] ss:$4 sm:$0xff] %v1407
    %v3775 = vld.sshfl [vmem:[#allocation1] sm:$0xff pattern:$0x73625140]
    %3777 = vmatpush.xpose.msra.mxu0 0.0
    %3778 = vmatpush.xpose.msra.mxu0 0.0
    %3779 = vmatpush.xpose.msra.mxu0 0.0
    %3780 = vmatpush.xpose.msra.mxu0 0.0
    %3781 = vmatpush.xpose.msra.mxu0 0.0
    %3782 = vmatpush.xpose.msra.mxu0 0.0
    %3783 = vmatpush.xpose.msra.mxu0 0.0
    %3784 = vmatpush.xpose.msra.mxu0 0.0
    %3785 = vmatpush.xpose.msra.mxu0 0.0
    %3786 = vmatpush.xpose.msra.mxu0 0.0
    %3787 = vmatpush.xpose.msra.mxu0 0.0
    %3788 = vmatpush.xpose.msra.mxu0 0.0
    %3789 = vmatpush.xpose.msra.mxu0 0.0
    %3790 = vmatpush.xpose.msra.mxu0 0.0
    %3791 = vmatpush.xpose.msra.mxu0 0.0
    %3792 = vmatpush.xpose.msra.mxu0 %v3775
    %3793 = vmatmul.f32.gmra.mxu0 %v3768
    %v3794 = vpop.f32.mrf.mxu0
    %v3795 = vadd.f32 0.0, %v3794
    %3796 = vdwg.mxu0
    %3797 = vst [vmem:[#allocation1] ss:$4 sm:$0xff] %v1168
    %s3798 = scalar_lea.vmem [#allocation1], 1
    %3799 = vst [vmem:[%s3798] ss:$4 sm:$0xff] %v1169
    %s3800 = scalar_lea.vmem [#allocation1], 2
    %3801 = vst [vmem:[%s3800] ss:$4 sm:$0xff] %v930
    %v3802 = vld.sshfl [vmem:[#allocation1] sm:$0xff pattern:$0x73625140]
    %3804 = vst [vmem:[#allocation1] ss:$4 sm:$0xff] %v1408
    %s3805 = scalar_lea.vmem [#allocation1], 1
    %3806 = vst [vmem:[%s3805] ss:$4 sm:$0xff] %v1409
    %s3807 = scalar_lea.vmem [#allocation1], 2
    %3808 = vst [vmem:[%s3807] ss:$4 sm:$0xff] %v931
    %v3809 = vld.sshfl [vmem:[#allocation1] sm:$0xff pattern:$0x73625140]
    %3811 = vmatpush.xpose.msra.mxu0 0.0
    %3812 = vmatpush.xpose.msra.mxu0 0.0
    %3813 = vmatpush.xpose.msra.mxu0 0.0
    %3814 = vmatpush.xpose.msra.mxu0 0.0
    %3815 = vmatpush.xpose.msra.mxu0 0.0
    %3816 = vmatpush.xpose.msra.mxu0 0.0
    %3817 = vmatpush.xpose.msra.mxu0 0.0
    %3818 = vmatpush.xpose.msra.mxu0 0.0
    %3819 = vmatpush.xpose.msra.mxu0 0.0
    %3820 = vmatpush.xpose.msra.mxu0 0.0
    %3821 = vmatpush.xpose.msra.mxu0 0.0
    %3822 = vmatpush.xpose.msra.mxu0 0.0
    %3823 = vmatpush.xpose.msra.mxu0 0.0
    %3824 = vmatpush.xpose.msra.mxu0 0.0
    %3825 = vmatpush.xpose.msra.mxu0 0.0
    %3826 = vmatpush.xpose.msra.mxu0 %v3809
    %3827 = vmatmul.f32.gmra.mxu0 %v3802
    %v3828 = vpop.f32.mrf.mxu0
    %v3829 = vadd.f32 0.0, %v3828
    %3830 = vdwg.mxu0
    %3831 = vst [vmem:[#allocation1] ss:$4 sm:$0xff] %v1170
    %s3832 = scalar_lea.vmem [#allocation1], 1
    %3833 = vst [vmem:[%s3832] ss:$4 sm:$0xff] %v1171
    %s3834 = scalar_lea.vmem [#allocation1], 2
    %3835 = vst [vmem:[%s3834] ss:$4 sm:$0xff] %v1172
    %v3836 = vld.sshfl [vmem:[#allocation1] sm:$0xff pattern:$0x73625140]
    %3838 = vst [vmem:[#allocation1] ss:$4 sm:$0xff] %v1410
    %s3839 = scalar_lea.vmem [#allocation1], 1
    %3840 = vst [vmem:[%s3839] ss:$4 sm:$0xff] %v1411
    %s3841 = scalar_lea.vmem [#allocation1], 2
    %3842 = vst [vmem:[%s3841] ss:$4 sm:$0xff] %v1412
    %v3843 = vld.sshfl [vmem:[#allocation1] sm:$0xff pattern:$0x73625140]
    %3845 = vmatpush.xpose.msra.mxu0 0.0
    %3846 = vmatpush.xpose.msra.mxu0 0.0
    %3847 = vmatpush.xpose.msra.mxu0 0.0
    %3848 = vmatpush.xpose.msra.mxu0 0.0
    %3849 = vmatpush.xpose.msra.mxu0 0.0
    %3850 = vmatpush.xpose.msra.mxu0 0.0
    %3851 = vmatpush.xpose.msra.mxu0 0.0
    %3852 = vmatpush.xpose.msra.mxu0 0.0
    %3853 = vmatpush.xpose.msra.mxu0 0.0
    %3854 = vmatpush.xpose.msra.mxu0 0.0
    %3855 = vmatpush.xpose.msra.mxu0 0.0
    %3856 = vmatpush.xpose.msra.mxu0 0.0
    %3857 = vmatpush.xpose.msra.mxu0 0.0
    %3858 = vmatpush.xpose.msra.mxu0 0.0
    %3859 = vmatpush.xpose.msra.mxu0 0.0
    %3860 = vmatpush.xpose.msra.mxu0 %v3843
    %3861 = vmatmul.f32.gmra.mxu0 %v3836
    %v3862 = vpop.f32.mrf.mxu0
    %v3863 = vadd.f32 0.0, %v3862
    %3864 = vdwg.mxu0
    %3865 = vst [vmem:[#allocation1] ss:$4 sm:$0xff] %v933
    %s3866 = scalar_lea.vmem [#allocation1], 1
    %3867 = vst [vmem:[%s3866] ss:$4 sm:$0xff] %v1173
    %s3868 = scalar_lea.vmem [#allocation1], 2
    %3869 = vst [vmem:[%s3868] ss:$4 sm:$0xff] %v1174
    %v3870 = vld.sshfl [vmem:[#allocation1] sm:$0xff pattern:$0x73625140]
    %3872 = vst [vmem:[#allocation1] ss:$4 sm:$0xff] %v934
    %s3873 = scalar_lea.vmem [#allocation1], 1
    %3874 = vst [vmem:[%s3873] ss:$4 sm:$0xff] %v1413
    %s3875 = scalar_lea.vmem [#allocation1], 2
    %3876 = vst [vmem:[%s3875] ss:$4 sm:$0xff] %v1414
    %v3877 = vld.sshfl [vmem:[#allocation1] sm:$0xff pattern:$0x73625140]
    %3879 = vmatpush.xpose.msra.mxu0 0.0
    %3880 = vmatpush.xpose.msra.mxu0 0.0
    %3881 = vmatpush.xpose.msra.mxu0 0.0
    %3882 = vmatpush.xpose.msra.mxu0 0.0
    %3883 = vmatpush.xpose.msra.mxu0 0.0
    %3884 = vmatpush.xpose.msra.mxu0 0.0
    %3885 = vmatpush.xpose.msra.mxu0 0.0
    %3886 = vmatpush.xpose.msra.mxu0 0.0
    %3887 = vmatpush.xpose.msra.mxu0 0.0
    %3888 = vmatpush.xpose.msra.mxu0 0.0
    %3889 = vmatpush.xpose.msra.mxu0 0.0
    %3890 = vmatpush.xpose.msra.mxu0 0.0
    %3891 = vmatpush.xpose.msra.mxu0 0.0
    %3892 = vmatpush.xpose.msra.mxu0 0.0
    %3893 = vmatpush.xpose.msra.mxu0 0.0
    %3894 = vmatpush.xpose.msra.mxu0 %v3877
    %3895 = vmatmul.f32.gmra.mxu0 %v3870
    %v3896 = vpop.f32.mrf.mxu0
    %v3897 = vadd.f32 0.0, %v3896
    %3898 = vdwg.mxu0
    %3899 = vst [vmem:[#allocation1] ss:$4 sm:$0xff] %v1175
    %s3900 = scalar_lea.vmem [#allocation1], 1
    %3901 = vst [vmem:[%s3900] ss:$4 sm:$0xff] %v936
    %s3902 = scalar_lea.vmem [#allocation1], 2
    %3903 = vst [vmem:[%s3902] ss:$4 sm:$0xff] %v1176
    %v3904 = vld.sshfl [vmem:[#allocation1] sm:$0xff pattern:$0x73625140]
    %3906 = vst [vmem:[#allocation1] ss:$4 sm:$0xff] %v1415
    %s3907 = scalar_lea.vmem [#allocation1], 1
    %3908 = vst [vmem:[%s3907] ss:$4 sm:$0xff] %v937
    %s3909 = scalar_lea.vmem [#allocation1], 2
    %3910 = vst [vmem:[%s3909] ss:$4 sm:$0xff] %v1416
    %v3911 = vld.sshfl [vmem:[#allocation1] sm:$0xff pattern:$0x73625140]
    %3913 = vmatpush.xpose.msra.mxu0 0.0
    %3914 = vmatpush.xpose.msra.mxu0 0.0
    %3915 = vmatpush.xpose.msra.mxu0 0.0
    %3916 = vmatpush.xpose.msra.mxu0 0.0
    %3917 = vmatpush.xpose.msra.mxu0 0.0
    %3918 = vmatpush.xpose.msra.mxu0 0.0
    %3919 = vmatpush.xpose.msra.mxu0 0.0
    %3920 = vmatpush.xpose.msra.mxu0 0.0
    %3921 = vmatpush.xpose.msra.mxu0 0.0
    %3922 = vmatpush.xpose.msra.mxu0 0.0
    %3923 = vmatpush.xpose.msra.mxu0 0.0
    %3924 = vmatpush.xpose.msra.mxu0 0.0
    %3925 = vmatpush.xpose.msra.mxu0 0.0
    %3926 = vmatpush.xpose.msra.mxu0 0.0
    %3927 = vmatpush.xpose.msra.mxu0 0.0
    %3928 = vmatpush.xpose.msra.mxu0 %v3911
    %3929 = vmatmul.f32.gmra.mxu0 %v3904
    %v3930 = vpop.f32.mrf.mxu0
    %v3931 = vadd.f32 0.0, %v3930
    %3932 = vdwg.mxu0
    %3933 = vst [vmem:[#allocation1] ss:$4 sm:$0xff] %v1177
    %s3934 = scalar_lea.vmem [#allocation1], 1
    %3935 = vst [vmem:[%s3934] ss:$4 sm:$0xff] %v1178
    %s3936 = scalar_lea.vmem [#allocation1], 2
    %3937 = vst [vmem:[%s3936] ss:$4 sm:$0xff] %v939
    %v3938 = vld.sshfl [vmem:[#allocation1] sm:$0xff pattern:$0x73625140]
    %3940 = vst [vmem:[#allocation1] ss:$4 sm:$0xff] %v1417
    %s3941 = scalar_lea.vmem [#allocation1], 1
    %3942 = vst [vmem:[%s3941] ss:$4 sm:$0xff] %v1418
    %s3943 = scalar_lea.vmem [#allocation1], 2
    %3944 = vst [vmem:[%s3943] ss:$4 sm:$0xff] %v940
    %v3945 = vld.sshfl [vmem:[#allocation1] sm:$0xff pattern:$0x73625140]
    %3947 = vmatpush.xpose.msra.mxu0 0.0
    %3948 = vmatpush.xpose.msra.mxu0 0.0
    %3949 = vmatpush.xpose.msra.mxu0 0.0
    %3950 = vmatpush.xpose.msra.mxu0 0.0
    %3951 = vmatpush.xpose.msra.mxu0 0.0
    %3952 = vmatpush.xpose.msra.mxu0 0.0
    %3953 = vmatpush.xpose.msra.mxu0 0.0
    %3954 = vmatpush.xpose.msra.mxu0 0.0
    %3955 = vmatpush.xpose.msra.mxu0 0.0
    %3956 = vmatpush.xpose.msra.mxu0 0.0
    %3957 = vmatpush.xpose.msra.mxu0 0.0
    %3958 = vmatpush.xpose.msra.mxu0 0.0
    %3959 = vmatpush.xpose.msra.mxu0 0.0
    %3960 = vmatpush.xpose.msra.mxu0 0.0
    %3961 = vmatpush.xpose.msra.mxu0 0.0
    %3962 = vmatpush.xpose.msra.mxu0 %v3945
    %3963 = vmatmul.f32.gmra.mxu0 %v3938
    %v3964 = vpop.f32.mrf.mxu0
    %v3965 = vadd.f32 0.0, %v3964
    %3966 = vdwg.mxu0
    %3967 = vst [vmem:[#allocation1] ss:$4 sm:$0xff] %v1179
    %s3968 = scalar_lea.vmem [#allocation1], 1
    %3969 = vst [vmem:[%s3968] ss:$4 sm:$0xff] %v1180
    %s3970 = scalar_lea.vmem [#allocation1], 2
    %3971 = vst [vmem:[%s3970] ss:$4 sm:$0xff] %v1181
    %v3972 = vld.sshfl [vmem:[#allocation1] sm:$0xff pattern:$0x73625140]
    %3974 = vst [vmem:[#allocation1] ss:$4 sm:$0xff] %v1419
    %s3975 = scalar_lea.vmem [#allocation1], 1
    %3976 = vst [vmem:[%s3975] ss:$4 sm:$0xff] %v1420
    %s3977 = scalar_lea.vmem [#allocation1], 2
    %3978 = vst [vmem:[%s3977] ss:$4 sm:$0xff] %v1421
    %v3979 = vld.sshfl [vmem:[#allocation1] sm:$0xff pattern:$0x73625140]
    %3981 = vmatpush.xpose.msra.mxu0 0.0
    %3982 = vmatpush.xpose.msra.mxu0 0.0
    %3983 = vmatpush.xpose.msra.mxu0 0.0
    %3984 = vmatpush.xpose.msra.mxu0 0.0
    %3985 = vmatpush.xpose.msra.mxu0 0.0
    %3986 = vmatpush.xpose.msra.mxu0 0.0
    %3987 = vmatpush.xpose.msra.mxu0 0.0
    %3988 = vmatpush.xpose.msra.mxu0 0.0
    %3989 = vmatpush.xpose.msra.mxu0 0.0
    %3990 = vmatpush.xpose.msra.mxu0 0.0
    %3991 = vmatpush.xpose.msra.mxu0 0.0
    %3992 = vmatpush.xpose.msra.mxu0 0.0
    %3993 = vmatpush.xpose.msra.mxu0 0.0
    %3994 = vmatpush.xpose.msra.mxu0 0.0
    %3995 = vmatpush.xpose.msra.mxu0 0.0
    %3996 = vmatpush.xpose.msra.mxu0 %v3979
    %3997 = vmatmul.f32.gmra.mxu0 %v3972
    %v3998 = vpop.f32.mrf.mxu0
    %v3999 = vadd.f32 0.0, %v3998
    %4000 = vdwg.mxu0
    %4001 = vst [vmem:[#allocation1] ss:$4 sm:$0xff] %v942
    %s4002 = scalar_lea.vmem [#allocation1], 1
    %4003 = vst [vmem:[%s4002] ss:$4 sm:$0xff] %v1182
    %s4004 = scalar_lea.vmem [#allocation1], 2
    %4005 = vst [vmem:[%s4004] ss:$4 sm:$0xff] %v1183
    %v4006 = vld.sshfl [vmem:[#allocation1] sm:$0xff pattern:$0x73625140]
    %4008 = vst [vmem:[#allocation1] ss:$4 sm:$0xff] %v943
    %s4009 = scalar_lea.vmem [#allocation1], 1
    %4010 = vst [vmem:[%s4009] ss:$4 sm:$0xff] %v1422
    %s4011 = scalar_lea.vmem [#allocation1], 2
    %4012 = vst [vmem:[%s4011] ss:$4 sm:$0xff] %v1423
    %v4013 = vld.sshfl [vmem:[#allocation1] sm:$0xff pattern:$0x73625140]
    %4015 = vmatpush.xpose.msra.mxu0 0.0
    %4016 = vmatpush.xpose.msra.mxu0 0.0
    %4017 = vmatpush.xpose.msra.mxu0 0.0
    %4018 = vmatpush.xpose.msra.mxu0 0.0
    %4019 = vmatpush.xpose.msra.mxu0 0.0
    %4020 = vmatpush.xpose.msra.mxu0 0.0
    %4021 = vmatpush.xpose.msra.mxu0 0.0
    %4022 = vmatpush.xpose.msra.mxu0 0.0
    %4023 = vmatpush.xpose.msra.mxu0 0.0
    %4024 = vmatpush.xpose.msra.mxu0 0.0
    %4025 = vmatpush.xpose.msra.mxu0 0.0
    %4026 = vmatpush.xpose.msra.mxu0 0.0
    %4027 = vmatpush.xpose.msra.mxu0 0.0
    %4028 = vmatpush.xpose.msra.mxu0 0.0
    %4029 = vmatpush.xpose.msra.mxu0 0.0
    %4030 = vmatpush.xpose.msra.mxu0 %v4013
    %4031 = vmatmul.f32.gmra.mxu0 %v4006
    %v4032 = vpop.f32.mrf.mxu0
    %v4033 = vadd.f32 0.0, %v4032
    %4034 = vdwg.mxu0
    %4035 = vst [vmem:[#allocation1] ss:$4 sm:$0xff] %v1184
    %s4036 = scalar_lea.vmem [#allocation1], 1
    %4037 = vst [vmem:[%s4036] ss:$4 sm:$0xff] %v945
    %s4038 = scalar_lea.vmem [#allocation1], 2
    %4039 = vst [vmem:[%s4038] ss:$4 sm:$0xff] %v1185
    %v4040 = vld.sshfl [vmem:[#allocation1] sm:$0xff pattern:$0x73625140]
    %4042 = vst [vmem:[#allocation1] ss:$4 sm:$0xff] %v1424
    %s4043 = scalar_lea.vmem [#allocation1], 1
    %4044 = vst [vmem:[%s4043] ss:$4 sm:$0xff] %v946
    %s4045 = scalar_lea.vmem [#allocation1], 2
    %4046 = vst [vmem:[%s4045] ss:$4 sm:$0xff] %v1425
    %v4047 = vld.sshfl [vmem:[#allocation1] sm:$0xff pattern:$0x73625140]
    %4049 = vmatpush.xpose.msra.mxu0 0.0
    %4050 = vmatpush.xpose.msra.mxu0 0.0
    %4051 = vmatpush.xpose.msra.mxu0 0.0
    %4052 = vmatpush.xpose.msra.mxu0 0.0
    %4053 = vmatpush.xpose.msra.mxu0 0.0
    %4054 = vmatpush.xpose.msra.mxu0 0.0
    %4055 = vmatpush.xpose.msra.mxu0 0.0
    %4056 = vmatpush.xpose.msra.mxu0 0.0
    %4057 = vmatpush.xpose.msra.mxu0 0.0
    %4058 = vmatpush.xpose.msra.mxu0 0.0
    %4059 = vmatpush.xpose.msra.mxu0 0.0
    %4060 = vmatpush.xpose.msra.mxu0 0.0
    %4061 = vmatpush.xpose.msra.mxu0 0.0
    %4062 = vmatpush.xpose.msra.mxu0 0.0
    %4063 = vmatpush.xpose.msra.mxu0 0.0
    %4064 = vmatpush.xpose.msra.mxu0 %v4047
    %4065 = vmatmul.f32.gmra.mxu0 %v4040
    %v4066 = vpop.f32.mrf.mxu0
    %v4067 = vadd.f32 0.0, %v4066
    %4068 = vdwg.mxu0
    %4069 = vst [vmem:[#allocation1] ss:$4 sm:$0xff] %v1186
    %s4070 = scalar_lea.vmem [#allocation1], 1
    %4071 = vst [vmem:[%s4070] ss:$4 sm:$0xff] %v1187
    %s4072 = scalar_lea.vmem [#allocation1], 2
    %4073 = vst [vmem:[%s4072] ss:$4 sm:$0xff] %v948
    %v4074 = vld.sshfl [vmem:[#allocation1] sm:$0xff pattern:$0x73625140]
    %4076 = vst [vmem:[#allocation1] ss:$4 sm:$0xff] %v1426
    %s4077 = scalar_lea.vmem [#allocation1], 1
    %4078 = vst [vmem:[%s4077] ss:$4 sm:$0xff] %v1427
    %s4079 = scalar_lea.vmem [#allocation1], 2
    %4080 = vst [vmem:[%s4079] ss:$4 sm:$0xff] %v949
    %v4081 = vld.sshfl [vmem:[#allocation1] sm:$0xff pattern:$0x73625140]
    %4083 = vmatpush.xpose.msra.mxu0 0.0
    %4084 = vmatpush.xpose.msra.mxu0 0.0
    %4085 = vmatpush.xpose.msra.mxu0 0.0
    %4086 = vmatpush.xpose.msra.mxu0 0.0
    %4087 = vmatpush.xpose.msra.mxu0 0.0
    %4088 = vmatpush.xpose.msra.mxu0 0.0
    %4089 = vmatpush.xpose.msra.mxu0 0.0
    %4090 = vmatpush.xpose.msra.mxu0 0.0
    %4091 = vmatpush.xpose.msra.mxu0 0.0
    %4092 = vmatpush.xpose.msra.mxu0 0.0
    %4093 = vmatpush.xpose.msra.mxu0 0.0
    %4094 = vmatpush.xpose.msra.mxu0 0.0
    %4095 = vmatpush.xpose.msra.mxu0 0.0
    %4096 = vmatpush.xpose.msra.mxu0 0.0
    %4097 = vmatpush.xpose.msra.mxu0 0.0
    %4098 = vmatpush.xpose.msra.mxu0 %v4081
    %4099 = vmatmul.f32.gmra.mxu0 %v4074
    %v4100 = vpop.f32.mrf.mxu0
    %v4101 = vadd.f32 0.0, %v4100
    %4102 = vdwg.mxu0
    %4103 = vst [vmem:[#allocation1] ss:$4 sm:$0xff] %v1188
    %s4104 = scalar_lea.vmem [#allocation1], 1
    %4105 = vst [vmem:[%s4104] ss:$4 sm:$0xff] %v1189
    %s4106 = scalar_lea.vmem [#allocation1], 2
    %4107 = vst [vmem:[%s4106] ss:$4 sm:$0xff] %v1190
    %v4108 = vld.sshfl [vmem:[#allocation1] sm:$0xff pattern:$0x73625140]
    %4110 = vst [vmem:[#allocation1] ss:$4 sm:$0xff] %v1428
    %s4111 = scalar_lea.vmem [#allocation1], 1
    %4112 = vst [vmem:[%s4111] ss:$4 sm:$0xff] %v1429
    %s4113 = scalar_lea.vmem [#allocation1], 2
    %4114 = vst [vmem:[%s4113] ss:$4 sm:$0xff] %v1430
    %v4115 = vld.sshfl [vmem:[#allocation1] sm:$0xff pattern:$0x73625140]
    %4117 = vmatpush.xpose.msra.mxu0 0.0
    %4118 = vmatpush.xpose.msra.mxu0 0.0
    %4119 = vmatpush.xpose.msra.mxu0 0.0
    %4120 = vmatpush.xpose.msra.mxu0 0.0
    %4121 = vmatpush.xpose.msra.mxu0 0.0
    %4122 = vmatpush.xpose.msra.mxu0 0.0
    %4123 = vmatpush.xpose.msra.mxu0 0.0
    %4124 = vmatpush.xpose.msra.mxu0 0.0
    %4125 = vmatpush.xpose.msra.mxu0 0.0
    %4126 = vmatpush.xpose.msra.mxu0 0.0
    %4127 = vmatpush.xpose.msra.mxu0 0.0
    %4128 = vmatpush.xpose.msra.mxu0 0.0
    %4129 = vmatpush.xpose.msra.mxu0 0.0
    %4130 = vmatpush.xpose.msra.mxu0 0.0
    %4131 = vmatpush.xpose.msra.mxu0 0.0
    %4132 = vmatpush.xpose.msra.mxu0 %v4115
    %4133 = vmatmul.f32.gmra.mxu0 %v4108
    %v4134 = vpop.f32.mrf.mxu0
    %v4135 = vadd.f32 0.0, %v4134
    %4136 = vdwg.mxu0
    %4137 = vst [vmem:[#allocation1] ss:$4 sm:$0xff] %v951
    %s4138 = scalar_lea.vmem [#allocation1], 1
    %4139 = vst [vmem:[%s4138] ss:$4 sm:$0xff] %v1191
    %s4140 = scalar_lea.vmem [#allocation1], 2
    %4141 = vst [vmem:[%s4140] ss:$4 sm:$0xff] %v1192
    %v4142 = vld.sshfl [vmem:[#allocation1] sm:$0xff pattern:$0x73625140]
    %4144 = vst [vmem:[#allocation1] ss:$4 sm:$0xff] %v952
    %s4145 = scalar_lea.vmem [#allocation1], 1
    %4146 = vst [vmem:[%s4145] ss:$4 sm:$0xff] %v1431
    %s4147 = scalar_lea.vmem [#allocation1], 2
    %4148 = vst [vmem:[%s4147] ss:$4 sm:$0xff] %v1432
    %v4149 = vld.sshfl [vmem:[#allocation1] sm:$0xff pattern:$0x73625140]
    %4151 = vmatpush.xpose.msra.mxu0 0.0
    %4152 = vmatpush.xpose.msra.mxu0 0.0
    %4153 = vmatpush.xpose.msra.mxu0 0.0
    %4154 = vmatpush.xpose.msra.mxu0 0.0
    %4155 = vmatpush.xpose.msra.mxu0 0.0
    %4156 = vmatpush.xpose.msra.mxu0 0.0
    %4157 = vmatpush.xpose.msra.mxu0 0.0
    %4158 = vmatpush.xpose.msra.mxu0 0.0
    %4159 = vmatpush.xpose.msra.mxu0 0.0
    %4160 = vmatpush.xpose.msra.mxu0 0.0
    %4161 = vmatpush.xpose.msra.mxu0 0.0
    %4162 = vmatpush.xpose.msra.mxu0 0.0
    %4163 = vmatpush.xpose.msra.mxu0 0.0
    %4164 = vmatpush.xpose.msra.mxu0 0.0
    %4165 = vmatpush.xpose.msra.mxu0 0.0
    %4166 = vmatpush.xpose.msra.mxu0 %v4149
    %4167 = vmatmul.f32.gmra.mxu0 %v4142
    %v4168 = vpop.f32.mrf.mxu0
    %v4169 = vadd.f32 0.0, %v4168
    %4170 = vdwg.mxu0
    %4171 = vst [vmem:[#allocation1] ss:$4 sm:$0xff] %v1193
    %s4172 = scalar_lea.vmem [#allocation1], 1
    %4173 = vst [vmem:[%s4172] ss:$4 sm:$0xff] %v954
    %s4174 = scalar_lea.vmem [#allocation1], 2
    %4175 = vst [vmem:[%s4174] ss:$4 sm:$0xff] %v1194
    %v4176 = vld.sshfl [vmem:[#allocation1] sm:$0xff pattern:$0x73625140]
    %4178 = vst [vmem:[#allocation1] ss:$4 sm:$0xff] %v1433
    %s4179 = scalar_lea.vmem [#allocation1], 1
    %4180 = vst [vmem:[%s4179] ss:$4 sm:$0xff] %v955
    %s4181 = scalar_lea.vmem [#allocation1], 2
    %4182 = vst [vmem:[%s4181] ss:$4 sm:$0xff] %v1434
    %v4183 = vld.sshfl [vmem:[#allocation1] sm:$0xff pattern:$0x73625140]
    %4185 = vmatpush.xpose.msra.mxu0 0.0
    %4186 = vmatpush.xpose.msra.mxu0 0.0
    %4187 = vmatpush.xpose.msra.mxu0 0.0
    %4188 = vmatpush.xpose.msra.mxu0 0.0
    %4189 = vmatpush.xpose.msra.mxu0 0.0
    %4190 = vmatpush.xpose.msra.mxu0 0.0
    %4191 = vmatpush.xpose.msra.mxu0 0.0
    %4192 = vmatpush.xpose.msra.mxu0 0.0
    %4193 = vmatpush.xpose.msra.mxu0 0.0
    %4194 = vmatpush.xpose.msra.mxu0 0.0
    %4195 = vmatpush.xpose.msra.mxu0 0.0
    %4196 = vmatpush.xpose.msra.mxu0 0.0
    %4197 = vmatpush.xpose.msra.mxu0 0.0
    %4198 = vmatpush.xpose.msra.mxu0 0.0
    %4199 = vmatpush.xpose.msra.mxu0 0.0
    %4200 = vmatpush.xpose.msra.mxu0 %v4183
    %4201 = vmatmul.f32.gmra.mxu0 %v4176
    %v4202 = vpop.f32.mrf.mxu0
    %v4203 = vadd.f32 0.0, %v4202
    %4204 = vdwg.mxu0
    %4205 = vst [vmem:[#allocation1] ss:$4 sm:$0xff] %v1195
    %s4206 = scalar_lea.vmem [#allocation1], 1
    %4207 = vst [vmem:[%s4206] ss:$4 sm:$0xff] %v1196
    %s4208 = scalar_lea.vmem [#allocation1], 2
    %4209 = vst [vmem:[%s4208] ss:$4 sm:$0xff] %v957
    %v4210 = vld.sshfl [vmem:[#allocation1] sm:$0xff pattern:$0x73625140]
    %4212 = vst [vmem:[#allocation1] ss:$4 sm:$0xff] %v1435
    %s4213 = scalar_lea.vmem [#allocation1], 1
    %4214 = vst [vmem:[%s4213] ss:$4 sm:$0xff] %v1436
    %s4215 = scalar_lea.vmem [#allocation1], 2
    %4216 = vst [vmem:[%s4215] ss:$4 sm:$0xff] %v958
    %v4217 = vld.sshfl [vmem:[#allocation1] sm:$0xff pattern:$0x73625140]
    %4219 = vmatpush.xpose.msra.mxu0 0.0
    %4220 = vmatpush.xpose.msra.mxu0 0.0
    %4221 = vmatpush.xpose.msra.mxu0 0.0
    %4222 = vmatpush.xpose.msra.mxu0 0.0
    %4223 = vmatpush.xpose.msra.mxu0 0.0
    %4224 = vmatpush.xpose.msra.mxu0 0.0
    %4225 = vmatpush.xpose.msra.mxu0 0.0
    %4226 = vmatpush.xpose.msra.mxu0 0.0
    %4227 = vmatpush.xpose.msra.mxu0 0.0
    %4228 = vmatpush.xpose.msra.mxu0 0.0
    %4229 = vmatpush.xpose.msra.mxu0 0.0
    %4230 = vmatpush.xpose.msra.mxu0 0.0
    %4231 = vmatpush.xpose.msra.mxu0 0.0
    %4232 = vmatpush.xpose.msra.mxu0 0.0
    %4233 = vmatpush.xpose.msra.mxu0 0.0
    %4234 = vmatpush.xpose.msra.mxu0 %v4217
    %4235 = vmatmul.f32.gmra.mxu0 %v4210
    %v4236 = vpop.f32.mrf.mxu0
    %v4237 = vadd.f32 0.0, %v4236
    %4238 = vdwg.mxu0
    %4239 = vst [vmem:[#allocation1] ss:$4 sm:$0xff] %v1197
    %s4240 = scalar_lea.vmem [#allocation1], 1
    %4241 = vst [vmem:[%s4240] ss:$4 sm:$0xff] %v1198
    %s4242 = scalar_lea.vmem [#allocation1], 2
    %4243 = vst [vmem:[%s4242] ss:$4 sm:$0xff] %v1199
    %v4244 = vld.sshfl [vmem:[#allocation1] sm:$0xff pattern:$0x73625140]
    %4246 = vst [vmem:[#allocation1] ss:$4 sm:$0xff] %v1437
    %s4247 = scalar_lea.vmem [#allocation1], 1
    %4248 = vst [vmem:[%s4247] ss:$4 sm:$0xff] %v1438
    %s4249 = scalar_lea.vmem [#allocation1], 2
    %4250 = vst [vmem:[%s4249] ss:$4 sm:$0xff] %v1439
    %v4251 = vld.sshfl [vmem:[#allocation1] sm:$0xff pattern:$0x73625140]
    %4253 = vmatpush.xpose.msra.mxu0 0.0
    %4254 = vmatpush.xpose.msra.mxu0 0.0
    %4255 = vmatpush.xpose.msra.mxu0 0.0
    %4256 = vmatpush.xpose.msra.mxu0 0.0
    %4257 = vmatpush.xpose.msra.mxu0 0.0
    %4258 = vmatpush.xpose.msra.mxu0 0.0
    %4259 = vmatpush.xpose.msra.mxu0 0.0
    %4260 = vmatpush.xpose.msra.mxu0 0.0
    %4261 = vmatpush.xpose.msra.mxu0 0.0
    %4262 = vmatpush.xpose.msra.mxu0 0.0
    %4263 = vmatpush.xpose.msra.mxu0 0.0
    %4264 = vmatpush.xpose.msra.mxu0 0.0
    %4265 = vmatpush.xpose.msra.mxu0 0.0
    %4266 = vmatpush.xpose.msra.mxu0 0.0
    %4267 = vmatpush.xpose.msra.mxu0 0.0
    %4268 = vmatpush.xpose.msra.mxu0 %v4251
    %4269 = vmatmul.f32.gmra.mxu0 %v4244
    %v4270 = vpop.f32.mrf.mxu0
    %v4271 = vadd.f32 0.0, %v4270
    %4272 = vdwg.mxu0
    %4273 = vst [vmem:[#allocation1] ss:$4 sm:$0xff] %v960
    %s4274 = scalar_lea.vmem [#allocation1], 1
    %4275 = vst [vmem:[%s4274] ss:$4 sm:$0xff] %v1200
    %s4276 = scalar_lea.vmem [#allocation1], 2
    %4277 = vst [vmem:[%s4276] ss:$4 sm:$0xff] %v1201
    %v4278 = vld.sshfl [vmem:[#allocation1] sm:$0xff pattern:$0x73625140]
    %4280 = vst [vmem:[#allocation1] ss:$4 sm:$0xff] %v961
    %s4281 = scalar_lea.vmem [#allocation1], 1
    %4282 = vst [vmem:[%s4281] ss:$4 sm:$0xff] %v1440
    %s4283 = scalar_lea.vmem [#allocation1], 2
    %4284 = vst [vmem:[%s4283] ss:$4 sm:$0xff] %v1441
    %v4285 = vld.sshfl [vmem:[#allocation1] sm:$0xff pattern:$0x73625140]
    %4287 = vmatpush.xpose.msra.mxu0 0.0
    %4288 = vmatpush.xpose.msra.mxu0 0.0
    %4289 = vmatpush.xpose.msra.mxu0 0.0
    %4290 = vmatpush.xpose.msra.mxu0 0.0
    %4291 = vmatpush.xpose.msra.mxu0 0.0
    %4292 = vmatpush.xpose.msra.mxu0 0.0
    %4293 = vmatpush.xpose.msra.mxu0 0.0
    %4294 = vmatpush.xpose.msra.mxu0 0.0
    %4295 = vmatpush.xpose.msra.mxu0 0.0
    %4296 = vmatpush.xpose.msra.mxu0 0.0
    %4297 = vmatpush.xpose.msra.mxu0 0.0
    %4298 = vmatpush.xpose.msra.mxu0 0.0
    %4299 = vmatpush.xpose.msra.mxu0 0.0
    %4300 = vmatpush.xpose.msra.mxu0 0.0
    %4301 = vmatpush.xpose.msra.mxu0 0.0
    %4302 = vmatpush.xpose.msra.mxu0 %v4285
    %4303 = vmatmul.f32.gmra.mxu0 %v4278
    %v4304 = vpop.f32.mrf.mxu0
    %v4305 = vadd.f32 0.0, %v4304
    %4306 = vdwg.mxu0
    %4307 = vst [vmem:[#allocation1] ss:$4 sm:$0xff] %v1202
    %s4308 = scalar_lea.vmem [#allocation1], 1
    %4309 = vst [vmem:[%s4308] ss:$4 sm:$0xff] %v963
    %s4310 = scalar_lea.vmem [#allocation1], 2
    %4311 = vst [vmem:[%s4310] ss:$4 sm:$0xff] %v1203
    %v4312 = vld.sshfl [vmem:[#allocation1] sm:$0xff pattern:$0x73625140]
    %4314 = vst [vmem:[#allocation1] ss:$4 sm:$0xff] %v1442
    %s4315 = scalar_lea.vmem [#allocation1], 1
    %4316 = vst [vmem:[%s4315] ss:$4 sm:$0xff] %v964
    %s4317 = scalar_lea.vmem [#allocation1], 2
    %4318 = vst [vmem:[%s4317] ss:$4 sm:$0xff] %v1443
    %v4319 = vld.sshfl [vmem:[#allocation1] sm:$0xff pattern:$0x73625140]
    %4321 = vmatpush.xpose.msra.mxu0 0.0
    %4322 = vmatpush.xpose.msra.mxu0 0.0
    %4323 = vmatpush.xpose.msra.mxu0 0.0
    %4324 = vmatpush.xpose.msra.mxu0 0.0
    %4325 = vmatpush.xpose.msra.mxu0 0.0
    %4326 = vmatpush.xpose.msra.mxu0 0.0
    %4327 = vmatpush.xpose.msra.mxu0 0.0
    %4328 = vmatpush.xpose.msra.mxu0 0.0
    %4329 = vmatpush.xpose.msra.mxu0 0.0
    %4330 = vmatpush.xpose.msra.mxu0 0.0
    %4331 = vmatpush.xpose.msra.mxu0 0.0
    %4332 = vmatpush.xpose.msra.mxu0 0.0
    %4333 = vmatpush.xpose.msra.mxu0 0.0
    %4334 = vmatpush.xpose.msra.mxu0 0.0
    %4335 = vmatpush.xpose.msra.mxu0 0.0
    %4336 = vmatpush.xpose.msra.mxu0 %v4319
    %4337 = vmatmul.f32.gmra.mxu0 %v4312
    %v4338 = vpop.f32.mrf.mxu0
    %v4339 = vadd.f32 0.0, %v4338
    %4340 = vdwg.mxu0
    %4341 = vst [vmem:[#allocation1] ss:$4 sm:$0xff] %v1204
    %s4342 = scalar_lea.vmem [#allocation1], 1
    %4343 = vst [vmem:[%s4342] ss:$4 sm:$0xff] %v1205
    %s4344 = scalar_lea.vmem [#allocation1], 2
    %4345 = vst [vmem:[%s4344] ss:$4 sm:$0xff] %v966
    %v4346 = vld.sshfl [vmem:[#allocation1] sm:$0xff pattern:$0x73625140]
    %4348 = vst [vmem:[#allocation1] ss:$4 sm:$0xff] %v1444
    %s4349 = scalar_lea.vmem [#allocation1], 1
    %4350 = vst [vmem:[%s4349] ss:$4 sm:$0xff] %v1445
    %s4351 = scalar_lea.vmem [#allocation1], 2
    %4352 = vst [vmem:[%s4351] ss:$4 sm:$0xff] %v967
    %v4353 = vld.sshfl [vmem:[#allocation1] sm:$0xff pattern:$0x73625140]
    %4355 = vmatpush.xpose.msra.mxu0 0.0
    %4356 = vmatpush.xpose.msra.mxu0 0.0
    %4357 = vmatpush.xpose.msra.mxu0 0.0
    %4358 = vmatpush.xpose.msra.mxu0 0.0
    %4359 = vmatpush.xpose.msra.mxu0 0.0
    %4360 = vmatpush.xpose.msra.mxu0 0.0
    %4361 = vmatpush.xpose.msra.mxu0 0.0
    %4362 = vmatpush.xpose.msra.mxu0 0.0
    %4363 = vmatpush.xpose.msra.mxu0 0.0
    %4364 = vmatpush.xpose.msra.mxu0 0.0
    %4365 = vmatpush.xpose.msra.mxu0 0.0
    %4366 = vmatpush.xpose.msra.mxu0 0.0
    %4367 = vmatpush.xpose.msra.mxu0 0.0
    %4368 = vmatpush.xpose.msra.mxu0 0.0
    %4369 = vmatpush.xpose.msra.mxu0 0.0
    %4370 = vmatpush.xpose.msra.mxu0 %v4353
    %4371 = vmatmul.f32.gmra.mxu0 %v4346
    %v4372 = vpop.f32.mrf.mxu0
    %v4373 = vadd.f32 0.0, %v4372
    %4374 = vdwg.mxu0
    %4375 = vst [vmem:[#allocation1] ss:$4 sm:$0xff] %v1206
    %s4376 = scalar_lea.vmem [#allocation1], 1
    %4377 = vst [vmem:[%s4376] ss:$4 sm:$0xff] %v1207
    %s4378 = scalar_lea.vmem [#allocation1], 2
    %4379 = vst [vmem:[%s4378] ss:$4 sm:$0xff] %v1208
    %v4380 = vld.sshfl [vmem:[#allocation1] sm:$0xff pattern:$0x73625140]
    %4382 = vst [vmem:[#allocation1] ss:$4 sm:$0xff] %v1446
    %s4383 = scalar_lea.vmem [#allocation1], 1
    %4384 = vst [vmem:[%s4383] ss:$4 sm:$0xff] %v1447
    %s4385 = scalar_lea.vmem [#allocation1], 2
    %4386 = vst [vmem:[%s4385] ss:$4 sm:$0xff] %v1448
    %v4387 = vld.sshfl [vmem:[#allocation1] sm:$0xff pattern:$0x73625140]
    %4389 = vmatpush.xpose.msra.mxu0 0.0
    %4390 = vmatpush.xpose.msra.mxu0 0.0
    %4391 = vmatpush.xpose.msra.mxu0 0.0
    %4392 = vmatpush.xpose.msra.mxu0 0.0
    %4393 = vmatpush.xpose.msra.mxu0 0.0
    %4394 = vmatpush.xpose.msra.mxu0 0.0
    %4395 = vmatpush.xpose.msra.mxu0 0.0
    %4396 = vmatpush.xpose.msra.mxu0 0.0
    %4397 = vmatpush.xpose.msra.mxu0 0.0
    %4398 = vmatpush.xpose.msra.mxu0 0.0
    %4399 = vmatpush.xpose.msra.mxu0 0.0
    %4400 = vmatpush.xpose.msra.mxu0 0.0
    %4401 = vmatpush.xpose.msra.mxu0 0.0
    %4402 = vmatpush.xpose.msra.mxu0 0.0
    %4403 = vmatpush.xpose.msra.mxu0 0.0
    %4404 = vmatpush.xpose.msra.mxu0 %v4387
    %4405 = vmatmul.f32.gmra.mxu0 %v4380
    %v4406 = vpop.f32.mrf.mxu0
    %v4407 = vadd.f32 0.0, %v4406
    %4408 = vdwg.mxu0
    %v4409 = vmul.f32 %v1721, 0.5
    %v4410 = vmul.f32 %v1755, 0.5
    %v4411 = vmul.f32 %v1789, 0.5
    %v4412 = vmul.f32 %v1823, 0.5
    %v4413 = vmul.f32 %v1857, 0.5
    %v4414 = vmul.f32 %v1891, 0.5
    %v4415 = vmul.f32 %v1925, 0.5
    %v4416 = vmul.f32 %v1959, 0.5
    %v4417 = vmul.f32 %v1993, 0.5
    %v4418 = vmul.f32 %v2027, 0.5
    %v4419 = vmul.f32 %v2061, 0.5
    %v4420 = vmul.f32 %v2095, 0.5
    %v4421 = vmul.f32 %v2129, 0.5
    %v4422 = vmul.f32 %v2163, 0.5
    %v4423 = vmul.f32 %v2197, 0.5
    %v4424 = vmul.f32 %v2231, 0.5
    %v4425 = vmul.f32 %v2265, 0.5
    %v4426 = vmul.f32 %v2299, 0.5
    %v4427 = vmul.f32 %v2333, 0.5
    %v4428 = vmul.f32 %v2367, 0.5
    %v4429 = vmul.f32 %v2401, 0.5
    %v4430 = vmul.f32 %v2435, 0.5
    %v4431 = vmul.f32 %v2469, 0.5
    %v4432 = vmul.f32 %v2503, 0.5
    %v4433 = vmul.f32 %v2537, 0.5
    %v4434 = vmul.f32 %v2571, 0.5
    %v4435 = vmul.f32 %v2605, 0.5
    %v4436 = vmul.f32 %v2639, 0.5
    %v4437 = vmul.f32 %v2673, 0.5
    %v4438 = vmul.f32 %v2707, 0.5
    %v4439 = vmul.f32 %v2741, 0.5
    %v4440 = vmul.f32 %v2775, 0.5
    %v4441 = vmul.f32 %v2809, 0.5
    %v4442 = vmul.f32 %v2843, 0.5
    %v4443 = vmul.f32 %v2877, 0.5
    %v4444 = vmul.f32 %v2911, 0.5
    %v4445 = vmul.f32 %v2945, 0.5
    %v4446 = vmul.f32 %v2979, 0.5
    %v4447 = vmul.f32 %v3013, 0.5
    %v4448 = vmul.f32 %v3047, 0.5
    %v4449 = vmul.f32 %v3081, 0.5
    %v4450 = vmul.f32 %v3115, 0.5
    %v4451 = vmul.f32 %v3149, 0.5
    %v4452 = vmul.f32 %v3183, 0.5
    %v4453 = vmul.f32 %v3217, 0.5
    %v4454 = vmul.f32 %v3251, 0.5
    %v4455 = vmul.f32 %v3285, 0.5
    %v4456 = vmul.f32 %v3319, 0.5
    %v4457 = vmul.f32 %v3353, 0.5
    %v4458 = vmul.f32 %v3387, 0.5
    %v4459 = vmul.f32 %v3421, 0.5
    %v4460 = vmul.f32 %v3455, 0.5
    %v4461 = vmul.f32 %v3489, 0.5
    %v4462 = vmul.f32 %v3523, 0.5
    %v4463 = vmul.f32 %v3557, 0.5
    %v4464 = vmul.f32 %v3591, 0.5
    %v4465 = vmul.f32 %v3625, 0.5
    %v4466 = vmul.f32 %v3659, 0.5
    %v4467 = vmul.f32 %v3693, 0.5
    %v4468 = vmul.f32 %v3727, 0.5
    %v4469 = vmul.f32 %v3761, 0.5
    %v4470 = vmul.f32 %v3795, 0.5
    %v4471 = vmul.f32 %v3829, 0.5
    %v4472 = vmul.f32 %v3863, 0.5
    %v4473 = vmul.f32 %v3897, 0.5
    %v4474 = vmul.f32 %v3931, 0.5
    %v4475 = vmul.f32 %v3965, 0.5
    %v4476 = vmul.f32 %v3999, 0.5
    %v4477 = vmul.f32 %v4033, 0.5
    %v4478 = vmul.f32 %v4067, 0.5
    %v4479 = vmul.f32 %v4101, 0.5
    %v4480 = vmul.f32 %v4135, 0.5
    %v4481 = vmul.f32 %v4169, 0.5
    %v4482 = vmul.f32 %v4203, 0.5
    %v4483 = vmul.f32 %v4237, 0.5
    %v4484 = vmul.f32 %v4271, 0.5
    %v4485 = vmul.f32 %v4305, 0.5
    %v4486 = vmul.f32 %v4339, 0.5
    %v4487 = vmul.f32 %v4373, 0.5
    %v4488 = vmul.f32 %v4407, 0.5
    %vm4489 = vcmask 46080
    %v4490 = vsel %vm4489, %v4409, -inf
    %4491 = vmax.xlane.f32.xlu0 %v4490
    %v4492 = vpop.xlane.xlu0 %4491
    %v4493 = vsel %vm4489, %v4410, -inf
    %4494 = vmax.xlane.f32.xlu0 %v4493
    %v4495 = vpop.xlane.xlu0 %4494
    %v4496 = vsel %vm4489, %v4411, -inf
    %4497 = vmax.xlane.f32.xlu0 %v4496
    %v4498 = vpop.xlane.xlu0 %4497
    %v4499 = vsel %vm4489, %v4412, -inf
    %4500 = vmax.xlane.f32.xlu0 %v4499
    %v4501 = vpop.xlane.xlu0 %4500
    %v4502 = vsel %vm4489, %v4413, -inf
    %4503 = vmax.xlane.f32.xlu0 %v4502
    %v4504 = vpop.xlane.xlu0 %4503
    %v4505 = vsel %vm4489, %v4414, -inf
    %4506 = vmax.xlane.f32.xlu0 %v4505
    %v4507 = vpop.xlane.xlu0 %4506
    %v4508 = vsel %vm4489, %v4415, -inf
    %4509 = vmax.xlane.f32.xlu0 %v4508
    %v4510 = vpop.xlane.xlu0 %4509
    %v4511 = vsel %vm4489, %v4416, -inf
    %4512 = vmax.xlane.f32.xlu0 %v4511
    %v4513 = vpop.xlane.xlu0 %4512
    %v4514 = vsel %vm4489, %v4417, -inf
    %4515 = vmax.xlane.f32.xlu0 %v4514
    %v4516 = vpop.xlane.xlu0 %4515
    %v4517 = vsel %vm4489, %v4418, -inf
    %4518 = vmax.xlane.f32.xlu0 %v4517
    %v4519 = vpop.xlane.xlu0 %4518
    %v4520 = vsel %vm4489, %v4419, -inf
    %4521 = vmax.xlane.f32.xlu0 %v4520
    %v4522 = vpop.xlane.xlu0 %4521
    %v4523 = vsel %vm4489, %v4420, -inf
    %4524 = vmax.xlane.f32.xlu0 %v4523
    %v4525 = vpop.xlane.xlu0 %4524
    %v4526 = vsel %vm4489, %v4421, -inf
    %4527 = vmax.xlane.f32.xlu0 %v4526
    %v4528 = vpop.xlane.xlu0 %4527
    %v4529 = vsel %vm4489, %v4422, -inf
    %4530 = vmax.xlane.f32.xlu0 %v4529
    %v4531 = vpop.xlane.xlu0 %4530
    %v4532 = vsel %vm4489, %v4423, -inf
    %4533 = vmax.xlane.f32.xlu0 %v4532
    %v4534 = vpop.xlane.xlu0 %4533
    %v4535 = vsel %vm4489, %v4424, -inf
    %4536 = vmax.xlane.f32.xlu0 %v4535
    %v4537 = vpop.xlane.xlu0 %4536
    %v4538 = vsel %vm4489, %v4425, -inf
    %4539 = vmax.xlane.f32.xlu0 %v4538
    %v4540 = vpop.xlane.xlu0 %4539
    %v4541 = vsel %vm4489, %v4426, -inf
    %4542 = vmax.xlane.f32.xlu0 %v4541
    %v4543 = vpop.xlane.xlu0 %4542
    %v4544 = vsel %vm4489, %v4427, -inf
    %4545 = vmax.xlane.f32.xlu0 %v4544
    %v4546 = vpop.xlane.xlu0 %4545
    %v4547 = vsel %vm4489, %v4428, -inf
    %4548 = vmax.xlane.f32.xlu0 %v4547
    %v4549 = vpop.xlane.xlu0 %4548
    %v4550 = vsel %vm4489, %v4429, -inf
    %4551 = vmax.xlane.f32.xlu0 %v4550
    %v4552 = vpop.xlane.xlu0 %4551
    %v4553 = vsel %vm4489, %v4430, -inf
    %4554 = vmax.xlane.f32.xlu0 %v4553
    %v4555 = vpop.xlane.xlu0 %4554
    %v4556 = vsel %vm4489, %v4431, -inf
    %4557 = vmax.xlane.f32.xlu0 %v4556
    %v4558 = vpop.xlane.xlu0 %4557
    %v4559 = vsel %vm4489, %v4432, -inf
    %4560 = vmax.xlane.f32.xlu0 %v4559
    %v4561 = vpop.xlane.xlu0 %4560
    %v4562 = vsel %vm4489, %v4433, -inf
    %4563 = vmax.xlane.f32.xlu0 %v4562
    %v4564 = vpop.xlane.xlu0 %4563
    %v4565 = vsel %vm4489, %v4434, -inf
    %4566 = vmax.xlane.f32.xlu0 %v4565
    %v4567 = vpop.xlane.xlu0 %4566
    %v4568 = vsel %vm4489, %v4435, -inf
    %4569 = vmax.xlane.f32.xlu0 %v4568
    %v4570 = vpop.xlane.xlu0 %4569
    %v4571 = vsel %vm4489, %v4436, -inf
    %4572 = vmax.xlane.f32.xlu0 %v4571
    %v4573 = vpop.xlane.xlu0 %4572
    %v4574 = vsel %vm4489, %v4437, -inf
    %4575 = vmax.xlane.f32.xlu0 %v4574
    %v4576 = vpop.xlane.xlu0 %4575
    %v4577 = vsel %vm4489, %v4438, -inf
    %4578 = vmax.xlane.f32.xlu0 %v4577
    %v4579 = vpop.xlane.xlu0 %4578
    %v4580 = vsel %vm4489, %v4439, -inf
    %4581 = vmax.xlane.f32.xlu0 %v4580
    %v4582 = vpop.xlane.xlu0 %4581
    %v4583 = vsel %vm4489, %v4440, -inf
    %4584 = vmax.xlane.f32.xlu0 %v4583
    %v4585 = vpop.xlane.xlu0 %4584
    %v4586 = vsel %vm4489, %v4441, -inf
    %4587 = vmax.xlane.f32.xlu0 %v4586
    %v4588 = vpop.xlane.xlu0 %4587
    %v4589 = vsel %vm4489, %v4442, -inf
    %4590 = vmax.xlane.f32.xlu0 %v4589
    %v4591 = vpop.xlane.xlu0 %4590
    %v4592 = vsel %vm4489, %v4443, -inf
    %4593 = vmax.xlane.f32.xlu0 %v4592
    %v4594 = vpop.xlane.xlu0 %4593
    %v4595 = vsel %vm4489, %v4444, -inf
    %4596 = vmax.xlane.f32.xlu0 %v4595
    %v4597 = vpop.xlane.xlu0 %4596
    %v4598 = vsel %vm4489, %v4445, -inf
    %4599 = vmax.xlane.f32.xlu0 %v4598
    %v4600 = vpop.xlane.xlu0 %4599
    %v4601 = vsel %vm4489, %v4446, -inf
    %4602 = vmax.xlane.f32.xlu0 %v4601
    %v4603 = vpop.xlane.xlu0 %4602
    %v4604 = vsel %vm4489, %v4447, -inf
    %4605 = vmax.xlane.f32.xlu0 %v4604
    %v4606 = vpop.xlane.xlu0 %4605
    %v4607 = vsel %vm4489, %v4448, -inf
    %4608 = vmax.xlane.f32.xlu0 %v4607
    %v4609 = vpop.xlane.xlu0 %4608
    %v4610 = vsel %vm4489, %v4449, -inf
    %4611 = vmax.xlane.f32.xlu0 %v4610
    %v4612 = vpop.xlane.xlu0 %4611
    %v4613 = vsel %vm4489, %v4450, -inf
    %4614 = vmax.xlane.f32.xlu0 %v4613
    %v4615 = vpop.xlane.xlu0 %4614
    %v4616 = vsel %vm4489, %v4451, -inf
    %4617 = vmax.xlane.f32.xlu0 %v4616
    %v4618 = vpop.xlane.xlu0 %4617
    %v4619 = vsel %vm4489, %v4452, -inf
    %4620 = vmax.xlane.f32.xlu0 %v4619
    %v4621 = vpop.xlane.xlu0 %4620
    %v4622 = vsel %vm4489, %v4453, -inf
    %4623 = vmax.xlane.f32.xlu0 %v4622
    %v4624 = vpop.xlane.xlu0 %4623
    %v4625 = vsel %vm4489, %v4454, -inf
    %4626 = vmax.xlane.f32.xlu0 %v4625
    %v4627 = vpop.xlane.xlu0 %4626
    %v4628 = vsel %vm4489, %v4455, -inf
    %4629 = vmax.xlane.f32.xlu0 %v4628
    %v4630 = vpop.xlane.xlu0 %4629
    %v4631 = vsel %vm4489, %v4456, -inf
    %4632 = vmax.xlane.f32.xlu0 %v4631
    %v4633 = vpop.xlane.xlu0 %4632
    %v4634 = vsel %vm4489, %v4457, -inf
    %4635 = vmax.xlane.f32.xlu0 %v4634
    %v4636 = vpop.xlane.xlu0 %4635
    %v4637 = vsel %vm4489, %v4458, -inf
    %4638 = vmax.xlane.f32.xlu0 %v4637
    %v4639 = vpop.xlane.xlu0 %4638
    %v4640 = vsel %vm4489, %v4459, -inf
    %4641 = vmax.xlane.f32.xlu0 %v4640
    %v4642 = vpop.xlane.xlu0 %4641
    %v4643 = vsel %vm4489, %v4460, -inf
    %4644 = vmax.xlane.f32.xlu0 %v4643
    %v4645 = vpop.xlane.xlu0 %4644
    %v4646 = vsel %vm4489, %v4461, -inf
    %4647 = vmax.xlane.f32.xlu0 %v4646
    %v4648 = vpop.xlane.xlu0 %4647
    %v4649 = vsel %vm4489, %v4462, -inf
    %4650 = vmax.xlane.f32.xlu0 %v4649
    %v4651 = vpop.xlane.xlu0 %4650
    %v4652 = vsel %vm4489, %v4463, -inf
    %4653 = vmax.xlane.f32.xlu0 %v4652
    %v4654 = vpop.xlane.xlu0 %4653
    %v4655 = vsel %vm4489, %v4464, -inf
    %4656 = vmax.xlane.f32.xlu0 %v4655
    %v4657 = vpop.xlane.xlu0 %4656
    %v4658 = vsel %vm4489, %v4465, -inf
    %4659 = vmax.xlane.f32.xlu0 %v4658
    %v4660 = vpop.xlane.xlu0 %4659
    %v4661 = vsel %vm4489, %v4466, -inf
    %4662 = vmax.xlane.f32.xlu0 %v4661
    %v4663 = vpop.xlane.xlu0 %4662
    %v4664 = vsel %vm4489, %v4467, -inf
    %4665 = vmax.xlane.f32.xlu0 %v4664
    %v4666 = vpop.xlane.xlu0 %4665
    %v4667 = vsel %vm4489, %v4468, -inf
    %4668 = vmax.xlane.f32.xlu0 %v4667
    %v4669 = vpop.xlane.xlu0 %4668
    %v4670 = vsel %vm4489, %v4469, -inf
    %4671 = vmax.xlane.f32.xlu0 %v4670
    %v4672 = vpop.xlane.xlu0 %4671
    %v4673 = vsel %vm4489, %v4470, -inf
    %4674 = vmax.xlane.f32.xlu0 %v4673
    %v4675 = vpop.xlane.xlu0 %4674
    %v4676 = vsel %vm4489, %v4471, -inf
    %4677 = vmax.xlane.f32.xlu0 %v4676
    %v4678 = vpop.xlane.xlu0 %4677
    %v4679 = vsel %vm4489, %v4472, -inf
    %4680 = vmax.xlane.f32.xlu0 %v4679
    %v4681 = vpop.xlane.xlu0 %4680
    %v4682 = vsel %vm4489, %v4473, -inf
    %4683 = vmax.xlane.f32.xlu0 %v4682
    %v4684 = vpop.xlane.xlu0 %4683
    %v4685 = vsel %vm4489, %v4474, -inf
    %4686 = vmax.xlane.f32.xlu0 %v4685
    %v4687 = vpop.xlane.xlu0 %4686
    %v4688 = vsel %vm4489, %v4475, -inf
    %4689 = vmax.xlane.f32.xlu0 %v4688
    %v4690 = vpop.xlane.xlu0 %4689
    %v4691 = vsel %vm4489, %v4476, -inf
    %4692 = vmax.xlane.f32.xlu0 %v4691
    %v4693 = vpop.xlane.xlu0 %4692
    %v4694 = vsel %vm4489, %v4477, -inf
    %4695 = vmax.xlane.f32.xlu0 %v4694
    %v4696 = vpop.xlane.xlu0 %4695
    %v4697 = vsel %vm4489, %v4478, -inf
    %4698 = vmax.xlane.f32.xlu0 %v4697
    %v4699 = vpop.xlane.xlu0 %4698
    %v4700 = vsel %vm4489, %v4479, -inf
    %4701 = vmax.xlane.f32.xlu0 %v4700
    %v4702 = vpop.xlane.xlu0 %4701
    %v4703 = vsel %vm4489, %v4480, -inf
    %4704 = vmax.xlane.f32.xlu0 %v4703
    %v4705 = vpop.xlane.xlu0 %4704
    %v4706 = vsel %vm4489, %v4481, -inf
    %4707 = vmax.xlane.f32.xlu0 %v4706
    %v4708 = vpop.xlane.xlu0 %4707
    %v4709 = vsel %vm4489, %v4482, -inf
    %4710 = vmax.xlane.f32.xlu0 %v4709
    %v4711 = vpop.xlane.xlu0 %4710
    %v4712 = vsel %vm4489, %v4483, -inf
    %4713 = vmax.xlane.f32.xlu0 %v4712
    %v4714 = vpop.xlane.xlu0 %4713
    %v4715 = vsel %vm4489, %v4484, -inf
    %4716 = vmax.xlane.f32.xlu0 %v4715
    %v4717 = vpop.xlane.xlu0 %4716
    %v4718 = vsel %vm4489, %v4485, -inf
    %4719 = vmax.xlane.f32.xlu0 %v4718
    %v4720 = vpop.xlane.xlu0 %4719
    %v4721 = vsel %vm4489, %v4486, -inf
    %4722 = vmax.xlane.f32.xlu0 %v4721
    %v4723 = vpop.xlane.xlu0 %4722
    %v4724 = vsel %vm4489, %v4487, -inf
    %4725 = vmax.xlane.f32.xlu0 %v4724
    %v4726 = vpop.xlane.xlu0 %4725
    %v4727 = vsel %vm4489, %v4488, -inf
    %4728 = vmax.xlane.f32.xlu0 %v4727
    %v4729 = vpop.xlane.xlu0 %4728
    %v4730 = vsub.f32 %v4409, %v4492
    %v4731 = vsub.f32 %v4410, %v4495
    %v4732 = vsub.f32 %v4411, %v4498
    %v4733 = vsub.f32 %v4412, %v4501
    %v4734 = vsub.f32 %v4413, %v4504
    %v4735 = vsub.f32 %v4414, %v4507
    %v4736 = vsub.f32 %v4415, %v4510
    %v4737 = vsub.f32 %v4416, %v4513
    %v4738 = vsub.f32 %v4417, %v4516
    %v4739 = vsub.f32 %v4418, %v4519
    %v4740 = vsub.f32 %v4419, %v4522
    %v4741 = vsub.f32 %v4420, %v4525
    %v4742 = vsub.f32 %v4421, %v4528
    %v4743 = vsub.f32 %v4422, %v4531
    %v4744 = vsub.f32 %v4423, %v4534
    %v4745 = vsub.f32 %v4424, %v4537
    %v4746 = vsub.f32 %v4425, %v4540
    %v4747 = vsub.f32 %v4426, %v4543
    %v4748 = vsub.f32 %v4427, %v4546
    %v4749 = vsub.f32 %v4428, %v4549
    %v4750 = vsub.f32 %v4429, %v4552
    %v4751 = vsub.f32 %v4430, %v4555
    %v4752 = vsub.f32 %v4431, %v4558
    %v4753 = vsub.f32 %v4432, %v4561
    %v4754 = vsub.f32 %v4433, %v4564
    %v4755 = vsub.f32 %v4434, %v4567
    %v4756 = vsub.f32 %v4435, %v4570
    %v4757 = vsub.f32 %v4436, %v4573
    %v4758 = vsub.f32 %v4437, %v4576
    %v4759 = vsub.f32 %v4438, %v4579
    %v4760 = vsub.f32 %v4439, %v4582
    %v4761 = vsub.f32 %v4440, %v4585
    %v4762 = vsub.f32 %v4441, %v4588
    %v4763 = vsub.f32 %v4442, %v4591
    %v4764 = vsub.f32 %v4443, %v4594
    %v4765 = vsub.f32 %v4444, %v4597
    %v4766 = vsub.f32 %v4445, %v4600
    %v4767 = vsub.f32 %v4446, %v4603
    %v4768 = vsub.f32 %v4447, %v4606
    %v4769 = vsub.f32 %v4448, %v4609
    %v4770 = vsub.f32 %v4449, %v4612
    %v4771 = vsub.f32 %v4450, %v4615
    %v4772 = vsub.f32 %v4451, %v4618
    %v4773 = vsub.f32 %v4452, %v4621
    %v4774 = vsub.f32 %v4453, %v4624
    %v4775 = vsub.f32 %v4454, %v4627
    %v4776 = vsub.f32 %v4455, %v4630
    %v4777 = vsub.f32 %v4456, %v4633
    %v4778 = vsub.f32 %v4457, %v4636
    %v4779 = vsub.f32 %v4458, %v4639
    %v4780 = vsub.f32 %v4459, %v4642
    %v4781 = vsub.f32 %v4460, %v4645
    %v4782 = vsub.f32 %v4461, %v4648
    %v4783 = vsub.f32 %v4462, %v4651
    %v4784 = vsub.f32 %v4463, %v4654
    %v4785 = vsub.f32 %v4464, %v4657
    %v4786 = vsub.f32 %v4465, %v4660
    %v4787 = vsub.f32 %v4466, %v4663
    %v4788 = vsub.f32 %v4467, %v4666
    %v4789 = vsub.f32 %v4468, %v4669
    %v4790 = vsub.f32 %v4469, %v4672
    %v4791 = vsub.f32 %v4470, %v4675
    %v4792 = vsub.f32 %v4471, %v4678
    %v4793 = vsub.f32 %v4472, %v4681
    %v4794 = vsub.f32 %v4473, %v4684
    %v4795 = vsub.f32 %v4474, %v4687
    %v4796 = vsub.f32 %v4475, %v4690
    %v4797 = vsub.f32 %v4476, %v4693
    %v4798 = vsub.f32 %v4477, %v4696
    %v4799 = vsub.f32 %v4478, %v4699
    %v4800 = vsub.f32 %v4479, %v4702
    %v4801 = vsub.f32 %v4480, %v4705
    %v4802 = vsub.f32 %v4481, %v4708
    %v4803 = vsub.f32 %v4482, %v4711
    %v4804 = vsub.f32 %v4483, %v4714
    %v4805 = vsub.f32 %v4484, %v4717
    %v4806 = vsub.f32 %v4485, %v4720
    %v4807 = vsub.f32 %v4486, %v4723
    %v4808 = vsub.f32 %v4487, %v4726
    %v4809 = vsub.f32 %v4488, %v4729
    %v4810 = vmul.f32 %v4730, 1.442695
    %v4811 = vpow.pop %v4810
    %v4812 = vmul.f32 %v4731, 1.442695
    %v4813 = vpow.pop %v4812
    %v4814 = vmul.f32 %v4732, 1.442695
    %v4815 = vpow.pop %v4814
    %v4816 = vmul.f32 %v4733, 1.442695
    %v4817 = vpow.pop %v4816
    %v4818 = vmul.f32 %v4734, 1.442695
    %v4819 = vpow.pop %v4818
    %v4820 = vmul.f32 %v4735, 1.442695
    %v4821 = vpow.pop %v4820
    %v4822 = vmul.f32 %v4736, 1.442695
    %v4823 = vpow.pop %v4822
    %v4824 = vmul.f32 %v4737, 1.442695
    %v4825 = vpow.pop %v4824
    %v4826 = vmul.f32 %v4738, 1.442695
    %v4827 = vpow.pop %v4826
    %v4828 = vmul.f32 %v4739, 1.442695
    %v4829 = vpow.pop %v4828
    %v4830 = vmul.f32 %v4740, 1.442695
    %v4831 = vpow.pop %v4830
    %v4832 = vmul.f32 %v4741, 1.442695
    %v4833 = vpow.pop %v4832
    %v4834 = vmul.f32 %v4742, 1.442695
    %v4835 = vpow.pop %v4834
    %v4836 = vmul.f32 %v4743, 1.442695
    %v4837 = vpow.pop %v4836
    %v4838 = vmul.f32 %v4744, 1.442695
    %v4839 = vpow.pop %v4838
    %v4840 = vmul.f32 %v4745, 1.442695
    %v4841 = vpow.pop %v4840
    %v4842 = vmul.f32 %v4746, 1.442695
    %v4843 = vpow.pop %v4842
    %v4844 = vmul.f32 %v4747, 1.442695
    %v4845 = vpow.pop %v4844
    %v4846 = vmul.f32 %v4748, 1.442695
    %v4847 = vpow.pop %v4846
    %v4848 = vmul.f32 %v4749, 1.442695
    %v4849 = vpow.pop %v4848
    %v4850 = vmul.f32 %v4750, 1.442695
    %v4851 = vpow.pop %v4850
    %v4852 = vmul.f32 %v4751, 1.442695
    %v4853 = vpow.pop %v4852
    %v4854 = vmul.f32 %v4752, 1.442695
    %v4855 = vpow.pop %v4854
    %v4856 = vmul.f32 %v4753, 1.442695
    %v4857 = vpow.pop %v4856
    %v4858 = vmul.f32 %v4754, 1.442695
    %v4859 = vpow.pop %v4858
    %v4860 = vmul.f32 %v4755, 1.442695
    %v4861 = vpow.pop %v4860
    %v4862 = vmul.f32 %v4756, 1.442695
    %v4863 = vpow.pop %v4862
    %v4864 = vmul.f32 %v4757, 1.442695
    %v4865 = vpow.pop %v4864
    %v4866 = vmul.f32 %v4758, 1.442695
    %v4867 = vpow.pop %v4866
    %v4868 = vmul.f32 %v4759, 1.442695
    %v4869 = vpow.pop %v4868
    %v4870 = vmul.f32 %v4760, 1.442695
    %v4871 = vpow.pop %v4870
    %v4872 = vmul.f32 %v4761, 1.442695
    %v4873 = vpow.pop %v4872
    %v4874 = vmul.f32 %v4762, 1.442695
    %v4875 = vpow.pop %v4874
    %v4876 = vmul.f32 %v4763, 1.442695
    %v4877 = vpow.pop %v4876
    %v4878 = vmul.f32 %v4764, 1.442695
    %v4879 = vpow.pop %v4878
    %v4880 = vmul.f32 %v4765, 1.442695
    %v4881 = vpow.pop %v4880
    %v4882 = vmul.f32 %v4766, 1.442695
    %v4883 = vpow.pop %v4882
    %v4884 = vmul.f32 %v4767, 1.442695
    %v4885 = vpow.pop %v4884
    %v4886 = vmul.f32 %v4768, 1.442695
    %v4887 = vpow.pop %v4886
    %v4888 = vmul.f32 %v4769, 1.442695
    %v4889 = vpow.pop %v4888
    %v4890 = vmul.f32 %v4770, 1.442695
    %v4891 = vpow.pop %v4890
    %v4892 = vmul.f32 %v4771, 1.442695
    %v4893 = vpow.pop %v4892
    %v4894 = vmul.f32 %v4772, 1.442695
    %v4895 = vpow.pop %v4894
    %v4896 = vmul.f32 %v4773, 1.442695
    %v4897 = vpow.pop %v4896
    %v4898 = vmul.f32 %v4774, 1.442695
    %v4899 = vpow.pop %v4898
    %v4900 = vmul.f32 %v4775, 1.442695
    %v4901 = vpow.pop %v4900
    %v4902 = vmul.f32 %v4776, 1.442695
    %v4903 = vpow.pop %v4902
    %v4904 = vmul.f32 %v4777, 1.442695
    %v4905 = vpow.pop %v4904
    %v4906 = vmul.f32 %v4778, 1.442695
    %v4907 = vpow.pop %v4906
    %v4908 = vmul.f32 %v4779, 1.442695
    %v4909 = vpow.pop %v4908
    %v4910 = vmul.f32 %v4780, 1.442695
    %v4911 = vpow.pop %v4910
    %v4912 = vmul.f32 %v4781, 1.442695
    %v4913 = vpow.pop %v4912
    %v4914 = vmul.f32 %v4782, 1.442695
    %v4915 = vpow.pop %v4914
    %v4916 = vmul.f32 %v4783, 1.442695
    %v4917 = vpow.pop %v4916
    %v4918 = vmul.f32 %v4784, 1.442695
    %v4919 = vpow.pop %v4918
    %v4920 = vmul.f32 %v4785, 1.442695
    %v4921 = vpow.pop %v4920
    %v4922 = vmul.f32 %v4786, 1.442695
    %v4923 = vpow.pop %v4922
    %v4924 = vmul.f32 %v4787, 1.442695
    %v4925 = vpow.pop %v4924
    %v4926 = vmul.f32 %v4788, 1.442695
    %v4927 = vpow.pop %v4926
    %v4928 = vmul.f32 %v4789, 1.442695
    %v4929 = vpow.pop %v4928
    %v4930 = vmul.f32 %v4790, 1.442695
    %v4931 = vpow.pop %v4930
    %v4932 = vmul.f32 %v4791, 1.442695
    %v4933 = vpow.pop %v4932
    %v4934 = vmul.f32 %v4792, 1.442695
    %v4935 = vpow.pop %v4934
    %v4936 = vmul.f32 %v4793, 1.442695
    %v4937 = vpow.pop %v4936
    %v4938 = vmul.f32 %v4794, 1.442695
    %v4939 = vpow.pop %v4938
    %v4940 = vmul.f32 %v4795, 1.442695
    %v4941 = vpow.pop %v4940
    %v4942 = vmul.f32 %v4796, 1.442695
    %v4943 = vpow.pop %v4942
    %v4944 = vmul.f32 %v4797, 1.442695
    %v4945 = vpow.pop %v4944
    %v4946 = vmul.f32 %v4798, 1.442695
    %v4947 = vpow.pop %v4946
    %v4948 = vmul.f32 %v4799, 1.442695
    %v4949 = vpow.pop %v4948
    %v4950 = vmul.f32 %v4800, 1.442695
    %v4951 = vpow.pop %v4950
    %v4952 = vmul.f32 %v4801, 1.442695
    %v4953 = vpow.pop %v4952
    %v4954 = vmul.f32 %v4802, 1.442695
    %v4955 = vpow.pop %v4954
    %v4956 = vmul.f32 %v4803, 1.442695
    %v4957 = vpow.pop %v4956
    %v4958 = vmul.f32 %v4804, 1.442695
    %v4959 = vpow.pop %v4958
    %v4960 = vmul.f32 %v4805, 1.442695
    %v4961 = vpow.pop %v4960
    %v4962 = vmul.f32 %v4806, 1.442695
    %v4963 = vpow.pop %v4962
    %v4964 = vmul.f32 %v4807, 1.442695
    %v4965 = vpow.pop %v4964
    %v4966 = vmul.f32 %v4808, 1.442695
    %v4967 = vpow.pop %v4966
    %v4968 = vmul.f32 %v4809, 1.442695
    %v4969 = vpow.pop %v4968
    %v4970 = vsel %vm4489, %v4811, 0.0
    %4971 = vadd.xlane.f32.xlu0 %v4970
    %v4972 = vpop.xlane.xlu0 %4971
    %v4973 = vsel %vm4489, %v4813, 0.0
    %4974 = vadd.xlane.f32.xlu0 %v4973
    %v4975 = vpop.xlane.xlu0 %4974
    %v4976 = vsel %vm4489, %v4815, 0.0
    %4977 = vadd.xlane.f32.xlu0 %v4976
    %v4978 = vpop.xlane.xlu0 %4977
    %v4979 = vsel %vm4489, %v4817, 0.0
    %4980 = vadd.xlane.f32.xlu0 %v4979
    %v4981 = vpop.xlane.xlu0 %4980
    %v4982 = vsel %vm4489, %v4819, 0.0
    %4983 = vadd.xlane.f32.xlu0 %v4982
    %v4984 = vpop.xlane.xlu0 %4983
    %v4985 = vsel %vm4489, %v4821, 0.0
    %4986 = vadd.xlane.f32.xlu0 %v4985
    %v4987 = vpop.xlane.xlu0 %4986
    %v4988 = vsel %vm4489, %v4823, 0.0
    %4989 = vadd.xlane.f32.xlu0 %v4988
    %v4990 = vpop.xlane.xlu0 %4989
    %v4991 = vsel %vm4489, %v4825, 0.0
    %4992 = vadd.xlane.f32.xlu0 %v4991
    %v4993 = vpop.xlane.xlu0 %4992
    %v4994 = vsel %vm4489, %v4827, 0.0
    %4995 = vadd.xlane.f32.xlu0 %v4994
    %v4996 = vpop.xlane.xlu0 %4995
    %v4997 = vsel %vm4489, %v4829, 0.0
    %4998 = vadd.xlane.f32.xlu0 %v4997
    %v4999 = vpop.xlane.xlu0 %4998
    %v5000 = vsel %vm4489, %v4831, 0.0
    %5001 = vadd.xlane.f32.xlu0 %v5000
    %v5002 = vpop.xlane.xlu0 %5001
    %v5003 = vsel %vm4489, %v4833, 0.0
    %5004 = vadd.xlane.f32.xlu0 %v5003
    %v5005 = vpop.xlane.xlu0 %5004
    %v5006 = vsel %vm4489, %v4835, 0.0
    %5007 = vadd.xlane.f32.xlu0 %v5006
    %v5008 = vpop.xlane.xlu0 %5007
    %v5009 = vsel %vm4489, %v4837, 0.0
    %5010 = vadd.xlane.f32.xlu0 %v5009
    %v5011 = vpop.xlane.xlu0 %5010
    %v5012 = vsel %vm4489, %v4839, 0.0
    %5013 = vadd.xlane.f32.xlu0 %v5012
    %v5014 = vpop.xlane.xlu0 %5013
    %v5015 = vsel %vm4489, %v4841, 0.0
    %5016 = vadd.xlane.f32.xlu0 %v5015
    %v5017 = vpop.xlane.xlu0 %5016
    %v5018 = vsel %vm4489, %v4843, 0.0
    %5019 = vadd.xlane.f32.xlu0 %v5018
    %v5020 = vpop.xlane.xlu0 %5019
    %v5021 = vsel %vm4489, %v4845, 0.0
    %5022 = vadd.xlane.f32.xlu0 %v5021
    %v5023 = vpop.xlane.xlu0 %5022
    %v5024 = vsel %vm4489, %v4847, 0.0
    %5025 = vadd.xlane.f32.xlu0 %v5024
    %v5026 = vpop.xlane.xlu0 %5025
    %v5027 = vsel %vm4489, %v4849, 0.0
    %5028 = vadd.xlane.f32.xlu0 %v5027
    %v5029 = vpop.xlane.xlu0 %5028
    %v5030 = vsel %vm4489, %v4851, 0.0
    %5031 = vadd.xlane.f32.xlu0 %v5030
    %v5032 = vpop.xlane.xlu0 %5031
    %v5033 = vsel %vm4489, %v4853, 0.0
    %5034 = vadd.xlane.f32.xlu0 %v5033
    %v5035 = vpop.xlane.xlu0 %5034
    %v5036 = vsel %vm4489, %v4855, 0.0
    %5037 = vadd.xlane.f32.xlu0 %v5036
    %v5038 = vpop.xlane.xlu0 %5037
    %v5039 = vsel %vm4489, %v4857, 0.0
    %5040 = vadd.xlane.f32.xlu0 %v5039
    %v5041 = vpop.xlane.xlu0 %5040
    %v5042 = vsel %vm4489, %v4859, 0.0
    %5043 = vadd.xlane.f32.xlu0 %v5042
    %v5044 = vpop.xlane.xlu0 %5043
    %v5045 = vsel %vm4489, %v4861, 0.0
    %5046 = vadd.xlane.f32.xlu0 %v5045
    %v5047 = vpop.xlane.xlu0 %5046
    %v5048 = vsel %vm4489, %v4863, 0.0
    %5049 = vadd.xlane.f32.xlu0 %v5048
    %v5050 = vpop.xlane.xlu0 %5049
    %v5051 = vsel %vm4489, %v4865, 0.0
    %5052 = vadd.xlane.f32.xlu0 %v5051
    %v5053 = vpop.xlane.xlu0 %5052
    %v5054 = vsel %vm4489, %v4867, 0.0
    %5055 = vadd.xlane.f32.xlu0 %v5054
    %v5056 = vpop.xlane.xlu0 %5055
    %v5057 = vsel %vm4489, %v4869, 0.0
    %5058 = vadd.xlane.f32.xlu0 %v5057
    %v5059 = vpop.xlane.xlu0 %5058
    %v5060 = vsel %vm4489, %v4871, 0.0
    %5061 = vadd.xlane.f32.xlu0 %v5060
    %v5062 = vpop.xlane.xlu0 %5061
    %v5063 = vsel %vm4489, %v4873, 0.0
    %5064 = vadd.xlane.f32.xlu0 %v5063
    %v5065 = vpop.xlane.xlu0 %5064
    %v5066 = vsel %vm4489, %v4875, 0.0
    %5067 = vadd.xlane.f32.xlu0 %v5066
    %v5068 = vpop.xlane.xlu0 %5067
    %v5069 = vsel %vm4489, %v4877, 0.0
    %5070 = vadd.xlane.f32.xlu0 %v5069
    %v5071 = vpop.xlane.xlu0 %5070
    %v5072 = vsel %vm4489, %v4879, 0.0
    %5073 = vadd.xlane.f32.xlu0 %v5072
    %v5074 = vpop.xlane.xlu0 %5073
    %v5075 = vsel %vm4489, %v4881, 0.0
    %5076 = vadd.xlane.f32.xlu0 %v5075
    %v5077 = vpop.xlane.xlu0 %5076
    %v5078 = vsel %vm4489, %v4883, 0.0
    %5079 = vadd.xlane.f32.xlu0 %v5078
    %v5080 = vpop.xlane.xlu0 %5079
    %v5081 = vsel %vm4489, %v4885, 0.0
    %5082 = vadd.xlane.f32.xlu0 %v5081
    %v5083 = vpop.xlane.xlu0 %5082
    %v5084 = vsel %vm4489, %v4887, 0.0
    %5085 = vadd.xlane.f32.xlu0 %v5084
    %v5086 = vpop.xlane.xlu0 %5085
    %v5087 = vsel %vm4489, %v4889, 0.0
    %5088 = vadd.xlane.f32.xlu0 %v5087
    %v5089 = vpop.xlane.xlu0 %5088
    %v5090 = vsel %vm4489, %v4891, 0.0
    %5091 = vadd.xlane.f32.xlu0 %v5090
    %v5092 = vpop.xlane.xlu0 %5091
    %v5093 = vsel %vm4489, %v4893, 0.0
    %5094 = vadd.xlane.f32.xlu0 %v5093
    %v5095 = vpop.xlane.xlu0 %5094
    %v5096 = vsel %vm4489, %v4895, 0.0
    %5097 = vadd.xlane.f32.xlu0 %v5096
    %v5098 = vpop.xlane.xlu0 %5097
    %v5099 = vsel %vm4489, %v4897, 0.0
    %5100 = vadd.xlane.f32.xlu0 %v5099
    %v5101 = vpop.xlane.xlu0 %5100
    %v5102 = vsel %vm4489, %v4899, 0.0
    %5103 = vadd.xlane.f32.xlu0 %v5102
    %v5104 = vpop.xlane.xlu0 %5103
    %v5105 = vsel %vm4489, %v4901, 0.0
    %5106 = vadd.xlane.f32.xlu0 %v5105
    %v5107 = vpop.xlane.xlu0 %5106
    %v5108 = vsel %vm4489, %v4903, 0.0
    %5109 = vadd.xlane.f32.xlu0 %v5108
    %v5110 = vpop.xlane.xlu0 %5109
    %v5111 = vsel %vm4489, %v4905, 0.0
    %5112 = vadd.xlane.f32.xlu0 %v5111
    %v5113 = vpop.xlane.xlu0 %5112
    %v5114 = vsel %vm4489, %v4907, 0.0
    %5115 = vadd.xlane.f32.xlu0 %v5114
    %v5116 = vpop.xlane.xlu0 %5115
    %v5117 = vsel %vm4489, %v4909, 0.0
    %5118 = vadd.xlane.f32.xlu0 %v5117
    %v5119 = vpop.xlane.xlu0 %5118
    %v5120 = vsel %vm4489, %v4911, 0.0
    %5121 = vadd.xlane.f32.xlu0 %v5120
    %v5122 = vpop.xlane.xlu0 %5121
    %v5123 = vsel %vm4489, %v4913, 0.0
    %5124 = vadd.xlane.f32.xlu0 %v5123
    %v5125 = vpop.xlane.xlu0 %5124
    %v5126 = vsel %vm4489, %v4915, 0.0
    %5127 = vadd.xlane.f32.xlu0 %v5126
    %v5128 = vpop.xlane.xlu0 %5127
    %v5129 = vsel %vm4489, %v4917, 0.0
    %5130 = vadd.xlane.f32.xlu0 %v5129
    %v5131 = vpop.xlane.xlu0 %5130
    %v5132 = vsel %vm4489, %v4919, 0.0
    %5133 = vadd.xlane.f32.xlu0 %v5132
    %v5134 = vpop.xlane.xlu0 %5133
    %v5135 = vsel %vm4489, %v4921, 0.0
    %5136 = vadd.xlane.f32.xlu0 %v5135
    %v5137 = vpop.xlane.xlu0 %5136
    %v5138 = vsel %vm4489, %v4923, 0.0
    %5139 = vadd.xlane.f32.xlu0 %v5138
    %v5140 = vpop.xlane.xlu0 %5139
    %v5141 = vsel %vm4489, %v4925, 0.0
    %5142 = vadd.xlane.f32.xlu0 %v5141
    %v5143 = vpop.xlane.xlu0 %5142
    %v5144 = vsel %vm4489, %v4927, 0.0
    %5145 = vadd.xlane.f32.xlu0 %v5144
    %v5146 = vpop.xlane.xlu0 %5145
    %v5147 = vsel %vm4489, %v4929, 0.0
    %5148 = vadd.xlane.f32.xlu0 %v5147
    %v5149 = vpop.xlane.xlu0 %5148
    %v5150 = vsel %vm4489, %v4931, 0.0
    %5151 = vadd.xlane.f32.xlu0 %v5150
    %v5152 = vpop.xlane.xlu0 %5151
    %v5153 = vsel %vm4489, %v4933, 0.0
    %5154 = vadd.xlane.f32.xlu0 %v5153
    %v5155 = vpop.xlane.xlu0 %5154
    %v5156 = vsel %vm4489, %v4935, 0.0
    %5157 = vadd.xlane.f32.xlu0 %v5156
    %v5158 = vpop.xlane.xlu0 %5157
    %v5159 = vsel %vm4489, %v4937, 0.0
    %5160 = vadd.xlane.f32.xlu0 %v5159
    %v5161 = vpop.xlane.xlu0 %5160
    %v5162 = vsel %vm4489, %v4939, 0.0
    %5163 = vadd.xlane.f32.xlu0 %v5162
    %v5164 = vpop.xlane.xlu0 %5163
    %v5165 = vsel %vm4489, %v4941, 0.0
    %5166 = vadd.xlane.f32.xlu0 %v5165
    %v5167 = vpop.xlane.xlu0 %5166
    %v5168 = vsel %vm4489, %v4943, 0.0
    %5169 = vadd.xlane.f32.xlu0 %v5168
    %v5170 = vpop.xlane.xlu0 %5169
    %v5171 = vsel %vm4489, %v4945, 0.0
    %5172 = vadd.xlane.f32.xlu0 %v5171
    %v5173 = vpop.xlane.xlu0 %5172
    %v5174 = vsel %vm4489, %v4947, 0.0
    %5175 = vadd.xlane.f32.xlu0 %v5174
    %v5176 = vpop.xlane.xlu0 %5175
    %v5177 = vsel %vm4489, %v4949, 0.0
    %5178 = vadd.xlane.f32.xlu0 %v5177
    %v5179 = vpop.xlane.xlu0 %5178
    %v5180 = vsel %vm4489, %v4951, 0.0
    %5181 = vadd.xlane.f32.xlu0 %v5180
    %v5182 = vpop.xlane.xlu0 %5181
    %v5183 = vsel %vm4489, %v4953, 0.0
    %5184 = vadd.xlane.f32.xlu0 %v5183
    %v5185 = vpop.xlane.xlu0 %5184
    %v5186 = vsel %vm4489, %v4955, 0.0
    %5187 = vadd.xlane.f32.xlu0 %v5186
    %v5188 = vpop.xlane.xlu0 %5187
    %v5189 = vsel %vm4489, %v4957, 0.0
    %5190 = vadd.xlane.f32.xlu0 %v5189
    %v5191 = vpop.xlane.xlu0 %5190
    %v5192 = vsel %vm4489, %v4959, 0.0
    %5193 = vadd.xlane.f32.xlu0 %v5192
    %v5194 = vpop.xlane.xlu0 %5193
    %v5195 = vsel %vm4489, %v4961, 0.0
    %5196 = vadd.xlane.f32.xlu0 %v5195
    %v5197 = vpop.xlane.xlu0 %5196
    %v5198 = vsel %vm4489, %v4963, 0.0
    %5199 = vadd.xlane.f32.xlu0 %v5198
    %v5200 = vpop.xlane.xlu0 %5199
    %v5201 = vsel %vm4489, %v4965, 0.0
    %5202 = vadd.xlane.f32.xlu0 %v5201
    %v5203 = vpop.xlane.xlu0 %5202
    %v5204 = vsel %vm4489, %v4967, 0.0
    %5205 = vadd.xlane.f32.xlu0 %v5204
    %v5206 = vpop.xlane.xlu0 %5205
    %v5207 = vsel %vm4489, %v4969, 0.0
    %5208 = vadd.xlane.f32.xlu0 %v5207
    %v5209 = vpop.xlane.xlu0 %5208
    %v5210 = vrcp.pop %v4972
    %v5211 = vrcp.pop %v4975
    %v5212 = vrcp.pop %v4978
    %v5213 = vrcp.pop %v4981
    %v5214 = vrcp.pop %v4984
    %v5215 = vrcp.pop %v4987
    %v5216 = vrcp.pop %v4990
    %v5217 = vrcp.pop %v4993
    %v5218 = vrcp.pop %v4996
    %v5219 = vrcp.pop %v4999
    %v5220 = vrcp.pop %v5002
    %v5221 = vrcp.pop %v5005
    %v5222 = vrcp.pop %v5008
    %v5223 = vrcp.pop %v5011
    %v5224 = vrcp.pop %v5014
    %v5225 = vrcp.pop %v5017
    %v5226 = vrcp.pop %v5020
    %v5227 = vrcp.pop %v5023
    %v5228 = vrcp.pop %v5026
    %v5229 = vrcp.pop %v5029
    %v5230 = vrcp.pop %v5032
    %v5231 = vrcp.pop %v5035
    %v5232 = vrcp.pop %v5038
    %v5233 = vrcp.pop %v5041
    %v5234 = vrcp.pop %v5044
    %v5235 = vrcp.pop %v5047
    %v5236 = vrcp.pop %v5050
    %v5237 = vrcp.pop %v5053
    %v5238 = vrcp.pop %v5056
    %v5239 = vrcp.pop %v5059
    %v5240 = vrcp.pop %v5062
    %v5241 = vrcp.pop %v5065
    %v5242 = vrcp.pop %v5068
    %v5243 = vrcp.pop %v5071
    %v5244 = vrcp.pop %v5074
    %v5245 = vrcp.pop %v5077
    %v5246 = vrcp.pop %v5080
    %v5247 = vrcp.pop %v5083
    %v5248 = vrcp.pop %v5086
    %v5249 = vrcp.pop %v5089
    %v5250 = vrcp.pop %v5092
    %v5251 = vrcp.pop %v5095
    %v5252 = vrcp.pop %v5098
    %v5253 = vrcp.pop %v5101
    %v5254 = vrcp.pop %v5104
    %v5255 = vrcp.pop %v5107
    %v5256 = vrcp.pop %v5110
    %v5257 = vrcp.pop %v5113
    %v5258 = vrcp.pop %v5116
    %v5259 = vrcp.pop %v5119
    %v5260 = vrcp.pop %v5122
    %v5261 = vrcp.pop %v5125
    %v5262 = vrcp.pop %v5128
    %v5263 = vrcp.pop %v5131
    %v5264 = vrcp.pop %v5134
    %v5265 = vrcp.pop %v5137
    %v5266 = vrcp.pop %v5140
    %v5267 = vrcp.pop %v5143
    %v5268 = vrcp.pop %v5146
    %v5269 = vrcp.pop %v5149
    %v5270 = vrcp.pop %v5152
    %v5271 = vrcp.pop %v5155
    %v5272 = vrcp.pop %v5158
    %v5273 = vrcp.pop %v5161
    %v5274 = vrcp.pop %v5164
    %v5275 = vrcp.pop %v5167
    %v5276 = vrcp.pop %v5170
    %v5277 = vrcp.pop %v5173
    %v5278 = vrcp.pop %v5176
    %v5279 = vrcp.pop %v5179
    %v5280 = vrcp.pop %v5182
    %v5281 = vrcp.pop %v5185
    %v5282 = vrcp.pop %v5188
    %v5283 = vrcp.pop %v5191
    %v5284 = vrcp.pop %v5194
    %v5285 = vrcp.pop %v5197
    %v5286 = vrcp.pop %v5200
    %v5287 = vrcp.pop %v5203
    %v5288 = vrcp.pop %v5206
    %v5289 = vrcp.pop %v5209
    %v5290 = vmul.f32 %v4811, %v5210
    %v5291 = vmul.f32 %v4813, %v5211
    %v5292 = vmul.f32 %v4815, %v5212
    %v5293 = vmul.f32 %v4817, %v5213
    %v5294 = vmul.f32 %v4819, %v5214
    %v5295 = vmul.f32 %v4821, %v5215
    %v5296 = vmul.f32 %v4823, %v5216
    %v5297 = vmul.f32 %v4825, %v5217
    %v5298 = vmul.f32 %v4827, %v5218
    %v5299 = vmul.f32 %v4829, %v5219
    %v5300 = vmul.f32 %v4831, %v5220
    %v5301 = vmul.f32 %v4833, %v5221
    %v5302 = vmul.f32 %v4835, %v5222
    %v5303 = vmul.f32 %v4837, %v5223
    %v5304 = vmul.f32 %v4839, %v5224
    %v5305 = vmul.f32 %v4841, %v5225
    %v5306 = vmul.f32 %v4843, %v5226
    %v5307 = vmul.f32 %v4845, %v5227
    %v5308 = vmul.f32 %v4847, %v5228
    %v5309 = vmul.f32 %v4849, %v5229
    %v5310 = vmul.f32 %v4851, %v5230
    %v5311 = vmul.f32 %v4853, %v5231
    %v5312 = vmul.f32 %v4855, %v5232
    %v5313 = vmul.f32 %v4857, %v5233
    %v5314 = vmul.f32 %v4859, %v5234
    %v5315 = vmul.f32 %v4861, %v5235
    %v5316 = vmul.f32 %v4863, %v5236
    %v5317 = vmul.f32 %v4865, %v5237
    %v5318 = vmul.f32 %v4867, %v5238
    %v5319 = vmul.f32 %v4869, %v5239
    %v5320 = vmul.f32 %v4871, %v5240
    %v5321 = vmul.f32 %v4873, %v5241
    %v5322 = vmul.f32 %v4875, %v5242
    %v5323 = vmul.f32 %v4877, %v5243
    %v5324 = vmul.f32 %v4879, %v5244
    %v5325 = vmul.f32 %v4881, %v5245
    %v5326 = vmul.f32 %v4883, %v5246
    %v5327 = vmul.f32 %v4885, %v5247
    %v5328 = vmul.f32 %v4887, %v5248
    %v5329 = vmul.f32 %v4889, %v5249
    %v5330 = vmul.f32 %v4891, %v5250
    %v5331 = vmul.f32 %v4893, %v5251
    %v5332 = vmul.f32 %v4895, %v5252
    %v5333 = vmul.f32 %v4897, %v5253
    %v5334 = vmul.f32 %v4899, %v5254
    %v5335 = vmul.f32 %v4901, %v5255
    %v5336 = vmul.f32 %v4903, %v5256
    %v5337 = vmul.f32 %v4905, %v5257
    %v5338 = vmul.f32 %v4907, %v5258
    %v5339 = vmul.f32 %v4909, %v5259
    %v5340 = vmul.f32 %v4911, %v5260
    %v5341 = vmul.f32 %v4913, %v5261
    %v5342 = vmul.f32 %v4915, %v5262
    %v5343 = vmul.f32 %v4917, %v5263
    %v5344 = vmul.f32 %v4919, %v5264
    %v5345 = vmul.f32 %v4921, %v5265
    %v5346 = vmul.f32 %v4923, %v5266
    %v5347 = vmul.f32 %v4925, %v5267
    %v5348 = vmul.f32 %v4927, %v5268
    %v5349 = vmul.f32 %v4929, %v5269
    %v5350 = vmul.f32 %v4931, %v5270
    %v5351 = vmul.f32 %v4933, %v5271
    %v5352 = vmul.f32 %v4935, %v5272
    %v5353 = vmul.f32 %v4937, %v5273
    %v5354 = vmul.f32 %v4939, %v5274
    %v5355 = vmul.f32 %v4941, %v5275
    %v5356 = vmul.f32 %v4943, %v5276
    %v5357 = vmul.f32 %v4945, %v5277
    %v5358 = vmul.f32 %v4947, %v5278
    %v5359 = vmul.f32 %v4949, %v5279
    %v5360 = vmul.f32 %v4951, %v5280
    %v5361 = vmul.f32 %v4953, %v5281
    %v5362 = vmul.f32 %v4955, %v5282
    %v5363 = vmul.f32 %v4957, %v5283
    %v5364 = vmul.f32 %v4959, %v5284
    %v5365 = vmul.f32 %v4961, %v5285
    %v5366 = vmul.f32 %v4963, %v5286
    %v5367 = vmul.f32 %v4965, %v5287
    %v5368 = vmul.f32 %v4967, %v5288
    %v5369 = vmul.f32 %v4969, %v5289
    %5370 = vst [vmem:[#allocation1] ss:$4 sm:$0xff] %v791
    %s5371 = scalar_lea.vmem [#allocation1], 1
    %5372 = vst [vmem:[%s5371] ss:$4 sm:$0xff] %v1509
    %s5373 = scalar_lea.vmem [#allocation1], 2
    %5374 = vst [vmem:[%s5373] ss:$4 sm:$0xff] %v1510
    %v5375 = vld.sshfl [vmem:[#allocation1] sm:$0xff pattern:$0x73625140]
    %vm5376 = vcmask 48128
    %v5378 = vsel %vm5376, %v5290, 0
    %vm5380 = vcmask 1045504
    %v5381 = vsel %vm5380, %v5375, 0
    %5383 = vmatpush.msra.mxu0 0.0
    %5384 = vmatpush.msra.mxu0 0.0
    %5385 = vmatpush.msra.mxu0 0.0
    %5386 = vmatpush.msra.mxu0 0.0
    %5387 = vmatpush.msra.mxu0 0.0
    %5388 = vmatpush.msra.mxu0 0.0
    %5389 = vmatpush.msra.mxu0 0.0
    %5390 = vmatpush.msra.mxu0 0.0
    %5391 = vmatpush.msra.mxu0 0.0
    %5392 = vmatpush.msra.mxu0 0.0
    %5393 = vmatpush.msra.mxu0 0.0
    %5394 = vmatpush.msra.mxu0 0.0
    %5395 = vmatpush.msra.mxu0 0.0
    %5396 = vmatpush.msra.mxu0 0.0
    %5397 = vmatpush.msra.mxu0 0.0
    %5398 = vmatpush.msra.mxu0 %v5381
    %5399 = vmatmul.f32.gmra.mxu0 %v5378
    %v5400 = vpop.f32.mrf.mxu0
    %v5401 = vadd.f32 0.0, %v5400
    %5402 = vdwg.mxu0
    %5403 = vst [vmem:[#allocation1] ss:$4 sm:$0xff] %v1511
    %s5404 = scalar_lea.vmem [#allocation1], 1
    %5405 = vst [vmem:[%s5404] ss:$4 sm:$0xff] %v794
    %s5406 = scalar_lea.vmem [#allocation1], 2
    %5407 = vst [vmem:[%s5406] ss:$4 sm:$0xff] %v1512
    %v5408 = vld.sshfl [vmem:[#allocation1] sm:$0xff pattern:$0x73625140]
    %v5410 = vsel %vm5376, %v5291, 0
    %v5412 = vsel %vm5380, %v5408, 0
    %5414 = vmatpush.msra.mxu0 0.0
    %5415 = vmatpush.msra.mxu0 0.0
    %5416 = vmatpush.msra.mxu0 0.0
    %5417 = vmatpush.msra.mxu0 0.0
    %5418 = vmatpush.msra.mxu0 0.0
    %5419 = vmatpush.msra.mxu0 0.0
    %5420 = vmatpush.msra.mxu0 0.0
    %5421 = vmatpush.msra.mxu0 0.0
    %5422 = vmatpush.msra.mxu0 0.0
    %5423 = vmatpush.msra.mxu0 0.0
    %5424 = vmatpush.msra.mxu0 0.0
    %5425 = vmatpush.msra.mxu0 0.0
    %5426 = vmatpush.msra.mxu0 0.0
    %5427 = vmatpush.msra.mxu0 0.0
    %5428 = vmatpush.msra.mxu0 0.0
    %5429 = vmatpush.msra.mxu0 %v5412
    %5430 = vmatmul.f32.gmra.mxu0 %v5410
    %v5431 = vpop.f32.mrf.mxu0
    %v5432 = vadd.f32 0.0, %v5431
    %5433 = vdwg.mxu0
    %5434 = vst [vmem:[#allocation1] ss:$4 sm:$0xff] %v1513
    %s5435 = scalar_lea.vmem [#allocation1], 1
    %5436 = vst [vmem:[%s5435] ss:$4 sm:$0xff] %v1514
    %s5437 = scalar_lea.vmem [#allocation1], 2
    %5438 = vst [vmem:[%s5437] ss:$4 sm:$0xff] %v797
    %v5439 = vld.sshfl [vmem:[#allocation1] sm:$0xff pattern:$0x73625140]
    %v5441 = vsel %vm5376, %v5292, 0
    %v5443 = vsel %vm5380, %v5439, 0
    %5445 = vmatpush.msra.mxu0 0.0
    %5446 = vmatpush.msra.mxu0 0.0
    %5447 = vmatpush.msra.mxu0 0.0
    %5448 = vmatpush.msra.mxu0 0.0
    %5449 = vmatpush.msra.mxu0 0.0
    %5450 = vmatpush.msra.mxu0 0.0
    %5451 = vmatpush.msra.mxu0 0.0
    %5452 = vmatpush.msra.mxu0 0.0
    %5453 = vmatpush.msra.mxu0 0.0
    %5454 = vmatpush.msra.mxu0 0.0
    %5455 = vmatpush.msra.mxu0 0.0
    %5456 = vmatpush.msra.mxu0 0.0
    %5457 = vmatpush.msra.mxu0 0.0
    %5458 = vmatpush.msra.mxu0 0.0
    %5459 = vmatpush.msra.mxu0 0.0
    %5460 = vmatpush.msra.mxu0 %v5443
    %5461 = vmatmul.f32.gmra.mxu0 %v5441
    %v5462 = vpop.f32.mrf.mxu0
    %v5463 = vadd.f32 0.0, %v5462
    %5464 = vdwg.mxu0
    %5465 = vst [vmem:[#allocation1] ss:$4 sm:$0xff] %v1515
    %s5466 = scalar_lea.vmem [#allocation1], 1
    %5467 = vst [vmem:[%s5466] ss:$4 sm:$0xff] %v1516
    %s5468 = scalar_lea.vmem [#allocation1], 2
    %5469 = vst [vmem:[%s5468] ss:$4 sm:$0xff] %v1517
    %v5470 = vld.sshfl [vmem:[#allocation1] sm:$0xff pattern:$0x73625140]
    %v5472 = vsel %vm5376, %v5293, 0
    %v5474 = vsel %vm5380, %v5470, 0
    %5476 = vmatpush.msra.mxu0 0.0
    %5477 = vmatpush.msra.mxu0 0.0
    %5478 = vmatpush.msra.mxu0 0.0
    %5479 = vmatpush.msra.mxu0 0.0
    %5480 = vmatpush.msra.mxu0 0.0
    %5481 = vmatpush.msra.mxu0 0.0
    %5482 = vmatpush.msra.mxu0 0.0
    %5483 = vmatpush.msra.mxu0 0.0
    %5484 = vmatpush.msra.mxu0 0.0
    %5485 = vmatpush.msra.mxu0 0.0
    %5486 = vmatpush.msra.mxu0 0.0
    %5487 = vmatpush.msra.mxu0 0.0
    %5488 = vmatpush.msra.mxu0 0.0
    %5489 = vmatpush.msra.mxu0 0.0
    %5490 = vmatpush.msra.mxu0 0.0
    %5491 = vmatpush.msra.mxu0 %v5474
    %5492 = vmatmul.f32.gmra.mxu0 %v5472
    %v5493 = vpop.f32.mrf.mxu0
    %v5494 = vadd.f32 0.0, %v5493
    %5495 = vdwg.mxu0
    %5496 = vst [vmem:[#allocation1] ss:$4 sm:$0xff] %v800
    %s5497 = scalar_lea.vmem [#allocation1], 1
    %5498 = vst [vmem:[%s5497] ss:$4 sm:$0xff] %v1518
    %s5499 = scalar_lea.vmem [#allocation1], 2
    %5500 = vst [vmem:[%s5499] ss:$4 sm:$0xff] %v1519
    %v5501 = vld.sshfl [vmem:[#allocation1] sm:$0xff pattern:$0x73625140]
    %v5503 = vsel %vm5376, %v5294, 0
    %v5505 = vsel %vm5380, %v5501, 0
    %5507 = vmatpush.msra.mxu0 0.0
    %5508 = vmatpush.msra.mxu0 0.0
    %5509 = vmatpush.msra.mxu0 0.0
    %5510 = vmatpush.msra.mxu0 0.0
    %5511 = vmatpush.msra.mxu0 0.0
    %5512 = vmatpush.msra.mxu0 0.0
    %5513 = vmatpush.msra.mxu0 0.0
    %5514 = vmatpush.msra.mxu0 0.0
    %5515 = vmatpush.msra.mxu0 0.0
    %5516 = vmatpush.msra.mxu0 0.0
    %5517 = vmatpush.msra.mxu0 0.0
    %5518 = vmatpush.msra.mxu0 0.0
    %5519 = vmatpush.msra.mxu0 0.0
    %5520 = vmatpush.msra.mxu0 0.0
    %5521 = vmatpush.msra.mxu0 0.0
    %5522 = vmatpush.msra.mxu0 %v5505
    %5523 = vmatmul.f32.gmra.mxu0 %v5503
    %v5524 = vpop.f32.mrf.mxu0
    %v5525 = vadd.f32 0.0, %v5524
    %5526 = vdwg.mxu0
    %5527 = vst [vmem:[#allocation1] ss:$4 sm:$0xff] %v1520
    %s5528 = scalar_lea.vmem [#allocation1], 1
    %5529 = vst [vmem:[%s5528] ss:$4 sm:$0xff] %v803
    %s5530 = scalar_lea.vmem [#allocation1], 2
    %5531 = vst [vmem:[%s5530] ss:$4 sm:$0xff] %v1521
    %v5532 = vld.sshfl [vmem:[#allocation1] sm:$0xff pattern:$0x73625140]
    %v5534 = vsel %vm5376, %v5295, 0
    %v5536 = vsel %vm5380, %v5532, 0
    %5538 = vmatpush.msra.mxu0 0.0
    %5539 = vmatpush.msra.mxu0 0.0
    %5540 = vmatpush.msra.mxu0 0.0
    %5541 = vmatpush.msra.mxu0 0.0
    %5542 = vmatpush.msra.mxu0 0.0
    %5543 = vmatpush.msra.mxu0 0.0
    %5544 = vmatpush.msra.mxu0 0.0
    %5545 = vmatpush.msra.mxu0 0.0
    %5546 = vmatpush.msra.mxu0 0.0
    %5547 = vmatpush.msra.mxu0 0.0
    %5548 = vmatpush.msra.mxu0 0.0
    %5549 = vmatpush.msra.mxu0 0.0
    %5550 = vmatpush.msra.mxu0 0.0
    %5551 = vmatpush.msra.mxu0 0.0
    %5552 = vmatpush.msra.mxu0 0.0
    %5553 = vmatpush.msra.mxu0 %v5536
    %5554 = vmatmul.f32.gmra.mxu0 %v5534
    %v5555 = vpop.f32.mrf.mxu0
    %v5556 = vadd.f32 0.0, %v5555
    %5557 = vdwg.mxu0
    %5558 = vst [vmem:[#allocation1] ss:$4 sm:$0xff] %v1522
    %s5559 = scalar_lea.vmem [#allocation1], 1
    %5560 = vst [vmem:[%s5559] ss:$4 sm:$0xff] %v1523
    %s5561 = scalar_lea.vmem [#allocation1], 2
    %5562 = vst [vmem:[%s5561] ss:$4 sm:$0xff] %v806
    %v5563 = vld.sshfl [vmem:[#allocation1] sm:$0xff pattern:$0x73625140]
    %v5565 = vsel %vm5376, %v5296, 0
    %v5567 = vsel %vm5380, %v5563, 0
    %5569 = vmatpush.msra.mxu0 0.0
    %5570 = vmatpush.msra.mxu0 0.0
    %5571 = vmatpush.msra.mxu0 0.0
    %5572 = vmatpush.msra.mxu0 0.0
    %5573 = vmatpush.msra.mxu0 0.0
    %5574 = vmatpush.msra.mxu0 0.0
    %5575 = vmatpush.msra.mxu0 0.0
    %5576 = vmatpush.msra.mxu0 0.0
    %5577 = vmatpush.msra.mxu0 0.0
    %5578 = vmatpush.msra.mxu0 0.0
    %5579 = vmatpush.msra.mxu0 0.0
    %5580 = vmatpush.msra.mxu0 0.0
    %5581 = vmatpush.msra.mxu0 0.0
    %5582 = vmatpush.msra.mxu0 0.0
    %5583 = vmatpush.msra.mxu0 0.0
    %5584 = vmatpush.msra.mxu0 %v5567
    %5585 = vmatmul.f32.gmra.mxu0 %v5565
    %v5586 = vpop.f32.mrf.mxu0
    %v5587 = vadd.f32 0.0, %v5586
    %5588 = vdwg.mxu0
    %5589 = vst [vmem:[#allocation1] ss:$4 sm:$0xff] %v1524
    %s5590 = scalar_lea.vmem [#allocation1], 1
    %5591 = vst [vmem:[%s5590] ss:$4 sm:$0xff] %v1525
    %s5592 = scalar_lea.vmem [#allocation1], 2
    %5593 = vst [vmem:[%s5592] ss:$4 sm:$0xff] %v1526
    %v5594 = vld.sshfl [vmem:[#allocation1] sm:$0xff pattern:$0x73625140]
    %v5596 = vsel %vm5376, %v5297, 0
    %v5598 = vsel %vm5380, %v5594, 0
    %5600 = vmatpush.msra.mxu0 0.0
    %5601 = vmatpush.msra.mxu0 0.0
    %5602 = vmatpush.msra.mxu0 0.0
    %5603 = vmatpush.msra.mxu0 0.0
    %5604 = vmatpush.msra.mxu0 0.0
    %5605 = vmatpush.msra.mxu0 0.0
    %5606 = vmatpush.msra.mxu0 0.0
    %5607 = vmatpush.msra.mxu0 0.0
    %5608 = vmatpush.msra.mxu0 0.0
    %5609 = vmatpush.msra.mxu0 0.0
    %5610 = vmatpush.msra.mxu0 0.0
    %5611 = vmatpush.msra.mxu0 0.0
    %5612 = vmatpush.msra.mxu0 0.0
    %5613 = vmatpush.msra.mxu0 0.0
    %5614 = vmatpush.msra.mxu0 0.0
    %5615 = vmatpush.msra.mxu0 %v5598
    %5616 = vmatmul.f32.gmra.mxu0 %v5596
    %v5617 = vpop.f32.mrf.mxu0
    %v5618 = vadd.f32 0.0, %v5617
    %5619 = vdwg.mxu0
    %5620 = vst [vmem:[#allocation1] ss:$4 sm:$0xff] %v809
    %s5621 = scalar_lea.vmem [#allocation1], 1
    %5622 = vst [vmem:[%s5621] ss:$4 sm:$0xff] %v1527
    %s5623 = scalar_lea.vmem [#allocation1], 2
    %5624 = vst [vmem:[%s5623] ss:$4 sm:$0xff] %v1528
    %v5625 = vld.sshfl [vmem:[#allocation1] sm:$0xff pattern:$0x73625140]
    %v5627 = vsel %vm5376, %v5298, 0
    %v5629 = vsel %vm5380, %v5625, 0
    %5631 = vmatpush.msra.mxu0 0.0
    %5632 = vmatpush.msra.mxu0 0.0
    %5633 = vmatpush.msra.mxu0 0.0
    %5634 = vmatpush.msra.mxu0 0.0
    %5635 = vmatpush.msra.mxu0 0.0
    %5636 = vmatpush.msra.mxu0 0.0
    %5637 = vmatpush.msra.mxu0 0.0
    %5638 = vmatpush.msra.mxu0 0.0
    %5639 = vmatpush.msra.mxu0 0.0
    %5640 = vmatpush.msra.mxu0 0.0
    %5641 = vmatpush.msra.mxu0 0.0
    %5642 = vmatpush.msra.mxu0 0.0
    %5643 = vmatpush.msra.mxu0 0.0
    %5644 = vmatpush.msra.mxu0 0.0
    %5645 = vmatpush.msra.mxu0 0.0
    %5646 = vmatpush.msra.mxu0 %v5629
    %5647 = vmatmul.f32.gmra.mxu0 %v5627
    %v5648 = vpop.f32.mrf.mxu0
    %v5649 = vadd.f32 0.0, %v5648
    %5650 = vdwg.mxu0
    %5651 = vst [vmem:[#allocation1] ss:$4 sm:$0xff] %v1529
    %s5652 = scalar_lea.vmem [#allocation1], 1
    %5653 = vst [vmem:[%s5652] ss:$4 sm:$0xff] %v812
    %s5654 = scalar_lea.vmem [#allocation1], 2
    %5655 = vst [vmem:[%s5654] ss:$4 sm:$0xff] %v1530
    %v5656 = vld.sshfl [vmem:[#allocation1] sm:$0xff pattern:$0x73625140]
    %v5658 = vsel %vm5376, %v5299, 0
    %v5660 = vsel %vm5380, %v5656, 0
    %5662 = vmatpush.msra.mxu0 0.0
    %5663 = vmatpush.msra.mxu0 0.0
    %5664 = vmatpush.msra.mxu0 0.0
    %5665 = vmatpush.msra.mxu0 0.0
    %5666 = vmatpush.msra.mxu0 0.0
    %5667 = vmatpush.msra.mxu0 0.0
    %5668 = vmatpush.msra.mxu0 0.0
    %5669 = vmatpush.msra.mxu0 0.0
    %5670 = vmatpush.msra.mxu0 0.0
    %5671 = vmatpush.msra.mxu0 0.0
    %5672 = vmatpush.msra.mxu0 0.0
    %5673 = vmatpush.msra.mxu0 0.0
    %5674 = vmatpush.msra.mxu0 0.0
    %5675 = vmatpush.msra.mxu0 0.0
    %5676 = vmatpush.msra.mxu0 0.0
    %5677 = vmatpush.msra.mxu0 %v5660
    %5678 = vmatmul.f32.gmra.mxu0 %v5658
    %v5679 = vpop.f32.mrf.mxu0
    %v5680 = vadd.f32 0.0, %v5679
    %5681 = vdwg.mxu0
    %5682 = vst [vmem:[#allocation1] ss:$4 sm:$0xff] %v1531
    %s5683 = scalar_lea.vmem [#allocation1], 1
    %5684 = vst [vmem:[%s5683] ss:$4 sm:$0xff] %v1532
    %s5685 = scalar_lea.vmem [#allocation1], 2
    %5686 = vst [vmem:[%s5685] ss:$4 sm:$0xff] %v815
    %v5687 = vld.sshfl [vmem:[#allocation1] sm:$0xff pattern:$0x73625140]
    %v5689 = vsel %vm5376, %v5300, 0
    %v5691 = vsel %vm5380, %v5687, 0
    %5693 = vmatpush.msra.mxu0 0.0
    %5694 = vmatpush.msra.mxu0 0.0
    %5695 = vmatpush.msra.mxu0 0.0
    %5696 = vmatpush.msra.mxu0 0.0
    %5697 = vmatpush.msra.mxu0 0.0
    %5698 = vmatpush.msra.mxu0 0.0
    %5699 = vmatpush.msra.mxu0 0.0
    %5700 = vmatpush.msra.mxu0 0.0
    %5701 = vmatpush.msra.mxu0 0.0
    %5702 = vmatpush.msra.mxu0 0.0
    %5703 = vmatpush.msra.mxu0 0.0
    %5704 = vmatpush.msra.mxu0 0.0
    %5705 = vmatpush.msra.mxu0 0.0
    %5706 = vmatpush.msra.mxu0 0.0
    %5707 = vmatpush.msra.mxu0 0.0
    %5708 = vmatpush.msra.mxu0 %v5691
    %5709 = vmatmul.f32.gmra.mxu0 %v5689
    %v5710 = vpop.f32.mrf.mxu0
    %v5711 = vadd.f32 0.0, %v5710
    %5712 = vdwg.mxu0
    %5713 = vst [vmem:[#allocation1] ss:$4 sm:$0xff] %v1533
    %s5714 = scalar_lea.vmem [#allocation1], 1
    %5715 = vst [vmem:[%s5714] ss:$4 sm:$0xff] %v1534
    %s5716 = scalar_lea.vmem [#allocation1], 2
    %5717 = vst [vmem:[%s5716] ss:$4 sm:$0xff] %v1535
    %v5718 = vld.sshfl [vmem:[#allocation1] sm:$0xff pattern:$0x73625140]
    %v5720 = vsel %vm5376, %v5301, 0
    %v5722 = vsel %vm5380, %v5718, 0
    %5724 = vmatpush.msra.mxu0 0.0
    %5725 = vmatpush.msra.mxu0 0.0
    %5726 = vmatpush.msra.mxu0 0.0
    %5727 = vmatpush.msra.mxu0 0.0
    %5728 = vmatpush.msra.mxu0 0.0
    %5729 = vmatpush.msra.mxu0 0.0
    %5730 = vmatpush.msra.mxu0 0.0
    %5731 = vmatpush.msra.mxu0 0.0
    %5732 = vmatpush.msra.mxu0 0.0
    %5733 = vmatpush.msra.mxu0 0.0
    %5734 = vmatpush.msra.mxu0 0.0
    %5735 = vmatpush.msra.mxu0 0.0
    %5736 = vmatpush.msra.mxu0 0.0
    %5737 = vmatpush.msra.mxu0 0.0
    %5738 = vmatpush.msra.mxu0 0.0
    %5739 = vmatpush.msra.mxu0 %v5722
    %5740 = vmatmul.f32.gmra.mxu0 %v5720
    %v5741 = vpop.f32.mrf.mxu0
    %v5742 = vadd.f32 0.0, %v5741
    %5743 = vdwg.mxu0
    %5744 = vst [vmem:[#allocation1] ss:$4 sm:$0xff] %v818
    %s5745 = scalar_lea.vmem [#allocation1], 1
    %5746 = vst [vmem:[%s5745] ss:$4 sm:$0xff] %v1536
    %s5747 = scalar_lea.vmem [#allocation1], 2
    %5748 = vst [vmem:[%s5747] ss:$4 sm:$0xff] %v1537
    %v5749 = vld.sshfl [vmem:[#allocation1] sm:$0xff pattern:$0x73625140]
    %v5751 = vsel %vm5376, %v5302, 0
    %v5753 = vsel %vm5380, %v5749, 0
    %5755 = vmatpush.msra.mxu0 0.0
    %5756 = vmatpush.msra.mxu0 0.0
    %5757 = vmatpush.msra.mxu0 0.0
    %5758 = vmatpush.msra.mxu0 0.0
    %5759 = vmatpush.msra.mxu0 0.0
    %5760 = vmatpush.msra.mxu0 0.0
    %5761 = vmatpush.msra.mxu0 0.0
    %5762 = vmatpush.msra.mxu0 0.0
    %5763 = vmatpush.msra.mxu0 0.0
    %5764 = vmatpush.msra.mxu0 0.0
    %5765 = vmatpush.msra.mxu0 0.0
    %5766 = vmatpush.msra.mxu0 0.0
    %5767 = vmatpush.msra.mxu0 0.0
    %5768 = vmatpush.msra.mxu0 0.0
    %5769 = vmatpush.msra.mxu0 0.0
    %5770 = vmatpush.msra.mxu0 %v5753
    %5771 = vmatmul.f32.gmra.mxu0 %v5751
    %v5772 = vpop.f32.mrf.mxu0
    %v5773 = vadd.f32 0.0, %v5772
    %5774 = vdwg.mxu0
    %5775 = vst [vmem:[#allocation1] ss:$4 sm:$0xff] %v1538
    %s5776 = scalar_lea.vmem [#allocation1], 1
    %5777 = vst [vmem:[%s5776] ss:$4 sm:$0xff] %v821
    %s5778 = scalar_lea.vmem [#allocation1], 2
    %5779 = vst [vmem:[%s5778] ss:$4 sm:$0xff] %v1539
    %v5780 = vld.sshfl [vmem:[#allocation1] sm:$0xff pattern:$0x73625140]
    %v5782 = vsel %vm5376, %v5303, 0
    %v5784 = vsel %vm5380, %v5780, 0
    %5786 = vmatpush.msra.mxu0 0.0
    %5787 = vmatpush.msra.mxu0 0.0
    %5788 = vmatpush.msra.mxu0 0.0
    %5789 = vmatpush.msra.mxu0 0.0
    %5790 = vmatpush.msra.mxu0 0.0
    %5791 = vmatpush.msra.mxu0 0.0
    %5792 = vmatpush.msra.mxu0 0.0
    %5793 = vmatpush.msra.mxu0 0.0
    %5794 = vmatpush.msra.mxu0 0.0
    %5795 = vmatpush.msra.mxu0 0.0
    %5796 = vmatpush.msra.mxu0 0.0
    %5797 = vmatpush.msra.mxu0 0.0
    %5798 = vmatpush.msra.mxu0 0.0
    %5799 = vmatpush.msra.mxu0 0.0
    %5800 = vmatpush.msra.mxu0 0.0
    %5801 = vmatpush.msra.mxu0 %v5784
    %5802 = vmatmul.f32.gmra.mxu0 %v5782
    %v5803 = vpop.f32.mrf.mxu0
    %v5804 = vadd.f32 0.0, %v5803
    %5805 = vdwg.mxu0
    %5806 = vst [vmem:[#allocation1] ss:$4 sm:$0xff] %v1540
    %s5807 = scalar_lea.vmem [#allocation1], 1
    %5808 = vst [vmem:[%s5807] ss:$4 sm:$0xff] %v1541
    %s5809 = scalar_lea.vmem [#allocation1], 2
    %5810 = vst [vmem:[%s5809] ss:$4 sm:$0xff] %v824
    %v5811 = vld.sshfl [vmem:[#allocation1] sm:$0xff pattern:$0x73625140]
    %v5813 = vsel %vm5376, %v5304, 0
    %v5815 = vsel %vm5380, %v5811, 0
    %5817 = vmatpush.msra.mxu0 0.0
    %5818 = vmatpush.msra.mxu0 0.0
    %5819 = vmatpush.msra.mxu0 0.0
    %5820 = vmatpush.msra.mxu0 0.0
    %5821 = vmatpush.msra.mxu0 0.0
    %5822 = vmatpush.msra.mxu0 0.0
    %5823 = vmatpush.msra.mxu0 0.0
    %5824 = vmatpush.msra.mxu0 0.0
    %5825 = vmatpush.msra.mxu0 0.0
    %5826 = vmatpush.msra.mxu0 0.0
    %5827 = vmatpush.msra.mxu0 0.0
    %5828 = vmatpush.msra.mxu0 0.0
    %5829 = vmatpush.msra.mxu0 0.0
    %5830 = vmatpush.msra.mxu0 0.0
    %5831 = vmatpush.msra.mxu0 0.0
    %5832 = vmatpush.msra.mxu0 %v5815
    %5833 = vmatmul.f32.gmra.mxu0 %v5813
    %v5834 = vpop.f32.mrf.mxu0
    %v5835 = vadd.f32 0.0, %v5834
    %5836 = vdwg.mxu0
    %5837 = vst [vmem:[#allocation1] ss:$4 sm:$0xff] %v1542
    %s5838 = scalar_lea.vmem [#allocation1], 1
    %5839 = vst [vmem:[%s5838] ss:$4 sm:$0xff] %v1543
    %s5840 = scalar_lea.vmem [#allocation1], 2
    %5841 = vst [vmem:[%s5840] ss:$4 sm:$0xff] %v1544
    %v5842 = vld.sshfl [vmem:[#allocation1] sm:$0xff pattern:$0x73625140]
    %v5844 = vsel %vm5376, %v5305, 0
    %v5846 = vsel %vm5380, %v5842, 0
    %5848 = vmatpush.msra.mxu0 0.0
    %5849 = vmatpush.msra.mxu0 0.0
    %5850 = vmatpush.msra.mxu0 0.0
    %5851 = vmatpush.msra.mxu0 0.0
    %5852 = vmatpush.msra.mxu0 0.0
    %5853 = vmatpush.msra.mxu0 0.0
    %5854 = vmatpush.msra.mxu0 0.0
    %5855 = vmatpush.msra.mxu0 0.0
    %5856 = vmatpush.msra.mxu0 0.0
    %5857 = vmatpush.msra.mxu0 0.0
    %5858 = vmatpush.msra.mxu0 0.0
    %5859 = vmatpush.msra.mxu0 0.0
    %5860 = vmatpush.msra.mxu0 0.0
    %5861 = vmatpush.msra.mxu0 0.0
    %5862 = vmatpush.msra.mxu0 0.0
    %5863 = vmatpush.msra.mxu0 %v5846
    %5864 = vmatmul.f32.gmra.mxu0 %v5844
    %v5865 = vpop.f32.mrf.mxu0
    %v5866 = vadd.f32 0.0, %v5865
    %5867 = vdwg.mxu0
    %5868 = vst [vmem:[#allocation1] ss:$4 sm:$0xff] %v827
    %s5869 = scalar_lea.vmem [#allocation1], 1
    %5870 = vst [vmem:[%s5869] ss:$4 sm:$0xff] %v1545
    %s5871 = scalar_lea.vmem [#allocation1], 2
    %5872 = vst [vmem:[%s5871] ss:$4 sm:$0xff] %v1546
    %v5873 = vld.sshfl [vmem:[#allocation1] sm:$0xff pattern:$0x73625140]
    %v5875 = vsel %vm5376, %v5306, 0
    %v5877 = vsel %vm5380, %v5873, 0
    %5879 = vmatpush.msra.mxu0 0.0
    %5880 = vmatpush.msra.mxu0 0.0
    %5881 = vmatpush.msra.mxu0 0.0
    %5882 = vmatpush.msra.mxu0 0.0
    %5883 = vmatpush.msra.mxu0 0.0
    %5884 = vmatpush.msra.mxu0 0.0
    %5885 = vmatpush.msra.mxu0 0.0
    %5886 = vmatpush.msra.mxu0 0.0
    %5887 = vmatpush.msra.mxu0 0.0
    %5888 = vmatpush.msra.mxu0 0.0
    %5889 = vmatpush.msra.mxu0 0.0
    %5890 = vmatpush.msra.mxu0 0.0
    %5891 = vmatpush.msra.mxu0 0.0
    %5892 = vmatpush.msra.mxu0 0.0
    %5893 = vmatpush.msra.mxu0 0.0
    %5894 = vmatpush.msra.mxu0 %v5877
    %5895 = vmatmul.f32.gmra.mxu0 %v5875
    %v5896 = vpop.f32.mrf.mxu0
    %v5897 = vadd.f32 0.0, %v5896
    %5898 = vdwg.mxu0
    %5899 = vst [vmem:[#allocation1] ss:$4 sm:$0xff] %v1547
    %s5900 = scalar_lea.vmem [#allocation1], 1
    %5901 = vst [vmem:[%s5900] ss:$4 sm:$0xff] %v830
    %s5902 = scalar_lea.vmem [#allocation1], 2
    %5903 = vst [vmem:[%s5902] ss:$4 sm:$0xff] %v1548
    %v5904 = vld.sshfl [vmem:[#allocation1] sm:$0xff pattern:$0x73625140]
    %v5906 = vsel %vm5376, %v5307, 0
    %v5908 = vsel %vm5380, %v5904, 0
    %5910 = vmatpush.msra.mxu0 0.0
    %5911 = vmatpush.msra.mxu0 0.0
    %5912 = vmatpush.msra.mxu0 0.0
    %5913 = vmatpush.msra.mxu0 0.0
    %5914 = vmatpush.msra.mxu0 0.0
    %5915 = vmatpush.msra.mxu0 0.0
    %5916 = vmatpush.msra.mxu0 0.0
    %5917 = vmatpush.msra.mxu0 0.0
    %5918 = vmatpush.msra.mxu0 0.0
    %5919 = vmatpush.msra.mxu0 0.0
    %5920 = vmatpush.msra.mxu0 0.0
    %5921 = vmatpush.msra.mxu0 0.0
    %5922 = vmatpush.msra.mxu0 0.0
    %5923 = vmatpush.msra.mxu0 0.0
    %5924 = vmatpush.msra.mxu0 0.0
    %5925 = vmatpush.msra.mxu0 %v5908
    %5926 = vmatmul.f32.gmra.mxu0 %v5906
    %v5927 = vpop.f32.mrf.mxu0
    %v5928 = vadd.f32 0.0, %v5927
    %5929 = vdwg.mxu0
    %5930 = vst [vmem:[#allocation1] ss:$4 sm:$0xff] %v1549
    %s5931 = scalar_lea.vmem [#allocation1], 1
    %5932 = vst [vmem:[%s5931] ss:$4 sm:$0xff] %v1550
    %s5933 = scalar_lea.vmem [#allocation1], 2
    %5934 = vst [vmem:[%s5933] ss:$4 sm:$0xff] %v833
    %v5935 = vld.sshfl [vmem:[#allocation1] sm:$0xff pattern:$0x73625140]
    %v5937 = vsel %vm5376, %v5308, 0
    %v5939 = vsel %vm5380, %v5935, 0
    %5941 = vmatpush.msra.mxu0 0.0
    %5942 = vmatpush.msra.mxu0 0.0
    %5943 = vmatpush.msra.mxu0 0.0
    %5944 = vmatpush.msra.mxu0 0.0
    %5945 = vmatpush.msra.mxu0 0.0
    %5946 = vmatpush.msra.mxu0 0.0
    %5947 = vmatpush.msra.mxu0 0.0
    %5948 = vmatpush.msra.mxu0 0.0
    %5949 = vmatpush.msra.mxu0 0.0
    %5950 = vmatpush.msra.mxu0 0.0
    %5951 = vmatpush.msra.mxu0 0.0
    %5952 = vmatpush.msra.mxu0 0.0
    %5953 = vmatpush.msra.mxu0 0.0
    %5954 = vmatpush.msra.mxu0 0.0
    %5955 = vmatpush.msra.mxu0 0.0
    %5956 = vmatpush.msra.mxu0 %v5939
    %5957 = vmatmul.f32.gmra.mxu0 %v5937
    %v5958 = vpop.f32.mrf.mxu0
    %v5959 = vadd.f32 0.0, %v5958
    %5960 = vdwg.mxu0
    %5961 = vst [vmem:[#allocation1] ss:$4 sm:$0xff] %v1551
    %s5962 = scalar_lea.vmem [#allocation1], 1
    %5963 = vst [vmem:[%s5962] ss:$4 sm:$0xff] %v1552
    %s5964 = scalar_lea.vmem [#allocation1], 2
    %5965 = vst [vmem:[%s5964] ss:$4 sm:$0xff] %v1553
    %v5966 = vld.sshfl [vmem:[#allocation1] sm:$0xff pattern:$0x73625140]
    %v5968 = vsel %vm5376, %v5309, 0
    %v5970 = vsel %vm5380, %v5966, 0
    %5972 = vmatpush.msra.mxu0 0.0
    %5973 = vmatpush.msra.mxu0 0.0
    %5974 = vmatpush.msra.mxu0 0.0
    %5975 = vmatpush.msra.mxu0 0.0
    %5976 = vmatpush.msra.mxu0 0.0
    %5977 = vmatpush.msra.mxu0 0.0
    %5978 = vmatpush.msra.mxu0 0.0
    %5979 = vmatpush.msra.mxu0 0.0
    %5980 = vmatpush.msra.mxu0 0.0
    %5981 = vmatpush.msra.mxu0 0.0
    %5982 = vmatpush.msra.mxu0 0.0
    %5983 = vmatpush.msra.mxu0 0.0
    %5984 = vmatpush.msra.mxu0 0.0
    %5985 = vmatpush.msra.mxu0 0.0
    %5986 = vmatpush.msra.mxu0 0.0
    %5987 = vmatpush.msra.mxu0 %v5970
    %5988 = vmatmul.f32.gmra.mxu0 %v5968
    %v5989 = vpop.f32.mrf.mxu0
    %v5990 = vadd.f32 0.0, %v5989
    %5991 = vdwg.mxu0
    %5992 = vst [vmem:[#allocation1] ss:$4 sm:$0xff] %v836
    %s5993 = scalar_lea.vmem [#allocation1], 1
    %5994 = vst [vmem:[%s5993] ss:$4 sm:$0xff] %v1554
    %s5995 = scalar_lea.vmem [#allocation1], 2
    %5996 = vst [vmem:[%s5995] ss:$4 sm:$0xff] %v1555
    %v5997 = vld.sshfl [vmem:[#allocation1] sm:$0xff pattern:$0x73625140]
    %v5999 = vsel %vm5376, %v5310, 0
    %v6001 = vsel %vm5380, %v5997, 0
    %6003 = vmatpush.msra.mxu0 0.0
    %6004 = vmatpush.msra.mxu0 0.0
    %6005 = vmatpush.msra.mxu0 0.0
    %6006 = vmatpush.msra.mxu0 0.0
    %6007 = vmatpush.msra.mxu0 0.0
    %6008 = vmatpush.msra.mxu0 0.0
    %6009 = vmatpush.msra.mxu0 0.0
    %6010 = vmatpush.msra.mxu0 0.0
    %6011 = vmatpush.msra.mxu0 0.0
    %6012 = vmatpush.msra.mxu0 0.0
    %6013 = vmatpush.msra.mxu0 0.0
    %6014 = vmatpush.msra.mxu0 0.0
    %6015 = vmatpush.msra.mxu0 0.0
    %6016 = vmatpush.msra.mxu0 0.0
    %6017 = vmatpush.msra.mxu0 0.0
    %6018 = vmatpush.msra.mxu0 %v6001
    %6019 = vmatmul.f32.gmra.mxu0 %v5999
    %v6020 = vpop.f32.mrf.mxu0
    %v6021 = vadd.f32 0.0, %v6020
    %6022 = vdwg.mxu0
    %6023 = vst [vmem:[#allocation1] ss:$4 sm:$0xff] %v1556
    %s6024 = scalar_lea.vmem [#allocation1], 1
    %6025 = vst [vmem:[%s6024] ss:$4 sm:$0xff] %v839
    %s6026 = scalar_lea.vmem [#allocation1], 2
    %6027 = vst [vmem:[%s6026] ss:$4 sm:$0xff] %v1557
    %v6028 = vld.sshfl [vmem:[#allocation1] sm:$0xff pattern:$0x73625140]
    %v6030 = vsel %vm5376, %v5311, 0
    %v6032 = vsel %vm5380, %v6028, 0
    %6034 = vmatpush.msra.mxu0 0.0
    %6035 = vmatpush.msra.mxu0 0.0
    %6036 = vmatpush.msra.mxu0 0.0
    %6037 = vmatpush.msra.mxu0 0.0
    %6038 = vmatpush.msra.mxu0 0.0
    %6039 = vmatpush.msra.mxu0 0.0
    %6040 = vmatpush.msra.mxu0 0.0
    %6041 = vmatpush.msra.mxu0 0.0
    %6042 = vmatpush.msra.mxu0 0.0
    %6043 = vmatpush.msra.mxu0 0.0
    %6044 = vmatpush.msra.mxu0 0.0
    %6045 = vmatpush.msra.mxu0 0.0
    %6046 = vmatpush.msra.mxu0 0.0
    %6047 = vmatpush.msra.mxu0 0.0
    %6048 = vmatpush.msra.mxu0 0.0
    %6049 = vmatpush.msra.mxu0 %v6032
    %6050 = vmatmul.f32.gmra.mxu0 %v6030
    %v6051 = vpop.f32.mrf.mxu0
    %v6052 = vadd.f32 0.0, %v6051
    %6053 = vdwg.mxu0
    %6054 = vst [vmem:[#allocation1] ss:$4 sm:$0xff] %v1558
    %s6055 = scalar_lea.vmem [#allocation1], 1
    %6056 = vst [vmem:[%s6055] ss:$4 sm:$0xff] %v1559
    %s6057 = scalar_lea.vmem [#allocation1], 2
    %6058 = vst [vmem:[%s6057] ss:$4 sm:$0xff] %v842
    %v6059 = vld.sshfl [vmem:[#allocation1] sm:$0xff pattern:$0x73625140]
    %v6061 = vsel %vm5376, %v5312, 0
    %v6063 = vsel %vm5380, %v6059, 0
    %6065 = vmatpush.msra.mxu0 0.0
    %6066 = vmatpush.msra.mxu0 0.0
    %6067 = vmatpush.msra.mxu0 0.0
    %6068 = vmatpush.msra.mxu0 0.0
    %6069 = vmatpush.msra.mxu0 0.0
    %6070 = vmatpush.msra.mxu0 0.0
    %6071 = vmatpush.msra.mxu0 0.0
    %6072 = vmatpush.msra.mxu0 0.0
    %6073 = vmatpush.msra.mxu0 0.0
    %6074 = vmatpush.msra.mxu0 0.0
    %6075 = vmatpush.msra.mxu0 0.0
    %6076 = vmatpush.msra.mxu0 0.0
    %6077 = vmatpush.msra.mxu0 0.0
    %6078 = vmatpush.msra.mxu0 0.0
    %6079 = vmatpush.msra.mxu0 0.0
    %6080 = vmatpush.msra.mxu0 %v6063
    %6081 = vmatmul.f32.gmra.mxu0 %v6061
    %v6082 = vpop.f32.mrf.mxu0
    %v6083 = vadd.f32 0.0, %v6082
    %6084 = vdwg.mxu0
    %6085 = vst [vmem:[#allocation1] ss:$4 sm:$0xff] %v1560
    %s6086 = scalar_lea.vmem [#allocation1], 1
    %6087 = vst [vmem:[%s6086] ss:$4 sm:$0xff] %v1561
    %s6088 = scalar_lea.vmem [#allocation1], 2
    %6089 = vst [vmem:[%s6088] ss:$4 sm:$0xff] %v1562
    %v6090 = vld.sshfl [vmem:[#allocation1] sm:$0xff pattern:$0x73625140]
    %v6092 = vsel %vm5376, %v5313, 0
    %v6094 = vsel %vm5380, %v6090, 0
    %6096 = vmatpush.msra.mxu0 0.0
    %6097 = vmatpush.msra.mxu0 0.0
    %6098 = vmatpush.msra.mxu0 0.0
    %6099 = vmatpush.msra.mxu0 0.0
    %6100 = vmatpush.msra.mxu0 0.0
    %6101 = vmatpush.msra.mxu0 0.0
    %6102 = vmatpush.msra.mxu0 0.0
    %6103 = vmatpush.msra.mxu0 0.0
    %6104 = vmatpush.msra.mxu0 0.0
    %6105 = vmatpush.msra.mxu0 0.0
    %6106 = vmatpush.msra.mxu0 0.0
    %6107 = vmatpush.msra.mxu0 0.0
    %6108 = vmatpush.msra.mxu0 0.0
    %6109 = vmatpush.msra.mxu0 0.0
    %6110 = vmatpush.msra.mxu0 0.0
    %6111 = vmatpush.msra.mxu0 %v6094
    %6112 = vmatmul.f32.gmra.mxu0 %v6092
    %v6113 = vpop.f32.mrf.mxu0
    %v6114 = vadd.f32 0.0, %v6113
    %6115 = vdwg.mxu0
    %6116 = vst [vmem:[#allocation1] ss:$4 sm:$0xff] %v845
    %s6117 = scalar_lea.vmem [#allocation1], 1
    %6118 = vst [vmem:[%s6117] ss:$4 sm:$0xff] %v1563
    %s6119 = scalar_lea.vmem [#allocation1], 2
    %6120 = vst [vmem:[%s6119] ss:$4 sm:$0xff] %v1564
    %v6121 = vld.sshfl [vmem:[#allocation1] sm:$0xff pattern:$0x73625140]
    %v6123 = vsel %vm5376, %v5314, 0
    %v6125 = vsel %vm5380, %v6121, 0
    %6127 = vmatpush.msra.mxu0 0.0
    %6128 = vmatpush.msra.mxu0 0.0
    %6129 = vmatpush.msra.mxu0 0.0
    %6130 = vmatpush.msra.mxu0 0.0
    %6131 = vmatpush.msra.mxu0 0.0
    %6132 = vmatpush.msra.mxu0 0.0
    %6133 = vmatpush.msra.mxu0 0.0
    %6134 = vmatpush.msra.mxu0 0.0
    %6135 = vmatpush.msra.mxu0 0.0
    %6136 = vmatpush.msra.mxu0 0.0
    %6137 = vmatpush.msra.mxu0 0.0
    %6138 = vmatpush.msra.mxu0 0.0
    %6139 = vmatpush.msra.mxu0 0.0
    %6140 = vmatpush.msra.mxu0 0.0
    %6141 = vmatpush.msra.mxu0 0.0
    %6142 = vmatpush.msra.mxu0 %v6125
    %6143 = vmatmul.f32.gmra.mxu0 %v6123
    %v6144 = vpop.f32.mrf.mxu0
    %v6145 = vadd.f32 0.0, %v6144
    %6146 = vdwg.mxu0
    %6147 = vst [vmem:[#allocation1] ss:$4 sm:$0xff] %v1565
    %s6148 = scalar_lea.vmem [#allocation1], 1
    %6149 = vst [vmem:[%s6148] ss:$4 sm:$0xff] %v848
    %s6150 = scalar_lea.vmem [#allocation1], 2
    %6151 = vst [vmem:[%s6150] ss:$4 sm:$0xff] %v1566
    %v6152 = vld.sshfl [vmem:[#allocation1] sm:$0xff pattern:$0x73625140]
    %v6154 = vsel %vm5376, %v5315, 0
    %v6156 = vsel %vm5380, %v6152, 0
    %6158 = vmatpush.msra.mxu0 0.0
    %6159 = vmatpush.msra.mxu0 0.0
    %6160 = vmatpush.msra.mxu0 0.0
    %6161 = vmatpush.msra.mxu0 0.0
    %6162 = vmatpush.msra.mxu0 0.0
    %6163 = vmatpush.msra.mxu0 0.0
    %6164 = vmatpush.msra.mxu0 0.0
    %6165 = vmatpush.msra.mxu0 0.0
    %6166 = vmatpush.msra.mxu0 0.0
    %6167 = vmatpush.msra.mxu0 0.0
    %6168 = vmatpush.msra.mxu0 0.0
    %6169 = vmatpush.msra.mxu0 0.0
    %6170 = vmatpush.msra.mxu0 0.0
    %6171 = vmatpush.msra.mxu0 0.0
    %6172 = vmatpush.msra.mxu0 0.0
    %6173 = vmatpush.msra.mxu0 %v6156
    %6174 = vmatmul.f32.gmra.mxu0 %v6154
    %v6175 = vpop.f32.mrf.mxu0
    %v6176 = vadd.f32 0.0, %v6175
    %6177 = vdwg.mxu0
    %6178 = vst [vmem:[#allocation1] ss:$4 sm:$0xff] %v1567
    %s6179 = scalar_lea.vmem [#allocation1], 1
    %6180 = vst [vmem:[%s6179] ss:$4 sm:$0xff] %v1568
    %s6181 = scalar_lea.vmem [#allocation1], 2
    %6182 = vst [vmem:[%s6181] ss:$4 sm:$0xff] %v851
    %v6183 = vld.sshfl [vmem:[#allocation1] sm:$0xff pattern:$0x73625140]
    %v6185 = vsel %vm5376, %v5316, 0
    %v6187 = vsel %vm5380, %v6183, 0
    %6189 = vmatpush.msra.mxu0 0.0
    %6190 = vmatpush.msra.mxu0 0.0
    %6191 = vmatpush.msra.mxu0 0.0
    %6192 = vmatpush.msra.mxu0 0.0
    %6193 = vmatpush.msra.mxu0 0.0
    %6194 = vmatpush.msra.mxu0 0.0
    %6195 = vmatpush.msra.mxu0 0.0
    %6196 = vmatpush.msra.mxu0 0.0
    %6197 = vmatpush.msra.mxu0 0.0
    %6198 = vmatpush.msra.mxu0 0.0
    %6199 = vmatpush.msra.mxu0 0.0
    %6200 = vmatpush.msra.mxu0 0.0
    %6201 = vmatpush.msra.mxu0 0.0
    %6202 = vmatpush.msra.mxu0 0.0
    %6203 = vmatpush.msra.mxu0 0.0
    %6204 = vmatpush.msra.mxu0 %v6187
    %6205 = vmatmul.f32.gmra.mxu0 %v6185
    %v6206 = vpop.f32.mrf.mxu0
    %v6207 = vadd.f32 0.0, %v6206
    %6208 = vdwg.mxu0
    %6209 = vst [vmem:[#allocation1] ss:$4 sm:$0xff] %v1569
    %s6210 = scalar_lea.vmem [#allocation1], 1
    %6211 = vst [vmem:[%s6210] ss:$4 sm:$0xff] %v1570
    %s6212 = scalar_lea.vmem [#allocation1], 2
    %6213 = vst [vmem:[%s6212] ss:$4 sm:$0xff] %v1571
    %v6214 = vld.sshfl [vmem:[#allocation1] sm:$0xff pattern:$0x73625140]
    %v6216 = vsel %vm5376, %v5317, 0
    %v6218 = vsel %vm5380, %v6214, 0
    %6220 = vmatpush.msra.mxu0 0.0
    %6221 = vmatpush.msra.mxu0 0.0
    %6222 = vmatpush.msra.mxu0 0.0
    %6223 = vmatpush.msra.mxu0 0.0
    %6224 = vmatpush.msra.mxu0 0.0
    %6225 = vmatpush.msra.mxu0 0.0
    %6226 = vmatpush.msra.mxu0 0.0
    %6227 = vmatpush.msra.mxu0 0.0
    %6228 = vmatpush.msra.mxu0 0.0
    %6229 = vmatpush.msra.mxu0 0.0
    %6230 = vmatpush.msra.mxu0 0.0
    %6231 = vmatpush.msra.mxu0 0.0
    %6232 = vmatpush.msra.mxu0 0.0
    %6233 = vmatpush.msra.mxu0 0.0
    %6234 = vmatpush.msra.mxu0 0.0
    %6235 = vmatpush.msra.mxu0 %v6218
    %6236 = vmatmul.f32.gmra.mxu0 %v6216
    %v6237 = vpop.f32.mrf.mxu0
    %v6238 = vadd.f32 0.0, %v6237
    %6239 = vdwg.mxu0
    %6240 = vst [vmem:[#allocation1] ss:$4 sm:$0xff] %v854
    %s6241 = scalar_lea.vmem [#allocation1], 1
    %6242 = vst [vmem:[%s6241] ss:$4 sm:$0xff] %v1572
    %s6243 = scalar_lea.vmem [#allocation1], 2
    %6244 = vst [vmem:[%s6243] ss:$4 sm:$0xff] %v1573
    %v6245 = vld.sshfl [vmem:[#allocation1] sm:$0xff pattern:$0x73625140]
    %v6247 = vsel %vm5376, %v5318, 0
    %v6249 = vsel %vm5380, %v6245, 0
    %6251 = vmatpush.msra.mxu0 0.0
    %6252 = vmatpush.msra.mxu0 0.0
    %6253 = vmatpush.msra.mxu0 0.0
    %6254 = vmatpush.msra.mxu0 0.0
    %6255 = vmatpush.msra.mxu0 0.0
    %6256 = vmatpush.msra.mxu0 0.0
    %6257 = vmatpush.msra.mxu0 0.0
    %6258 = vmatpush.msra.mxu0 0.0
    %6259 = vmatpush.msra.mxu0 0.0
    %6260 = vmatpush.msra.mxu0 0.0
    %6261 = vmatpush.msra.mxu0 0.0
    %6262 = vmatpush.msra.mxu0 0.0
    %6263 = vmatpush.msra.mxu0 0.0
    %6264 = vmatpush.msra.mxu0 0.0
    %6265 = vmatpush.msra.mxu0 0.0
    %6266 = vmatpush.msra.mxu0 %v6249
    %6267 = vmatmul.f32.gmra.mxu0 %v6247
    %v6268 = vpop.f32.mrf.mxu0
    %v6269 = vadd.f32 0.0, %v6268
    %6270 = vdwg.mxu0
    %6271 = vst [vmem:[#allocation1] ss:$4 sm:$0xff] %v1574
    %s6272 = scalar_lea.vmem [#allocation1], 1
    %6273 = vst [vmem:[%s6272] ss:$4 sm:$0xff] %v857
    %s6274 = scalar_lea.vmem [#allocation1], 2
    %6275 = vst [vmem:[%s6274] ss:$4 sm:$0xff] %v1575
    %v6276 = vld.sshfl [vmem:[#allocation1] sm:$0xff pattern:$0x73625140]
    %v6278 = vsel %vm5376, %v5319, 0
    %v6280 = vsel %vm5380, %v6276, 0
    %6282 = vmatpush.msra.mxu0 0.0
    %6283 = vmatpush.msra.mxu0 0.0
    %6284 = vmatpush.msra.mxu0 0.0
    %6285 = vmatpush.msra.mxu0 0.0
    %6286 = vmatpush.msra.mxu0 0.0
    %6287 = vmatpush.msra.mxu0 0.0
    %6288 = vmatpush.msra.mxu0 0.0
    %6289 = vmatpush.msra.mxu0 0.0
    %6290 = vmatpush.msra.mxu0 0.0
    %6291 = vmatpush.msra.mxu0 0.0
    %6292 = vmatpush.msra.mxu0 0.0
    %6293 = vmatpush.msra.mxu0 0.0
    %6294 = vmatpush.msra.mxu0 0.0
    %6295 = vmatpush.msra.mxu0 0.0
    %6296 = vmatpush.msra.mxu0 0.0
    %6297 = vmatpush.msra.mxu0 %v6280
    %6298 = vmatmul.f32.gmra.mxu0 %v6278
    %v6299 = vpop.f32.mrf.mxu0
    %v6300 = vadd.f32 0.0, %v6299
    %6301 = vdwg.mxu0
    %6302 = vst [vmem:[#allocation1] ss:$4 sm:$0xff] %v1576
    %s6303 = scalar_lea.vmem [#allocation1], 1
    %6304 = vst [vmem:[%s6303] ss:$4 sm:$0xff] %v1577
    %s6305 = scalar_lea.vmem [#allocation1], 2
    %6306 = vst [vmem:[%s6305] ss:$4 sm:$0xff] %v860
    %v6307 = vld.sshfl [vmem:[#allocation1] sm:$0xff pattern:$0x73625140]
    %v6309 = vsel %vm5376, %v5320, 0
    %v6311 = vsel %vm5380, %v6307, 0
    %6313 = vmatpush.msra.mxu0 0.0
    %6314 = vmatpush.msra.mxu0 0.0
    %6315 = vmatpush.msra.mxu0 0.0
    %6316 = vmatpush.msra.mxu0 0.0
    %6317 = vmatpush.msra.mxu0 0.0
    %6318 = vmatpush.msra.mxu0 0.0
    %6319 = vmatpush.msra.mxu0 0.0
    %6320 = vmatpush.msra.mxu0 0.0
    %6321 = vmatpush.msra.mxu0 0.0
    %6322 = vmatpush.msra.mxu0 0.0
    %6323 = vmatpush.msra.mxu0 0.0
    %6324 = vmatpush.msra.mxu0 0.0
    %6325 = vmatpush.msra.mxu0 0.0
    %6326 = vmatpush.msra.mxu0 0.0
    %6327 = vmatpush.msra.mxu0 0.0
    %6328 = vmatpush.msra.mxu0 %v6311
    %6329 = vmatmul.f32.gmra.mxu0 %v6309
    %v6330 = vpop.f32.mrf.mxu0
    %v6331 = vadd.f32 0.0, %v6330
    %6332 = vdwg.mxu0
    %6333 = vst [vmem:[#allocation1] ss:$4 sm:$0xff] %v1578
    %s6334 = scalar_lea.vmem [#allocation1], 1
    %6335 = vst [vmem:[%s6334] ss:$4 sm:$0xff] %v1579
    %s6336 = scalar_lea.vmem [#allocation1], 2
    %6337 = vst [vmem:[%s6336] ss:$4 sm:$0xff] %v1580
    %v6338 = vld.sshfl [vmem:[#allocation1] sm:$0xff pattern:$0x73625140]
    %v6340 = vsel %vm5376, %v5321, 0
    %v6342 = vsel %vm5380, %v6338, 0
    %6344 = vmatpush.msra.mxu0 0.0
    %6345 = vmatpush.msra.mxu0 0.0
    %6346 = vmatpush.msra.mxu0 0.0
    %6347 = vmatpush.msra.mxu0 0.0
    %6348 = vmatpush.msra.mxu0 0.0
    %6349 = vmatpush.msra.mxu0 0.0
    %6350 = vmatpush.msra.mxu0 0.0
    %6351 = vmatpush.msra.mxu0 0.0
    %6352 = vmatpush.msra.mxu0 0.0
    %6353 = vmatpush.msra.mxu0 0.0
    %6354 = vmatpush.msra.mxu0 0.0
    %6355 = vmatpush.msra.mxu0 0.0
    %6356 = vmatpush.msra.mxu0 0.0
    %6357 = vmatpush.msra.mxu0 0.0
    %6358 = vmatpush.msra.mxu0 0.0
    %6359 = vmatpush.msra.mxu0 %v6342
    %6360 = vmatmul.f32.gmra.mxu0 %v6340
    %v6361 = vpop.f32.mrf.mxu0
    %v6362 = vadd.f32 0.0, %v6361
    %6363 = vdwg.mxu0
    %6364 = vst [vmem:[#allocation1] ss:$4 sm:$0xff] %v863
    %s6365 = scalar_lea.vmem [#allocation1], 1
    %6366 = vst [vmem:[%s6365] ss:$4 sm:$0xff] %v1581
    %s6367 = scalar_lea.vmem [#allocation1], 2
    %6368 = vst [vmem:[%s6367] ss:$4 sm:$0xff] %v1582
    %v6369 = vld.sshfl [vmem:[#allocation1] sm:$0xff pattern:$0x73625140]
    %v6371 = vsel %vm5376, %v5322, 0
    %v6373 = vsel %vm5380, %v6369, 0
    %6375 = vmatpush.msra.mxu0 0.0
    %6376 = vmatpush.msra.mxu0 0.0
    %6377 = vmatpush.msra.mxu0 0.0
    %6378 = vmatpush.msra.mxu0 0.0
    %6379 = vmatpush.msra.mxu0 0.0
    %6380 = vmatpush.msra.mxu0 0.0
    %6381 = vmatpush.msra.mxu0 0.0
    %6382 = vmatpush.msra.mxu0 0.0
    %6383 = vmatpush.msra.mxu0 0.0
    %6384 = vmatpush.msra.mxu0 0.0
    %6385 = vmatpush.msra.mxu0 0.0
    %6386 = vmatpush.msra.mxu0 0.0
    %6387 = vmatpush.msra.mxu0 0.0
    %6388 = vmatpush.msra.mxu0 0.0
    %6389 = vmatpush.msra.mxu0 0.0
    %6390 = vmatpush.msra.mxu0 %v6373
    %6391 = vmatmul.f32.gmra.mxu0 %v6371
    %v6392 = vpop.f32.mrf.mxu0
    %v6393 = vadd.f32 0.0, %v6392
    %6394 = vdwg.mxu0
    %6395 = vst [vmem:[#allocation1] ss:$4 sm:$0xff] %v1583
    %s6396 = scalar_lea.vmem [#allocation1], 1
    %6397 = vst [vmem:[%s6396] ss:$4 sm:$0xff] %v866
    %s6398 = scalar_lea.vmem [#allocation1], 2
    %6399 = vst [vmem:[%s6398] ss:$4 sm:$0xff] %v1584
    %v6400 = vld.sshfl [vmem:[#allocation1] sm:$0xff pattern:$0x73625140]
    %v6402 = vsel %vm5376, %v5323, 0
    %v6404 = vsel %vm5380, %v6400, 0
    %6406 = vmatpush.msra.mxu0 0.0
    %6407 = vmatpush.msra.mxu0 0.0
    %6408 = vmatpush.msra.mxu0 0.0
    %6409 = vmatpush.msra.mxu0 0.0
    %6410 = vmatpush.msra.mxu0 0.0
    %6411 = vmatpush.msra.mxu0 0.0
    %6412 = vmatpush.msra.mxu0 0.0
    %6413 = vmatpush.msra.mxu0 0.0
    %6414 = vmatpush.msra.mxu0 0.0
    %6415 = vmatpush.msra.mxu0 0.0
    %6416 = vmatpush.msra.mxu0 0.0
    %6417 = vmatpush.msra.mxu0 0.0
    %6418 = vmatpush.msra.mxu0 0.0
    %6419 = vmatpush.msra.mxu0 0.0
    %6420 = vmatpush.msra.mxu0 0.0
    %6421 = vmatpush.msra.mxu0 %v6404
    %6422 = vmatmul.f32.gmra.mxu0 %v6402
    %v6423 = vpop.f32.mrf.mxu0
    %v6424 = vadd.f32 0.0, %v6423
    %6425 = vdwg.mxu0
    %6426 = vst [vmem:[#allocation1] ss:$4 sm:$0xff] %v1585
    %s6427 = scalar_lea.vmem [#allocation1], 1
    %6428 = vst [vmem:[%s6427] ss:$4 sm:$0xff] %v1586
    %s6429 = scalar_lea.vmem [#allocation1], 2
    %6430 = vst [vmem:[%s6429] ss:$4 sm:$0xff] %v869
    %v6431 = vld.sshfl [vmem:[#allocation1] sm:$0xff pattern:$0x73625140]
    %v6433 = vsel %vm5376, %v5324, 0
    %v6435 = vsel %vm5380, %v6431, 0
    %6437 = vmatpush.msra.mxu0 0.0
    %6438 = vmatpush.msra.mxu0 0.0
    %6439 = vmatpush.msra.mxu0 0.0
    %6440 = vmatpush.msra.mxu0 0.0
    %6441 = vmatpush.msra.mxu0 0.0
    %6442 = vmatpush.msra.mxu0 0.0
    %6443 = vmatpush.msra.mxu0 0.0
    %6444 = vmatpush.msra.mxu0 0.0
    %6445 = vmatpush.msra.mxu0 0.0
    %6446 = vmatpush.msra.mxu0 0.0
    %6447 = vmatpush.msra.mxu0 0.0
    %6448 = vmatpush.msra.mxu0 0.0
    %6449 = vmatpush.msra.mxu0 0.0
    %6450 = vmatpush.msra.mxu0 0.0
    %6451 = vmatpush.msra.mxu0 0.0
    %6452 = vmatpush.msra.mxu0 %v6435
    %6453 = vmatmul.f32.gmra.mxu0 %v6433
    %v6454 = vpop.f32.mrf.mxu0
    %v6455 = vadd.f32 0.0, %v6454
    %6456 = vdwg.mxu0
    %6457 = vst [vmem:[#allocation1] ss:$4 sm:$0xff] %v1587
    %s6458 = scalar_lea.vmem [#allocation1], 1
    %6459 = vst [vmem:[%s6458] ss:$4 sm:$0xff] %v1588
    %s6460 = scalar_lea.vmem [#allocation1], 2
    %6461 = vst [vmem:[%s6460] ss:$4 sm:$0xff] %v1589
    %v6462 = vld.sshfl [vmem:[#allocation1] sm:$0xff pattern:$0x73625140]
    %v6464 = vsel %vm5376, %v5325, 0
    %v6466 = vsel %vm5380, %v6462, 0
    %6468 = vmatpush.msra.mxu0 0.0
    %6469 = vmatpush.msra.mxu0 0.0
    %6470 = vmatpush.msra.mxu0 0.0
    %6471 = vmatpush.msra.mxu0 0.0
    %6472 = vmatpush.msra.mxu0 0.0
    %6473 = vmatpush.msra.mxu0 0.0
    %6474 = vmatpush.msra.mxu0 0.0
    %6475 = vmatpush.msra.mxu0 0.0
    %6476 = vmatpush.msra.mxu0 0.0
    %6477 = vmatpush.msra.mxu0 0.0
    %6478 = vmatpush.msra.mxu0 0.0
    %6479 = vmatpush.msra.mxu0 0.0
    %6480 = vmatpush.msra.mxu0 0.0
    %6481 = vmatpush.msra.mxu0 0.0
    %6482 = vmatpush.msra.mxu0 0.0
    %6483 = vmatpush.msra.mxu0 %v6466
    %6484 = vmatmul.f32.gmra.mxu0 %v6464
    %v6485 = vpop.f32.mrf.mxu0
    %v6486 = vadd.f32 0.0, %v6485
    %6487 = vdwg.mxu0
    %6488 = vst [vmem:[#allocation1] ss:$4 sm:$0xff] %v872
    %s6489 = scalar_lea.vmem [#allocation1], 1
    %6490 = vst [vmem:[%s6489] ss:$4 sm:$0xff] %v1590
    %s6491 = scalar_lea.vmem [#allocation1], 2
    %6492 = vst [vmem:[%s6491] ss:$4 sm:$0xff] %v1591
    %v6493 = vld.sshfl [vmem:[#allocation1] sm:$0xff pattern:$0x73625140]
    %v6495 = vsel %vm5376, %v5326, 0
    %v6497 = vsel %vm5380, %v6493, 0
    %6499 = vmatpush.msra.mxu0 0.0
    %6500 = vmatpush.msra.mxu0 0.0
    %6501 = vmatpush.msra.mxu0 0.0
    %6502 = vmatpush.msra.mxu0 0.0
    %6503 = vmatpush.msra.mxu0 0.0
    %6504 = vmatpush.msra.mxu0 0.0
    %6505 = vmatpush.msra.mxu0 0.0
    %6506 = vmatpush.msra.mxu0 0.0
    %6507 = vmatpush.msra.mxu0 0.0
    %6508 = vmatpush.msra.mxu0 0.0
    %6509 = vmatpush.msra.mxu0 0.0
    %6510 = vmatpush.msra.mxu0 0.0
    %6511 = vmatpush.msra.mxu0 0.0
    %6512 = vmatpush.msra.mxu0 0.0
    %6513 = vmatpush.msra.mxu0 0.0
    %6514 = vmatpush.msra.mxu0 %v6497
    %6515 = vmatmul.f32.gmra.mxu0 %v6495
    %v6516 = vpop.f32.mrf.mxu0
    %v6517 = vadd.f32 0.0, %v6516
    %6518 = vdwg.mxu0
    %6519 = vst [vmem:[#allocation1] ss:$4 sm:$0xff] %v1592
    %s6520 = scalar_lea.vmem [#allocation1], 1
    %6521 = vst [vmem:[%s6520] ss:$4 sm:$0xff] %v875
    %s6522 = scalar_lea.vmem [#allocation1], 2
    %6523 = vst [vmem:[%s6522] ss:$4 sm:$0xff] %v1593
    %v6524 = vld.sshfl [vmem:[#allocation1] sm:$0xff pattern:$0x73625140]
    %v6526 = vsel %vm5376, %v5327, 0
    %v6528 = vsel %vm5380, %v6524, 0
    %6530 = vmatpush.msra.mxu0 0.0
    %6531 = vmatpush.msra.mxu0 0.0
    %6532 = vmatpush.msra.mxu0 0.0
    %6533 = vmatpush.msra.mxu0 0.0
    %6534 = vmatpush.msra.mxu0 0.0
    %6535 = vmatpush.msra.mxu0 0.0
    %6536 = vmatpush.msra.mxu0 0.0
    %6537 = vmatpush.msra.mxu0 0.0
    %6538 = vmatpush.msra.mxu0 0.0
    %6539 = vmatpush.msra.mxu0 0.0
    %6540 = vmatpush.msra.mxu0 0.0
    %6541 = vmatpush.msra.mxu0 0.0
    %6542 = vmatpush.msra.mxu0 0.0
    %6543 = vmatpush.msra.mxu0 0.0
    %6544 = vmatpush.msra.mxu0 0.0
    %6545 = vmatpush.msra.mxu0 %v6528
    %6546 = vmatmul.f32.gmra.mxu0 %v6526
    %v6547 = vpop.f32.mrf.mxu0
    %v6548 = vadd.f32 0.0, %v6547
    %6549 = vdwg.mxu0
    %6550 = vst [vmem:[#allocation1] ss:$4 sm:$0xff] %v1594
    %s6551 = scalar_lea.vmem [#allocation1], 1
    %6552 = vst [vmem:[%s6551] ss:$4 sm:$0xff] %v1595
    %s6553 = scalar_lea.vmem [#allocation1], 2
    %6554 = vst [vmem:[%s6553] ss:$4 sm:$0xff] %v878
    %v6555 = vld.sshfl [vmem:[#allocation1] sm:$0xff pattern:$0x73625140]
    %v6557 = vsel %vm5376, %v5328, 0
    %v6559 = vsel %vm5380, %v6555, 0
    %6561 = vmatpush.msra.mxu0 0.0
    %6562 = vmatpush.msra.mxu0 0.0
    %6563 = vmatpush.msra.mxu0 0.0
    %6564 = vmatpush.msra.mxu0 0.0
    %6565 = vmatpush.msra.mxu0 0.0
    %6566 = vmatpush.msra.mxu0 0.0
    %6567 = vmatpush.msra.mxu0 0.0
    %6568 = vmatpush.msra.mxu0 0.0
    %6569 = vmatpush.msra.mxu0 0.0
    %6570 = vmatpush.msra.mxu0 0.0
    %6571 = vmatpush.msra.mxu0 0.0
    %6572 = vmatpush.msra.mxu0 0.0
    %6573 = vmatpush.msra.mxu0 0.0
    %6574 = vmatpush.msra.mxu0 0.0
    %6575 = vmatpush.msra.mxu0 0.0
    %6576 = vmatpush.msra.mxu0 %v6559
    %6577 = vmatmul.f32.gmra.mxu0 %v6557
    %v6578 = vpop.f32.mrf.mxu0
    %v6579 = vadd.f32 0.0, %v6578
    %6580 = vdwg.mxu0
    %6581 = vst [vmem:[#allocation1] ss:$4 sm:$0xff] %v1596
    %s6582 = scalar_lea.vmem [#allocation1], 1
    %6583 = vst [vmem:[%s6582] ss:$4 sm:$0xff] %v1597
    %s6584 = scalar_lea.vmem [#allocation1], 2
    %6585 = vst [vmem:[%s6584] ss:$4 sm:$0xff] %v1598
    %v6586 = vld.sshfl [vmem:[#allocation1] sm:$0xff pattern:$0x73625140]
    %v6588 = vsel %vm5376, %v5329, 0
    %v6590 = vsel %vm5380, %v6586, 0
    %6592 = vmatpush.msra.mxu0 0.0
    %6593 = vmatpush.msra.mxu0 0.0
    %6594 = vmatpush.msra.mxu0 0.0
    %6595 = vmatpush.msra.mxu0 0.0
    %6596 = vmatpush.msra.mxu0 0.0
    %6597 = vmatpush.msra.mxu0 0.0
    %6598 = vmatpush.msra.mxu0 0.0
    %6599 = vmatpush.msra.mxu0 0.0
    %6600 = vmatpush.msra.mxu0 0.0
    %6601 = vmatpush.msra.mxu0 0.0
    %6602 = vmatpush.msra.mxu0 0.0
    %6603 = vmatpush.msra.mxu0 0.0
    %6604 = vmatpush.msra.mxu0 0.0
    %6605 = vmatpush.msra.mxu0 0.0
    %6606 = vmatpush.msra.mxu0 0.0
    %6607 = vmatpush.msra.mxu0 %v6590
    %6608 = vmatmul.f32.gmra.mxu0 %v6588
    %v6609 = vpop.f32.mrf.mxu0
    %v6610 = vadd.f32 0.0, %v6609
    %6611 = vdwg.mxu0
    %6612 = vst [vmem:[#allocation1] ss:$4 sm:$0xff] %v881
    %s6613 = scalar_lea.vmem [#allocation1], 1
    %6614 = vst [vmem:[%s6613] ss:$4 sm:$0xff] %v1599
    %s6615 = scalar_lea.vmem [#allocation1], 2
    %6616 = vst [vmem:[%s6615] ss:$4 sm:$0xff] %v1600
    %v6617 = vld.sshfl [vmem:[#allocation1] sm:$0xff pattern:$0x73625140]
    %v6619 = vsel %vm5376, %v5330, 0
    %v6621 = vsel %vm5380, %v6617, 0
    %6623 = vmatpush.msra.mxu0 0.0
    %6624 = vmatpush.msra.mxu0 0.0
    %6625 = vmatpush.msra.mxu0 0.0
    %6626 = vmatpush.msra.mxu0 0.0
    %6627 = vmatpush.msra.mxu0 0.0
    %6628 = vmatpush.msra.mxu0 0.0
    %6629 = vmatpush.msra.mxu0 0.0
    %6630 = vmatpush.msra.mxu0 0.0
    %6631 = vmatpush.msra.mxu0 0.0
    %6632 = vmatpush.msra.mxu0 0.0
    %6633 = vmatpush.msra.mxu0 0.0
    %6634 = vmatpush.msra.mxu0 0.0
    %6635 = vmatpush.msra.mxu0 0.0
    %6636 = vmatpush.msra.mxu0 0.0
    %6637 = vmatpush.msra.mxu0 0.0
    %6638 = vmatpush.msra.mxu0 %v6621
    %6639 = vmatmul.f32.gmra.mxu0 %v6619
    %v6640 = vpop.f32.mrf.mxu0
    %v6641 = vadd.f32 0.0, %v6640
    %6642 = vdwg.mxu0
    %6643 = vst [vmem:[#allocation1] ss:$4 sm:$0xff] %v1601
    %s6644 = scalar_lea.vmem [#allocation1], 1
    %6645 = vst [vmem:[%s6644] ss:$4 sm:$0xff] %v884
    %s6646 = scalar_lea.vmem [#allocation1], 2
    %6647 = vst [vmem:[%s6646] ss:$4 sm:$0xff] %v1602
    %v6648 = vld.sshfl [vmem:[#allocation1] sm:$0xff pattern:$0x73625140]
    %v6650 = vsel %vm5376, %v5331, 0
    %v6652 = vsel %vm5380, %v6648, 0
    %6654 = vmatpush.msra.mxu0 0.0
    %6655 = vmatpush.msra.mxu0 0.0
    %6656 = vmatpush.msra.mxu0 0.0
    %6657 = vmatpush.msra.mxu0 0.0
    %6658 = vmatpush.msra.mxu0 0.0
    %6659 = vmatpush.msra.mxu0 0.0
    %6660 = vmatpush.msra.mxu0 0.0
    %6661 = vmatpush.msra.mxu0 0.0
    %6662 = vmatpush.msra.mxu0 0.0
    %6663 = vmatpush.msra.mxu0 0.0
    %6664 = vmatpush.msra.mxu0 0.0
    %6665 = vmatpush.msra.mxu0 0.0
    %6666 = vmatpush.msra.mxu0 0.0
    %6667 = vmatpush.msra.mxu0 0.0
    %6668 = vmatpush.msra.mxu0 0.0
    %6669 = vmatpush.msra.mxu0 %v6652
    %6670 = vmatmul.f32.gmra.mxu0 %v6650
    %v6671 = vpop.f32.mrf.mxu0
    %v6672 = vadd.f32 0.0, %v6671
    %6673 = vdwg.mxu0
    %6674 = vst [vmem:[#allocation1] ss:$4 sm:$0xff] %v1603
    %s6675 = scalar_lea.vmem [#allocation1], 1
    %6676 = vst [vmem:[%s6675] ss:$4 sm:$0xff] %v1604
    %s6677 = scalar_lea.vmem [#allocation1], 2
    %6678 = vst [vmem:[%s6677] ss:$4 sm:$0xff] %v887
    %v6679 = vld.sshfl [vmem:[#allocation1] sm:$0xff pattern:$0x73625140]
    %v6681 = vsel %vm5376, %v5332, 0
    %v6683 = vsel %vm5380, %v6679, 0
    %6685 = vmatpush.msra.mxu0 0.0
    %6686 = vmatpush.msra.mxu0 0.0
    %6687 = vmatpush.msra.mxu0 0.0
    %6688 = vmatpush.msra.mxu0 0.0
    %6689 = vmatpush.msra.mxu0 0.0
    %6690 = vmatpush.msra.mxu0 0.0
    %6691 = vmatpush.msra.mxu0 0.0
    %6692 = vmatpush.msra.mxu0 0.0
    %6693 = vmatpush.msra.mxu0 0.0
    %6694 = vmatpush.msra.mxu0 0.0
    %6695 = vmatpush.msra.mxu0 0.0
    %6696 = vmatpush.msra.mxu0 0.0
    %6697 = vmatpush.msra.mxu0 0.0
    %6698 = vmatpush.msra.mxu0 0.0
    %6699 = vmatpush.msra.mxu0 0.0
    %6700 = vmatpush.msra.mxu0 %v6683
    %6701 = vmatmul.f32.gmra.mxu0 %v6681
    %v6702 = vpop.f32.mrf.mxu0
    %v6703 = vadd.f32 0.0, %v6702
    %6704 = vdwg.mxu0
    %6705 = vst [vmem:[#allocation1] ss:$4 sm:$0xff] %v1605
    %s6706 = scalar_lea.vmem [#allocation1], 1
    %6707 = vst [vmem:[%s6706] ss:$4 sm:$0xff] %v1606
    %s6708 = scalar_lea.vmem [#allocation1], 2
    %6709 = vst [vmem:[%s6708] ss:$4 sm:$0xff] %v1607
    %v6710 = vld.sshfl [vmem:[#allocation1] sm:$0xff pattern:$0x73625140]
    %v6712 = vsel %vm5376, %v5333, 0
    %v6714 = vsel %vm5380, %v6710, 0
    %6716 = vmatpush.msra.mxu0 0.0
    %6717 = vmatpush.msra.mxu0 0.0
    %6718 = vmatpush.msra.mxu0 0.0
    %6719 = vmatpush.msra.mxu0 0.0
    %6720 = vmatpush.msra.mxu0 0.0
    %6721 = vmatpush.msra.mxu0 0.0
    %6722 = vmatpush.msra.mxu0 0.0
    %6723 = vmatpush.msra.mxu0 0.0
    %6724 = vmatpush.msra.mxu0 0.0
    %6725 = vmatpush.msra.mxu0 0.0
    %6726 = vmatpush.msra.mxu0 0.0
    %6727 = vmatpush.msra.mxu0 0.0
    %6728 = vmatpush.msra.mxu0 0.0
    %6729 = vmatpush.msra.mxu0 0.0
    %6730 = vmatpush.msra.mxu0 0.0
    %6731 = vmatpush.msra.mxu0 %v6714
    %6732 = vmatmul.f32.gmra.mxu0 %v6712
    %v6733 = vpop.f32.mrf.mxu0
    %v6734 = vadd.f32 0.0, %v6733
    %6735 = vdwg.mxu0
    %6736 = vst [vmem:[#allocation1] ss:$4 sm:$0xff] %v890
    %s6737 = scalar_lea.vmem [#allocation1], 1
    %6738 = vst [vmem:[%s6737] ss:$4 sm:$0xff] %v1608
    %s6739 = scalar_lea.vmem [#allocation1], 2
    %6740 = vst [vmem:[%s6739] ss:$4 sm:$0xff] %v1609
    %v6741 = vld.sshfl [vmem:[#allocation1] sm:$0xff pattern:$0x73625140]
    %v6743 = vsel %vm5376, %v5334, 0
    %v6745 = vsel %vm5380, %v6741, 0
    %6747 = vmatpush.msra.mxu0 0.0
    %6748 = vmatpush.msra.mxu0 0.0
    %6749 = vmatpush.msra.mxu0 0.0
    %6750 = vmatpush.msra.mxu0 0.0
    %6751 = vmatpush.msra.mxu0 0.0
    %6752 = vmatpush.msra.mxu0 0.0
    %6753 = vmatpush.msra.mxu0 0.0
    %6754 = vmatpush.msra.mxu0 0.0
    %6755 = vmatpush.msra.mxu0 0.0
    %6756 = vmatpush.msra.mxu0 0.0
    %6757 = vmatpush.msra.mxu0 0.0
    %6758 = vmatpush.msra.mxu0 0.0
    %6759 = vmatpush.msra.mxu0 0.0
    %6760 = vmatpush.msra.mxu0 0.0
    %6761 = vmatpush.msra.mxu0 0.0
    %6762 = vmatpush.msra.mxu0 %v6745
    %6763 = vmatmul.f32.gmra.mxu0 %v6743
    %v6764 = vpop.f32.mrf.mxu0
    %v6765 = vadd.f32 0.0, %v6764
    %6766 = vdwg.mxu0
    %6767 = vst [vmem:[#allocation1] ss:$4 sm:$0xff] %v1610
    %s6768 = scalar_lea.vmem [#allocation1], 1
    %6769 = vst [vmem:[%s6768] ss:$4 sm:$0xff] %v893
    %s6770 = scalar_lea.vmem [#allocation1], 2
    %6771 = vst [vmem:[%s6770] ss:$4 sm:$0xff] %v1611
    %v6772 = vld.sshfl [vmem:[#allocation1] sm:$0xff pattern:$0x73625140]
    %v6774 = vsel %vm5376, %v5335, 0
    %v6776 = vsel %vm5380, %v6772, 0
    %6778 = vmatpush.msra.mxu0 0.0
    %6779 = vmatpush.msra.mxu0 0.0
    %6780 = vmatpush.msra.mxu0 0.0
    %6781 = vmatpush.msra.mxu0 0.0
    %6782 = vmatpush.msra.mxu0 0.0
    %6783 = vmatpush.msra.mxu0 0.0
    %6784 = vmatpush.msra.mxu0 0.0
    %6785 = vmatpush.msra.mxu0 0.0
    %6786 = vmatpush.msra.mxu0 0.0
    %6787 = vmatpush.msra.mxu0 0.0
    %6788 = vmatpush.msra.mxu0 0.0
    %6789 = vmatpush.msra.mxu0 0.0
    %6790 = vmatpush.msra.mxu0 0.0
    %6791 = vmatpush.msra.mxu0 0.0
    %6792 = vmatpush.msra.mxu0 0.0
    %6793 = vmatpush.msra.mxu0 %v6776
    %6794 = vmatmul.f32.gmra.mxu0 %v6774
    %v6795 = vpop.f32.mrf.mxu0
    %v6796 = vadd.f32 0.0, %v6795
    %6797 = vdwg.mxu0
    %6798 = vst [vmem:[#allocation1] ss:$4 sm:$0xff] %v1612
    %s6799 = scalar_lea.vmem [#allocation1], 1
    %6800 = vst [vmem:[%s6799] ss:$4 sm:$0xff] %v1613
    %s6801 = scalar_lea.vmem [#allocation1], 2
    %6802 = vst [vmem:[%s6801] ss:$4 sm:$0xff] %v896
    %v6803 = vld.sshfl [vmem:[#allocation1] sm:$0xff pattern:$0x73625140]
    %v6805 = vsel %vm5376, %v5336, 0
    %v6807 = vsel %vm5380, %v6803, 0
    %6809 = vmatpush.msra.mxu0 0.0
    %6810 = vmatpush.msra.mxu0 0.0
    %6811 = vmatpush.msra.mxu0 0.0
    %6812 = vmatpush.msra.mxu0 0.0
    %6813 = vmatpush.msra.mxu0 0.0
    %6814 = vmatpush.msra.mxu0 0.0
    %6815 = vmatpush.msra.mxu0 0.0
    %6816 = vmatpush.msra.mxu0 0.0
    %6817 = vmatpush.msra.mxu0 0.0
    %6818 = vmatpush.msra.mxu0 0.0
    %6819 = vmatpush.msra.mxu0 0.0
    %6820 = vmatpush.msra.mxu0 0.0
    %6821 = vmatpush.msra.mxu0 0.0
    %6822 = vmatpush.msra.mxu0 0.0
    %6823 = vmatpush.msra.mxu0 0.0
    %6824 = vmatpush.msra.mxu0 %v6807
    %6825 = vmatmul.f32.gmra.mxu0 %v6805
    %v6826 = vpop.f32.mrf.mxu0
    %v6827 = vadd.f32 0.0, %v6826
    %6828 = vdwg.mxu0
    %6829 = vst [vmem:[#allocation1] ss:$4 sm:$0xff] %v1614
    %s6830 = scalar_lea.vmem [#allocation1], 1
    %6831 = vst [vmem:[%s6830] ss:$4 sm:$0xff] %v1615
    %s6832 = scalar_lea.vmem [#allocation1], 2
    %6833 = vst [vmem:[%s6832] ss:$4 sm:$0xff] %v1616
    %v6834 = vld.sshfl [vmem:[#allocation1] sm:$0xff pattern:$0x73625140]
    %v6836 = vsel %vm5376, %v5337, 0
    %v6838 = vsel %vm5380, %v6834, 0
    %6840 = vmatpush.msra.mxu0 0.0
    %6841 = vmatpush.msra.mxu0 0.0
    %6842 = vmatpush.msra.mxu0 0.0
    %6843 = vmatpush.msra.mxu0 0.0
    %6844 = vmatpush.msra.mxu0 0.0
    %6845 = vmatpush.msra.mxu0 0.0
    %6846 = vmatpush.msra.mxu0 0.0
    %6847 = vmatpush.msra.mxu0 0.0
    %6848 = vmatpush.msra.mxu0 0.0
    %6849 = vmatpush.msra.mxu0 0.0
    %6850 = vmatpush.msra.mxu0 0.0
    %6851 = vmatpush.msra.mxu0 0.0
    %6852 = vmatpush.msra.mxu0 0.0
    %6853 = vmatpush.msra.mxu0 0.0
    %6854 = vmatpush.msra.mxu0 0.0
    %6855 = vmatpush.msra.mxu0 %v6838
    %6856 = vmatmul.f32.gmra.mxu0 %v6836
    %v6857 = vpop.f32.mrf.mxu0
    %v6858 = vadd.f32 0.0, %v6857
    %6859 = vdwg.mxu0
    %6860 = vst [vmem:[#allocation1] ss:$4 sm:$0xff] %v899
    %s6861 = scalar_lea.vmem [#allocation1], 1
    %6862 = vst [vmem:[%s6861] ss:$4 sm:$0xff] %v1617
    %s6863 = scalar_lea.vmem [#allocation1], 2
    %6864 = vst [vmem:[%s6863] ss:$4 sm:$0xff] %v1618
    %v6865 = vld.sshfl [vmem:[#allocation1] sm:$0xff pattern:$0x73625140]
    %v6867 = vsel %vm5376, %v5338, 0
    %v6869 = vsel %vm5380, %v6865, 0
    %6871 = vmatpush.msra.mxu0 0.0
    %6872 = vmatpush.msra.mxu0 0.0
    %6873 = vmatpush.msra.mxu0 0.0
    %6874 = vmatpush.msra.mxu0 0.0
    %6875 = vmatpush.msra.mxu0 0.0
    %6876 = vmatpush.msra.mxu0 0.0
    %6877 = vmatpush.msra.mxu0 0.0
    %6878 = vmatpush.msra.mxu0 0.0
    %6879 = vmatpush.msra.mxu0 0.0
    %6880 = vmatpush.msra.mxu0 0.0
    %6881 = vmatpush.msra.mxu0 0.0
    %6882 = vmatpush.msra.mxu0 0.0
    %6883 = vmatpush.msra.mxu0 0.0
    %6884 = vmatpush.msra.mxu0 0.0
    %6885 = vmatpush.msra.mxu0 0.0
    %6886 = vmatpush.msra.mxu0 %v6869
    %6887 = vmatmul.f32.gmra.mxu0 %v6867
    %v6888 = vpop.f32.mrf.mxu0
    %v6889 = vadd.f32 0.0, %v6888
    %6890 = vdwg.mxu0
    %6891 = vst [vmem:[#allocation1] ss:$4 sm:$0xff] %v1619
    %s6892 = scalar_lea.vmem [#allocation1], 1
    %6893 = vst [vmem:[%s6892] ss:$4 sm:$0xff] %v902
    %s6894 = scalar_lea.vmem [#allocation1], 2
    %6895 = vst [vmem:[%s6894] ss:$4 sm:$0xff] %v1620
    %v6896 = vld.sshfl [vmem:[#allocation1] sm:$0xff pattern:$0x73625140]
    %v6898 = vsel %vm5376, %v5339, 0
    %v6900 = vsel %vm5380, %v6896, 0
    %6902 = vmatpush.msra.mxu0 0.0
    %6903 = vmatpush.msra.mxu0 0.0
    %6904 = vmatpush.msra.mxu0 0.0
    %6905 = vmatpush.msra.mxu0 0.0
    %6906 = vmatpush.msra.mxu0 0.0
    %6907 = vmatpush.msra.mxu0 0.0
    %6908 = vmatpush.msra.mxu0 0.0
    %6909 = vmatpush.msra.mxu0 0.0
    %6910 = vmatpush.msra.mxu0 0.0
    %6911 = vmatpush.msra.mxu0 0.0
    %6912 = vmatpush.msra.mxu0 0.0
    %6913 = vmatpush.msra.mxu0 0.0
    %6914 = vmatpush.msra.mxu0 0.0
    %6915 = vmatpush.msra.mxu0 0.0
    %6916 = vmatpush.msra.mxu0 0.0
    %6917 = vmatpush.msra.mxu0 %v6900
    %6918 = vmatmul.f32.gmra.mxu0 %v6898
    %v6919 = vpop.f32.mrf.mxu0
    %v6920 = vadd.f32 0.0, %v6919
    %6921 = vdwg.mxu0
    %6922 = vst [vmem:[#allocation1] ss:$4 sm:$0xff] %v1621
    %s6923 = scalar_lea.vmem [#allocation1], 1
    %6924 = vst [vmem:[%s6923] ss:$4 sm:$0xff] %v1622
    %s6925 = scalar_lea.vmem [#allocation1], 2
    %6926 = vst [vmem:[%s6925] ss:$4 sm:$0xff] %v905
    %v6927 = vld.sshfl [vmem:[#allocation1] sm:$0xff pattern:$0x73625140]
    %v6929 = vsel %vm5376, %v5340, 0
    %v6931 = vsel %vm5380, %v6927, 0
    %6933 = vmatpush.msra.mxu0 0.0
    %6934 = vmatpush.msra.mxu0 0.0
    %6935 = vmatpush.msra.mxu0 0.0
    %6936 = vmatpush.msra.mxu0 0.0
    %6937 = vmatpush.msra.mxu0 0.0
    %6938 = vmatpush.msra.mxu0 0.0
    %6939 = vmatpush.msra.mxu0 0.0
    %6940 = vmatpush.msra.mxu0 0.0
    %6941 = vmatpush.msra.mxu0 0.0
    %6942 = vmatpush.msra.mxu0 0.0
    %6943 = vmatpush.msra.mxu0 0.0
    %6944 = vmatpush.msra.mxu0 0.0
    %6945 = vmatpush.msra.mxu0 0.0
    %6946 = vmatpush.msra.mxu0 0.0
    %6947 = vmatpush.msra.mxu0 0.0
    %6948 = vmatpush.msra.mxu0 %v6931
    %6949 = vmatmul.f32.gmra.mxu0 %v6929
    %v6950 = vpop.f32.mrf.mxu0
    %v6951 = vadd.f32 0.0, %v6950
    %6952 = vdwg.mxu0
    %6953 = vst [vmem:[#allocation1] ss:$4 sm:$0xff] %v1623
    %s6954 = scalar_lea.vmem [#allocation1], 1
    %6955 = vst [vmem:[%s6954] ss:$4 sm:$0xff] %v1624
    %s6956 = scalar_lea.vmem [#allocation1], 2
    %6957 = vst [vmem:[%s6956] ss:$4 sm:$0xff] %v1625
    %v6958 = vld.sshfl [vmem:[#allocation1] sm:$0xff pattern:$0x73625140]
    %v6960 = vsel %vm5376, %v5341, 0
    %v6962 = vsel %vm5380, %v6958, 0
    %6964 = vmatpush.msra.mxu0 0.0
    %6965 = vmatpush.msra.mxu0 0.0
    %6966 = vmatpush.msra.mxu0 0.0
    %6967 = vmatpush.msra.mxu0 0.0
    %6968 = vmatpush.msra.mxu0 0.0
    %6969 = vmatpush.msra.mxu0 0.0
    %6970 = vmatpush.msra.mxu0 0.0
    %6971 = vmatpush.msra.mxu0 0.0
    %6972 = vmatpush.msra.mxu0 0.0
    %6973 = vmatpush.msra.mxu0 0.0
    %6974 = vmatpush.msra.mxu0 0.0
    %6975 = vmatpush.msra.mxu0 0.0
    %6976 = vmatpush.msra.mxu0 0.0
    %6977 = vmatpush.msra.mxu0 0.0
    %6978 = vmatpush.msra.mxu0 0.0
    %6979 = vmatpush.msra.mxu0 %v6962
    %6980 = vmatmul.f32.gmra.mxu0 %v6960
    %v6981 = vpop.f32.mrf.mxu0
    %v6982 = vadd.f32 0.0, %v6981
    %6983 = vdwg.mxu0
    %6984 = vst [vmem:[#allocation1] ss:$4 sm:$0xff] %v908
    %s6985 = scalar_lea.vmem [#allocation1], 1
    %6986 = vst [vmem:[%s6985] ss:$4 sm:$0xff] %v1626
    %s6987 = scalar_lea.vmem [#allocation1], 2
    %6988 = vst [vmem:[%s6987] ss:$4 sm:$0xff] %v1627
    %v6989 = vld.sshfl [vmem:[#allocation1] sm:$0xff pattern:$0x73625140]
    %v6991 = vsel %vm5376, %v5342, 0
    %v6993 = vsel %vm5380, %v6989, 0
    %6995 = vmatpush.msra.mxu0 0.0
    %6996 = vmatpush.msra.mxu0 0.0
    %6997 = vmatpush.msra.mxu0 0.0
    %6998 = vmatpush.msra.mxu0 0.0
    %6999 = vmatpush.msra.mxu0 0.0
    %7000 = vmatpush.msra.mxu0 0.0
    %7001 = vmatpush.msra.mxu0 0.0
    %7002 = vmatpush.msra.mxu0 0.0
    %7003 = vmatpush.msra.mxu0 0.0
    %7004 = vmatpush.msra.mxu0 0.0
    %7005 = vmatpush.msra.mxu0 0.0
    %7006 = vmatpush.msra.mxu0 0.0
    %7007 = vmatpush.msra.mxu0 0.0
    %7008 = vmatpush.msra.mxu0 0.0
    %7009 = vmatpush.msra.mxu0 0.0
    %7010 = vmatpush.msra.mxu0 %v6993
    %7011 = vmatmul.f32.gmra.mxu0 %v6991
    %v7012 = vpop.f32.mrf.mxu0
    %v7013 = vadd.f32 0.0, %v7012
    %7014 = vdwg.mxu0
    %7015 = vst [vmem:[#allocation1] ss:$4 sm:$0xff] %v1628
    %s7016 = scalar_lea.vmem [#allocation1], 1
    %7017 = vst [vmem:[%s7016] ss:$4 sm:$0xff] %v911
    %s7018 = scalar_lea.vmem [#allocation1], 2
    %7019 = vst [vmem:[%s7018] ss:$4 sm:$0xff] %v1629
    %v7020 = vld.sshfl [vmem:[#allocation1] sm:$0xff pattern:$0x73625140]
    %v7022 = vsel %vm5376, %v5343, 0
    %v7024 = vsel %vm5380, %v7020, 0
    %7026 = vmatpush.msra.mxu0 0.0
    %7027 = vmatpush.msra.mxu0 0.0
    %7028 = vmatpush.msra.mxu0 0.0
    %7029 = vmatpush.msra.mxu0 0.0
    %7030 = vmatpush.msra.mxu0 0.0
    %7031 = vmatpush.msra.mxu0 0.0
    %7032 = vmatpush.msra.mxu0 0.0
    %7033 = vmatpush.msra.mxu0 0.0
    %7034 = vmatpush.msra.mxu0 0.0
    %7035 = vmatpush.msra.mxu0 0.0
    %7036 = vmatpush.msra.mxu0 0.0
    %7037 = vmatpush.msra.mxu0 0.0
    %7038 = vmatpush.msra.mxu0 0.0
    %7039 = vmatpush.msra.mxu0 0.0
    %7040 = vmatpush.msra.mxu0 0.0
    %7041 = vmatpush.msra.mxu0 %v7024
    %7042 = vmatmul.f32.gmra.mxu0 %v7022
    %v7043 = vpop.f32.mrf.mxu0
    %v7044 = vadd.f32 0.0, %v7043
    %7045 = vdwg.mxu0
    %7046 = vst [vmem:[#allocation1] ss:$4 sm:$0xff] %v1630
    %s7047 = scalar_lea.vmem [#allocation1], 1
    %7048 = vst [vmem:[%s7047] ss:$4 sm:$0xff] %v1631
    %s7049 = scalar_lea.vmem [#allocation1], 2
    %7050 = vst [vmem:[%s7049] ss:$4 sm:$0xff] %v914
    %v7051 = vld.sshfl [vmem:[#allocation1] sm:$0xff pattern:$0x73625140]
    %v7053 = vsel %vm5376, %v5344, 0
    %v7055 = vsel %vm5380, %v7051, 0
    %7057 = vmatpush.msra.mxu0 0.0
    %7058 = vmatpush.msra.mxu0 0.0
    %7059 = vmatpush.msra.mxu0 0.0
    %7060 = vmatpush.msra.mxu0 0.0
    %7061 = vmatpush.msra.mxu0 0.0
    %7062 = vmatpush.msra.mxu0 0.0
    %7063 = vmatpush.msra.mxu0 0.0
    %7064 = vmatpush.msra.mxu0 0.0
    %7065 = vmatpush.msra.mxu0 0.0
    %7066 = vmatpush.msra.mxu0 0.0
    %7067 = vmatpush.msra.mxu0 0.0
    %7068 = vmatpush.msra.mxu0 0.0
    %7069 = vmatpush.msra.mxu0 0.0
    %7070 = vmatpush.msra.mxu0 0.0
    %7071 = vmatpush.msra.mxu0 0.0
    %7072 = vmatpush.msra.mxu0 %v7055
    %7073 = vmatmul.f32.gmra.mxu0 %v7053
    %v7074 = vpop.f32.mrf.mxu0
    %v7075 = vadd.f32 0.0, %v7074
    %7076 = vdwg.mxu0
    %7077 = vst [vmem:[#allocation1] ss:$4 sm:$0xff] %v1632
    %s7078 = scalar_lea.vmem [#allocation1], 1
    %7079 = vst [vmem:[%s7078] ss:$4 sm:$0xff] %v1633
    %s7080 = scalar_lea.vmem [#allocation1], 2
    %7081 = vst [vmem:[%s7080] ss:$4 sm:$0xff] %v1634
    %v7082 = vld.sshfl [vmem:[#allocation1] sm:$0xff pattern:$0x73625140]
    %v7084 = vsel %vm5376, %v5345, 0
    %v7086 = vsel %vm5380, %v7082, 0
    %7088 = vmatpush.msra.mxu0 0.0
    %7089 = vmatpush.msra.mxu0 0.0
    %7090 = vmatpush.msra.mxu0 0.0
    %7091 = vmatpush.msra.mxu0 0.0
    %7092 = vmatpush.msra.mxu0 0.0
    %7093 = vmatpush.msra.mxu0 0.0
    %7094 = vmatpush.msra.mxu0 0.0
    %7095 = vmatpush.msra.mxu0 0.0
    %7096 = vmatpush.msra.mxu0 0.0
    %7097 = vmatpush.msra.mxu0 0.0
    %7098 = vmatpush.msra.mxu0 0.0
    %7099 = vmatpush.msra.mxu0 0.0
    %7100 = vmatpush.msra.mxu0 0.0
    %7101 = vmatpush.msra.mxu0 0.0
    %7102 = vmatpush.msra.mxu0 0.0
    %7103 = vmatpush.msra.mxu0 %v7086
    %7104 = vmatmul.f32.gmra.mxu0 %v7084
    %v7105 = vpop.f32.mrf.mxu0
    %v7106 = vadd.f32 0.0, %v7105
    %7107 = vdwg.mxu0
    %7108 = vst [vmem:[#allocation1] ss:$4 sm:$0xff] %v917
    %s7109 = scalar_lea.vmem [#allocation1], 1
    %7110 = vst [vmem:[%s7109] ss:$4 sm:$0xff] %v1635
    %s7111 = scalar_lea.vmem [#allocation1], 2
    %7112 = vst [vmem:[%s7111] ss:$4 sm:$0xff] %v1636
    %v7113 = vld.sshfl [vmem:[#allocation1] sm:$0xff pattern:$0x73625140]
    %v7115 = vsel %vm5376, %v5346, 0
    %v7117 = vsel %vm5380, %v7113, 0
    %7119 = vmatpush.msra.mxu0 0.0
    %7120 = vmatpush.msra.mxu0 0.0
    %7121 = vmatpush.msra.mxu0 0.0
    %7122 = vmatpush.msra.mxu0 0.0
    %7123 = vmatpush.msra.mxu0 0.0
    %7124 = vmatpush.msra.mxu0 0.0
    %7125 = vmatpush.msra.mxu0 0.0
    %7126 = vmatpush.msra.mxu0 0.0
    %7127 = vmatpush.msra.mxu0 0.0
    %7128 = vmatpush.msra.mxu0 0.0
    %7129 = vmatpush.msra.mxu0 0.0
    %7130 = vmatpush.msra.mxu0 0.0
    %7131 = vmatpush.msra.mxu0 0.0
    %7132 = vmatpush.msra.mxu0 0.0
    %7133 = vmatpush.msra.mxu0 0.0
    %7134 = vmatpush.msra.mxu0 %v7117
    %7135 = vmatmul.f32.gmra.mxu0 %v7115
    %v7136 = vpop.f32.mrf.mxu0
    %v7137 = vadd.f32 0.0, %v7136
    %7138 = vdwg.mxu0
    %7139 = vst [vmem:[#allocation1] ss:$4 sm:$0xff] %v1637
    %s7140 = scalar_lea.vmem [#allocation1], 1
    %7141 = vst [vmem:[%s7140] ss:$4 sm:$0xff] %v920
    %s7142 = scalar_lea.vmem [#allocation1], 2
    %7143 = vst [vmem:[%s7142] ss:$4 sm:$0xff] %v1638
    %v7144 = vld.sshfl [vmem:[#allocation1] sm:$0xff pattern:$0x73625140]
    %v7146 = vsel %vm5376, %v5347, 0
    %v7148 = vsel %vm5380, %v7144, 0
    %7150 = vmatpush.msra.mxu0 0.0
    %7151 = vmatpush.msra.mxu0 0.0
    %7152 = vmatpush.msra.mxu0 0.0
    %7153 = vmatpush.msra.mxu0 0.0
    %7154 = vmatpush.msra.mxu0 0.0
    %7155 = vmatpush.msra.mxu0 0.0
    %7156 = vmatpush.msra.mxu0 0.0
    %7157 = vmatpush.msra.mxu0 0.0
    %7158 = vmatpush.msra.mxu0 0.0
    %7159 = vmatpush.msra.mxu0 0.0
    %7160 = vmatpush.msra.mxu0 0.0
    %7161 = vmatpush.msra.mxu0 0.0
    %7162 = vmatpush.msra.mxu0 0.0
    %7163 = vmatpush.msra.mxu0 0.0
    %7164 = vmatpush.msra.mxu0 0.0
    %7165 = vmatpush.msra.mxu0 %v7148
    %7166 = vmatmul.f32.gmra.mxu0 %v7146
    %v7167 = vpop.f32.mrf.mxu0
    %v7168 = vadd.f32 0.0, %v7167
    %7169 = vdwg.mxu0
    %7170 = vst [vmem:[#allocation1] ss:$4 sm:$0xff] %v1639
    %s7171 = scalar_lea.vmem [#allocation1], 1
    %7172 = vst [vmem:[%s7171] ss:$4 sm:$0xff] %v1640
    %s7173 = scalar_lea.vmem [#allocation1], 2
    %7174 = vst [vmem:[%s7173] ss:$4 sm:$0xff] %v923
    %v7175 = vld.sshfl [vmem:[#allocation1] sm:$0xff pattern:$0x73625140]
    %v7177 = vsel %vm5376, %v5348, 0
    %v7179 = vsel %vm5380, %v7175, 0
    %7181 = vmatpush.msra.mxu0 0.0
    %7182 = vmatpush.msra.mxu0 0.0
    %7183 = vmatpush.msra.mxu0 0.0
    %7184 = vmatpush.msra.mxu0 0.0
    %7185 = vmatpush.msra.mxu0 0.0
    %7186 = vmatpush.msra.mxu0 0.0
    %7187 = vmatpush.msra.mxu0 0.0
    %7188 = vmatpush.msra.mxu0 0.0
    %7189 = vmatpush.msra.mxu0 0.0
    %7190 = vmatpush.msra.mxu0 0.0
    %7191 = vmatpush.msra.mxu0 0.0
    %7192 = vmatpush.msra.mxu0 0.0
    %7193 = vmatpush.msra.mxu0 0.0
    %7194 = vmatpush.msra.mxu0 0.0
    %7195 = vmatpush.msra.mxu0 0.0
    %7196 = vmatpush.msra.mxu0 %v7179
    %7197 = vmatmul.f32.gmra.mxu0 %v7177
    %v7198 = vpop.f32.mrf.mxu0
    %v7199 = vadd.f32 0.0, %v7198
    %7200 = vdwg.mxu0
    %7201 = vst [vmem:[#allocation1] ss:$4 sm:$0xff] %v1641
    %s7202 = scalar_lea.vmem [#allocation1], 1
    %7203 = vst [vmem:[%s7202] ss:$4 sm:$0xff] %v1642
    %s7204 = scalar_lea.vmem [#allocation1], 2
    %7205 = vst [vmem:[%s7204] ss:$4 sm:$0xff] %v1643
    %v7206 = vld.sshfl [vmem:[#allocation1] sm:$0xff pattern:$0x73625140]
    %v7208 = vsel %vm5376, %v5349, 0
    %v7210 = vsel %vm5380, %v7206, 0
    %7212 = vmatpush.msra.mxu0 0.0
    %7213 = vmatpush.msra.mxu0 0.0
    %7214 = vmatpush.msra.mxu0 0.0
    %7215 = vmatpush.msra.mxu0 0.0
    %7216 = vmatpush.msra.mxu0 0.0
    %7217 = vmatpush.msra.mxu0 0.0
    %7218 = vmatpush.msra.mxu0 0.0
    %7219 = vmatpush.msra.mxu0 0.0
    %7220 = vmatpush.msra.mxu0 0.0
    %7221 = vmatpush.msra.mxu0 0.0
    %7222 = vmatpush.msra.mxu0 0.0
    %7223 = vmatpush.msra.mxu0 0.0
    %7224 = vmatpush.msra.mxu0 0.0
    %7225 = vmatpush.msra.mxu0 0.0
    %7226 = vmatpush.msra.mxu0 0.0
    %7227 = vmatpush.msra.mxu0 %v7210
    %7228 = vmatmul.f32.gmra.mxu0 %v7208
    %v7229 = vpop.f32.mrf.mxu0
    %v7230 = vadd.f32 0.0, %v7229
    %7231 = vdwg.mxu0
    %7232 = vst [vmem:[#allocation1] ss:$4 sm:$0xff] %v926
    %s7233 = scalar_lea.vmem [#allocation1], 1
    %7234 = vst [vmem:[%s7233] ss:$4 sm:$0xff] %v1644
    %s7235 = scalar_lea.vmem [#allocation1], 2
    %7236 = vst [vmem:[%s7235] ss:$4 sm:$0xff] %v1645
    %v7237 = vld.sshfl [vmem:[#allocation1] sm:$0xff pattern:$0x73625140]
    %v7239 = vsel %vm5376, %v5350, 0
    %v7241 = vsel %vm5380, %v7237, 0
    %7243 = vmatpush.msra.mxu0 0.0
    %7244 = vmatpush.msra.mxu0 0.0
    %7245 = vmatpush.msra.mxu0 0.0
    %7246 = vmatpush.msra.mxu0 0.0
    %7247 = vmatpush.msra.mxu0 0.0
    %7248 = vmatpush.msra.mxu0 0.0
    %7249 = vmatpush.msra.mxu0 0.0
    %7250 = vmatpush.msra.mxu0 0.0
    %7251 = vmatpush.msra.mxu0 0.0
    %7252 = vmatpush.msra.mxu0 0.0
    %7253 = vmatpush.msra.mxu0 0.0
    %7254 = vmatpush.msra.mxu0 0.0
    %7255 = vmatpush.msra.mxu0 0.0
    %7256 = vmatpush.msra.mxu0 0.0
    %7257 = vmatpush.msra.mxu0 0.0
    %7258 = vmatpush.msra.mxu0 %v7241
    %7259 = vmatmul.f32.gmra.mxu0 %v7239
    %v7260 = vpop.f32.mrf.mxu0
    %v7261 = vadd.f32 0.0, %v7260
    %7262 = vdwg.mxu0
    %7263 = vst [vmem:[#allocation1] ss:$4 sm:$0xff] %v1646
    %s7264 = scalar_lea.vmem [#allocation1], 1
    %7265 = vst [vmem:[%s7264] ss:$4 sm:$0xff] %v929
    %s7266 = scalar_lea.vmem [#allocation1], 2
    %7267 = vst [vmem:[%s7266] ss:$4 sm:$0xff] %v1647
    %v7268 = vld.sshfl [vmem:[#allocation1] sm:$0xff pattern:$0x73625140]
    %v7270 = vsel %vm5376, %v5351, 0
    %v7272 = vsel %vm5380, %v7268, 0
    %7274 = vmatpush.msra.mxu0 0.0
    %7275 = vmatpush.msra.mxu0 0.0
    %7276 = vmatpush.msra.mxu0 0.0
    %7277 = vmatpush.msra.mxu0 0.0
    %7278 = vmatpush.msra.mxu0 0.0
    %7279 = vmatpush.msra.mxu0 0.0
    %7280 = vmatpush.msra.mxu0 0.0
    %7281 = vmatpush.msra.mxu0 0.0
    %7282 = vmatpush.msra.mxu0 0.0
    %7283 = vmatpush.msra.mxu0 0.0
    %7284 = vmatpush.msra.mxu0 0.0
    %7285 = vmatpush.msra.mxu0 0.0
    %7286 = vmatpush.msra.mxu0 0.0
    %7287 = vmatpush.msra.mxu0 0.0
    %7288 = vmatpush.msra.mxu0 0.0
    %7289 = vmatpush.msra.mxu0 %v7272
    %7290 = vmatmul.f32.gmra.mxu0 %v7270
    %v7291 = vpop.f32.mrf.mxu0
    %v7292 = vadd.f32 0.0, %v7291
    %7293 = vdwg.mxu0
    %7294 = vst [vmem:[#allocation1] ss:$4 sm:$0xff] %v1648
    %s7295 = scalar_lea.vmem [#allocation1], 1
    %7296 = vst [vmem:[%s7295] ss:$4 sm:$0xff] %v1649
    %s7297 = scalar_lea.vmem [#allocation1], 2
    %7298 = vst [vmem:[%s7297] ss:$4 sm:$0xff] %v932
    %v7299 = vld.sshfl [vmem:[#allocation1] sm:$0xff pattern:$0x73625140]
    %v7301 = vsel %vm5376, %v5352, 0
    %v7303 = vsel %vm5380, %v7299, 0
    %7305 = vmatpush.msra.mxu0 0.0
    %7306 = vmatpush.msra.mxu0 0.0
    %7307 = vmatpush.msra.mxu0 0.0
    %7308 = vmatpush.msra.mxu0 0.0
    %7309 = vmatpush.msra.mxu0 0.0
    %7310 = vmatpush.msra.mxu0 0.0
    %7311 = vmatpush.msra.mxu0 0.0
    %7312 = vmatpush.msra.mxu0 0.0
    %7313 = vmatpush.msra.mxu0 0.0
    %7314 = vmatpush.msra.mxu0 0.0
    %7315 = vmatpush.msra.mxu0 0.0
    %7316 = vmatpush.msra.mxu0 0.0
    %7317 = vmatpush.msra.mxu0 0.0
    %7318 = vmatpush.msra.mxu0 0.0
    %7319 = vmatpush.msra.mxu0 0.0
    %7320 = vmatpush.msra.mxu0 %v7303
    %7321 = vmatmul.f32.gmra.mxu0 %v7301
    %v7322 = vpop.f32.mrf.mxu0
    %v7323 = vadd.f32 0.0, %v7322
    %7324 = vdwg.mxu0
    %7325 = vst [vmem:[#allocation1] ss:$4 sm:$0xff] %v1650
    %s7326 = scalar_lea.vmem [#allocation1], 1
    %7327 = vst [vmem:[%s7326] ss:$4 sm:$0xff] %v1651
    %s7328 = scalar_lea.vmem [#allocation1], 2
    %7329 = vst [vmem:[%s7328] ss:$4 sm:$0xff] %v1652
    %v7330 = vld.sshfl [vmem:[#allocation1] sm:$0xff pattern:$0x73625140]
    %v7332 = vsel %vm5376, %v5353, 0
    %v7334 = vsel %vm5380, %v7330, 0
    %7336 = vmatpush.msra.mxu0 0.0
    %7337 = vmatpush.msra.mxu0 0.0
    %7338 = vmatpush.msra.mxu0 0.0
    %7339 = vmatpush.msra.mxu0 0.0
    %7340 = vmatpush.msra.mxu0 0.0
    %7341 = vmatpush.msra.mxu0 0.0
    %7342 = vmatpush.msra.mxu0 0.0
    %7343 = vmatpush.msra.mxu0 0.0
    %7344 = vmatpush.msra.mxu0 0.0
    %7345 = vmatpush.msra.mxu0 0.0
    %7346 = vmatpush.msra.mxu0 0.0
    %7347 = vmatpush.msra.mxu0 0.0
    %7348 = vmatpush.msra.mxu0 0.0
    %7349 = vmatpush.msra.mxu0 0.0
    %7350 = vmatpush.msra.mxu0 0.0
    %7351 = vmatpush.msra.mxu0 %v7334
    %7352 = vmatmul.f32.gmra.mxu0 %v7332
    %v7353 = vpop.f32.mrf.mxu0
    %v7354 = vadd.f32 0.0, %v7353
    %7355 = vdwg.mxu0
    %7356 = vst [vmem:[#allocation1] ss:$4 sm:$0xff] %v935
    %s7357 = scalar_lea.vmem [#allocation1], 1
    %7358 = vst [vmem:[%s7357] ss:$4 sm:$0xff] %v1653
    %s7359 = scalar_lea.vmem [#allocation1], 2
    %7360 = vst [vmem:[%s7359] ss:$4 sm:$0xff] %v1654
    %v7361 = vld.sshfl [vmem:[#allocation1] sm:$0xff pattern:$0x73625140]
    %v7363 = vsel %vm5376, %v5354, 0
    %v7365 = vsel %vm5380, %v7361, 0
    %7367 = vmatpush.msra.mxu0 0.0
    %7368 = vmatpush.msra.mxu0 0.0
    %7369 = vmatpush.msra.mxu0 0.0
    %7370 = vmatpush.msra.mxu0 0.0
    %7371 = vmatpush.msra.mxu0 0.0
    %7372 = vmatpush.msra.mxu0 0.0
    %7373 = vmatpush.msra.mxu0 0.0
    %7374 = vmatpush.msra.mxu0 0.0
    %7375 = vmatpush.msra.mxu0 0.0
    %7376 = vmatpush.msra.mxu0 0.0
    %7377 = vmatpush.msra.mxu0 0.0
    %7378 = vmatpush.msra.mxu0 0.0
    %7379 = vmatpush.msra.mxu0 0.0
    %7380 = vmatpush.msra.mxu0 0.0
    %7381 = vmatpush.msra.mxu0 0.0
    %7382 = vmatpush.msra.mxu0 %v7365
    %7383 = vmatmul.f32.gmra.mxu0 %v7363
    %v7384 = vpop.f32.mrf.mxu0
    %v7385 = vadd.f32 0.0, %v7384
    %7386 = vdwg.mxu0
    %7387 = vst [vmem:[#allocation1] ss:$4 sm:$0xff] %v1655
    %s7388 = scalar_lea.vmem [#allocation1], 1
    %7389 = vst [vmem:[%s7388] ss:$4 sm:$0xff] %v938
    %s7390 = scalar_lea.vmem [#allocation1], 2
    %7391 = vst [vmem:[%s7390] ss:$4 sm:$0xff] %v1656
    %v7392 = vld.sshfl [vmem:[#allocation1] sm:$0xff pattern:$0x73625140]
    %v7394 = vsel %vm5376, %v5355, 0
    %v7396 = vsel %vm5380, %v7392, 0
    %7398 = vmatpush.msra.mxu0 0.0
    %7399 = vmatpush.msra.mxu0 0.0
    %7400 = vmatpush.msra.mxu0 0.0
    %7401 = vmatpush.msra.mxu0 0.0
    %7402 = vmatpush.msra.mxu0 0.0
    %7403 = vmatpush.msra.mxu0 0.0
    %7404 = vmatpush.msra.mxu0 0.0
    %7405 = vmatpush.msra.mxu0 0.0
    %7406 = vmatpush.msra.mxu0 0.0
    %7407 = vmatpush.msra.mxu0 0.0
    %7408 = vmatpush.msra.mxu0 0.0
    %7409 = vmatpush.msra.mxu0 0.0
    %7410 = vmatpush.msra.mxu0 0.0
    %7411 = vmatpush.msra.mxu0 0.0
    %7412 = vmatpush.msra.mxu0 0.0
    %7413 = vmatpush.msra.mxu0 %v7396
    %7414 = vmatmul.f32.gmra.mxu0 %v7394
    %v7415 = vpop.f32.mrf.mxu0
    %v7416 = vadd.f32 0.0, %v7415
    %7417 = vdwg.mxu0
    %7418 = vst [vmem:[#allocation1] ss:$4 sm:$0xff] %v1657
    %s7419 = scalar_lea.vmem [#allocation1], 1
    %7420 = vst [vmem:[%s7419] ss:$4 sm:$0xff] %v1658
    %s7421 = scalar_lea.vmem [#allocation1], 2
    %7422 = vst [vmem:[%s7421] ss:$4 sm:$0xff] %v941
    %v7423 = vld.sshfl [vmem:[#allocation1] sm:$0xff pattern:$0x73625140]
    %v7425 = vsel %vm5376, %v5356, 0
    %v7427 = vsel %vm5380, %v7423, 0
    %7429 = vmatpush.msra.mxu0 0.0
    %7430 = vmatpush.msra.mxu0 0.0
    %7431 = vmatpush.msra.mxu0 0.0
    %7432 = vmatpush.msra.mxu0 0.0
    %7433 = vmatpush.msra.mxu0 0.0
    %7434 = vmatpush.msra.mxu0 0.0
    %7435 = vmatpush.msra.mxu0 0.0
    %7436 = vmatpush.msra.mxu0 0.0
    %7437 = vmatpush.msra.mxu0 0.0
    %7438 = vmatpush.msra.mxu0 0.0
    %7439 = vmatpush.msra.mxu0 0.0
    %7440 = vmatpush.msra.mxu0 0.0
    %7441 = vmatpush.msra.mxu0 0.0
    %7442 = vmatpush.msra.mxu0 0.0
    %7443 = vmatpush.msra.mxu0 0.0
    %7444 = vmatpush.msra.mxu0 %v7427
    %7445 = vmatmul.f32.gmra.mxu0 %v7425
    %v7446 = vpop.f32.mrf.mxu0
    %v7447 = vadd.f32 0.0, %v7446
    %7448 = vdwg.mxu0
    %7449 = vst [vmem:[#allocation1] ss:$4 sm:$0xff] %v1659
    %s7450 = scalar_lea.vmem [#allocation1], 1
    %7451 = vst [vmem:[%s7450] ss:$4 sm:$0xff] %v1660
    %s7452 = scalar_lea.vmem [#allocation1], 2
    %7453 = vst [vmem:[%s7452] ss:$4 sm:$0xff] %v1661
    %v7454 = vld.sshfl [vmem:[#allocation1] sm:$0xff pattern:$0x73625140]
    %v7456 = vsel %vm5376, %v5357, 0
    %v7458 = vsel %vm5380, %v7454, 0
    %7460 = vmatpush.msra.mxu0 0.0
    %7461 = vmatpush.msra.mxu0 0.0
    %7462 = vmatpush.msra.mxu0 0.0
    %7463 = vmatpush.msra.mxu0 0.0
    %7464 = vmatpush.msra.mxu0 0.0
    %7465 = vmatpush.msra.mxu0 0.0
    %7466 = vmatpush.msra.mxu0 0.0
    %7467 = vmatpush.msra.mxu0 0.0
    %7468 = vmatpush.msra.mxu0 0.0
    %7469 = vmatpush.msra.mxu0 0.0
    %7470 = vmatpush.msra.mxu0 0.0
    %7471 = vmatpush.msra.mxu0 0.0
    %7472 = vmatpush.msra.mxu0 0.0
    %7473 = vmatpush.msra.mxu0 0.0
    %7474 = vmatpush.msra.mxu0 0.0
    %7475 = vmatpush.msra.mxu0 %v7458
    %7476 = vmatmul.f32.gmra.mxu0 %v7456
    %v7477 = vpop.f32.mrf.mxu0
    %v7478 = vadd.f32 0.0, %v7477
    %7479 = vdwg.mxu0
    %7480 = vst [vmem:[#allocation1] ss:$4 sm:$0xff] %v944
    %s7481 = scalar_lea.vmem [#allocation1], 1
    %7482 = vst [vmem:[%s7481] ss:$4 sm:$0xff] %v1662
    %s7483 = scalar_lea.vmem [#allocation1], 2
    %7484 = vst [vmem:[%s7483] ss:$4 sm:$0xff] %v1663
    %v7485 = vld.sshfl [vmem:[#allocation1] sm:$0xff pattern:$0x73625140]
    %v7487 = vsel %vm5376, %v5358, 0
    %v7489 = vsel %vm5380, %v7485, 0
    %7491 = vmatpush.msra.mxu0 0.0
    %7492 = vmatpush.msra.mxu0 0.0
    %7493 = vmatpush.msra.mxu0 0.0
    %7494 = vmatpush.msra.mxu0 0.0
    %7495 = vmatpush.msra.mxu0 0.0
    %7496 = vmatpush.msra.mxu0 0.0
    %7497 = vmatpush.msra.mxu0 0.0
    %7498 = vmatpush.msra.mxu0 0.0
    %7499 = vmatpush.msra.mxu0 0.0
    %7500 = vmatpush.msra.mxu0 0.0
    %7501 = vmatpush.msra.mxu0 0.0
    %7502 = vmatpush.msra.mxu0 0.0
    %7503 = vmatpush.msra.mxu0 0.0
    %7504 = vmatpush.msra.mxu0 0.0
    %7505 = vmatpush.msra.mxu0 0.0
    %7506 = vmatpush.msra.mxu0 %v7489
    %7507 = vmatmul.f32.gmra.mxu0 %v7487
    %v7508 = vpop.f32.mrf.mxu0
    %v7509 = vadd.f32 0.0, %v7508
    %7510 = vdwg.mxu0
    %7511 = vst [vmem:[#allocation1] ss:$4 sm:$0xff] %v1664
    %s7512 = scalar_lea.vmem [#allocation1], 1
    %7513 = vst [vmem:[%s7512] ss:$4 sm:$0xff] %v947
    %s7514 = scalar_lea.vmem [#allocation1], 2
    %7515 = vst [vmem:[%s7514] ss:$4 sm:$0xff] %v1665
    %v7516 = vld.sshfl [vmem:[#allocation1] sm:$0xff pattern:$0x73625140]
    %v7518 = vsel %vm5376, %v5359, 0
    %v7520 = vsel %vm5380, %v7516, 0
    %7522 = vmatpush.msra.mxu0 0.0
    %7523 = vmatpush.msra.mxu0 0.0
    %7524 = vmatpush.msra.mxu0 0.0
    %7525 = vmatpush.msra.mxu0 0.0
    %7526 = vmatpush.msra.mxu0 0.0
    %7527 = vmatpush.msra.mxu0 0.0
    %7528 = vmatpush.msra.mxu0 0.0
    %7529 = vmatpush.msra.mxu0 0.0
    %7530 = vmatpush.msra.mxu0 0.0
    %7531 = vmatpush.msra.mxu0 0.0
    %7532 = vmatpush.msra.mxu0 0.0
    %7533 = vmatpush.msra.mxu0 0.0
    %7534 = vmatpush.msra.mxu0 0.0
    %7535 = vmatpush.msra.mxu0 0.0
    %7536 = vmatpush.msra.mxu0 0.0
    %7537 = vmatpush.msra.mxu0 %v7520
    %7538 = vmatmul.f32.gmra.mxu0 %v7518
    %v7539 = vpop.f32.mrf.mxu0
    %v7540 = vadd.f32 0.0, %v7539
    %7541 = vdwg.mxu0
    %7542 = vst [vmem:[#allocation1] ss:$4 sm:$0xff] %v1666
    %s7543 = scalar_lea.vmem [#allocation1], 1
    %7544 = vst [vmem:[%s7543] ss:$4 sm:$0xff] %v1667
    %s7545 = scalar_lea.vmem [#allocation1], 2
    %7546 = vst [vmem:[%s7545] ss:$4 sm:$0xff] %v950
    %v7547 = vld.sshfl [vmem:[#allocation1] sm:$0xff pattern:$0x73625140]
    %v7549 = vsel %vm5376, %v5360, 0
    %v7551 = vsel %vm5380, %v7547, 0
    %7553 = vmatpush.msra.mxu0 0.0
    %7554 = vmatpush.msra.mxu0 0.0
    %7555 = vmatpush.msra.mxu0 0.0
    %7556 = vmatpush.msra.mxu0 0.0
    %7557 = vmatpush.msra.mxu0 0.0
    %7558 = vmatpush.msra.mxu0 0.0
    %7559 = vmatpush.msra.mxu0 0.0
    %7560 = vmatpush.msra.mxu0 0.0
    %7561 = vmatpush.msra.mxu0 0.0
    %7562 = vmatpush.msra.mxu0 0.0
    %7563 = vmatpush.msra.mxu0 0.0
    %7564 = vmatpush.msra.mxu0 0.0
    %7565 = vmatpush.msra.mxu0 0.0
    %7566 = vmatpush.msra.mxu0 0.0
    %7567 = vmatpush.msra.mxu0 0.0
    %7568 = vmatpush.msra.mxu0 %v7551
    %7569 = vmatmul.f32.gmra.mxu0 %v7549
    %v7570 = vpop.f32.mrf.mxu0
    %v7571 = vadd.f32 0.0, %v7570
    %7572 = vdwg.mxu0
    %7573 = vst [vmem:[#allocation1] ss:$4 sm:$0xff] %v1668
    %s7574 = scalar_lea.vmem [#allocation1], 1
    %7575 = vst [vmem:[%s7574] ss:$4 sm:$0xff] %v1669
    %s7576 = scalar_lea.vmem [#allocation1], 2
    %7577 = vst [vmem:[%s7576] ss:$4 sm:$0xff] %v1670
    %v7578 = vld.sshfl [vmem:[#allocation1] sm:$0xff pattern:$0x73625140]
    %v7580 = vsel %vm5376, %v5361, 0
    %v7582 = vsel %vm5380, %v7578, 0
    %7584 = vmatpush.msra.mxu0 0.0
    %7585 = vmatpush.msra.mxu0 0.0
    %7586 = vmatpush.msra.mxu0 0.0
    %7587 = vmatpush.msra.mxu0 0.0
    %7588 = vmatpush.msra.mxu0 0.0
    %7589 = vmatpush.msra.mxu0 0.0
    %7590 = vmatpush.msra.mxu0 0.0
    %7591 = vmatpush.msra.mxu0 0.0
    %7592 = vmatpush.msra.mxu0 0.0
    %7593 = vmatpush.msra.mxu0 0.0
    %7594 = vmatpush.msra.mxu0 0.0
    %7595 = vmatpush.msra.mxu0 0.0
    %7596 = vmatpush.msra.mxu0 0.0
    %7597 = vmatpush.msra.mxu0 0.0
    %7598 = vmatpush.msra.mxu0 0.0
    %7599 = vmatpush.msra.mxu0 %v7582
    %7600 = vmatmul.f32.gmra.mxu0 %v7580
    %v7601 = vpop.f32.mrf.mxu0
    %v7602 = vadd.f32 0.0, %v7601
    %7603 = vdwg.mxu0
    %7604 = vst [vmem:[#allocation1] ss:$4 sm:$0xff] %v953
    %s7605 = scalar_lea.vmem [#allocation1], 1
    %7606 = vst [vmem:[%s7605] ss:$4 sm:$0xff] %v1671
    %s7607 = scalar_lea.vmem [#allocation1], 2
    %7608 = vst [vmem:[%s7607] ss:$4 sm:$0xff] %v1672
    %v7609 = vld.sshfl [vmem:[#allocation1] sm:$0xff pattern:$0x73625140]
    %v7611 = vsel %vm5376, %v5362, 0
    %v7613 = vsel %vm5380, %v7609, 0
    %7615 = vmatpush.msra.mxu0 0.0
    %7616 = vmatpush.msra.mxu0 0.0
    %7617 = vmatpush.msra.mxu0 0.0
    %7618 = vmatpush.msra.mxu0 0.0
    %7619 = vmatpush.msra.mxu0 0.0
    %7620 = vmatpush.msra.mxu0 0.0
    %7621 = vmatpush.msra.mxu0 0.0
    %7622 = vmatpush.msra.mxu0 0.0
    %7623 = vmatpush.msra.mxu0 0.0
    %7624 = vmatpush.msra.mxu0 0.0
    %7625 = vmatpush.msra.mxu0 0.0
    %7626 = vmatpush.msra.mxu0 0.0
    %7627 = vmatpush.msra.mxu0 0.0
    %7628 = vmatpush.msra.mxu0 0.0
    %7629 = vmatpush.msra.mxu0 0.0
    %7630 = vmatpush.msra.mxu0 %v7613
    %7631 = vmatmul.f32.gmra.mxu0 %v7611
    %v7632 = vpop.f32.mrf.mxu0
    %v7633 = vadd.f32 0.0, %v7632
    %7634 = vdwg.mxu0
    %7635 = vst [vmem:[#allocation1] ss:$4 sm:$0xff] %v1673
    %s7636 = scalar_lea.vmem [#allocation1], 1
    %7637 = vst [vmem:[%s7636] ss:$4 sm:$0xff] %v956
    %s7638 = scalar_lea.vmem [#allocation1], 2
    %7639 = vst [vmem:[%s7638] ss:$4 sm:$0xff] %v1674
    %v7640 = vld.sshfl [vmem:[#allocation1] sm:$0xff pattern:$0x73625140]
    %v7642 = vsel %vm5376, %v5363, 0
    %v7644 = vsel %vm5380, %v7640, 0
    %7646 = vmatpush.msra.mxu0 0.0
    %7647 = vmatpush.msra.mxu0 0.0
    %7648 = vmatpush.msra.mxu0 0.0
    %7649 = vmatpush.msra.mxu0 0.0
    %7650 = vmatpush.msra.mxu0 0.0
    %7651 = vmatpush.msra.mxu0 0.0
    %7652 = vmatpush.msra.mxu0 0.0
    %7653 = vmatpush.msra.mxu0 0.0
    %7654 = vmatpush.msra.mxu0 0.0
    %7655 = vmatpush.msra.mxu0 0.0
    %7656 = vmatpush.msra.mxu0 0.0
    %7657 = vmatpush.msra.mxu0 0.0
    %7658 = vmatpush.msra.mxu0 0.0
    %7659 = vmatpush.msra.mxu0 0.0
    %7660 = vmatpush.msra.mxu0 0.0
    %7661 = vmatpush.msra.mxu0 %v7644
    %7662 = vmatmul.f32.gmra.mxu0 %v7642
    %v7663 = vpop.f32.mrf.mxu0
    %v7664 = vadd.f32 0.0, %v7663
    %7665 = vdwg.mxu0
    %7666 = vst [vmem:[#allocation1] ss:$4 sm:$0xff] %v1675
    %s7667 = scalar_lea.vmem [#allocation1], 1
    %7668 = vst [vmem:[%s7667] ss:$4 sm:$0xff] %v1676
    %s7669 = scalar_lea.vmem [#allocation1], 2
    %7670 = vst [vmem:[%s7669] ss:$4 sm:$0xff] %v959
    %v7671 = vld.sshfl [vmem:[#allocation1] sm:$0xff pattern:$0x73625140]
    %v7673 = vsel %vm5376, %v5364, 0
    %v7675 = vsel %vm5380, %v7671, 0
    %7677 = vmatpush.msra.mxu0 0.0
    %7678 = vmatpush.msra.mxu0 0.0
    %7679 = vmatpush.msra.mxu0 0.0
    %7680 = vmatpush.msra.mxu0 0.0
    %7681 = vmatpush.msra.mxu0 0.0
    %7682 = vmatpush.msra.mxu0 0.0
    %7683 = vmatpush.msra.mxu0 0.0
    %7684 = vmatpush.msra.mxu0 0.0
    %7685 = vmatpush.msra.mxu0 0.0
    %7686 = vmatpush.msra.mxu0 0.0
    %7687 = vmatpush.msra.mxu0 0.0
    %7688 = vmatpush.msra.mxu0 0.0
    %7689 = vmatpush.msra.mxu0 0.0
    %7690 = vmatpush.msra.mxu0 0.0
    %7691 = vmatpush.msra.mxu0 0.0
    %7692 = vmatpush.msra.mxu0 %v7675
    %7693 = vmatmul.f32.gmra.mxu0 %v7673
    %v7694 = vpop.f32.mrf.mxu0
    %v7695 = vadd.f32 0.0, %v7694
    %7696 = vdwg.mxu0
    %7697 = vst [vmem:[#allocation1] ss:$4 sm:$0xff] %v1677
    %s7698 = scalar_lea.vmem [#allocation1], 1
    %7699 = vst [vmem:[%s7698] ss:$4 sm:$0xff] %v1678
    %s7700 = scalar_lea.vmem [#allocation1], 2
    %7701 = vst [vmem:[%s7700] ss:$4 sm:$0xff] %v1679
    %v7702 = vld.sshfl [vmem:[#allocation1] sm:$0xff pattern:$0x73625140]
    %v7704 = vsel %vm5376, %v5365, 0
    %v7706 = vsel %vm5380, %v7702, 0
    %7708 = vmatpush.msra.mxu0 0.0
    %7709 = vmatpush.msra.mxu0 0.0
    %7710 = vmatpush.msra.mxu0 0.0
    %7711 = vmatpush.msra.mxu0 0.0
    %7712 = vmatpush.msra.mxu0 0.0
    %7713 = vmatpush.msra.mxu0 0.0
    %7714 = vmatpush.msra.mxu0 0.0
    %7715 = vmatpush.msra.mxu0 0.0
    %7716 = vmatpush.msra.mxu0 0.0
    %7717 = vmatpush.msra.mxu0 0.0
    %7718 = vmatpush.msra.mxu0 0.0
    %7719 = vmatpush.msra.mxu0 0.0
    %7720 = vmatpush.msra.mxu0 0.0
    %7721 = vmatpush.msra.mxu0 0.0
    %7722 = vmatpush.msra.mxu0 0.0
    %7723 = vmatpush.msra.mxu0 %v7706
    %7724 = vmatmul.f32.gmra.mxu0 %v7704
    %v7725 = vpop.f32.mrf.mxu0
    %v7726 = vadd.f32 0.0, %v7725
    %7727 = vdwg.mxu0
    %7728 = vst [vmem:[#allocation1] ss:$4 sm:$0xff] %v962
    %s7729 = scalar_lea.vmem [#allocation1], 1
    %7730 = vst [vmem:[%s7729] ss:$4 sm:$0xff] %v1680
    %s7731 = scalar_lea.vmem [#allocation1], 2
    %7732 = vst [vmem:[%s7731] ss:$4 sm:$0xff] %v1681
    %v7733 = vld.sshfl [vmem:[#allocation1] sm:$0xff pattern:$0x73625140]
    %v7735 = vsel %vm5376, %v5366, 0
    %v7737 = vsel %vm5380, %v7733, 0
    %7739 = vmatpush.msra.mxu0 0.0
    %7740 = vmatpush.msra.mxu0 0.0
    %7741 = vmatpush.msra.mxu0 0.0
    %7742 = vmatpush.msra.mxu0 0.0
    %7743 = vmatpush.msra.mxu0 0.0
    %7744 = vmatpush.msra.mxu0 0.0
    %7745 = vmatpush.msra.mxu0 0.0
    %7746 = vmatpush.msra.mxu0 0.0
    %7747 = vmatpush.msra.mxu0 0.0
    %7748 = vmatpush.msra.mxu0 0.0
    %7749 = vmatpush.msra.mxu0 0.0
    %7750 = vmatpush.msra.mxu0 0.0
    %7751 = vmatpush.msra.mxu0 0.0
    %7752 = vmatpush.msra.mxu0 0.0
    %7753 = vmatpush.msra.mxu0 0.0
    %7754 = vmatpush.msra.mxu0 %v7737
    %7755 = vmatmul.f32.gmra.mxu0 %v7735
    %v7756 = vpop.f32.mrf.mxu0
    %v7757 = vadd.f32 0.0, %v7756
    %7758 = vdwg.mxu0
    %7759 = vst [vmem:[#allocation1] ss:$4 sm:$0xff] %v1682
    %s7760 = scalar_lea.vmem [#allocation1], 1
    %7761 = vst [vmem:[%s7760] ss:$4 sm:$0xff] %v965
    %s7762 = scalar_lea.vmem [#allocation1], 2
    %7763 = vst [vmem:[%s7762] ss:$4 sm:$0xff] %v1683
    %v7764 = vld.sshfl [vmem:[#allocation1] sm:$0xff pattern:$0x73625140]
    %v7766 = vsel %vm5376, %v5367, 0
    %v7768 = vsel %vm5380, %v7764, 0
    %7770 = vmatpush.msra.mxu0 0.0
    %7771 = vmatpush.msra.mxu0 0.0
    %7772 = vmatpush.msra.mxu0 0.0
    %7773 = vmatpush.msra.mxu0 0.0
    %7774 = vmatpush.msra.mxu0 0.0
    %7775 = vmatpush.msra.mxu0 0.0
    %7776 = vmatpush.msra.mxu0 0.0
    %7777 = vmatpush.msra.mxu0 0.0
    %7778 = vmatpush.msra.mxu0 0.0
    %7779 = vmatpush.msra.mxu0 0.0
    %7780 = vmatpush.msra.mxu0 0.0
    %7781 = vmatpush.msra.mxu0 0.0
    %7782 = vmatpush.msra.mxu0 0.0
    %7783 = vmatpush.msra.mxu0 0.0
    %7784 = vmatpush.msra.mxu0 0.0
    %7785 = vmatpush.msra.mxu0 %v7768
    %7786 = vmatmul.f32.gmra.mxu0 %v7766
    %v7787 = vpop.f32.mrf.mxu0
    %v7788 = vadd.f32 0.0, %v7787
    %7789 = vdwg.mxu0
    %7790 = vst [vmem:[#allocation1] ss:$4 sm:$0xff] %v1684
    %s7791 = scalar_lea.vmem [#allocation1], 1
    %7792 = vst [vmem:[%s7791] ss:$4 sm:$0xff] %v1685
    %s7793 = scalar_lea.vmem [#allocation1], 2
    %7794 = vst [vmem:[%s7793] ss:$4 sm:$0xff] %v968
    %v7795 = vld.sshfl [vmem:[#allocation1] sm:$0xff pattern:$0x73625140]
    %v7797 = vsel %vm5376, %v5368, 0
    %v7799 = vsel %vm5380, %v7795, 0
    %7801 = vmatpush.msra.mxu0 0.0
    %7802 = vmatpush.msra.mxu0 0.0
    %7803 = vmatpush.msra.mxu0 0.0
    %7804 = vmatpush.msra.mxu0 0.0
    %7805 = vmatpush.msra.mxu0 0.0
    %7806 = vmatpush.msra.mxu0 0.0
    %7807 = vmatpush.msra.mxu0 0.0
    %7808 = vmatpush.msra.mxu0 0.0
    %7809 = vmatpush.msra.mxu0 0.0
    %7810 = vmatpush.msra.mxu0 0.0
    %7811 = vmatpush.msra.mxu0 0.0
    %7812 = vmatpush.msra.mxu0 0.0
    %7813 = vmatpush.msra.mxu0 0.0
    %7814 = vmatpush.msra.mxu0 0.0
    %7815 = vmatpush.msra.mxu0 0.0
    %7816 = vmatpush.msra.mxu0 %v7799
    %7817 = vmatmul.f32.gmra.mxu0 %v7797
    %v7818 = vpop.f32.mrf.mxu0
    %v7819 = vadd.f32 0.0, %v7818
    %7820 = vdwg.mxu0
    %7821 = vst [vmem:[#allocation1] ss:$4 sm:$0xff] %v1686
    %s7822 = scalar_lea.vmem [#allocation1], 1
    %7823 = vst [vmem:[%s7822] ss:$4 sm:$0xff] %v1687
    %s7824 = scalar_lea.vmem [#allocation1], 2
    %7825 = vst [vmem:[%s7824] ss:$4 sm:$0xff] %v1688
    %v7826 = vld.sshfl [vmem:[#allocation1] sm:$0xff pattern:$0x73625140]
    %v7828 = vsel %vm5376, %v5369, 0
    %v7830 = vsel %vm5380, %v7826, 0
    %7832 = vmatpush.msra.mxu0 0.0
    %7833 = vmatpush.msra.mxu0 0.0
    %7834 = vmatpush.msra.mxu0 0.0
    %7835 = vmatpush.msra.mxu0 0.0
    %7836 = vmatpush.msra.mxu0 0.0
    %7837 = vmatpush.msra.mxu0 0.0
    %7838 = vmatpush.msra.mxu0 0.0
    %7839 = vmatpush.msra.mxu0 0.0
    %7840 = vmatpush.msra.mxu0 0.0
    %7841 = vmatpush.msra.mxu0 0.0
    %7842 = vmatpush.msra.mxu0 0.0
    %7843 = vmatpush.msra.mxu0 0.0
    %7844 = vmatpush.msra.mxu0 0.0
    %7845 = vmatpush.msra.mxu0 0.0
    %7846 = vmatpush.msra.mxu0 0.0
    %7847 = vmatpush.msra.mxu0 %v7830
    %7848 = vmatmul.f32.gmra.mxu0 %v7828
    %v7849 = vpop.f32.mrf.mxu0
    %v7850 = vadd.f32 0.0, %v7849
    %7851 = vdwg.mxu0
    %v7932 = vrot.slane %v5401, 2
    %v7933 = vrot.slane %v5401, 4
    %v7934 = vrot.slane %v5432, 2
    %v7935 = vrot.slane %v5432, 4
    %v7936 = vrot.slane %v5463, 2
    %v7937 = vrot.slane %v5463, 4
    %v7938 = vrot.slane %v5494, 2
    %v7939 = vrot.slane %v5494, 4
    %v7940 = vrot.slane %v5525, 2
    %v7941 = vrot.slane %v5525, 4
    %v7942 = vrot.slane %v5556, 2
    %v7943 = vrot.slane %v5556, 4
    %v7944 = vrot.slane %v5587, 2
    %v7945 = vrot.slane %v5587, 4
    %v7946 = vrot.slane %v5618, 2
    %v7947 = vrot.slane %v5618, 4
    %v7948 = vrot.slane %v5649, 2
    %v7949 = vrot.slane %v5649, 4
    %v7950 = vrot.slane %v5680, 2
    %v7951 = vrot.slane %v5680, 4
    %v7952 = vrot.slane %v5711, 2
    %v7953 = vrot.slane %v5711, 4
    %v7954 = vrot.slane %v5742, 2
    %v7955 = vrot.slane %v5742, 4
    %v7956 = vrot.slane %v5773, 2
    %v7957 = vrot.slane %v5773, 4
    %v7958 = vrot.slane %v5804, 2
    %v7959 = vrot.slane %v5804, 4
    %v7960 = vrot.slane %v5835, 2
    %v7961 = vrot.slane %v5835, 4
    %v7962 = vrot.slane %v5866, 2
    %v7963 = vrot.slane %v5866, 4
    %v7964 = vrot.slane %v5897, 2
    %v7965 = vrot.slane %v5897, 4
    %v7966 = vrot.slane %v5928, 2
    %v7967 = vrot.slane %v5928, 4
    %v7968 = vrot.slane %v5959, 2
    %v7969 = vrot.slane %v5959, 4
    %v7970 = vrot.slane %v5990, 2
    %v7971 = vrot.slane %v5990, 4
    %v7972 = vrot.slane %v6021, 2
    %v7973 = vrot.slane %v6021, 4
    %v7974 = vrot.slane %v6052, 2
    %v7975 = vrot.slane %v6052, 4
    %v7976 = vrot.slane %v6083, 2
    %v7977 = vrot.slane %v6083, 4
    %v7978 = vrot.slane %v6114, 2
    %v7979 = vrot.slane %v6114, 4
    %v7980 = vrot.slane %v6145, 2
    %v7981 = vrot.slane %v6145, 4
    %v7982 = vrot.slane %v6176, 2
    %v7983 = vrot.slane %v6176, 4
    %v7984 = vrot.slane %v6207, 2
    %v7985 = vrot.slane %v6207, 4
    %v7986 = vrot.slane %v6238, 2
    %v7987 = vrot.slane %v6238, 4
    %v7988 = vrot.slane %v6269, 2
    %v7989 = vrot.slane %v6269, 4
    %v7990 = vrot.slane %v6300, 2
    %v7991 = vrot.slane %v6300, 4
    %v7992 = vrot.slane %v6331, 2
    %v7993 = vrot.slane %v6331, 4
    %v7994 = vrot.slane %v6362, 2
    %v7995 = vrot.slane %v6362, 4
    %v7996 = vrot.slane %v6393, 2
    %v7997 = vrot.slane %v6393, 4
    %v7998 = vrot.slane %v6424, 2
    %v7999 = vrot.slane %v6424, 4
    %v8000 = vrot.slane %v6455, 2
    %v8001 = vrot.slane %v6455, 4
    %v8002 = vrot.slane %v6486, 2
    %v8003 = vrot.slane %v6486, 4
    %v8004 = vrot.slane %v6517, 2
    %v8005 = vrot.slane %v6517, 4
    %v8006 = vrot.slane %v6548, 2
    %v8007 = vrot.slane %v6548, 4
    %v8008 = vrot.slane %v6579, 2
    %v8009 = vrot.slane %v6579, 4
    %v8010 = vrot.slane %v6610, 2
    %v8011 = vrot.slane %v6610, 4
    %v8012 = vrot.slane %v6641, 2
    %v8013 = vrot.slane %v6641, 4
    %v8014 = vrot.slane %v6672, 2
    %v8015 = vrot.slane %v6672, 4
    %v8016 = vrot.slane %v6703, 2
    %v8017 = vrot.slane %v6703, 4
    %v8018 = vrot.slane %v6734, 2
    %v8019 = vrot.slane %v6734, 4
    %v8020 = vrot.slane %v6765, 2
    %v8021 = vrot.slane %v6765, 4
    %v8022 = vrot.slane %v6796, 2
    %v8023 = vrot.slane %v6796, 4
    %v8024 = vrot.slane %v6827, 2
    %v8025 = vrot.slane %v6827, 4
    %v8026 = vrot.slane %v6858, 2
    %v8027 = vrot.slane %v6858, 4
    %v8028 = vrot.slane %v6889, 2
    %v8029 = vrot.slane %v6889, 4
    %v8030 = vrot.slane %v6920, 2
    %v8031 = vrot.slane %v6920, 4
    %v8032 = vrot.slane %v6951, 2
    %v8033 = vrot.slane %v6951, 4
    %v8034 = vrot.slane %v6982, 2
    %v8035 = vrot.slane %v6982, 4
    %v8036 = vrot.slane %v7013, 2
    %v8037 = vrot.slane %v7013, 4
    %v8038 = vrot.slane %v7044, 2
    %v8039 = vrot.slane %v7044, 4
    %v8040 = vrot.slane %v7075, 2
    %v8041 = vrot.slane %v7075, 4
    %v8042 = vrot.slane %v7106, 2
    %v8043 = vrot.slane %v7106, 4
    %v8044 = vrot.slane %v7137, 2
    %v8045 = vrot.slane %v7137, 4
    %v8046 = vrot.slane %v7168, 2
    %v8047 = vrot.slane %v7168, 4
    %v8048 = vrot.slane %v7199, 2
    %v8049 = vrot.slane %v7199, 4
    %v8050 = vrot.slane %v7230, 2
    %v8051 = vrot.slane %v7230, 4
    %v8052 = vrot.slane %v7261, 2
    %v8053 = vrot.slane %v7261, 4
    %v8054 = vrot.slane %v7292, 2
    %v8055 = vrot.slane %v7292, 4
    %v8056 = vrot.slane %v7323, 2
    %v8057 = vrot.slane %v7323, 4
    %v8058 = vrot.slane %v7354, 2
    %v8059 = vrot.slane %v7354, 4
    %v8060 = vrot.slane %v7385, 2
    %v8061 = vrot.slane %v7385, 4
    %v8062 = vrot.slane %v7416, 2
    %v8063 = vrot.slane %v7416, 4
    %v8064 = vrot.slane %v7447, 2
    %v8065 = vrot.slane %v7447, 4
    %v8066 = vrot.slane %v7478, 2
    %v8067 = vrot.slane %v7478, 4
    %v8068 = vrot.slane %v7509, 2
    %v8069 = vrot.slane %v7509, 4
    %v8070 = vrot.slane %v7540, 2
    %v8071 = vrot.slane %v7540, 4
    %v8072 = vrot.slane %v7571, 2
    %v8073 = vrot.slane %v7571, 4
    %v8074 = vrot.slane %v7602, 2
    %v8075 = vrot.slane %v7602, 4
    %v8076 = vrot.slane %v7633, 2
    %v8077 = vrot.slane %v7633, 4
    %v8078 = vrot.slane %v7664, 2
    %v8079 = vrot.slane %v7664, 4
    %v8080 = vrot.slane %v7695, 2
    %v8081 = vrot.slane %v7695, 4
    %v8082 = vrot.slane %v7726, 2
    %v8083 = vrot.slane %v7726, 4
    %v8084 = vrot.slane %v7757, 2
    %v8085 = vrot.slane %v7757, 4
    %v8086 = vrot.slane %v7788, 2
    %v8087 = vrot.slane %v7788, 4
    %v8088 = vrot.slane %v7819, 2
    %v8089 = vrot.slane %v7819, 4
    %v8090 = vrot.slane %v7850, 2
    %v8091 = vrot.slane %v7850, 4
    %v8092 = vld [vmem:[#allocation8] sm:$0xff]
    %v8093 = vld [vmem:[#allocation8 + $0x8] sm:$0xff]
    %v8094 = vld [vmem:[#allocation8 + $0x10] sm:$0xff]
    %v8095 = vld [vmem:[#allocation8 + $0x18] sm:$0xff]
    %v8096 = vld [vmem:[#allocation8 + $0x20] sm:$0xff]
    %v8097 = vld [vmem:[#allocation8 + $0x28] sm:$0xff]
    %v8098 = vld [vmem:[#allocation8 + $0x30] sm:$0xff]
    %v8099 = vld [vmem:[#allocation8 + $0x38] sm:$0xff]
    %v8100 = vld [vmem:[#allocation8 + $0x40] sm:$0xff]
    %v8101 = vld [vmem:[#allocation8 + $0x48] sm:$0xff]
    %v8102 = vld [vmem:[#allocation8 + $0x50] sm:$0xff]
    %v8103 = vld [vmem:[#allocation8 + $0x58] sm:$0xff]
    %v8104 = vld [vmem:[#allocation8 + $0x60] sm:$0xff]
    %v8105 = vld [vmem:[#allocation8 + $0x68] sm:$0xff]
    %v8106 = vld [vmem:[#allocation8 + $0x70] sm:$0xff]
    %v8107 = vld [vmem:[#allocation8 + $0x78] sm:$0xff]
    %v8108 = vld [vmem:[%s4] sm:$0x1]
    %v8110 = vperm.slane %v8108, 0
    %8112 = vst [vmem:[#allocation1] ss:$4 sm:$0xff] %v5401
    %s8113 = scalar_lea.vmem [#allocation1], 1
    %8114 = vst [vmem:[%s8113] ss:$4 sm:$0xff] %v7932
    %s8115 = scalar_lea.vmem [#allocation1], 2
    %8116 = vst [vmem:[%s8115] ss:$4 sm:$0xff] %v7933
    %s8117 = scalar_lea.vmem [#allocation1], 3
    %8118 = vst [vmem:[%s8117] ss:$4 sm:$0xff] %v5432
    %s8119 = scalar_lea.vmem [#allocation1], 32
    %8120 = vst [vmem:[%s8119] ss:$4 sm:$0xff] %v7934
    %s8121 = scalar_lea.vmem [#allocation1], 33
    %8122 = vst [vmem:[%s8121] ss:$4 sm:$0xff] %v7935
    %s8123 = scalar_lea.vmem [#allocation1], 34
    %8124 = vst [vmem:[%s8123] ss:$4 sm:$0xff] %v5463
    %s8125 = scalar_lea.vmem [#allocation1], 35
    %8126 = vst [vmem:[%s8125] ss:$4 sm:$0xff] %v7936
    %v8127 = vld.sshfl [vmem:[#allocation1] sm:$0xff pattern:$0x73625140]
    %v8128 = vld.sshfl [vmem:[#allocation1 + $0x20] sm:$0xff pattern:$0x73625140]
    %8129 = vst [vmem:[#allocation1] ss:$4 sm:$0xff] %v7937
    %8130 = vst [vmem:[%s8113] ss:$4 sm:$0xff] %v5494
    %8131 = vst [vmem:[%s8115] ss:$4 sm:$0xff] %v7938
    %8132 = vst [vmem:[%s8117] ss:$4 sm:$0xff] %v7939
    %8133 = vst [vmem:[%s8119] ss:$4 sm:$0xff] %v5525
    %8134 = vst [vmem:[%s8121] ss:$4 sm:$0xff] %v7940
    %8135 = vst [vmem:[%s8123] ss:$4 sm:$0xff] %v7941
    %8136 = vst [vmem:[%s8125] ss:$4 sm:$0xff] %v5556
    %v8137 = vld.sshfl [vmem:[#allocation1] sm:$0xff pattern:$0x73625140]
    %v8138 = vld.sshfl [vmem:[#allocation1 + $0x20] sm:$0xff pattern:$0x73625140]
    %8139 = vst [vmem:[#allocation1] ss:$4 sm:$0xff] %v7942
    %8140 = vst [vmem:[%s8113] ss:$4 sm:$0xff] %v7943
    %8141 = vst [vmem:[%s8115] ss:$4 sm:$0xff] %v5587
    %8142 = vst [vmem:[%s8117] ss:$4 sm:$0xff] %v7944
    %8143 = vst [vmem:[%s8119] ss:$4 sm:$0xff] %v7945
    %8144 = vst [vmem:[%s8121] ss:$4 sm:$0xff] %v5618
    %8145 = vst [vmem:[%s8123] ss:$4 sm:$0xff] %v7946
    %8146 = vst [vmem:[%s8125] ss:$4 sm:$0xff] %v7947
    %v8147 = vld.sshfl [vmem:[#allocation1] sm:$0xff pattern:$0x73625140]
    %v8148 = vld.sshfl [vmem:[#allocation1 + $0x20] sm:$0xff pattern:$0x73625140]
    %8149 = vst [vmem:[#allocation1] ss:$4 sm:$0xff] %v5649
    %8150 = vst [vmem:[%s8113] ss:$4 sm:$0xff] %v7948
    %8151 = vst [vmem:[%s8115] ss:$4 sm:$0xff] %v7949
    %8152 = vst [vmem:[%s8117] ss:$4 sm:$0xff] %v5680
    %8153 = vst [vmem:[%s8119] ss:$4 sm:$0xff] %v7950
    %8154 = vst [vmem:[%s8121] ss:$4 sm:$0xff] %v7951
    %8155 = vst [vmem:[%s8123] ss:$4 sm:$0xff] %v5711
    %8156 = vst [vmem:[%s8125] ss:$4 sm:$0xff] %v7952
    %v8157 = vld.sshfl [vmem:[#allocation1] sm:$0xff pattern:$0x73625140]
    %v8158 = vld.sshfl [vmem:[#allocation1 + $0x20] sm:$0xff pattern:$0x73625140]
    %8159 = vst [vmem:[#allocation1] ss:$4 sm:$0xff] %v7953
    %8160 = vst [vmem:[%s8113] ss:$4 sm:$0xff] %v5742
    %8161 = vst [vmem:[%s8115] ss:$4 sm:$0xff] %v7954
    %8162 = vst [vmem:[%s8117] ss:$4 sm:$0xff] %v7955
    %8163 = vst [vmem:[%s8119] ss:$4 sm:$0xff] %v5773
    %8164 = vst [vmem:[%s8121] ss:$4 sm:$0xff] %v7956
    %8165 = vst [vmem:[%s8123] ss:$4 sm:$0xff] %v7957
    %8166 = vst [vmem:[%s8125] ss:$4 sm:$0xff] %v5804
    %v8167 = vld.sshfl [vmem:[#allocation1] sm:$0xff pattern:$0x73625140]
    %v8168 = vld.sshfl [vmem:[#allocation1 + $0x20] sm:$0xff pattern:$0x73625140]
    %8169 = vst [vmem:[#allocation1] ss:$4 sm:$0xff] %v7958
    %8170 = vst [vmem:[%s8113] ss:$4 sm:$0xff] %v7959
    %8171 = vst [vmem:[%s8115] ss:$4 sm:$0xff] %v5835
    %8172 = vst [vmem:[%s8117] ss:$4 sm:$0xff] %v7960
    %8173 = vst [vmem:[%s8119] ss:$4 sm:$0xff] %v7961
    %8174 = vst [vmem:[%s8121] ss:$4 sm:$0xff] %v5866
    %8175 = vst [vmem:[%s8123] ss:$4 sm:$0xff] %v7962
    %8176 = vst [vmem:[%s8125] ss:$4 sm:$0xff] %v7963
    %v8177 = vld.sshfl [vmem:[#allocation1] sm:$0xff pattern:$0x73625140]
    %v8178 = vld.sshfl [vmem:[#allocation1 + $0x20] sm:$0xff pattern:$0x73625140]
    %8179 = vst [vmem:[#allocation1] ss:$4 sm:$0xff] %v5897
    %8180 = vst [vmem:[%s8113] ss:$4 sm:$0xff] %v7964
    %8181 = vst [vmem:[%s8115] ss:$4 sm:$0xff] %v7965
    %8182 = vst [vmem:[%s8117] ss:$4 sm:$0xff] %v5928
    %8183 = vst [vmem:[%s8119] ss:$4 sm:$0xff] %v7966
    %8184 = vst [vmem:[%s8121] ss:$4 sm:$0xff] %v7967
    %8185 = vst [vmem:[%s8123] ss:$4 sm:$0xff] %v5959
    %8186 = vst [vmem:[%s8125] ss:$4 sm:$0xff] %v7968
    %v8187 = vld.sshfl [vmem:[#allocation1] sm:$0xff pattern:$0x73625140]
    %v8188 = vld.sshfl [vmem:[#allocation1 + $0x20] sm:$0xff pattern:$0x73625140]
    %8189 = vst [vmem:[#allocation1] ss:$4 sm:$0xff] %v7969
    %8190 = vst [vmem:[%s8113] ss:$4 sm:$0xff] %v5990
    %8191 = vst [vmem:[%s8115] ss:$4 sm:$0xff] %v7970
    %8192 = vst [vmem:[%s8117] ss:$4 sm:$0xff] %v7971
    %8193 = vst [vmem:[%s8119] ss:$4 sm:$0xff] %v6021
    %8194 = vst [vmem:[%s8121] ss:$4 sm:$0xff] %v7972
    %8195 = vst [vmem:[%s8123] ss:$4 sm:$0xff] %v7973
    %8196 = vst [vmem:[%s8125] ss:$4 sm:$0xff] %v6052
    %v8197 = vld.sshfl [vmem:[#allocation1] sm:$0xff pattern:$0x73625140]
    %v8198 = vld.sshfl [vmem:[#allocation1 + $0x20] sm:$0xff pattern:$0x73625140]
    %8199 = vst [vmem:[#allocation1] ss:$4 sm:$0xff] %v7974
    %8200 = vst [vmem:[%s8113] ss:$4 sm:$0xff] %v7975
    %8201 = vst [vmem:[%s8115] ss:$4 sm:$0xff] %v6083
    %8202 = vst [vmem:[%s8117] ss:$4 sm:$0xff] %v7976
    %8203 = vst [vmem:[%s8119] ss:$4 sm:$0xff] %v7977
    %8204 = vst [vmem:[%s8121] ss:$4 sm:$0xff] %v6114
    %8205 = vst [vmem:[%s8123] ss:$4 sm:$0xff] %v7978
    %8206 = vst [vmem:[%s8125] ss:$4 sm:$0xff] %v7979
    %v8207 = vld.sshfl [vmem:[#allocation1] sm:$0xff pattern:$0x73625140]
    %v8208 = vld.sshfl [vmem:[#allocation1 + $0x20] sm:$0xff pattern:$0x73625140]
    %8209 = vst [vmem:[#allocation1] ss:$4 sm:$0xff] %v6145
    %8210 = vst [vmem:[%s8113] ss:$4 sm:$0xff] %v7980
    %8211 = vst [vmem:[%s8115] ss:$4 sm:$0xff] %v7981
    %8212 = vst [vmem:[%s8117] ss:$4 sm:$0xff] %v6176
    %8213 = vst [vmem:[%s8119] ss:$4 sm:$0xff] %v7982
    %8214 = vst [vmem:[%s8121] ss:$4 sm:$0xff] %v7983
    %8215 = vst [vmem:[%s8123] ss:$4 sm:$0xff] %v6207
    %8216 = vst [vmem:[%s8125] ss:$4 sm:$0xff] %v7984
    %v8217 = vld.sshfl [vmem:[#allocation1] sm:$0xff pattern:$0x73625140]
    %v8218 = vld.sshfl [vmem:[#allocation1 + $0x20] sm:$0xff pattern:$0x73625140]
    %8219 = vst [vmem:[#allocation1] ss:$4 sm:$0xff] %v7985
    %8220 = vst [vmem:[%s8113] ss:$4 sm:$0xff] %v6238
    %8221 = vst [vmem:[%s8115] ss:$4 sm:$0xff] %v7986
    %8222 = vst [vmem:[%s8117] ss:$4 sm:$0xff] %v7987
    %8223 = vst [vmem:[%s8119] ss:$4 sm:$0xff] %v6269
    %8224 = vst [vmem:[%s8121] ss:$4 sm:$0xff] %v7988
    %8225 = vst [vmem:[%s8123] ss:$4 sm:$0xff] %v7989
    %8226 = vst [vmem:[%s8125] ss:$4 sm:$0xff] %v6300
    %v8227 = vld.sshfl [vmem:[#allocation1] sm:$0xff pattern:$0x73625140]
    %v8228 = vld.sshfl [vmem:[#allocation1 + $0x20] sm:$0xff pattern:$0x73625140]
    %8229 = vst [vmem:[#allocation1] ss:$4 sm:$0xff] %v7990
    %8230 = vst [vmem:[%s8113] ss:$4 sm:$0xff] %v7991
    %8231 = vst [vmem:[%s8115] ss:$4 sm:$0xff] %v6331
    %8232 = vst [vmem:[%s8117] ss:$4 sm:$0xff] %v7992
    %8233 = vst [vmem:[%s8119] ss:$4 sm:$0xff] %v7993
    %8234 = vst [vmem:[%s8121] ss:$4 sm:$0xff] %v6362
    %8235 = vst [vmem:[%s8123] ss:$4 sm:$0xff] %v7994
    %8236 = vst [vmem:[%s8125] ss:$4 sm:$0xff] %v7995
    %v8237 = vld.sshfl [vmem:[#allocation1] sm:$0xff pattern:$0x73625140]
    %v8238 = vld.sshfl [vmem:[#allocation1 + $0x20] sm:$0xff pattern:$0x73625140]
    %8239 = vst [vmem:[#allocation1] ss:$4 sm:$0xff] %v6393
    %8240 = vst [vmem:[%s8113] ss:$4 sm:$0xff] %v7996
    %8241 = vst [vmem:[%s8115] ss:$4 sm:$0xff] %v7997
    %8242 = vst [vmem:[%s8117] ss:$4 sm:$0xff] %v6424
    %8243 = vst [vmem:[%s8119] ss:$4 sm:$0xff] %v7998
    %8244 = vst [vmem:[%s8121] ss:$4 sm:$0xff] %v7999
    %8245 = vst [vmem:[%s8123] ss:$4 sm:$0xff] %v6455
    %8246 = vst [vmem:[%s8125] ss:$4 sm:$0xff] %v8000
    %v8247 = vld.sshfl [vmem:[#allocation1] sm:$0xff pattern:$0x73625140]
    %v8248 = vld.sshfl [vmem:[#allocation1 + $0x20] sm:$0xff pattern:$0x73625140]
    %8249 = vst [vmem:[#allocation1] ss:$4 sm:$0xff] %v8001
    %8250 = vst [vmem:[%s8113] ss:$4 sm:$0xff] %v6486
    %8251 = vst [vmem:[%s8115] ss:$4 sm:$0xff] %v8002
    %8252 = vst [vmem:[%s8117] ss:$4 sm:$0xff] %v8003
    %8253 = vst [vmem:[%s8119] ss:$4 sm:$0xff] %v6517
    %8254 = vst [vmem:[%s8121] ss:$4 sm:$0xff] %v8004
    %8255 = vst [vmem:[%s8123] ss:$4 sm:$0xff] %v8005
    %8256 = vst [vmem:[%s8125] ss:$4 sm:$0xff] %v6548
    %v8257 = vld.sshfl [vmem:[#allocation1] sm:$0xff pattern:$0x73625140]
    %v8258 = vld.sshfl [vmem:[#allocation1 + $0x20] sm:$0xff pattern:$0x73625140]
    %8259 = vst [vmem:[#allocation1] ss:$4 sm:$0xff] %v8006
    %8260 = vst [vmem:[%s8113] ss:$4 sm:$0xff] %v8007
    %8261 = vst [vmem:[%s8115] ss:$4 sm:$0xff] %v6579
    %8262 = vst [vmem:[%s8117] ss:$4 sm:$0xff] %v8008
    %8263 = vst [vmem:[%s8119] ss:$4 sm:$0xff] %v8009
    %8264 = vst [vmem:[%s8121] ss:$4 sm:$0xff] %v6610
    %8265 = vst [vmem:[%s8123] ss:$4 sm:$0xff] %v8010
    %8266 = vst [vmem:[%s8125] ss:$4 sm:$0xff] %v8011
    %v8267 = vld.sshfl [vmem:[#allocation1] sm:$0xff pattern:$0x73625140]
    %v8268 = vld.sshfl [vmem:[#allocation1 + $0x20] sm:$0xff pattern:$0x73625140]
    %8269 = vst [vmem:[#allocation1] ss:$4 sm:$0xff] %v6641
    %8270 = vst [vmem:[%s8113] ss:$4 sm:$0xff] %v8012
    %8271 = vst [vmem:[%s8115] ss:$4 sm:$0xff] %v8013
    %8272 = vst [vmem:[%s8117] ss:$4 sm:$0xff] %v6672
    %8273 = vst [vmem:[%s8119] ss:$4 sm:$0xff] %v8014
    %8274 = vst [vmem:[%s8121] ss:$4 sm:$0xff] %v8015
    %8275 = vst [vmem:[%s8123] ss:$4 sm:$0xff] %v6703
    %8276 = vst [vmem:[%s8125] ss:$4 sm:$0xff] %v8016
    %v8277 = vld.sshfl [vmem:[#allocation1] sm:$0xff pattern:$0x73625140]
    %v8278 = vld.sshfl [vmem:[#allocation1 + $0x20] sm:$0xff pattern:$0x73625140]
    %8279 = vst [vmem:[#allocation1] ss:$4 sm:$0xff] %v8017
    %8280 = vst [vmem:[%s8113] ss:$4 sm:$0xff] %v6734
    %8281 = vst [vmem:[%s8115] ss:$4 sm:$0xff] %v8018
    %8282 = vst [vmem:[%s8117] ss:$4 sm:$0xff] %v8019
    %8283 = vst [vmem:[%s8119] ss:$4 sm:$0xff] %v6765
    %8284 = vst [vmem:[%s8121] ss:$4 sm:$0xff] %v8020
    %8285 = vst [vmem:[%s8123] ss:$4 sm:$0xff] %v8021
    %8286 = vst [vmem:[%s8125] ss:$4 sm:$0xff] %v6796
    %v8287 = vld.sshfl [vmem:[#allocation1] sm:$0xff pattern:$0x73625140]
    %v8288 = vld.sshfl [vmem:[#allocation1 + $0x20] sm:$0xff pattern:$0x73625140]
    %8289 = vst [vmem:[#allocation1] ss:$4 sm:$0xff] %v8022
    %8290 = vst [vmem:[%s8113] ss:$4 sm:$0xff] %v8023
    %8291 = vst [vmem:[%s8115] ss:$4 sm:$0xff] %v6827
    %8292 = vst [vmem:[%s8117] ss:$4 sm:$0xff] %v8024
    %8293 = vst [vmem:[%s8119] ss:$4 sm:$0xff] %v8025
    %8294 = vst [vmem:[%s8121] ss:$4 sm:$0xff] %v6858
    %8295 = vst [vmem:[%s8123] ss:$4 sm:$0xff] %v8026
    %8296 = vst [vmem:[%s8125] ss:$4 sm:$0xff] %v8027
    %v8297 = vld.sshfl [vmem:[#allocation1] sm:$0xff pattern:$0x73625140]
    %v8298 = vld.sshfl [vmem:[#allocation1 + $0x20] sm:$0xff pattern:$0x73625140]
    %8299 = vst [vmem:[#allocation1] ss:$4 sm:$0xff] %v6889
    %8300 = vst [vmem:[%s8113] ss:$4 sm:$0xff] %v8028
    %8301 = vst [vmem:[%s8115] ss:$4 sm:$0xff] %v8029
    %8302 = vst [vmem:[%s8117] ss:$4 sm:$0xff] %v6920
    %8303 = vst [vmem:[%s8119] ss:$4 sm:$0xff] %v8030
    %8304 = vst [vmem:[%s8121] ss:$4 sm:$0xff] %v8031
    %8305 = vst [vmem:[%s8123] ss:$4 sm:$0xff] %v6951
    %8306 = vst [vmem:[%s8125] ss:$4 sm:$0xff] %v8032
    %v8307 = vld.sshfl [vmem:[#allocation1] sm:$0xff pattern:$0x73625140]
    %v8308 = vld.sshfl [vmem:[#allocation1 + $0x20] sm:$0xff pattern:$0x73625140]
    %8309 = vst [vmem:[#allocation1] ss:$4 sm:$0xff] %v8033
    %8310 = vst [vmem:[%s8113] ss:$4 sm:$0xff] %v6982
    %8311 = vst [vmem:[%s8115] ss:$4 sm:$0xff] %v8034
    %8312 = vst [vmem:[%s8117] ss:$4 sm:$0xff] %v8035
    %8313 = vst [vmem:[%s8119] ss:$4 sm:$0xff] %v7013
    %8314 = vst [vmem:[%s8121] ss:$4 sm:$0xff] %v8036
    %8315 = vst [vmem:[%s8123] ss:$4 sm:$0xff] %v8037
    %8316 = vst [vmem:[%s8125] ss:$4 sm:$0xff] %v7044
    %v8317 = vld.sshfl [vmem:[#allocation1] sm:$0xff pattern:$0x73625140]
    %v8318 = vld.sshfl [vmem:[#allocation1 + $0x20] sm:$0xff pattern:$0x73625140]
    %8319 = vst [vmem:[#allocation1] ss:$4 sm:$0xff] %v8038
    %8320 = vst [vmem:[%s8113] ss:$4 sm:$0xff] %v8039
    %8321 = vst [vmem:[%s8115] ss:$4 sm:$0xff] %v7075
    %8322 = vst [vmem:[%s8117] ss:$4 sm:$0xff] %v8040
    %8323 = vst [vmem:[%s8119] ss:$4 sm:$0xff] %v8041
    %8324 = vst [vmem:[%s8121] ss:$4 sm:$0xff] %v7106
    %8325 = vst [vmem:[%s8123] ss:$4 sm:$0xff] %v8042
    %8326 = vst [vmem:[%s8125] ss:$4 sm:$0xff] %v8043
    %v8327 = vld.sshfl [vmem:[#allocation1] sm:$0xff pattern:$0x73625140]
    %v8328 = vld.sshfl [vmem:[#allocation1 + $0x20] sm:$0xff pattern:$0x73625140]
    %8329 = vst [vmem:[#allocation1] ss:$4 sm:$0xff] %v7137
    %8330 = vst [vmem:[%s8113] ss:$4 sm:$0xff] %v8044
    %8331 = vst [vmem:[%s8115] ss:$4 sm:$0xff] %v8045
    %8332 = vst [vmem:[%s8117] ss:$4 sm:$0xff] %v7168
    %8333 = vst [vmem:[%s8119] ss:$4 sm:$0xff] %v8046
    %8334 = vst [vmem:[%s8121] ss:$4 sm:$0xff] %v8047
    %8335 = vst [vmem:[%s8123] ss:$4 sm:$0xff] %v7199
    %8336 = vst [vmem:[%s8125] ss:$4 sm:$0xff] %v8048
    %v8337 = vld.sshfl [vmem:[#allocation1] sm:$0xff pattern:$0x73625140]
    %v8338 = vld.sshfl [vmem:[#allocation1 + $0x20] sm:$0xff pattern:$0x73625140]
    %8339 = vst [vmem:[#allocation1] ss:$4 sm:$0xff] %v8049
    %8340 = vst [vmem:[%s8113] ss:$4 sm:$0xff] %v7230
    %8341 = vst [vmem:[%s8115] ss:$4 sm:$0xff] %v8050
    %8342 = vst [vmem:[%s8117] ss:$4 sm:$0xff] %v8051
    %8343 = vst [vmem:[%s8119] ss:$4 sm:$0xff] %v7261
    %8344 = vst [vmem:[%s8121] ss:$4 sm:$0xff] %v8052
    %8345 = vst [vmem:[%s8123] ss:$4 sm:$0xff] %v8053
    %8346 = vst [vmem:[%s8125] ss:$4 sm:$0xff] %v7292
    %v8347 = vld.sshfl [vmem:[#allocation1] sm:$0xff pattern:$0x73625140]
    %v8348 = vld.sshfl [vmem:[#allocation1 + $0x20] sm:$0xff pattern:$0x73625140]
    %8349 = vst [vmem:[#allocation1] ss:$4 sm:$0xff] %v8054
    %8350 = vst [vmem:[%s8113] ss:$4 sm:$0xff] %v8055
    %8351 = vst [vmem:[%s8115] ss:$4 sm:$0xff] %v7323
    %8352 = vst [vmem:[%s8117] ss:$4 sm:$0xff] %v8056
    %8353 = vst [vmem:[%s8119] ss:$4 sm:$0xff] %v8057
    %8354 = vst [vmem:[%s8121] ss:$4 sm:$0xff] %v7354
    %8355 = vst [vmem:[%s8123] ss:$4 sm:$0xff] %v8058
    %8356 = vst [vmem:[%s8125] ss:$4 sm:$0xff] %v8059
    %v8357 = vld.sshfl [vmem:[#allocation1] sm:$0xff pattern:$0x73625140]
    %v8358 = vld.sshfl [vmem:[#allocation1 + $0x20] sm:$0xff pattern:$0x73625140]
    %8359 = vst [vmem:[#allocation1] ss:$4 sm:$0xff] %v7385
    %8360 = vst [vmem:[%s8113] ss:$4 sm:$0xff] %v8060
    %8361 = vst [vmem:[%s8115] ss:$4 sm:$0xff] %v8061
    %8362 = vst [vmem:[%s8117] ss:$4 sm:$0xff] %v7416
    %8363 = vst [vmem:[%s8119] ss:$4 sm:$0xff] %v8062
    %8364 = vst [vmem:[%s8121] ss:$4 sm:$0xff] %v8063
    %8365 = vst [vmem:[%s8123] ss:$4 sm:$0xff] %v7447
    %8366 = vst [vmem:[%s8125] ss:$4 sm:$0xff] %v8064
    %v8367 = vld.sshfl [vmem:[#allocation1] sm:$0xff pattern:$0x73625140]
    %v8368 = vld.sshfl [vmem:[#allocation1 + $0x20] sm:$0xff pattern:$0x73625140]
    %8369 = vst [vmem:[#allocation1] ss:$4 sm:$0xff] %v8065
    %8370 = vst [vmem:[%s8113] ss:$4 sm:$0xff] %v7478
    %8371 = vst [vmem:[%s8115] ss:$4 sm:$0xff] %v8066
    %8372 = vst [vmem:[%s8117] ss:$4 sm:$0xff] %v8067
    %8373 = vst [vmem:[%s8119] ss:$4 sm:$0xff] %v7509
    %8374 = vst [vmem:[%s8121] ss:$4 sm:$0xff] %v8068
    %8375 = vst [vmem:[%s8123] ss:$4 sm:$0xff] %v8069
    %8376 = vst [vmem:[%s8125] ss:$4 sm:$0xff] %v7540
    %v8377 = vld.sshfl [vmem:[#allocation1] sm:$0xff pattern:$0x73625140]
    %v8378 = vld.sshfl [vmem:[#allocation1 + $0x20] sm:$0xff pattern:$0x73625140]
    %8379 = vst [vmem:[#allocation1] ss:$4 sm:$0xff] %v8070
    %8380 = vst [vmem:[%s8113] ss:$4 sm:$0xff] %v8071
    %8381 = vst [vmem:[%s8115] ss:$4 sm:$0xff] %v7571
    %8382 = vst [vmem:[%s8117] ss:$4 sm:$0xff] %v8072
    %8383 = vst [vmem:[%s8119] ss:$4 sm:$0xff] %v8073
    %8384 = vst [vmem:[%s8121] ss:$4 sm:$0xff] %v7602
    %8385 = vst [vmem:[%s8123] ss:$4 sm:$0xff] %v8074
    %8386 = vst [vmem:[%s8125] ss:$4 sm:$0xff] %v8075
    %v8387 = vld.sshfl [vmem:[#allocation1] sm:$0xff pattern:$0x73625140]
    %v8388 = vld.sshfl [vmem:[#allocation1 + $0x20] sm:$0xff pattern:$0x73625140]
    %8389 = vst [vmem:[#allocation1] ss:$4 sm:$0xff] %v7633
    %8390 = vst [vmem:[%s8113] ss:$4 sm:$0xff] %v8076
    %8391 = vst [vmem:[%s8115] ss:$4 sm:$0xff] %v8077
    %8392 = vst [vmem:[%s8117] ss:$4 sm:$0xff] %v7664
    %8393 = vst [vmem:[%s8119] ss:$4 sm:$0xff] %v8078
    %8394 = vst [vmem:[%s8121] ss:$4 sm:$0xff] %v8079
    %8395 = vst [vmem:[%s8123] ss:$4 sm:$0xff] %v7695
    %8396 = vst [vmem:[%s8125] ss:$4 sm:$0xff] %v8080
    %v8397 = vld.sshfl [vmem:[#allocation1] sm:$0xff pattern:$0x73625140]
    %v8398 = vld.sshfl [vmem:[#allocation1 + $0x20] sm:$0xff pattern:$0x73625140]
    %8399 = vst [vmem:[#allocation1] ss:$4 sm:$0xff] %v8081
    %8400 = vst [vmem:[%s8113] ss:$4 sm:$0xff] %v7726
    %8401 = vst [vmem:[%s8115] ss:$4 sm:$0xff] %v8082
    %8402 = vst [vmem:[%s8117] ss:$4 sm:$0xff] %v8083
    %8403 = vst [vmem:[%s8119] ss:$4 sm:$0xff] %v7757
    %8404 = vst [vmem:[%s8121] ss:$4 sm:$0xff] %v8084
    %8405 = vst [vmem:[%s8123] ss:$4 sm:$0xff] %v8085
    %8406 = vst [vmem:[%s8125] ss:$4 sm:$0xff] %v7788
    %v8407 = vld.sshfl [vmem:[#allocation1] sm:$0xff pattern:$0x73625140]
    %v8408 = vld.sshfl [vmem:[#allocation1 + $0x20] sm:$0xff pattern:$0x73625140]
    %8409 = vst [vmem:[#allocation1] ss:$4 sm:$0xff] %v8086
    %8410 = vst [vmem:[%s8113] ss:$4 sm:$0xff] %v8087
    %8411 = vst [vmem:[%s8115] ss:$4 sm:$0xff] %v7819
    %8412 = vst [vmem:[%s8117] ss:$4 sm:$0xff] %v8088
    %8413 = vst [vmem:[%s8119] ss:$4 sm:$0xff] %v8089
    %8414 = vst [vmem:[%s8121] ss:$4 sm:$0xff] %v7850
    %8415 = vst [vmem:[%s8123] ss:$4 sm:$0xff] %v8090
    %8416 = vst [vmem:[%s8125] ss:$4 sm:$0xff] %v8091
    %v8417 = vld.sshfl [vmem:[#allocation1] sm:$0xff pattern:$0x73625140]
    %v8418 = vld.sshfl [vmem:[#allocation1 + $0x20] sm:$0xff pattern:$0x73625140]
    %8479 = vmatpush.msra.mxu0 %v8107
    %8480 = vmatpush.msra.mxu0 %v8106
    %8481 = vmatpush.msra.mxu0 %v8105
    %8482 = vmatpush.msra.mxu0 %v8104
    %8483 = vmatpush.msra.mxu0 %v8103
    %8484 = vmatpush.msra.mxu0 %v8102
    %8485 = vmatpush.msra.mxu0 %v8101
    %8486 = vmatpush.msra.mxu0 %v8100
    %8487 = vmatpush.msra.mxu0 %v8099
    %8488 = vmatpush.msra.mxu0 %v8098
    %8489 = vmatpush.msra.mxu0 %v8097
    %8490 = vmatpush.msra.mxu0 %v8096
    %8491 = vmatpush.msra.mxu0 %v8095
    %8492 = vmatpush.msra.mxu0 %v8094
    %8493 = vmatpush.msra.mxu0 %v8093
    %8494 = vmatpush.msra.mxu0 %v8092
    %8495 = vmatmul.f32.gmra.mxu0 %v8127
    %v8496 = vpop.f32.mrf.mxu0
    %v8497 = vadd.f32 %v8110, %v8496
    %8498 = vmatmul.f32.gmra.mxu0 %v8128
    %v8499 = vpop.f32.mrf.mxu0
    %v8500 = vadd.f32 %v8110, %v8499
    %8501 = vmatmul.f32.gmra.mxu0 %v8137
    %v8502 = vpop.f32.mrf.mxu0
    %v8503 = vadd.f32 %v8110, %v8502
    %8504 = vmatmul.f32.gmra.mxu0 %v8138
    %v8505 = vpop.f32.mrf.mxu0
    %v8506 = vadd.f32 %v8110, %v8505
    %8507 = vmatmul.f32.gmra.mxu0 %v8147
    %v8508 = vpop.f32.mrf.mxu0
    %v8509 = vadd.f32 %v8110, %v8508
    %8510 = vmatmul.f32.gmra.mxu0 %v8148
    %v8511 = vpop.f32.mrf.mxu0
    %v8512 = vadd.f32 %v8110, %v8511
    %8513 = vmatmul.f32.gmra.mxu0 %v8157
    %v8514 = vpop.f32.mrf.mxu0
    %v8515 = vadd.f32 %v8110, %v8514
    %8516 = vmatmul.f32.gmra.mxu0 %v8158
    %v8517 = vpop.f32.mrf.mxu0
    %v8518 = vadd.f32 %v8110, %v8517
    %8519 = vmatmul.f32.gmra.mxu0 %v8167
    %v8520 = vpop.f32.mrf.mxu0
    %v8521 = vadd.f32 %v8110, %v8520
    %8522 = vmatmul.f32.gmra.mxu0 %v8168
    %v8523 = vpop.f32.mrf.mxu0
    %v8524 = vadd.f32 %v8110, %v8523
    %8525 = vmatmul.f32.gmra.mxu0 %v8177
    %v8526 = vpop.f32.mrf.mxu0
    %v8527 = vadd.f32 %v8110, %v8526
    %8528 = vmatmul.f32.gmra.mxu0 %v8178
    %v8529 = vpop.f32.mrf.mxu0
    %v8530 = vadd.f32 %v8110, %v8529
    %8531 = vmatmul.f32.gmra.mxu0 %v8187
    %v8532 = vpop.f32.mrf.mxu0
    %v8533 = vadd.f32 %v8110, %v8532
    %8534 = vmatmul.f32.gmra.mxu0 %v8188
    %v8535 = vpop.f32.mrf.mxu0
    %v8536 = vadd.f32 %v8110, %v8535
    %8537 = vmatmul.f32.gmra.mxu0 %v8197
    %v8538 = vpop.f32.mrf.mxu0
    %v8539 = vadd.f32 %v8110, %v8538
    %8540 = vmatmul.f32.gmra.mxu0 %v8198
    %v8541 = vpop.f32.mrf.mxu0
    %v8542 = vadd.f32 %v8110, %v8541
    %8543 = vmatmul.f32.gmra.mxu0 %v8207
    %v8544 = vpop.f32.mrf.mxu0
    %v8545 = vadd.f32 %v8110, %v8544
    %8546 = vmatmul.f32.gmra.mxu0 %v8208
    %v8547 = vpop.f32.mrf.mxu0
    %v8548 = vadd.f32 %v8110, %v8547
    %8549 = vmatmul.f32.gmra.mxu0 %v8217
    %v8550 = vpop.f32.mrf.mxu0
    %v8551 = vadd.f32 %v8110, %v8550
    %8552 = vmatmul.f32.gmra.mxu0 %v8218
    %v8553 = vpop.f32.mrf.mxu0
    %v8554 = vadd.f32 %v8110, %v8553
    %8555 = vmatmul.f32.gmra.mxu0 %v8227
    %v8556 = vpop.f32.mrf.mxu0
    %v8557 = vadd.f32 %v8110, %v8556
    %8558 = vmatmul.f32.gmra.mxu0 %v8228
    %v8559 = vpop.f32.mrf.mxu0
    %v8560 = vadd.f32 %v8110, %v8559
    %8561 = vmatmul.f32.gmra.mxu0 %v8237
    %v8562 = vpop.f32.mrf.mxu0
    %v8563 = vadd.f32 %v8110, %v8562
    %8564 = vmatmul.f32.gmra.mxu0 %v8238
    %v8565 = vpop.f32.mrf.mxu0
    %v8566 = vadd.f32 %v8110, %v8565
    %8567 = vmatmul.f32.gmra.mxu0 %v8247
    %v8568 = vpop.f32.mrf.mxu0
    %v8569 = vadd.f32 %v8110, %v8568
    %8570 = vmatmul.f32.gmra.mxu0 %v8248
    %v8571 = vpop.f32.mrf.mxu0
    %v8572 = vadd.f32 %v8110, %v8571
    %8573 = vmatmul.f32.gmra.mxu0 %v8257
    %v8574 = vpop.f32.mrf.mxu0
    %v8575 = vadd.f32 %v8110, %v8574
    %8576 = vmatmul.f32.gmra.mxu0 %v8258
    %v8577 = vpop.f32.mrf.mxu0
    %v8578 = vadd.f32 %v8110, %v8577
    %8579 = vmatmul.f32.gmra.mxu0 %v8267
    %v8580 = vpop.f32.mrf.mxu0
    %v8581 = vadd.f32 %v8110, %v8580
    %8582 = vmatmul.f32.gmra.mxu0 %v8268
    %v8583 = vpop.f32.mrf.mxu0
    %v8584 = vadd.f32 %v8110, %v8583
    %8585 = vmatmul.f32.gmra.mxu0 %v8277
    %v8586 = vpop.f32.mrf.mxu0
    %v8587 = vadd.f32 %v8110, %v8586
    %8588 = vmatmul.f32.gmra.mxu0 %v8278
    %v8589 = vpop.f32.mrf.mxu0
    %v8590 = vadd.f32 %v8110, %v8589
    %8591 = vmatmul.f32.gmra.mxu0 %v8287
    %v8592 = vpop.f32.mrf.mxu0
    %v8593 = vadd.f32 %v8110, %v8592
    %8594 = vmatmul.f32.gmra.mxu0 %v8288
    %v8595 = vpop.f32.mrf.mxu0
    %v8596 = vadd.f32 %v8110, %v8595
    %8597 = vmatmul.f32.gmra.mxu0 %v8297
    %v8598 = vpop.f32.mrf.mxu0
    %v8599 = vadd.f32 %v8110, %v8598
    %8600 = vmatmul.f32.gmra.mxu0 %v8298
    %v8601 = vpop.f32.mrf.mxu0
    %v8602 = vadd.f32 %v8110, %v8601
    %8603 = vmatmul.f32.gmra.mxu0 %v8307
    %v8604 = vpop.f32.mrf.mxu0
    %v8605 = vadd.f32 %v8110, %v8604
    %8606 = vmatmul.f32.gmra.mxu0 %v8308
    %v8607 = vpop.f32.mrf.mxu0
    %v8608 = vadd.f32 %v8110, %v8607
    %8609 = vmatmul.f32.gmra.mxu0 %v8317
    %v8610 = vpop.f32.mrf.mxu0
    %v8611 = vadd.f32 %v8110, %v8610
    %8612 = vmatmul.f32.gmra.mxu0 %v8318
    %v8613 = vpop.f32.mrf.mxu0
    %v8614 = vadd.f32 %v8110, %v8613
    %8615 = vmatmul.f32.gmra.mxu0 %v8327
    %v8616 = vpop.f32.mrf.mxu0
    %v8617 = vadd.f32 %v8110, %v8616
    %8618 = vmatmul.f32.gmra.mxu0 %v8328
    %v8619 = vpop.f32.mrf.mxu0
    %v8620 = vadd.f32 %v8110, %v8619
    %8621 = vmatmul.f32.gmra.mxu0 %v8337
    %v8622 = vpop.f32.mrf.mxu0
    %v8623 = vadd.f32 %v8110, %v8622
    %8624 = vmatmul.f32.gmra.mxu0 %v8338
    %v8625 = vpop.f32.mrf.mxu0
    %v8626 = vadd.f32 %v8110, %v8625
    %8627 = vmatmul.f32.gmra.mxu0 %v8347
    %v8628 = vpop.f32.mrf.mxu0
    %v8629 = vadd.f32 %v8110, %v8628
    %8630 = vmatmul.f32.gmra.mxu0 %v8348
    %v8631 = vpop.f32.mrf.mxu0
    %v8632 = vadd.f32 %v8110, %v8631
    %8633 = vmatmul.f32.gmra.mxu0 %v8357
    %v8634 = vpop.f32.mrf.mxu0
    %v8635 = vadd.f32 %v8110, %v8634
    %8636 = vmatmul.f32.gmra.mxu0 %v8358
    %v8637 = vpop.f32.mrf.mxu0
    %v8638 = vadd.f32 %v8110, %v8637
    %8639 = vmatmul.f32.gmra.mxu0 %v8367
    %v8640 = vpop.f32.mrf.mxu0
    %v8641 = vadd.f32 %v8110, %v8640
    %8642 = vmatmul.f32.gmra.mxu0 %v8368
    %v8643 = vpop.f32.mrf.mxu0
    %v8644 = vadd.f32 %v8110, %v8643
    %8645 = vmatmul.f32.gmra.mxu0 %v8377
    %v8646 = vpop.f32.mrf.mxu0
    %v8647 = vadd.f32 %v8110, %v8646
    %8648 = vmatmul.f32.gmra.mxu0 %v8378
    %v8649 = vpop.f32.mrf.mxu0
    %v8650 = vadd.f32 %v8110, %v8649
    %8651 = vmatmul.f32.gmra.mxu0 %v8387
    %v8652 = vpop.f32.mrf.mxu0
    %v8653 = vadd.f32 %v8110, %v8652
    %8654 = vmatmul.f32.gmra.mxu0 %v8388
    %v8655 = vpop.f32.mrf.mxu0
    %v8656 = vadd.f32 %v8110, %v8655
    %8657 = vmatmul.f32.gmra.mxu0 %v8397
    %v8658 = vpop.f32.mrf.mxu0
    %v8659 = vadd.f32 %v8110, %v8658
    %8660 = vmatmul.f32.gmra.mxu0 %v8398
    %v8661 = vpop.f32.mrf.mxu0
    %v8662 = vadd.f32 %v8110, %v8661
    %8663 = vmatmul.f32.gmra.mxu0 %v8407
    %v8664 = vpop.f32.mrf.mxu0
    %v8665 = vadd.f32 %v8110, %v8664
    %8666 = vmatmul.f32.gmra.mxu0 %v8408
    %v8667 = vpop.f32.mrf.mxu0
    %v8668 = vadd.f32 %v8110, %v8667
    %8669 = vmatmul.f32.gmra.mxu0 %v8417
    %v8670 = vpop.f32.mrf.mxu0
    %v8671 = vadd.f32 %v8110, %v8670
    %8672 = vmatmul.f32.gmra.mxu0 %v8418
    %v8673 = vpop.f32.mrf.mxu0
    %v8674 = vadd.f32 %v8110, %v8673
    %8675 = vdwg.mxu0
    %v8676 = vmax.f32 %v8497, 0.0
    %v8677 = vmax.f32 %v8500, 0.0
    %v8678 = vmax.f32 %v8503, 0.0
    %v8679 = vmax.f32 %v8506, 0.0
    %v8680 = vmax.f32 %v8509, 0.0
    %v8681 = vmax.f32 %v8512, 0.0
    %v8682 = vmax.f32 %v8515, 0.0
    %v8683 = vmax.f32 %v8518, 0.0
    %v8684 = vmax.f32 %v8521, 0.0
    %v8685 = vmax.f32 %v8524, 0.0
    %v8686 = vmax.f32 %v8527, 0.0
    %v8687 = vmax.f32 %v8530, 0.0
    %v8688 = vmax.f32 %v8533, 0.0
    %v8689 = vmax.f32 %v8536, 0.0
    %v8690 = vmax.f32 %v8539, 0.0
    %v8691 = vmax.f32 %v8542, 0.0
    %v8692 = vmax.f32 %v8545, 0.0
    %v8693 = vmax.f32 %v8548, 0.0
    %v8694 = vmax.f32 %v8551, 0.0
    %v8695 = vmax.f32 %v8554, 0.0
    %v8696 = vmax.f32 %v8557, 0.0
    %v8697 = vmax.f32 %v8560, 0.0
    %v8698 = vmax.f32 %v8563, 0.0
    %v8699 = vmax.f32 %v8566, 0.0
    %v8700 = vmax.f32 %v8569, 0.0
    %v8701 = vmax.f32 %v8572, 0.0
    %v8702 = vmax.f32 %v8575, 0.0
    %v8703 = vmax.f32 %v8578, 0.0
    %v8704 = vmax.f32 %v8581, 0.0
    %v8705 = vmax.f32 %v8584, 0.0
    %v8706 = vmax.f32 %v8587, 0.0
    %v8707 = vmax.f32 %v8590, 0.0
    %v8708 = vmax.f32 %v8593, 0.0
    %v8709 = vmax.f32 %v8596, 0.0
    %v8710 = vmax.f32 %v8599, 0.0
    %v8711 = vmax.f32 %v8602, 0.0
    %v8712 = vmax.f32 %v8605, 0.0
    %v8713 = vmax.f32 %v8608, 0.0
    %v8714 = vmax.f32 %v8611, 0.0
    %v8715 = vmax.f32 %v8614, 0.0
    %v8716 = vmax.f32 %v8617, 0.0
    %v8717 = vmax.f32 %v8620, 0.0
    %v8718 = vmax.f32 %v8623, 0.0
    %v8719 = vmax.f32 %v8626, 0.0
    %v8720 = vmax.f32 %v8629, 0.0
    %v8721 = vmax.f32 %v8632, 0.0
    %v8722 = vmax.f32 %v8635, 0.0
    %v8723 = vmax.f32 %v8638, 0.0
    %v8724 = vmax.f32 %v8641, 0.0
    %v8725 = vmax.f32 %v8644, 0.0
    %v8726 = vmax.f32 %v8647, 0.0
    %v8727 = vmax.f32 %v8650, 0.0
    %v8728 = vmax.f32 %v8653, 0.0
    %v8729 = vmax.f32 %v8656, 0.0
    %v8730 = vmax.f32 %v8659, 0.0
    %v8731 = vmax.f32 %v8662, 0.0
    %v8732 = vmax.f32 %v8665, 0.0
    %v8733 = vmax.f32 %v8668, 0.0
    %v8734 = vmax.f32 %v8671, 0.0
    %v8735 = vmax.f32 %v8674, 0.0
    %8736 = vst [vmem:[#allocation10] sm:$0xff] %v8676
    %8737 = vst [vmem:[#allocation10 + $0x8] sm:$0xff] %v8677
    %8738 = vst [vmem:[#allocation10 + $0x10] sm:$0xff] %v8678
    %8739 = vst [vmem:[#allocation10 + $0x18] sm:$0xff] %v8679
    %8740 = vst [vmem:[#allocation10 + $0x20] sm:$0xff] %v8680
    %8741 = vst [vmem:[#allocation10 + $0x28] sm:$0xff] %v8681
    %8742 = vst [vmem:[#allocation10 + $0x30] sm:$0xff] %v8682
    %8743 = vst [vmem:[#allocation10 + $0x38] sm:$0xff] %v8683
    %8744 = vst [vmem:[#allocation10 + $0x40] sm:$0xff] %v8684
    %8745 = vst [vmem:[#allocation10 + $0x48] sm:$0xff] %v8685
    %8746 = vst [vmem:[#allocation10 + $0x50] sm:$0xff] %v8686
    %8747 = vst [vmem:[#allocation10 + $0x58] sm:$0xff] %v8687
    %8748 = vst [vmem:[#allocation10 + $0x60] sm:$0xff] %v8688
    %8749 = vst [vmem:[#allocation10 + $0x68] sm:$0xff] %v8689
    %8750 = vst [vmem:[#allocation10 + $0x70] sm:$0xff] %v8690
    %8751 = vst [vmem:[#allocation10 + $0x78] sm:$0xff] %v8691
    %8752 = vst [vmem:[#allocation10 + $0x80] sm:$0xff] %v8692
    %8753 = vst [vmem:[#allocation10 + $0x88] sm:$0xff] %v8693
    %8754 = vst [vmem:[#allocation10 + $0x90] sm:$0xff] %v8694
    %8755 = vst [vmem:[#allocation10 + $0x98] sm:$0xff] %v8695
    %8756 = vst [vmem:[#allocation10 + $0xa0] sm:$0xff] %v8696
    %8757 = vst [vmem:[#allocation10 + $0xa8] sm:$0xff] %v8697
    %8758 = vst [vmem:[#allocation10 + $0xb0] sm:$0xff] %v8698
    %8759 = vst [vmem:[#allocation10 + $0xb8] sm:$0xff] %v8699
    %8760 = vst [vmem:[#allocation10 + $0xc0] sm:$0xff] %v8700
    %8761 = vst [vmem:[#allocation10 + $0xc8] sm:$0xff] %v8701
    %8762 = vst [vmem:[#allocation10 + $0xd0] sm:$0xff] %v8702
    %8763 = vst [vmem:[#allocation10 + $0xd8] sm:$0xff] %v8703
    %8764 = vst [vmem:[#allocation10 + $0xe0] sm:$0xff] %v8704
    %8765 = vst [vmem:[#allocation10 + $0xe8] sm:$0xff] %v8705
    %8766 = vst [vmem:[#allocation10 + $0xf0] sm:$0xff] %v8706
    %8767 = vst [vmem:[#allocation10 + $0xf8] sm:$0xff] %v8707
    %8768 = vst [vmem:[#allocation10 + $0x100] sm:$0xff] %v8708
    %8769 = vst [vmem:[#allocation10 + $0x108] sm:$0xff] %v8709
    %8770 = vst [vmem:[#allocation10 + $0x110] sm:$0xff] %v8710
    %8771 = vst [vmem:[#allocation10 + $0x118] sm:$0xff] %v8711
    %8772 = vst [vmem:[#allocation10 + $0x120] sm:$0xff] %v8712
    %8773 = vst [vmem:[#allocation10 + $0x128] sm:$0xff] %v8713
    %8774 = vst [vmem:[#allocation10 + $0x130] sm:$0xff] %v8714
    %8775 = vst [vmem:[#allocation10 + $0x138] sm:$0xff] %v8715
    %8776 = vst [vmem:[#allocation10 + $0x140] sm:$0xff] %v8716
    %8777 = vst [vmem:[#allocation10 + $0x148] sm:$0xff] %v8717
    %8778 = vst [vmem:[#allocation10 + $0x150] sm:$0xff] %v8718
    %8779 = vst [vmem:[#allocation10 + $0x158] sm:$0xff] %v8719
    %8780 = vst [vmem:[#allocation10 + $0x160] sm:$0xff] %v8720
    %8781 = vst [vmem:[#allocation10 + $0x168] sm:$0xff] %v8721
    %8782 = vst [vmem:[#allocation10 + $0x170] sm:$0xff] %v8722
    %8783 = vst [vmem:[#allocation10 + $0x178] sm:$0xff] %v8723
    %8784 = vst [vmem:[#allocation10 + $0x180] sm:$0xff] %v8724
    %8785 = vst [vmem:[#allocation10 + $0x188] sm:$0xff] %v8725
    %8786 = vst [vmem:[#allocation10 + $0x190] sm:$0xff] %v8726
    %8787 = vst [vmem:[#allocation10 + $0x198] sm:$0xff] %v8727
    %8788 = vst [vmem:[#allocation10 + $0x1a0] sm:$0xff] %v8728
    %8789 = vst [vmem:[#allocation10 + $0x1a8] sm:$0xff] %v8729
    %8790 = vst [vmem:[#allocation10 + $0x1b0] sm:$0xff] %v8730
    %8791 = vst [vmem:[#allocation10 + $0x1b8] sm:$0xff] %v8731
    %8792 = vst [vmem:[#allocation10 + $0x1c0] sm:$0xff] %v8732
    %8793 = vst [vmem:[#allocation10 + $0x1c8] sm:$0xff] %v8733
    %8794 = vst [vmem:[#allocation10 + $0x1d0] sm:$0xff] %v8734
    %8795 = vst [vmem:[#allocation10 + $0x1d8] sm:$0xff] %v8735
    // Predicated region
    $region38: #{tpu_custom_call.1} parent=1 // pred_check
      _
    $region39: #{tpu_custom_call.1} parent=1 // pred_check_branch
      %8797 = sbr.rel (0) target = $region41
    $region40: #{tpu_custom_call.1} parent=1 // pred_region
      %8799 = vsyncadd [#allocation4], 0
      %s8800 = sshll.u32 [#allocation10], 4
      %s8801 = int_to_ptr.vmem [resolvable:$true] %s8800
      %s8802 = sshll.u32 %s5, 4
      %s8803 = int_to_ptr.hbm [resolvable:$true] %s8802
      %8808 = dma.vmem_to_hbm [thread:$0]  %s8801, 7680, %s8803, [#allocation4], 128, 128, 8
    $region41: #{tpu_custom_call.1} parent=1 // pred_fallthru
      _
    // Predicated region
    $region42: #{tpu_custom_call.1} parent=1 // pred_check
      _
    $region43: #{tpu_custom_call.1} parent=1 // pred_check_branch
      %8810 = sbr.rel (0) target = $region45
    $region44: #{tpu_custom_call.1} parent=1 // pred_region
      %8812 = dma.done [#allocation4], 7680
    $region45: #{tpu_custom_call.1} parent=1 // pred_fallthru
      _
    %8813 = vsyncpa [#allocation3], 1
    %8814 = vsyncpa [#allocation6], 1
    %8815 = vsyncpa [#allocation9], 1
    %8816 = vsyncpa [#allocation4], 1

</llo_original>
